<compile_context>
chip_gen: v7x
topology: tpu7x:2x2x1
jax: 0.10.0
libtpu: 0.0.40
codegen_flags: <defaults>
</compile_context>

<pallas_src>
import functools

import jax
import jax.numpy as jnp
from jax.experimental import pallas as pl
from jax.experimental.pallas import tpu as pltpu


_VMEM_LIMIT = 32 * 1024 * 1024  # safe on v5e (128 MiB), v6e (128 MiB), v7x (64 MiB)


# ----------------------------------------------------------------------------
# Tiling helpers (trace-time python ints only)
# ----------------------------------------------------------------------------
def _largest_divisor_tile(n, cap=512):
    """Largest multiple of 8 that divides n and is <= cap (fallback: n itself)."""
    best = None
    t = 8
    while t <= min(n, cap):
        if n % t == 0:
            best = t
        t += 8
    return best if best is not None else n


def _pick_row_block(ho, wo, target_rows=512):
    """Largest divisor of ho with block rows (BH * wo) ~= target_rows."""
    cap = max(1, target_rows // wo)
    bh = 1
    d = 1
    while d <= min(ho, cap):
        if ho % d == 0:
            bh = d
        d += 1
    return bh


# ----------------------------------------------------------------------------
# Conv2d(4, 2, 1) + bias + LeakyReLU(0.2) + folded eval BN  (space-to-depth path)
# ----------------------------------------------------------------------------
def _conv_s2d(x_nhwc, w_oihw, pp):
    N, H, W, Cin = x_nhwc.shape
    Cout = w_oihw.shape[0]
    Ho, Wo = H // 2, W // 2
    Hp2, Wp2 = Ho + 1, Wo + 1
    C4 = 4 * Cin

    # pad + space-to-depth: (N, Ho+1, Wo+1, 4*Cin), bf16 activations
    xp = jnp.pad(x_nhwc, ((0, 0), (1, 1), (1, 1), (0, 0)))
    xs2d = (xp.reshape(N, Hp2, 2, Wp2, 2, Cin)
              .transpose(0, 1, 3, 2, 4, 5)
              .reshape(N, Hp2, Wp2, C4))

    # row-blocked slab with a 1-row overlap so each grid step is self-contained
    BH = _pick_row_block(Ho, Wo)
    RB = Ho // BH
    ridx = jnp.arange(RB)[:, None] * BH + jnp.arange(BH + 1)[None, :]
    xblk = xs2d[:, ridx].reshape(N * RB, BH + 1, Wp2, C4)

    # weight -> (shift = 2a+b, channel = (dh*2+dw)*Cin + cin, Cout), bf16 for MXU
    wq = (jnp.transpose(w_oihw, (2, 3, 1, 0))      # (KH, KW, Cin, Cout)
            .reshape(2, 2, 2, 2, Cin, Cout)        # (a, dh, b, dw, Cin, Cout)
            .transpose(0, 2, 1, 3, 4, 5)           # (a, b, dh, dw, Cin, Cout)
            .reshape(4, C4, Cout)
            .astype(jnp.bfloat16))

    def kernel(x_ref, w_ref, p_ref, o_ref):
        acc = jnp.zeros((BH * Wo, Cout), jnp.float32)
        for a in range(2):
            for b in range(2):
                # f32 round-trip keeps the (BH, Wo, C4) -> (BH*Wo, C4) reshape on an
                # unpacked (8,128)-tiled layout (Wo % 8 == 0 => layout preserving).
                xs = x_ref[0, a:a + BH, b:b + Wo, :].astype(jnp.float32)
                xs = xs.reshape(BH * Wo, C4).astype(jnp.bfloat16)
                acc = acc + jnp.dot(xs, w_ref[2 * a + b],
                                    preferred_element_type=jnp.float32)
        h = acc + p_ref[0:1, :]                  # conv bias
        h = jnp.where(h > 0.0, h, 0.2 * h)       # LeakyReLU(0.2); Dropout = identity (eval)
        h = h * p_ref[1:2, :] + p_ref[2:3, :]    # folded eval-mode BatchNorm affine
        o_ref[0] = h.reshape(BH, Wo, Cout).astype(o_ref.dtype)

    out = pl.pallas_call(
        kernel,
        out_shape=jax.ShapeDtypeStruct((N * RB, BH, Wo, Cout), jnp.bfloat16),
        grid=(N * RB,),
        in_specs=[
            pl.BlockSpec((1, BH + 1, Wp2, C4), lambda g: (g, 0, 0, 0)),
            pl.BlockSpec((4, C4, Cout), lambda g: (0, 0, 0)),
            pl.BlockSpec((3, Cout), lambda g: (0, 0)),
        ],
        out_specs=pl.BlockSpec((1, BH, Wo, Cout), lambda g: (g, 0, 0, 0)),
        compiler_params=pltpu.CompilerParams(
            dimension_semantics=("parallel",),
            vmem_limit_bytes=_VMEM_LIMIT),
    )(xblk, wq, pp)
    return out.reshape(N, Ho, Wo, Cout)


# ----------------------------------------------------------------------------
# Fallback for tiny feature maps (Wo % 8 != 0): glue im2col + tiled fused matmul
# ----------------------------------------------------------------------------
def _im2col(x_nhwc, kh=4, kw=4, stride=2, pad=1):
    N, H, W, C = x_nhwc.shape
    xp = jnp.pad(x_nhwc, ((0, 0), (pad, pad), (pad, pad), (0, 0)))
    Ho = (H + 2 * pad - kh) // stride + 1
    Wo = (W + 2 * pad - kw) // stride + 1
    cols = []
    for i in range(kh):
        for j in range(kw):
            cols.append(xp[:, i:i + stride * Ho:stride, j:j + stride * Wo:stride, :])
    patches = jnp.concatenate(cols, axis=-1)       # (N, Ho, Wo, KH*KW*C)
    return patches.reshape(N * Ho * Wo, kh * kw * C), (N, Ho, Wo)


def _conv_im2col(x_nhwc, w_oihw, pp):
    Cout = w_oihw.shape[0]
    x2d, (N, Ho, Wo) = _im2col(x_nhwc)
    x2d = x2d.astype(jnp.bfloat16)
    w2d = (jnp.transpose(w_oihw, (2, 3, 1, 0)).reshape(-1, Cout)
             .astype(jnp.bfloat16))
    M, K = x2d.shape
    TM = _largest_divisor_tile(M, 512)

    def kernel(x_ref, w_ref, p_ref, o_ref):
        h = jnp.dot(x_ref[...], w_ref[...], preferred_element_type=jnp.float32)
        h = h + p_ref[0:1, :]
        h = jnp.where(h > 0.0, h, 0.2 * h)
        o_ref[...] = (h * p_ref[1:2, :] + p_ref[2:3, :]).astype(o_ref.dtype)

    out2d = pl.pallas_call(
        kernel,
        out_shape=jax.ShapeDtypeStruct((M, Cout), jnp.bfloat16),
        grid=(M // TM,),
        in_specs=[
            pl.BlockSpec((TM, K), lambda i: (i, 0)),
            pl.BlockSpec((K, Cout), lambda i: (0, 0)),
            pl.BlockSpec((3, Cout), lambda i: (0, 0)),
        ],
        out_specs=pl.BlockSpec((TM, Cout), lambda i: (i, 0)),
        compiler_params=pltpu.CompilerParams(
            dimension_semantics=("parallel",),
            vmem_limit_bytes=_VMEM_LIMIT),
    )(x2d, w2d, pp)
    return out2d.reshape(N, Ho, Wo, Cout)


# ----------------------------------------------------------------------------
# Layer glue
# ----------------------------------------------------------------------------
def conv_layer(x_nhwc, params, use_bn):
    """Conv2d(4,2,1) + LeakyReLU(0.2) + Dropout(eval=id) [+ BatchNorm2d eval]."""
    w, b = params["w"], params["b"]
    Cout = w.shape[0]
    if use_bn:
        eps = 0.8  # BatchNorm2d(C, 0.8): second positional arg is eps.
        scale = params["gamma"] / jnp.sqrt(params["running_var"] + eps)
        shift = params["beta"] - params["running_mean"] * scale
    else:
        scale = jnp.ones((Cout,), jnp.float32)
        shift = jnp.zeros((Cout,), jnp.float32)
    pp = jnp.stack([b, scale, shift], axis=0).astype(jnp.float32)   # packed (3, Cout)
    x = x_nhwc.astype(jnp.bfloat16)
    Wo = x.shape[2] // 2
    if Wo % 8 == 0:
        return _conv_s2d(x, w, pp)
    return _conv_im2col(x, w, pp)


def head(flat, w, b):
    """Linear(D, 1) + Sigmoid as a VPU multiply + lane reduction."""
    N, D = flat.shape
    w_row = w.reshape(1, D).astype(jnp.float32)
    b11 = b.reshape(1, 1).astype(jnp.float32)

    def kernel(x_ref, w_ref, b_ref, o_ref):
        x = x_ref[...].astype(jnp.float32)
        z = jnp.sum(x * w_ref[...], axis=1, keepdims=True) + b_ref[...]
        o_ref[...] = jax.nn.sigmoid(z)

    return pl.pallas_call(
        kernel,
        out_shape=jax.ShapeDtypeStruct((N, 1), jnp.float32),
        grid=(1,),
        in_specs=[
            pl.BlockSpec((N, D), lambda i: (0, 0)),
            pl.BlockSpec((1, D), lambda i: (0, 0)),
            pl.BlockSpec((1, 1), lambda i: (0, 0)),
        ],
        out_specs=pl.BlockSpec((N, 1), lambda i: (0, 0)),
        compiler_params=pltpu.CompilerParams(
            dimension_semantics=("arbitrary",),
            vmem_limit_bytes=_VMEM_LIMIT),
    )(flat.astype(jnp.bfloat16), w_row, b11)


# ----------------------------------------------------------------------------
# Parameter construction (deterministic, synthetic)
# ----------------------------------------------------------------------------
def make_conv_params(key, cin, cout, use_bn):
    k = jax.random.split(key, 6)
    p = {
        "w": 0.05 * jax.random.normal(k[0], (cout, cin, 4, 4), jnp.float32),
        "b": 0.05 * jax.random.normal(k[1], (cout,), jnp.float32),
    }
    if use_bn:
        p["gamma"] = 1.0 + 0.05 * jax.random.normal(k[2], (cout,), jnp.float32)
        p["beta"] = 0.05 * jax.random.normal(k[3], (cout,), jnp.float32)
        p["running_mean"] = 0.05 * jax.random.normal(k[4], (cout,), jnp.float32)
        p["running_var"] = 1.0 + 0.1 * jnp.abs(jax.random.normal(k[5], (cout,), jnp.float32))
    return p


def make_discriminator_params(key, target_size, num_channels, feature_size):
    assert target_size in (64, 128, 256)
    assert num_channels in (1, 3)
    assert feature_size // 8 > 0
    fs = feature_size // 2
    keys = jax.random.split(key, 8)
    params = {}
    params["conv_1"] = make_conv_params(keys[0], num_channels, fs, use_bn=False)
    params["conv_2"] = make_conv_params(keys[1], fs, fs, use_bn=True)
    params["conv_3"] = make_conv_params(keys[2], fs, 2 * fs, use_bn=True)
    fs *= 2
    if target_size >= 128:
        params["conv_4"] = make_conv_params(keys[3], fs, 2 * fs, use_bn=True)
        fs *= 2
        if target_size == 256:
            params["conv_5"] = make_conv_params(keys[4], fs, 2 * fs, use_bn=True)
            fs *= 2
    params["conv_final"] = make_conv_params(keys[5], fs, 2 * fs, use_bn=True)
    fs *= 2
    d = fs * 4 ** 2
    params["discrim_w"] = 0.05 * jax.random.normal(keys[6], (d, 1), jnp.float32)
    params["discrim_b"] = 0.05 * jax.random.normal(keys[7], (1,), jnp.float32)
    return params


# ----------------------------------------------------------------------------
# Forward pass
# ----------------------------------------------------------------------------
@functools.partial(jax.jit, static_argnums=0)
def discriminator_forward(target_size, params, x_nchw):
    x = jnp.transpose(x_nchw, (0, 2, 3, 1)).astype(jnp.bfloat16)   # NCHW -> NHWC
    x = conv_layer(x, params["conv_1"], use_bn=False)
    x = conv_layer(x, params["conv_2"], use_bn=True)
    x = conv_layer(x, params["conv_3"], use_bn=True)
    if target_size >= 128:
        x = conv_layer(x, params["conv_4"], use_bn=True)
        if target_size == 256:
            x = conv_layer(x, params["conv_5"], use_bn=True)
    x = conv_layer(x, params["conv_final"], use_bn=True)
    # PyTorch flattens NCHW: order (C, H, W)
    n = x.shape[0]
    flat = jnp.transpose(x, (0, 3, 1, 2)).reshape(n, -1)
    return head(flat, params["discrim_w"], params["discrim_b"])


# ----------------------------------------------------------------------------
if __name__ == "__main__":
    key = jax.random.PRNGKey(0)
    k_param, k_input = jax.random.split(key)

    target_size = 64          # smallest allowed by the module's assert
    num_channels = 3
    feature_size = 16         # small but valid (feature_size // 8 > 0)
    batch = 2

    params = make_discriminator_params(k_param, target_size, num_channels, feature_size)
    x = jax.random.normal(k_input, (batch, num_channels, target_size, target_size),
                          jnp.float32)

    labels = discriminator_forward(target_size, params, x)
    labels = jax.block_until_ready(labels)

    assert labels.shape == (batch, 1)
    assert bool(jnp.all(jnp.isfinite(labels)))
    assert bool(jnp.all((labels >= 0.0) & (labels <= 1.0)))
    print("KERNEL_OK")
</pallas_src>

<mosaic_0001>
module attributes {stable_mosaic.version = 11 : i64} {
  func.func @kernel(%arg0: i32, %arg1: memref<1x17x33x12xbf16, #tpu.memory_space<vmem>>, %arg2: memref<4x12x8xbf16, #tpu.memory_space<vmem>>, %arg3: memref<3x8xf32, #tpu.memory_space<vmem>>, %arg4: memref<1x16x32x8xbf16, #tpu.memory_space<vmem>>) attributes {dimension_semantics = [#tpu.dimension_semantics<parallel>], iteration_bounds = array<i64: 4>, scalar_prefetch = 0 : i64, scratch_operands = 0 : i64, tpu.core_type = #tpu.core_type<tc>, window_params = [{transform_indices = @transform_0, window_bounds = array<i64: 1, 17, 33, 12>}, {pipeline_mode = #tpu.pipeline_mode<synchronous>, transform_indices = @transform_1, window_bounds = array<i64: 4, 12, 8>}, {pipeline_mode = #tpu.pipeline_mode<synchronous>, transform_indices = @transform_2, window_bounds = array<i64: 3, 8>}, {transform_indices = @transform_3, window_bounds = array<i64: 1, 16, 32, 8>}]} {
    %cst = arith.constant 0.000000e+00 : f32
    %0 = vector.broadcast %cst : f32 to vector<512x8xf32>
    %c0 = arith.constant 0 : index
    %c0_0 = arith.constant 0 : index
    %c0_1 = arith.constant 0 : index
    %c0_2 = arith.constant 0 : index
    %1 = vector.load %arg1[%c0, %c0_0, %c0_1, %c0_2] : memref<1x17x33x12xbf16, #tpu.memory_space<vmem>>, vector<1x16x32x12xbf16>
    %2 = vector.shape_cast %1 : vector<1x16x32x12xbf16> to vector<16x32x12xbf16>
    %3 = arith.extf %2 : vector<16x32x12xbf16> to vector<16x32x12xf32>
    %4 = vector.shape_cast %3 : vector<16x32x12xf32> to vector<512x12xf32>
    %5 = arith.truncf %4 : vector<512x12xf32> to vector<512x12xbf16>
    %c0_3 = arith.constant 0 : index
    %c0_4 = arith.constant 0 : index
    %c0_5 = arith.constant 0 : index
    %6 = vector.load %arg2[%c0_3, %c0_4, %c0_5] : memref<4x12x8xbf16, #tpu.memory_space<vmem>>, vector<1x12x8xbf16>
    %7 = vector.shape_cast %6 : vector<1x12x8xbf16> to vector<12x8xbf16>
    %cst_6 = arith.constant dense<0.000000e+00> : vector<512x8xf32>
    %8 = tpu.matmul %5, %7, %cst_6 {dimension_numbers = #tpu.dot_dimension_numbers<[1], [0], [0], [1], [0, 0, 1, 1], [], []>} : vector<512x12xbf16>, vector<12x8xbf16>, vector<512x8xf32> -> vector<512x8xf32>
    %9 = arith.addf %0, %8 : vector<512x8xf32>
    %c0_7 = arith.constant 0 : index
    %c0_8 = arith.constant 0 : index
    %c1 = arith.constant 1 : index
    %c0_9 = arith.constant 0 : index
    %10 = vector.load %arg1[%c0_7, %c0_8, %c1, %c0_9] : memref<1x17x33x12xbf16, #tpu.memory_space<vmem>>, vector<1x16x32x12xbf16>
    %11 = vector.shape_cast %10 : vector<1x16x32x12xbf16> to vector<16x32x12xbf16>
    %12 = arith.extf %11 : vector<16x32x12xbf16> to vector<16x32x12xf32>
    %13 = vector.shape_cast %12 : vector<16x32x12xf32> to vector<512x12xf32>
    %14 = arith.truncf %13 : vector<512x12xf32> to vector<512x12xbf16>
    %c1_10 = arith.constant 1 : index
    %c0_11 = arith.constant 0 : index
    %c0_12 = arith.constant 0 : index
    %15 = vector.load %arg2[%c1_10, %c0_11, %c0_12] : memref<4x12x8xbf16, #tpu.memory_space<vmem>>, vector<1x12x8xbf16>
    %16 = vector.shape_cast %15 : vector<1x12x8xbf16> to vector<12x8xbf16>
    %cst_13 = arith.constant dense<0.000000e+00> : vector<512x8xf32>
    %17 = tpu.matmul %14, %16, %cst_13 {dimension_numbers = #tpu.dot_dimension_numbers<[1], [0], [0], [1], [0, 0, 1, 1], [], []>} : vector<512x12xbf16>, vector<12x8xbf16>, vector<512x8xf32> -> vector<512x8xf32>
    %18 = arith.addf %9, %17 : vector<512x8xf32>
    %c0_14 = arith.constant 0 : index
    %c1_15 = arith.constant 1 : index
    %c0_16 = arith.constant 0 : index
    %c0_17 = arith.constant 0 : index
    %19 = vector.load %arg1[%c0_14, %c1_15, %c0_16, %c0_17] : memref<1x17x33x12xbf16, #tpu.memory_space<vmem>>, vector<1x16x32x12xbf16>
    %20 = vector.shape_cast %19 : vector<1x16x32x12xbf16> to vector<16x32x12xbf16>
    %21 = arith.extf %20 : vector<16x32x12xbf16> to vector<16x32x12xf32>
    %22 = vector.shape_cast %21 : vector<16x32x12xf32> to vector<512x12xf32>
    %23 = arith.truncf %22 : vector<512x12xf32> to vector<512x12xbf16>
    %c2 = arith.constant 2 : index
    %c0_18 = arith.constant 0 : index
    %c0_19 = arith.constant 0 : index
    %24 = vector.load %arg2[%c2, %c0_18, %c0_19] : memref<4x12x8xbf16, #tpu.memory_space<vmem>>, vector<1x12x8xbf16>
    %25 = vector.shape_cast %24 : vector<1x12x8xbf16> to vector<12x8xbf16>
    %cst_20 = arith.constant dense<0.000000e+00> : vector<512x8xf32>
    %26 = tpu.matmul %23, %25, %cst_20 {dimension_numbers = #tpu.dot_dimension_numbers<[1], [0], [0], [1], [0, 0, 1, 1], [], []>} : vector<512x12xbf16>, vector<12x8xbf16>, vector<512x8xf32> -> vector<512x8xf32>
    %27 = arith.addf %18, %26 : vector<512x8xf32>
    %c0_21 = arith.constant 0 : index
    %c1_22 = arith.constant 1 : index
    %c1_23 = arith.constant 1 : index
    %c0_24 = arith.constant 0 : index
    %28 = vector.load %arg1[%c0_21, %c1_22, %c1_23, %c0_24] : memref<1x17x33x12xbf16, #tpu.memory_space<vmem>>, vector<1x16x32x12xbf16>
    %29 = vector.shape_cast %28 : vector<1x16x32x12xbf16> to vector<16x32x12xbf16>
    %30 = arith.extf %29 : vector<16x32x12xbf16> to vector<16x32x12xf32>
    %31 = vector.shape_cast %30 : vector<16x32x12xf32> to vector<512x12xf32>
    %32 = arith.truncf %31 : vector<512x12xf32> to vector<512x12xbf16>
    %c3 = arith.constant 3 : index
    %c0_25 = arith.constant 0 : index
    %c0_26 = arith.constant 0 : index
    %33 = vector.load %arg2[%c3, %c0_25, %c0_26] : memref<4x12x8xbf16, #tpu.memory_space<vmem>>, vector<1x12x8xbf16>
    %34 = vector.shape_cast %33 : vector<1x12x8xbf16> to vector<12x8xbf16>
    %cst_27 = arith.constant dense<0.000000e+00> : vector<512x8xf32>
    %35 = tpu.matmul %32, %34, %cst_27 {dimension_numbers = #tpu.dot_dimension_numbers<[1], [0], [0], [1], [0, 0, 1, 1], [], []>} : vector<512x12xbf16>, vector<12x8xbf16>, vector<512x8xf32> -> vector<512x8xf32>
    %36 = arith.addf %27, %35 : vector<512x8xf32>
    %c0_28 = arith.constant 0 : index
    %c0_29 = arith.constant 0 : index
    %37 = vector.load %arg3[%c0_28, %c0_29] : memref<3x8xf32, #tpu.memory_space<vmem>>, vector<1x8xf32>
    %38 = vector.broadcast %37 : vector<1x8xf32> to vector<512x8xf32>
    %39 = arith.addf %36, %38 : vector<512x8xf32>
    %cst_30 = arith.constant 0.000000e+00 : f32
    %40 = vector.broadcast %cst_30 : f32 to vector<512x8xf32>
    %41 = arith.cmpf ogt, %39, %40 : vector<512x8xf32>
    %cst_31 = arith.constant 2.000000e-01 : f32
    %42 = vector.broadcast %cst_31 : f32 to vector<512x8xf32>
    %43 = arith.mulf %42, %39 : vector<512x8xf32>
    %44 = arith.select %41, %39, %43 : vector<512x8xi1>, vector<512x8xf32>
    %c1_32 = arith.constant 1 : index
    %c0_33 = arith.constant 0 : index
    %45 = vector.load %arg3[%c1_32, %c0_33] : memref<3x8xf32, #tpu.memory_space<vmem>>, vector<1x8xf32>
    %46 = vector.broadcast %45 : vector<1x8xf32> to vector<512x8xf32>
    %47 = arith.mulf %44, %46 : vector<512x8xf32>
    %c2_34 = arith.constant 2 : index
    %c0_35 = arith.constant 0 : index
    %48 = vector.load %arg3[%c2_34, %c0_35] : memref<3x8xf32, #tpu.memory_space<vmem>>, vector<1x8xf32>
    %49 = vector.broadcast %48 : vector<1x8xf32> to vector<512x8xf32>
    %50 = arith.addf %47, %49 : vector<512x8xf32>
    %51 = vector.shape_cast %50 : vector<512x8xf32> to vector<16x32x8xf32>
    %52 = arith.truncf %51 : vector<16x32x8xf32> to vector<16x32x8xbf16>
    %c0_36 = arith.constant 0 : index
    %c0_37 = arith.constant 0 : index
    %c0_38 = arith.constant 0 : index
    %c0_39 = arith.constant 0 : index
    %53 = vector.load %arg4[%c0_36, %c0_37, %c0_38, %c0_39] : memref<1x16x32x8xbf16, #tpu.memory_space<vmem>>, vector<1x16x32x8xbf16>
    %54 = vector.shape_cast %53 : vector<1x16x32x8xbf16> to vector<16x32x8xbf16>
    %55 = vector.shape_cast %52 : vector<16x32x8xbf16> to vector<1x16x32x8xbf16>
    tpu.vector_store %arg4[%c0_36, %c0_37, %c0_38, %c0_39], %55 {strides = array<i32>} : memref<1x16x32x8xbf16, #tpu.memory_space<vmem>>, vector<1x16x32x8xbf16>,
    return
  }
  func.func @transform_0(%arg0: i32) -> (i32, i32, i32, i32) {
    %c0_i32 = arith.constant 0 : i32
    %c0_i32_0 = arith.constant 0 : i32
    %c0_i32_1 = arith.constant 0 : i32
    %c0_i32_2 = arith.constant 0 : i32
    return %arg0, %c0_i32, %c0_i32_0, %c0_i32_1 : i32, i32, i32, i32
  }
  func.func @transform_1(%arg0: i32) -> (i32, i32, i32) {
    %c0_i32 = arith.constant 0 : i32
    %c0_i32_0 = arith.constant 0 : i32
    %c0_i32_1 = arith.constant 0 : i32
    %c0_i32_2 = arith.constant 0 : i32
    return %c0_i32, %c0_i32_0, %c0_i32_1 : i32, i32, i32
  }
  func.func @transform_2(%arg0: i32) -> (i32, i32) {
    %c0_i32 = arith.constant 0 : i32
    %c0_i32_0 = arith.constant 0 : i32
    %c0_i32_1 = arith.constant 0 : i32
    return %c0_i32, %c0_i32_0 : i32, i32
  }
  func.func @transform_3(%arg0: i32) -> (i32, i32, i32, i32) {
    %c0_i32 = arith.constant 0 : i32
    %c0_i32_0 = arith.constant 0 : i32
    %c0_i32_1 = arith.constant 0 : i32
    %c0_i32_2 = arith.constant 0 : i32
    return %arg0, %c0_i32, %c0_i32_0, %c0_i32_1 : i32, i32, i32, i32
  }
}

module attributes {stable_mosaic.version = 11 : i64} {
  func.func @kernel(%arg0: i32, %arg1: memref<1x17x17x32xbf16, #tpu.memory_space<vmem>>, %arg2: memref<4x32x8xbf16, #tpu.memory_space<vmem>>, %arg3: memref<3x8xf32, #tpu.memory_space<vmem>>, %arg4: memref<1x16x16x8xbf16, #tpu.memory_space<vmem>>) attributes {dimension_semantics = [#tpu.dimension_semantics<parallel>], iteration_bounds = array<i64: 2>, scalar_prefetch = 0 : i64, scratch_operands = 0 : i64, tpu.core_type = #tpu.core_type<tc>, window_params = [{transform_indices = @transform_0, window_bounds = array<i64: 1, 17, 17, 32>}, {pipeline_mode = #tpu.pipeline_mode<synchronous>, transform_indices = @transform_1, window_bounds = array<i64: 4, 32, 8>}, {pipeline_mode = #tpu.pipeline_mode<synchronous>, transform_indices = @transform_2, window_bounds = array<i64: 3, 8>}, {transform_indices = @transform_3, window_bounds = array<i64: 1, 16, 16, 8>}]} {
    %cst = arith.constant 0.000000e+00 : f32
    %0 = vector.broadcast %cst : f32 to vector<256x8xf32>
    %c0 = arith.constant 0 : index
    %c0_0 = arith.constant 0 : index
    %c0_1 = arith.constant 0 : index
    %c0_2 = arith.constant 0 : index
    %1 = vector.load %arg1[%c0, %c0_0, %c0_1, %c0_2] : memref<1x17x17x32xbf16, #tpu.memory_space<vmem>>, vector<1x16x16x32xbf16>
    %2 = vector.shape_cast %1 : vector<1x16x16x32xbf16> to vector<16x16x32xbf16>
    %3 = arith.extf %2 : vector<16x16x32xbf16> to vector<16x16x32xf32>
    %4 = vector.shape_cast %3 : vector<16x16x32xf32> to vector<256x32xf32>
    %5 = arith.truncf %4 : vector<256x32xf32> to vector<256x32xbf16>
    %c0_3 = arith.constant 0 : index
    %c0_4 = arith.constant 0 : index
    %c0_5 = arith.constant 0 : index
    %6 = vector.load %arg2[%c0_3, %c0_4, %c0_5] : memref<4x32x8xbf16, #tpu.memory_space<vmem>>, vector<1x32x8xbf16>
    %7 = vector.shape_cast %6 : vector<1x32x8xbf16> to vector<32x8xbf16>
    %cst_6 = arith.constant dense<0.000000e+00> : vector<256x8xf32>
    %8 = tpu.matmul %5, %7, %cst_6 {dimension_numbers = #tpu.dot_dimension_numbers<[1], [0], [0], [1], [0, 0, 1, 1], [], []>} : vector<256x32xbf16>, vector<32x8xbf16>, vector<256x8xf32> -> vector<256x8xf32>
    %9 = arith.addf %0, %8 : vector<256x8xf32>
    %c0_7 = arith.constant 0 : index
    %c0_8 = arith.constant 0 : index
    %c1 = arith.constant 1 : index
    %c0_9 = arith.constant 0 : index
    %10 = vector.load %arg1[%c0_7, %c0_8, %c1, %c0_9] : memref<1x17x17x32xbf16, #tpu.memory_space<vmem>>, vector<1x16x16x32xbf16>
    %11 = vector.shape_cast %10 : vector<1x16x16x32xbf16> to vector<16x16x32xbf16>
    %12 = arith.extf %11 : vector<16x16x32xbf16> to vector<16x16x32xf32>
    %13 = vector.shape_cast %12 : vector<16x16x32xf32> to vector<256x32xf32>
    %14 = arith.truncf %13 : vector<256x32xf32> to vector<256x32xbf16>
    %c1_10 = arith.constant 1 : index
    %c0_11 = arith.constant 0 : index
    %c0_12 = arith.constant 0 : index
    %15 = vector.load %arg2[%c1_10, %c0_11, %c0_12] : memref<4x32x8xbf16, #tpu.memory_space<vmem>>, vector<1x32x8xbf16>
    %16 = vector.shape_cast %15 : vector<1x32x8xbf16> to vector<32x8xbf16>
    %cst_13 = arith.constant dense<0.000000e+00> : vector<256x8xf32>
    %17 = tpu.matmul %14, %16, %cst_13 {dimension_numbers = #tpu.dot_dimension_numbers<[1], [0], [0], [1], [0, 0, 1, 1], [], []>} : vector<256x32xbf16>, vector<32x8xbf16>, vector<256x8xf32> -> vector<256x8xf32>
    %18 = arith.addf %9, %17 : vector<256x8xf32>
    %c0_14 = arith.constant 0 : index
    %c1_15 = arith.constant 1 : index
    %c0_16 = arith.constant 0 : index
    %c0_17 = arith.constant 0 : index
    %19 = vector.load %arg1[%c0_14, %c1_15, %c0_16, %c0_17] : memref<1x17x17x32xbf16, #tpu.memory_space<vmem>>, vector<1x16x16x32xbf16>
    %20 = vector.shape_cast %19 : vector<1x16x16x32xbf16> to vector<16x16x32xbf16>
    %21 = arith.extf %20 : vector<16x16x32xbf16> to vector<16x16x32xf32>
    %22 = vector.shape_cast %21 : vector<16x16x32xf32> to vector<256x32xf32>
    %23 = arith.truncf %22 : vector<256x32xf32> to vector<256x32xbf16>
    %c2 = arith.constant 2 : index
    %c0_18 = arith.constant 0 : index
    %c0_19 = arith.constant 0 : index
    %24 = vector.load %arg2[%c2, %c0_18, %c0_19] : memref<4x32x8xbf16, #tpu.memory_space<vmem>>, vector<1x32x8xbf16>
    %25 = vector.shape_cast %24 : vector<1x32x8xbf16> to vector<32x8xbf16>
    %cst_20 = arith.constant dense<0.000000e+00> : vector<256x8xf32>
    %26 = tpu.matmul %23, %25, %cst_20 {dimension_numbers = #tpu.dot_dimension_numbers<[1], [0], [0], [1], [0, 0, 1, 1], [], []>} : vector<256x32xbf16>, vector<32x8xbf16>, vector<256x8xf32> -> vector<256x8xf32>
    %27 = arith.addf %18, %26 : vector<256x8xf32>
    %c0_21 = arith.constant 0 : index
    %c1_22 = arith.constant 1 : index
    %c1_23 = arith.constant 1 : index
    %c0_24 = arith.constant 0 : index
    %28 = vector.load %arg1[%c0_21, %c1_22, %c1_23, %c0_24] : memref<1x17x17x32xbf16, #tpu.memory_space<vmem>>, vector<1x16x16x32xbf16>
    %29 = vector.shape_cast %28 : vector<1x16x16x32xbf16> to vector<16x16x32xbf16>
    %30 = arith.extf %29 : vector<16x16x32xbf16> to vector<16x16x32xf32>
    %31 = vector.shape_cast %30 : vector<16x16x32xf32> to vector<256x32xf32>
    %32 = arith.truncf %31 : vector<256x32xf32> to vector<256x32xbf16>
    %c3 = arith.constant 3 : index
    %c0_25 = arith.constant 0 : index
    %c0_26 = arith.constant 0 : index
    %33 = vector.load %arg2[%c3, %c0_25, %c0_26] : memref<4x32x8xbf16, #tpu.memory_space<vmem>>, vector<1x32x8xbf16>
    %34 = vector.shape_cast %33 : vector<1x32x8xbf16> to vector<32x8xbf16>
    %cst_27 = arith.constant dense<0.000000e+00> : vector<256x8xf32>
    %35 = tpu.matmul %32, %34, %cst_27 {dimension_numbers = #tpu.dot_dimension_numbers<[1], [0], [0], [1], [0, 0, 1, 1], [], []>} : vector<256x32xbf16>, vector<32x8xbf16>, vector<256x8xf32> -> vector<256x8xf32>
    %36 = arith.addf %27, %35 : vector<256x8xf32>
    %c0_28 = arith.constant 0 : index
    %c0_29 = arith.constant 0 : index
    %37 = vector.load %arg3[%c0_28, %c0_29] : memref<3x8xf32, #tpu.memory_space<vmem>>, vector<1x8xf32>
    %38 = vector.broadcast %37 : vector<1x8xf32> to vector<256x8xf32>
    %39 = arith.addf %36, %38 : vector<256x8xf32>
    %cst_30 = arith.constant 0.000000e+00 : f32
    %40 = vector.broadcast %cst_30 : f32 to vector<256x8xf32>
    %41 = arith.cmpf ogt, %39, %40 : vector<256x8xf32>
    %cst_31 = arith.constant 2.000000e-01 : f32
    %42 = vector.broadcast %cst_31 : f32 to vector<256x8xf32>
    %43 = arith.mulf %42, %39 : vector<256x8xf32>
    %44 = arith.select %41, %39, %43 : vector<256x8xi1>, vector<256x8xf32>
    %c1_32 = arith.constant 1 : index
    %c0_33 = arith.constant 0 : index
    %45 = vector.load %arg3[%c1_32, %c0_33] : memref<3x8xf32, #tpu.memory_space<vmem>>, vector<1x8xf32>
    %46 = vector.broadcast %45 : vector<1x8xf32> to vector<256x8xf32>
    %47 = arith.mulf %44, %46 : vector<256x8xf32>
    %c2_34 = arith.constant 2 : index
    %c0_35 = arith.constant 0 : index
    %48 = vector.load %arg3[%c2_34, %c0_35] : memref<3x8xf32, #tpu.memory_space<vmem>>, vector<1x8xf32>
    %49 = vector.broadcast %48 : vector<1x8xf32> to vector<256x8xf32>
    %50 = arith.addf %47, %49 : vector<256x8xf32>
    %51 = vector.shape_cast %50 : vector<256x8xf32> to vector<16x16x8xf32>
    %52 = arith.truncf %51 : vector<16x16x8xf32> to vector<16x16x8xbf16>
    %c0_36 = arith.constant 0 : index
    %c0_37 = arith.constant 0 : index
    %c0_38 = arith.constant 0 : index
    %c0_39 = arith.constant 0 : index
    %53 = vector.load %arg4[%c0_36, %c0_37, %c0_38, %c0_39] : memref<1x16x16x8xbf16, #tpu.memory_space<vmem>>, vector<1x16x16x8xbf16>
    %54 = vector.shape_cast %53 : vector<1x16x16x8xbf16> to vector<16x16x8xbf16>
    %55 = vector.shape_cast %52 : vector<16x16x8xbf16> to vector<1x16x16x8xbf16>
    tpu.vector_store %arg4[%c0_36, %c0_37, %c0_38, %c0_39], %55 {strides = array<i32>} : memref<1x16x16x8xbf16, #tpu.memory_space<vmem>>, vector<1x16x16x8xbf16>,
    return
  }
  func.func @transform_0(%arg0: i32) -> (i32, i32, i32, i32) {
    %c0_i32 = arith.constant 0 : i32
    %c0_i32_0 = arith.constant 0 : i32
    %c0_i32_1 = arith.constant 0 : i32
    %c0_i32_2 = arith.constant 0 : i32
    return %arg0, %c0_i32, %c0_i32_0, %c0_i32_1 : i32, i32, i32, i32
  }
  func.func @transform_1(%arg0: i32) -> (i32, i32, i32) {
    %c0_i32 = arith.constant 0 : i32
    %c0_i32_0 = arith.constant 0 : i32
    %c0_i32_1 = arith.constant 0 : i32
    %c0_i32_2 = arith.constant 0 : i32
    return %c0_i32, %c0_i32_0, %c0_i32_1 : i32, i32, i32
  }
  func.func @transform_2(%arg0: i32) -> (i32, i32) {
    %c0_i32 = arith.constant 0 : i32
    %c0_i32_0 = arith.constant 0 : i32
    %c0_i32_1 = arith.constant 0 : i32
    return %c0_i32, %c0_i32_0 : i32, i32
  }
  func.func @transform_3(%arg0: i32) -> (i32, i32, i32, i32) {
    %c0_i32 = arith.constant 0 : i32
    %c0_i32_0 = arith.constant 0 : i32
    %c0_i32_1 = arith.constant 0 : i32
    %c0_i32_2 = arith.constant 0 : i32
    return %arg0, %c0_i32, %c0_i32_0, %c0_i32_1 : i32, i32, i32, i32
  }
}

module attributes {stable_mosaic.version = 11 : i64} {
  func.func @kernel(%arg0: i32, %arg1: memref<1x9x9x32xbf16, #tpu.memory_space<vmem>>, %arg2: memref<4x32x16xbf16, #tpu.memory_space<vmem>>, %arg3: memref<3x16xf32, #tpu.memory_space<vmem>>, %arg4: memref<1x8x8x16xbf16, #tpu.memory_space<vmem>>) attributes {dimension_semantics = [#tpu.dimension_semantics<parallel>], iteration_bounds = array<i64: 2>, scalar_prefetch = 0 : i64, scratch_operands = 0 : i64, tpu.core_type = #tpu.core_type<tc>, window_params = [{transform_indices = @transform_0, window_bounds = array<i64: 1, 9, 9, 32>}, {pipeline_mode = #tpu.pipeline_mode<synchronous>, transform_indices = @transform_1, window_bounds = array<i64: 4, 32, 16>}, {pipeline_mode = #tpu.pipeline_mode<synchronous>, transform_indices = @transform_2, window_bounds = array<i64: 3, 16>}, {transform_indices = @transform_3, window_bounds = array<i64: 1, 8, 8, 16>}]} {
    %cst = arith.constant 0.000000e+00 : f32
    %0 = vector.broadcast %cst : f32 to vector<64x16xf32>
    %c0 = arith.constant 0 : index
    %c0_0 = arith.constant 0 : index
    %c0_1 = arith.constant 0 : index
    %c0_2 = arith.constant 0 : index
    %1 = vector.load %arg1[%c0, %c0_0, %c0_1, %c0_2] : memref<1x9x9x32xbf16, #tpu.memory_space<vmem>>, vector<1x8x8x32xbf16>
    %2 = vector.shape_cast %1 : vector<1x8x8x32xbf16> to vector<8x8x32xbf16>
    %3 = arith.extf %2 : vector<8x8x32xbf16> to vector<8x8x32xf32>
    %4 = vector.shape_cast %3 : vector<8x8x32xf32> to vector<64x32xf32>
    %5 = arith.truncf %4 : vector<64x32xf32> to vector<64x32xbf16>
    %c0_3 = arith.constant 0 : index
    %c0_4 = arith.constant 0 : index
    %c0_5 = arith.constant 0 : index
    %6 = vector.load %arg2[%c0_3, %c0_4, %c0_5] : memref<4x32x16xbf16, #tpu.memory_space<vmem>>, vector<1x32x16xbf16>
    %7 = vector.shape_cast %6 : vector<1x32x16xbf16> to vector<32x16xbf16>
    %cst_6 = arith.constant dense<0.000000e+00> : vector<64x16xf32>
    %8 = tpu.matmul %5, %7, %cst_6 {dimension_numbers = #tpu.dot_dimension_numbers<[1], [0], [0], [1], [0, 0, 1, 1], [], []>} : vector<64x32xbf16>, vector<32x16xbf16>, vector<64x16xf32> -> vector<64x16xf32>
    %9 = arith.addf %0, %8 : vector<64x16xf32>
    %c0_7 = arith.constant 0 : index
    %c0_8 = arith.constant 0 : index
    %c1 = arith.constant 1 : index
    %c0_9 = arith.constant 0 : index
    %10 = vector.load %arg1[%c0_7, %c0_8, %c1, %c0_9] : memref<1x9x9x32xbf16, #tpu.memory_space<vmem>>, vector<1x8x8x32xbf16>
    %11 = vector.shape_cast %10 : vector<1x8x8x32xbf16> to vector<8x8x32xbf16>
    %12 = arith.extf %11 : vector<8x8x32xbf16> to vector<8x8x32xf32>
    %13 = vector.shape_cast %12 : vector<8x8x32xf32> to vector<64x32xf32>
    %14 = arith.truncf %13 : vector<64x32xf32> to vector<64x32xbf16>
    %c1_10 = arith.constant 1 : index
    %c0_11 = arith.constant 0 : index
    %c0_12 = arith.constant 0 : index
    %15 = vector.load %arg2[%c1_10, %c0_11, %c0_12] : memref<4x32x16xbf16, #tpu.memory_space<vmem>>, vector<1x32x16xbf16>
    %16 = vector.shape_cast %15 : vector<1x32x16xbf16> to vector<32x16xbf16>
    %cst_13 = arith.constant dense<0.000000e+00> : vector<64x16xf32>
    %17 = tpu.matmul %14, %16, %cst_13 {dimension_numbers = #tpu.dot_dimension_numbers<[1], [0], [0], [1], [0, 0, 1, 1], [], []>} : vector<64x32xbf16>, vector<32x16xbf16>, vector<64x16xf32> -> vector<64x16xf32>
    %18 = arith.addf %9, %17 : vector<64x16xf32>
    %c0_14 = arith.constant 0 : index
    %c1_15 = arith.constant 1 : index
    %c0_16 = arith.constant 0 : index
    %c0_17 = arith.constant 0 : index
    %19 = vector.load %arg1[%c0_14, %c1_15, %c0_16, %c0_17] : memref<1x9x9x32xbf16, #tpu.memory_space<vmem>>, vector<1x8x8x32xbf16>
    %20 = vector.shape_cast %19 : vector<1x8x8x32xbf16> to vector<8x8x32xbf16>
    %21 = arith.extf %20 : vector<8x8x32xbf16> to vector<8x8x32xf32>
    %22 = vector.shape_cast %21 : vector<8x8x32xf32> to vector<64x32xf32>
    %23 = arith.truncf %22 : vector<64x32xf32> to vector<64x32xbf16>
    %c2 = arith.constant 2 : index
    %c0_18 = arith.constant 0 : index
    %c0_19 = arith.constant 0 : index
    %24 = vector.load %arg2[%c2, %c0_18, %c0_19] : memref<4x32x16xbf16, #tpu.memory_space<vmem>>, vector<1x32x16xbf16>
    %25 = vector.shape_cast %24 : vector<1x32x16xbf16> to vector<32x16xbf16>
    %cst_20 = arith.constant dense<0.000000e+00> : vector<64x16xf32>
    %26 = tpu.matmul %23, %25, %cst_20 {dimension_numbers = #tpu.dot_dimension_numbers<[1], [0], [0], [1], [0, 0, 1, 1], [], []>} : vector<64x32xbf16>, vector<32x16xbf16>, vector<64x16xf32> -> vector<64x16xf32>
    %27 = arith.addf %18, %26 : vector<64x16xf32>
    %c0_21 = arith.constant 0 : index
    %c1_22 = arith.constant 1 : index
    %c1_23 = arith.constant 1 : index
    %c0_24 = arith.constant 0 : index
    %28 = vector.load %arg1[%c0_21, %c1_22, %c1_23, %c0_24] : memref<1x9x9x32xbf16, #tpu.memory_space<vmem>>, vector<1x8x8x32xbf16>
    %29 = vector.shape_cast %28 : vector<1x8x8x32xbf16> to vector<8x8x32xbf16>
    %30 = arith.extf %29 : vector<8x8x32xbf16> to vector<8x8x32xf32>
    %31 = vector.shape_cast %30 : vector<8x8x32xf32> to vector<64x32xf32>
    %32 = arith.truncf %31 : vector<64x32xf32> to vector<64x32xbf16>
    %c3 = arith.constant 3 : index
    %c0_25 = arith.constant 0 : index
    %c0_26 = arith.constant 0 : index
    %33 = vector.load %arg2[%c3, %c0_25, %c0_26] : memref<4x32x16xbf16, #tpu.memory_space<vmem>>, vector<1x32x16xbf16>
    %34 = vector.shape_cast %33 : vector<1x32x16xbf16> to vector<32x16xbf16>
    %cst_27 = arith.constant dense<0.000000e+00> : vector<64x16xf32>
    %35 = tpu.matmul %32, %34, %cst_27 {dimension_numbers = #tpu.dot_dimension_numbers<[1], [0], [0], [1], [0, 0, 1, 1], [], []>} : vector<64x32xbf16>, vector<32x16xbf16>, vector<64x16xf32> -> vector<64x16xf32>
    %36 = arith.addf %27, %35 : vector<64x16xf32>
    %c0_28 = arith.constant 0 : index
    %c0_29 = arith.constant 0 : index
    %37 = vector.load %arg3[%c0_28, %c0_29] : memref<3x16xf32, #tpu.memory_space<vmem>>, vector<1x16xf32>
    %38 = vector.broadcast %37 : vector<1x16xf32> to vector<64x16xf32>
    %39 = arith.addf %36, %38 : vector<64x16xf32>
    %cst_30 = arith.constant 0.000000e+00 : f32
    %40 = vector.broadcast %cst_30 : f32 to vector<64x16xf32>
    %41 = arith.cmpf ogt, %39, %40 : vector<64x16xf32>
    %cst_31 = arith.constant 2.000000e-01 : f32
    %42 = vector.broadcast %cst_31 : f32 to vector<64x16xf32>
    %43 = arith.mulf %42, %39 : vector<64x16xf32>
    %44 = arith.select %41, %39, %43 : vector<64x16xi1>, vector<64x16xf32>
    %c1_32 = arith.constant 1 : index
    %c0_33 = arith.constant 0 : index
    %45 = vector.load %arg3[%c1_32, %c0_33] : memref<3x16xf32, #tpu.memory_space<vmem>>, vector<1x16xf32>
    %46 = vector.broadcast %45 : vector<1x16xf32> to vector<64x16xf32>
    %47 = arith.mulf %44, %46 : vector<64x16xf32>
    %c2_34 = arith.constant 2 : index
    %c0_35 = arith.constant 0 : index
    %48 = vector.load %arg3[%c2_34, %c0_35] : memref<3x16xf32, #tpu.memory_space<vmem>>, vector<1x16xf32>
    %49 = vector.broadcast %48 : vector<1x16xf32> to vector<64x16xf32>
    %50 = arith.addf %47, %49 : vector<64x16xf32>
    %51 = vector.shape_cast %50 : vector<64x16xf32> to vector<8x8x16xf32>
    %52 = arith.truncf %51 : vector<8x8x16xf32> to vector<8x8x16xbf16>
    %c0_36 = arith.constant 0 : index
    %c0_37 = arith.constant 0 : index
    %c0_38 = arith.constant 0 : index
    %c0_39 = arith.constant 0 : index
    %53 = vector.load %arg4[%c0_36, %c0_37, %c0_38, %c0_39] : memref<1x8x8x16xbf16, #tpu.memory_space<vmem>>, vector<1x8x8x16xbf16>
    %54 = vector.shape_cast %53 : vector<1x8x8x16xbf16> to vector<8x8x16xbf16>
    %55 = vector.shape_cast %52 : vector<8x8x16xbf16> to vector<1x8x8x16xbf16>
    tpu.vector_store %arg4[%c0_36, %c0_37, %c0_38, %c0_39], %55 {strides = array<i32>} : memref<1x8x8x16xbf16, #tpu.memory_space<vmem>>, vector<1x8x8x16xbf16>,
    return
  }
  func.func @transform_0(%arg0: i32) -> (i32, i32, i32, i32) {
    %c0_i32 = arith.constant 0 : i32
    %c0_i32_0 = arith.constant 0 : i32
    %c0_i32_1 = arith.constant 0 : i32
    %c0_i32_2 = arith.constant 0 : i32
    return %arg0, %c0_i32, %c0_i32_0, %c0_i32_1 : i32, i32, i32, i32
  }
  func.func @transform_1(%arg0: i32) -> (i32, i32, i32) {
    %c0_i32 = arith.constant 0 : i32
    %c0_i32_0 = arith.constant 0 : i32
    %c0_i32_1 = arith.constant 0 : i32
    %c0_i32_2 = arith.constant 0 : i32
    return %c0_i32, %c0_i32_0, %c0_i32_1 : i32, i32, i32
  }
  func.func @transform_2(%arg0: i32) -> (i32, i32) {
    %c0_i32 = arith.constant 0 : i32
    %c0_i32_0 = arith.constant 0 : i32
    %c0_i32_1 = arith.constant 0 : i32
    return %c0_i32, %c0_i32_0 : i32, i32
  }
  func.func @transform_3(%arg0: i32) -> (i32, i32, i32, i32) {
    %c0_i32 = arith.constant 0 : i32
    %c0_i32_0 = arith.constant 0 : i32
    %c0_i32_1 = arith.constant 0 : i32
    %c0_i32_2 = arith.constant 0 : i32
    return %arg0, %c0_i32, %c0_i32_0, %c0_i32_1 : i32, i32, i32, i32
  }
}

module attributes {stable_mosaic.version = 11 : i64} {
  func.func @kernel(%arg0: i32, %arg1: memref<32x256xbf16, #tpu.memory_space<vmem>>, %arg2: memref<256x32xbf16, #tpu.memory_space<vmem>>, %arg3: memref<3x32xf32, #tpu.memory_space<vmem>>, %arg4: memref<32x32xbf16, #tpu.memory_space<vmem>>) attributes {dimension_semantics = [#tpu.dimension_semantics<parallel>], iteration_bounds = array<i64: 1>, scalar_prefetch = 0 : i64, scratch_operands = 0 : i64, tpu.core_type = #tpu.core_type<tc>, window_params = [{transform_indices = @transform_0, window_bounds = array<i64: 32, 256>}, {pipeline_mode = #tpu.pipeline_mode<synchronous>, transform_indices = @transform_1, window_bounds = array<i64: 256, 32>}, {pipeline_mode = #tpu.pipeline_mode<synchronous>, transform_indices = @transform_2, window_bounds = array<i64: 3, 32>}, {transform_indices = @transform_3, window_bounds = array<i64: 32, 32>}]} {
    %c0 = arith.constant 0 : index
    %c0_0 = arith.constant 0 : index
    %0 = vector.load %arg1[%c0, %c0_0] : memref<32x256xbf16, #tpu.memory_space<vmem>>, vector<32x256xbf16>
    %c0_1 = arith.constant 0 : index
    %c0_2 = arith.constant 0 : index
    %1 = vector.load %arg2[%c0_1, %c0_2] : memref<256x32xbf16, #tpu.memory_space<vmem>>, vector<256x32xbf16>
    %cst = arith.constant dense<0.000000e+00> : vector<32x32xf32>
    %2 = tpu.matmul %0, %1, %cst {dimension_numbers = #tpu.dot_dimension_numbers<[1], [0], [0], [1], [0, 0, 1, 1], [], []>} : vector<32x256xbf16>, vector<256x32xbf16>, vector<32x32xf32> -> vector<32x32xf32>
    %c0_3 = arith.constant 0 : index
    %c0_4 = arith.constant 0 : index
    %3 = vector.load %arg3[%c0_3, %c0_4] : memref<3x32xf32, #tpu.memory_space<vmem>>, vector<1x32xf32>
    %4 = vector.broadcast %3 : vector<1x32xf32> to vector<32x32xf32>
    %5 = arith.addf %2, %4 : vector<32x32xf32>
    %cst_5 = arith.constant 0.000000e+00 : f32
    %6 = vector.broadcast %cst_5 : f32 to vector<32x32xf32>
    %7 = arith.cmpf ogt, %5, %6 : vector<32x32xf32>
    %cst_6 = arith.constant 2.000000e-01 : f32
    %8 = vector.broadcast %cst_6 : f32 to vector<32x32xf32>
    %9 = arith.mulf %8, %5 : vector<32x32xf32>
    %10 = arith.select %7, %5, %9 : vector<32x32xi1>, vector<32x32xf32>
    %c1 = arith.constant 1 : index
    %c0_7 = arith.constant 0 : index
    %11 = vector.load %arg3[%c1, %c0_7] : memref<3x32xf32, #tpu.memory_space<vmem>>, vector<1x32xf32>
    %12 = vector.broadcast %11 : vector<1x32xf32> to vector<32x32xf32>
    %13 = arith.mulf %10, %12 : vector<32x32xf32>
    %c2 = arith.constant 2 : index
    %c0_8 = arith.constant 0 : index
    %14 = vector.load %arg3[%c2, %c0_8] : memref<3x32xf32, #tpu.memory_space<vmem>>, vector<1x32xf32>
    %15 = vector.broadcast %14 : vector<1x32xf32> to vector<32x32xf32>
    %16 = arith.addf %13, %15 : vector<32x32xf32>
    %17 = arith.truncf %16 : vector<32x32xf32> to vector<32x32xbf16>
    %c0_9 = arith.constant 0 : index
    %c0_10 = arith.constant 0 : index
    %18 = vector.load %arg4[%c0_9, %c0_10] : memref<32x32xbf16, #tpu.memory_space<vmem>>, vector<32x32xbf16>
    tpu.vector_store %arg4[%c0_9, %c0_10], %17 {strides = array<i32>} : memref<32x32xbf16, #tpu.memory_space<vmem>>, vector<32x32xbf16>,
    return
  }
  func.func @transform_0(%arg0: i32) -> (i32, i32) {
    %c0_i32 = arith.constant 0 : i32
    %c0_i32_0 = arith.constant 0 : i32
    return %arg0, %c0_i32 : i32, i32
  }
  func.func @transform_1(%arg0: i32) -> (i32, i32) {
    %c0_i32 = arith.constant 0 : i32
    %c0_i32_0 = arith.constant 0 : i32
    %c0_i32_1 = arith.constant 0 : i32
    return %c0_i32, %c0_i32_0 : i32, i32
  }
  func.func @transform_2(%arg0: i32) -> (i32, i32) {
    %c0_i32 = arith.constant 0 : i32
    %c0_i32_0 = arith.constant 0 : i32
    %c0_i32_1 = arith.constant 0 : i32
    return %c0_i32, %c0_i32_0 : i32, i32
  }
  func.func @transform_3(%arg0: i32) -> (i32, i32) {
    %c0_i32 = arith.constant 0 : i32
    %c0_i32_0 = arith.constant 0 : i32
    return %arg0, %c0_i32 : i32, i32
  }
}

module attributes {stable_mosaic.version = 11 : i64} {
  func.func @kernel(%arg0: i32, %arg1: memref<2x512xbf16, #tpu.memory_space<vmem>>, %arg2: memref<1x512xf32, #tpu.memory_space<vmem>>, %arg3: memref<1x1xf32, #tpu.memory_space<vmem>>, %arg4: memref<2x1xf32, #tpu.memory_space<vmem>>) attributes {dimension_semantics = [#tpu.dimension_semantics<arbitrary>], iteration_bounds = array<i64: 1>, scalar_prefetch = 0 : i64, scratch_operands = 0 : i64, tpu.core_type = #tpu.core_type<tc>, window_params = [{pipeline_mode = #tpu.pipeline_mode<synchronous>, transform_indices = @transform_0, window_bounds = array<i64: 2, 512>}, {pipeline_mode = #tpu.pipeline_mode<synchronous>, transform_indices = @transform_1, window_bounds = array<i64: 1, 512>}, {pipeline_mode = #tpu.pipeline_mode<synchronous>, transform_indices = @transform_2, window_bounds = array<i64: 1, 1>}, {pipeline_mode = #tpu.pipeline_mode<synchronous>, transform_indices = @transform_3, window_bounds = array<i64: 2, 1>}]} {
    %c0 = arith.constant 0 : index
    %c0_0 = arith.constant 0 : index
    %0 = vector.load %arg1[%c0, %c0_0] : memref<2x512xbf16, #tpu.memory_space<vmem>>, vector<2x512xbf16>
    %1 = arith.extf %0 : vector<2x512xbf16> to vector<2x512xf32>
    %c0_1 = arith.constant 0 : index
    %c0_2 = arith.constant 0 : index
    %2 = vector.load %arg2[%c0_1, %c0_2] : memref<1x512xf32, #tpu.memory_space<vmem>>, vector<1x512xf32>
    %3 = vector.broadcast %2 : vector<1x512xf32> to vector<2x512xf32>
    %4 = arith.mulf %1, %3 : vector<2x512xf32>
    %cst = arith.constant dense<0.000000e+00> : vector<2xf32>
    %5 = vector.multi_reduction <add>, %4, %cst [1] : vector<2x512xf32> to vector<2xf32>
    %6 = vector.shape_cast %5 : vector<2xf32> to vector<2x1xf32>
    %c0_3 = arith.constant 0 : index
    %c0_4 = arith.constant 0 : index
    %7 = vector.load %arg3[%c0_3, %c0_4] : memref<1x1xf32, #tpu.memory_space<vmem>>, vector<1x1xf32>
    %8 = vector.broadcast %7 : vector<1x1xf32> to vector<2x1xf32>
    %9 = arith.addf %6, %8 : vector<2x1xf32>
    %10 = arith.negf %9 : vector<2x1xf32>
    %11 = math.exp %10 : vector<2x1xf32>
    %cst_5 = arith.constant 1.000000e+00 : f32
    %12 = vector.broadcast %cst_5 : f32 to vector<2x1xf32>
    %13 = arith.addf %12, %11 : vector<2x1xf32>
    %14 = arith.divf %12, %13 : vector<2x1xf32>
    %c0_6 = arith.constant 0 : index
    %c0_7 = arith.constant 0 : index
    %15 = vector.load %arg4[%c0_6, %c0_7] : memref<2x1xf32, #tpu.memory_space<vmem>>, vector<2x1xf32>
    tpu.vector_store %arg4[%c0_6, %c0_7], %14 {strides = array<i32>} : memref<2x1xf32, #tpu.memory_space<vmem>>, vector<2x1xf32>,
    return
  }
  func.func @transform_0(%arg0: i32) -> (i32, i32) {
    %c0_i32 = arith.constant 0 : i32
    %c0_i32_0 = arith.constant 0 : i32
    %c0_i32_1 = arith.constant 0 : i32
    return %c0_i32, %c0_i32_0 : i32, i32
  }
  func.func @transform_1(%arg0: i32) -> (i32, i32) {
    %c0_i32 = arith.constant 0 : i32
    %c0_i32_0 = arith.constant 0 : i32
    %c0_i32_1 = arith.constant 0 : i32
    return %c0_i32, %c0_i32_0 : i32, i32
  }
  func.func @transform_2(%arg0: i32) -> (i32, i32) {
    %c0_i32 = arith.constant 0 : i32
    %c0_i32_0 = arith.constant 0 : i32
    %c0_i32_1 = arith.constant 0 : i32
    return %c0_i32, %c0_i32_0 : i32, i32
  }
  func.func @transform_3(%arg0: i32) -> (i32, i32) {
    %c0_i32 = arith.constant 0 : i32
    %c0_i32_0 = arith.constant 0 : i32
    %c0_i32_1 = arith.constant 0 : i32
    return %c0_i32, %c0_i32_0 : i32, i32
  }
}

</mosaic_0001>

<llo_original>
// kernel: discriminator_forward.5
$region0: #{discriminator_forward.5}
  #allocation0 [shape = 'u32[]', space=smem, size = 0x4, offset = 0x4, fixed_abs, tag = 'smem constant byte address 0x4 - core index']
  #allocation1 [shape = 'u32[144,128]{1,0:T(1,128)}', space=vmem, size = 0x12000, scoped, tag = 'internal scratch']
  %s0 = inlined_call_operand.vmem [shape: bf16[4,17,33,12], index: 0, kind: input, shape index: {}]
  %s1 = inlined_call_operand.vmem [shape: bf16[4,12,8], index: 1, kind: input, shape index: {}]
  %s2 = inlined_call_operand.vmem [shape: f32[3,8], index: 2, kind: input, shape index: {}]
  %s3 = inlined_call_operand.vmem [shape: bf16[4,16,32,8], index: 3, kind: output, shape index: {}]
  %s4 = sld [smem:[#allocation0]]
  $region45: #{discriminator_forward.5} parent=0
    _
  %s6 = ssub.s32 1, %s4
  %s7 = scalar_select 0, %s6, %s4
  loop: start=0, step=1, limit=6
  $region2: #{discriminator_forward.5} parent=0 // loop_pre_header
    _
  $region3: #{discriminator_forward.5} parent=0 // loop_header
    %s9 = sphi 0, %s13
    %p10 = scmp.ge.s32.totalorder %s9, 6
    %s19 = sphi 0, %s21
    %s22 = sphi 0, %s19
    %s23 = sphi 0, %s22
    %s39 = sphi 0, %s23
    %s43 = sphi 0, %s43
    %s45 = sphi 0, %s43
    %s46 = sphi 0, %s45
    %s60 = sphi 0, %s46
    %s64 = sphi 0, %s64
    %s66 = sphi 0, %s64
    %s67 = sphi 0, %s66
    %s81 = sphi 0, %s67
    %s87 = sphi 0, %s89
    %s90 = sphi 0, %s87
    %s91 = sphi 0, %s90
    %s107 = sphi 0, %s91
  $region4: #{discriminator_forward.5} parent=0 // loop_header_branch
    %12 = sbr.rel (%p10) target = $region8
  $region5: #{discriminator_forward.5} parent=0 // loop_body
    %s14 = ssub.s32 %s9, 1
    %s15 = ssub.s32 %s9, 2
    %s16 = sadd.s32 %s9, 1
    %s17 = ssub.s32 %s9, %s16
    %p18 = scmp.eq.s32.totalorder %s17, 0
    %s20 = sadd.s32 %s19, 1
    %s21 = scalar_select %p18, %s19, %s20
    %p24 = pneg %p18
    %p25 = scmp.eq.s32.totalorder %s9, 3
    %p26 = por %p24, %p25
    %p27 = scmp.ne.s32.totalorder %s19, %s22
    %p28 = scmp.eq.s32.totalorder %s9, 0
    %p29 = por %p27, %p28
    %p30 = scmp.ne.s32.totalorder %s19, %s22
    %p31 = scmp.eq.s32.totalorder %s14, 3
    %p32 = por %p30, %p31
    %p33 = scmp.ne.s32.totalorder %s22, %s23
    %p34 = scmp.eq.s32.totalorder %s14, 0
    %p35 = por %p33, %p34
    %p36 = scmp.ne.s32.totalorder %s22, %s23
    %p37 = scmp.eq.s32.totalorder %s15, 3
    %p38 = por %p36, %p37
    %p40 = scmp.ne.s32.totalorder %s23, %s39
    %p41 = scmp.eq.s32.totalorder %s15, 0
    %p42 = por %p40, %p41
    %s44 = sadd.s32 %s43, 1
    %p47 = scmp.eq.s32.totalorder %s9, 3
    %p48 = scmp.ne.s32.totalorder %s43, %s45
    %p49 = scmp.eq.s32.totalorder %s9, 0
    %p50 = por %p48, %p49
    %p51 = scmp.ne.s32.totalorder %s43, %s45
    %p52 = scmp.eq.s32.totalorder %s14, 3
    %p53 = por %p51, %p52
    %p54 = scmp.ne.s32.totalorder %s45, %s46
    %p55 = scmp.eq.s32.totalorder %s14, 0
    %p56 = por %p54, %p55
    %p57 = scmp.ne.s32.totalorder %s45, %s46
    %p58 = scmp.eq.s32.totalorder %s15, 3
    %p59 = por %p57, %p58
    %p61 = scmp.ne.s32.totalorder %s46, %s60
    %p62 = scmp.eq.s32.totalorder %s15, 0
    %p63 = por %p61, %p62
    %s65 = sadd.s32 %s64, 1
    %p68 = scmp.eq.s32.totalorder %s9, 3
    %p69 = scmp.ne.s32.totalorder %s64, %s66
    %p70 = scmp.eq.s32.totalorder %s9, 0
    %p71 = por %p69, %p70
    %p72 = scmp.ne.s32.totalorder %s64, %s66
    %p73 = scmp.eq.s32.totalorder %s14, 3
    %p74 = por %p72, %p73
    %p75 = scmp.ne.s32.totalorder %s66, %s67
    %p76 = scmp.eq.s32.totalorder %s14, 0
    %p77 = por %p75, %p76
    %p78 = scmp.ne.s32.totalorder %s66, %s67
    %p79 = scmp.eq.s32.totalorder %s15, 3
    %p80 = por %p78, %p79
    %p82 = scmp.ne.s32.totalorder %s67, %s81
    %p83 = scmp.eq.s32.totalorder %s15, 0
    %p84 = por %p82, %p83
    %s85 = ssub.s32 %s9, %s16
    %p86 = scmp.eq.s32.totalorder %s85, 0
    %s88 = sadd.s32 %s87, 1
    %s89 = scalar_select %p86, %s87, %s88
    %p92 = pneg %p86
    %p93 = scmp.eq.s32.totalorder %s9, 3
    %p94 = por %p92, %p93
    %p95 = scmp.ne.s32.totalorder %s87, %s90
    %p96 = scmp.eq.s32.totalorder %s9, 0
    %p97 = por %p95, %p96
    %p98 = scmp.ne.s32.totalorder %s87, %s90
    %p99 = scmp.eq.s32.totalorder %s14, 3
    %p100 = por %p98, %p99
    %p101 = scmp.ne.s32.totalorder %s90, %s91
    %p102 = scmp.eq.s32.totalorder %s14, 0
    %p103 = por %p101, %p102
    %p104 = scmp.ne.s32.totalorder %s90, %s91
    %p105 = scmp.eq.s32.totalorder %s15, 3
    %p106 = por %p104, %p105
    %p108 = scmp.ne.s32.totalorder %s91, %s107
    %p109 = scmp.eq.s32.totalorder %s15, 0
    %p110 = por %p108, %p109
    %p111 = scmp.le.s32.totalorder 1, %s9
    %p112 = scmp.lt.s32.totalorder %s9, 5
    %p113 = pnand %p111, %p112
    %p114 = pneg %p113
    // Predicated region
    $region9: #{discriminator_forward.5} parent=5 // pred_check
      _
    $region10: #{discriminator_forward.5} parent=5 // pred_check_branch
      %116 = sbr.rel (%p113) target = $region12
    $region11: #{discriminator_forward.5} parent=5 // pred_region
      %s117 = ssub.s32 %s9, 1
      // Predicated region
      $region13: #{discriminator_forward.5} parent=11 // pred_check
        %p118 = pneg %p56
      $region14: #{discriminator_forward.5} parent=11 // pred_check_branch
        %120 = sbr.rel (%p118) target = $region16
      $region15: #{discriminator_forward.5} parent=11 // pred_region
        _
      $region16: #{discriminator_forward.5} parent=11 // pred_fallthru
        _
      // Predicated region
      $region17: #{discriminator_forward.5} parent=11 // pred_check
        %p121 = pneg %p77
      $region18: #{discriminator_forward.5} parent=11 // pred_check_branch
        %123 = sbr.rel (%p121) target = $region20
      $region19: #{discriminator_forward.5} parent=11 // pred_region
        _
      $region20: #{discriminator_forward.5} parent=11 // pred_fallthru
        _
    $region12: #{discriminator_forward.5} parent=5 // pred_fallthru
      _
    %p124 = scmp.lt.s32.totalorder %s9, 4
    // Predicated region
    $region21: #{discriminator_forward.5} parent=5 // pred_check
      %p125 = pneg %p124
    $region22: #{discriminator_forward.5} parent=5 // pred_check_branch
      %127 = sbr.rel (%p125) target = $region24
    $region23: #{discriminator_forward.5} parent=5 // pred_region
      // Predicated region
      $region25: #{discriminator_forward.5} parent=23 // pred_check
        %p128 = pneg %p29
      $region26: #{discriminator_forward.5} parent=23 // pred_check_branch
        %130 = sbr.rel (%p128) target = $region28
      $region27: #{discriminator_forward.5} parent=23 // pred_region
        %p131 = scmp.lt.s32.totalorder %s9, 3
        %s132 = scalar_select %p131, %s9, 3
        %s133 = smul.addr %s132, 85
        %s134 = smul.addr %s133, 4
        %s135 = scalar_lea.vmem %s0, %s134
      $region28: #{discriminator_forward.5} parent=23 // pred_fallthru
        _
    $region24: #{discriminator_forward.5} parent=5 // pred_fallthru
      _
    %p136 = scmp.le.s32.totalorder 1, %s9
    %p137 = scmp.lt.s32.totalorder %s9, 5
    %p138 = pnand %p136, %p137
    %p139 = pneg %p138
    // Predicated region
    $region29: #{discriminator_forward.5} parent=5 // pred_check
      _
    $region30: #{discriminator_forward.5} parent=5 // pred_check_branch
      %141 = sbr.rel (%p138) target = $region32
    $region31: #{discriminator_forward.5} parent=5 // pred_region
      %s142 = ssub.s32 %s9, 1
      %p143 = scmp.lt.s32.totalorder %s14, 3
      %s144 = scalar_select %p143, %s14, 3
      %s145 = smul.addr %s144, 85
      %s146 = smul.addr %s145, 4
      %s147 = scalar_lea.vmem %s0, %s146
      %p148 = pneg %p35
      %p149 = pneg %p32
      %p150 = pneg %p56
      %p151 = pneg %p53
      %p152 = pneg %p77
      %p153 = pneg %p74
      %p154 = pneg %p103
      %p155 = pneg %p100
      %p156 = scmp.lt.s32.totalorder %s14, 3
      %s157 = scalar_select %p156, %s14, 3
      %s158 = smul.addr %s157, 64
      %s159 = smul.addr %s158, 4
      %s160 = scalar_lea.vmem %s3, %s159
      %p161 = scmp.lt.s32.totalorder %s14, 3
      %s162 = scalar_select %p161, %s14, 3
      %s163 = smul.addr %s162, 85
      %s164 = smul.addr %s163, 4
      %s165 = scalar_lea.vmem %s0, %s164
      %p166 = scmp.lt.s32.totalorder %s14, 3
      %s167 = scalar_select %p166, %s14, 3
      %s168 = smul.addr %s167, 64
      %s169 = smul.addr %s168, 4
      %s170 = scalar_lea.vmem %s3, %s169
      %v172 = vld [vmem:[%s165] sm:$0xf]
      %v173 = vld [vmem:[%s165 + $0x4] sm:$0xf]
      %v174 = vld [vmem:[%s165 + $0x8] sm:$0xf]
      %v175 = vld [vmem:[%s165 + $0xc] sm:$0xf]
      %v176 = vld [vmem:[%s165 + $0x14] sm:$0xf]
      %v177 = vld [vmem:[%s165 + $0x18] sm:$0xf]
      %v178 = vld [vmem:[%s165 + $0x1c] sm:$0xf]
      %v179 = vld [vmem:[%s165 + $0x20] sm:$0xf]
      %v180 = vld [vmem:[%s165 + $0x28] sm:$0xf]
      %v181 = vld [vmem:[%s165 + $0x2c] sm:$0xf]
      %v182 = vld [vmem:[%s165 + $0x30] sm:$0xf]
      %v183 = vld [vmem:[%s165 + $0x34] sm:$0xf]
      %v184 = vld [vmem:[%s165 + $0x3c] sm:$0xf]
      %v185 = vld [vmem:[%s165 + $0x40] sm:$0xf]
      %v186 = vld [vmem:[%s165 + $0x44] sm:$0xf]
      %v187 = vld [vmem:[%s165 + $0x48] sm:$0xf]
      %v188 = vld [vmem:[%s165 + $0x50] sm:$0xf]
      %v189 = vld [vmem:[%s165 + $0x54] sm:$0xf]
      %v190 = vld [vmem:[%s165 + $0x58] sm:$0xf]
      %v191 = vld [vmem:[%s165 + $0x5c] sm:$0xf]
      %v192 = vld [vmem:[%s165 + $0x64] sm:$0xf]
      %v193 = vld [vmem:[%s165 + $0x68] sm:$0xf]
      %v194 = vld [vmem:[%s165 + $0x6c] sm:$0xf]
      %v195 = vld [vmem:[%s165 + $0x70] sm:$0xf]
      %v196 = vld [vmem:[%s165 + $0x78] sm:$0xf]
      %v197 = vld [vmem:[%s165 + $0x7c] sm:$0xf]
      %v198 = vld [vmem:[%s165 + $0x80] sm:$0xf]
      %v199 = vld [vmem:[%s165 + $0x84] sm:$0xf]
      %v200 = vld [vmem:[%s165 + $0x8c] sm:$0xf]
      %v201 = vld [vmem:[%s165 + $0x90] sm:$0xf]
      %v202 = vld [vmem:[%s165 + $0x94] sm:$0xf]
      %v203 = vld [vmem:[%s165 + $0x98] sm:$0xf]
      %v204 = vld [vmem:[%s165 + $0xa0] sm:$0xf]
      %v205 = vld [vmem:[%s165 + $0xa4] sm:$0xf]
      %v206 = vld [vmem:[%s165 + $0xa8] sm:$0xf]
      %v207 = vld [vmem:[%s165 + $0xac] sm:$0xf]
      %v208 = vld [vmem:[%s165 + $0xb4] sm:$0xf]
      %v209 = vld [vmem:[%s165 + $0xb8] sm:$0xf]
      %v210 = vld [vmem:[%s165 + $0xbc] sm:$0xf]
      %v211 = vld [vmem:[%s165 + $0xc0] sm:$0xf]
      %v212 = vld [vmem:[%s165 + $0xc8] sm:$0xf]
      %v213 = vld [vmem:[%s165 + $0xcc] sm:$0xf]
      %v214 = vld [vmem:[%s165 + $0xd0] sm:$0xf]
      %v215 = vld [vmem:[%s165 + $0xd4] sm:$0xf]
      %v216 = vld [vmem:[%s165 + $0xdc] sm:$0xf]
      %v217 = vld [vmem:[%s165 + $0xe0] sm:$0xf]
      %v218 = vld [vmem:[%s165 + $0xe4] sm:$0xf]
      %v219 = vld [vmem:[%s165 + $0xe8] sm:$0xf]
      %v220 = vld [vmem:[%s165 + $0xf0] sm:$0xf]
      %v221 = vld [vmem:[%s165 + $0xf4] sm:$0xf]
      %v222 = vld [vmem:[%s165 + $0xf8] sm:$0xf]
      %v223 = vld [vmem:[%s165 + $0xfc] sm:$0xf]
      %v224 = vld [vmem:[%s165 + $0x104] sm:$0xf]
      %v225 = vld [vmem:[%s165 + $0x108] sm:$0xf]
      %v226 = vld [vmem:[%s165 + $0x10c] sm:$0xf]
      %v227 = vld [vmem:[%s165 + $0x110] sm:$0xf]
      %v228 = vld [vmem:[%s165 + $0x118] sm:$0xf]
      %v229 = vld [vmem:[%s165 + $0x11c] sm:$0xf]
      %v230 = vld [vmem:[%s165 + $0x120] sm:$0xf]
      %v231 = vld [vmem:[%s165 + $0x124] sm:$0xf]
      %v232 = vld [vmem:[%s165 + $0x12c] sm:$0xf]
      %v233 = vld [vmem:[%s165 + $0x130] sm:$0xf]
      %v234 = vld [vmem:[%s165 + $0x134] sm:$0xf]
      %v235 = vld [vmem:[%s165 + $0x138] sm:$0xf]
      %v236 = vunpack.c.l.bf16 %v172
      %v237 = vunpack.c.l.bf16 %v173
      %v238 = vunpack.c.l.bf16 %v174
      %v239 = vunpack.c.l.bf16 %v175
      %v240 = vunpack.c.l.bf16 %v176
      %v241 = vunpack.c.l.bf16 %v177
      %v242 = vunpack.c.l.bf16 %v178
      %v243 = vunpack.c.l.bf16 %v179
      %v244 = vunpack.c.l.bf16 %v180
      %v245 = vunpack.c.l.bf16 %v181
      %v246 = vunpack.c.l.bf16 %v182
      %v247 = vunpack.c.l.bf16 %v183
      %v248 = vunpack.c.l.bf16 %v184
      %v249 = vunpack.c.l.bf16 %v185
      %v250 = vunpack.c.l.bf16 %v186
      %v251 = vunpack.c.l.bf16 %v187
      %v252 = vunpack.c.l.bf16 %v188
      %v253 = vunpack.c.l.bf16 %v189
      %v254 = vunpack.c.l.bf16 %v190
      %v255 = vunpack.c.l.bf16 %v191
      %v256 = vunpack.c.l.bf16 %v192
      %v257 = vunpack.c.l.bf16 %v193
      %v258 = vunpack.c.l.bf16 %v194
      %v259 = vunpack.c.l.bf16 %v195
      %v260 = vunpack.c.l.bf16 %v196
      %v261 = vunpack.c.l.bf16 %v197
      %v262 = vunpack.c.l.bf16 %v198
      %v263 = vunpack.c.l.bf16 %v199
      %v264 = vunpack.c.l.bf16 %v200
      %v265 = vunpack.c.l.bf16 %v201
      %v266 = vunpack.c.l.bf16 %v202
      %v267 = vunpack.c.l.bf16 %v203
      %v268 = vunpack.c.l.bf16 %v204
      %v269 = vunpack.c.l.bf16 %v205
      %v270 = vunpack.c.l.bf16 %v206
      %v271 = vunpack.c.l.bf16 %v207
      %v272 = vunpack.c.l.bf16 %v208
      %v273 = vunpack.c.l.bf16 %v209
      %v274 = vunpack.c.l.bf16 %v210
      %v275 = vunpack.c.l.bf16 %v211
      %v276 = vunpack.c.l.bf16 %v212
      %v277 = vunpack.c.l.bf16 %v213
      %v278 = vunpack.c.l.bf16 %v214
      %v279 = vunpack.c.l.bf16 %v215
      %v280 = vunpack.c.l.bf16 %v216
      %v281 = vunpack.c.l.bf16 %v217
      %v282 = vunpack.c.l.bf16 %v218
      %v283 = vunpack.c.l.bf16 %v219
      %v284 = vunpack.c.l.bf16 %v220
      %v285 = vunpack.c.l.bf16 %v221
      %v286 = vunpack.c.l.bf16 %v222
      %v287 = vunpack.c.l.bf16 %v223
      %v288 = vunpack.c.l.bf16 %v224
      %v289 = vunpack.c.l.bf16 %v225
      %v290 = vunpack.c.l.bf16 %v226
      %v291 = vunpack.c.l.bf16 %v227
      %v292 = vunpack.c.l.bf16 %v228
      %v293 = vunpack.c.l.bf16 %v229
      %v294 = vunpack.c.l.bf16 %v230
      %v295 = vunpack.c.l.bf16 %v231
      %v296 = vunpack.c.l.bf16 %v232
      %v297 = vunpack.c.l.bf16 %v233
      %v298 = vunpack.c.l.bf16 %v234
      %v299 = vunpack.c.l.bf16 %v235
      %v300 = vpack.c.bf16 %v237, %v236
      %v301 = vpack.c.bf16 %v239, %v238
      %v302 = vpack.c.bf16 %v241, %v240
      %v303 = vpack.c.bf16 %v243, %v242
      %v304 = vpack.c.bf16 %v245, %v244
      %v305 = vpack.c.bf16 %v247, %v246
      %v306 = vpack.c.bf16 %v249, %v248
      %v307 = vpack.c.bf16 %v251, %v250
      %v308 = vpack.c.bf16 %v253, %v252
      %v309 = vpack.c.bf16 %v255, %v254
      %v310 = vpack.c.bf16 %v257, %v256
      %v311 = vpack.c.bf16 %v259, %v258
      %v312 = vpack.c.bf16 %v261, %v260
      %v313 = vpack.c.bf16 %v263, %v262
      %v314 = vpack.c.bf16 %v265, %v264
      %v315 = vpack.c.bf16 %v267, %v266
      %v316 = vpack.c.bf16 %v269, %v268
      %v317 = vpack.c.bf16 %v271, %v270
      %v318 = vpack.c.bf16 %v273, %v272
      %v319 = vpack.c.bf16 %v275, %v274
      %v320 = vpack.c.bf16 %v277, %v276
      %v321 = vpack.c.bf16 %v279, %v278
      %v322 = vpack.c.bf16 %v281, %v280
      %v323 = vpack.c.bf16 %v283, %v282
      %v324 = vpack.c.bf16 %v285, %v284
      %v325 = vpack.c.bf16 %v287, %v286
      %v326 = vpack.c.bf16 %v289, %v288
      %v327 = vpack.c.bf16 %v291, %v290
      %v328 = vpack.c.bf16 %v293, %v292
      %v329 = vpack.c.bf16 %v295, %v294
      %v330 = vpack.c.bf16 %v297, %v296
      %v331 = vpack.c.bf16 %v299, %v298
      %v332 = vld [vmem:[%s1] sm:$0xf]
      %v333 = vld [vmem:[%s1 + $0x4] sm:$0x3]
      %v334 = vld [vmem:[%s165 + $0x10] sm:$0x1]
      %v335 = vld [vmem:[%s165 + $0x24] sm:$0x1]
      %v336 = vld [vmem:[%s165 + $0x38] sm:$0x1]
      %v337 = vld [vmem:[%s165 + $0x4c] sm:$0x1]
      %v338 = vld [vmem:[%s165 + $0x60] sm:$0x1]
      %v339 = vld [vmem:[%s165 + $0x74] sm:$0x1]
      %v340 = vld [vmem:[%s165 + $0x88] sm:$0x1]
      %v341 = vld [vmem:[%s165 + $0x9c] sm:$0x1]
      %v342 = vld [vmem:[%s165 + $0xb0] sm:$0x1]
      %v343 = vld [vmem:[%s165 + $0xc4] sm:$0x1]
      %v344 = vld [vmem:[%s165 + $0xd8] sm:$0x1]
      %v345 = vld [vmem:[%s165 + $0xec] sm:$0x1]
      %v346 = vld [vmem:[%s165 + $0x100] sm:$0x1]
      %v347 = vld [vmem:[%s165 + $0x114] sm:$0x1]
      %v348 = vld [vmem:[%s165 + $0x128] sm:$0x1]
      %v349 = vld [vmem:[%s165 + $0x13c] sm:$0x1]
      %v350 = vunpack.c.l.bf16 %v334
      %v351 = vunpack.c.l.bf16 %v335
      %v352 = vunpack.c.l.bf16 %v336
      %v353 = vunpack.c.l.bf16 %v337
      %v354 = vunpack.c.l.bf16 %v338
      %v355 = vunpack.c.l.bf16 %v339
      %v356 = vunpack.c.l.bf16 %v340
      %v357 = vunpack.c.l.bf16 %v341
      %v358 = vunpack.c.l.bf16 %v342
      %v359 = vunpack.c.l.bf16 %v343
      %v360 = vunpack.c.l.bf16 %v344
      %v361 = vunpack.c.l.bf16 %v345
      %v362 = vunpack.c.l.bf16 %v346
      %v363 = vunpack.c.l.bf16 %v347
      %v364 = vunpack.c.l.bf16 %v348
      %v365 = vunpack.c.l.bf16 %v349
      %vm446 = vcmask 1046528
      %v447 = vrot.slane %v236, 1
      %v448 = vrot.slane %v237, 1
      %v449 = vsel %vm446, %v447, %v448
      %v450 = vrot.slane %v238, 1
      %v451 = vsel %vm446, %v448, %v450
      %v452 = vrot.slane %v239, 1
      %v453 = vsel %vm446, %v450, %v452
      %v454 = vrot.slane %v350, 1
      %v455 = vsel %vm446, %v452, %v454
      %v456 = vrot.slane %v240, 1
      %v457 = vrot.slane %v241, 1
      %v458 = vsel %vm446, %v456, %v457
      %v459 = vrot.slane %v242, 1
      %v460 = vsel %vm446, %v457, %v459
      %v461 = vrot.slane %v243, 1
      %v462 = vsel %vm446, %v459, %v461
      %v463 = vrot.slane %v351, 1
      %v464 = vsel %vm446, %v461, %v463
      %v465 = vrot.slane %v244, 1
      %v466 = vrot.slane %v245, 1
      %v467 = vsel %vm446, %v465, %v466
      %v468 = vrot.slane %v246, 1
      %v469 = vsel %vm446, %v466, %v468
      %v470 = vrot.slane %v247, 1
      %v471 = vsel %vm446, %v468, %v470
      %v472 = vrot.slane %v352, 1
      %v473 = vsel %vm446, %v470, %v472
      %v474 = vrot.slane %v248, 1
      %v475 = vrot.slane %v249, 1
      %v476 = vsel %vm446, %v474, %v475
      %v477 = vrot.slane %v250, 1
      %v478 = vsel %vm446, %v475, %v477
      %v479 = vrot.slane %v251, 1
      %v480 = vsel %vm446, %v477, %v479
      %v481 = vrot.slane %v353, 1
      %v482 = vsel %vm446, %v479, %v481
      %v483 = vrot.slane %v252, 1
      %v484 = vrot.slane %v253, 1
      %v485 = vsel %vm446, %v483, %v484
      %v486 = vrot.slane %v254, 1
      %v487 = vsel %vm446, %v484, %v486
      %v488 = vrot.slane %v255, 1
      %v489 = vsel %vm446, %v486, %v488
      %v490 = vrot.slane %v354, 1
      %v491 = vsel %vm446, %v488, %v490
      %v492 = vrot.slane %v256, 1
      %v493 = vrot.slane %v257, 1
      %v494 = vsel %vm446, %v492, %v493
      %v495 = vrot.slane %v258, 1
      %v496 = vsel %vm446, %v493, %v495
      %v497 = vrot.slane %v259, 1
      %v498 = vsel %vm446, %v495, %v497
      %v499 = vrot.slane %v355, 1
      %v500 = vsel %vm446, %v497, %v499
      %v501 = vrot.slane %v260, 1
      %v502 = vrot.slane %v261, 1
      %v503 = vsel %vm446, %v501, %v502
      %v504 = vrot.slane %v262, 1
      %v505 = vsel %vm446, %v502, %v504
      %v506 = vrot.slane %v263, 1
      %v507 = vsel %vm446, %v504, %v506
      %v508 = vrot.slane %v356, 1
      %v509 = vsel %vm446, %v506, %v508
      %v510 = vrot.slane %v264, 1
      %v511 = vrot.slane %v265, 1
      %v512 = vsel %vm446, %v510, %v511
      %v513 = vrot.slane %v266, 1
      %v514 = vsel %vm446, %v511, %v513
      %v515 = vrot.slane %v267, 1
      %v516 = vsel %vm446, %v513, %v515
      %v517 = vrot.slane %v357, 1
      %v518 = vsel %vm446, %v515, %v517
      %v519 = vrot.slane %v268, 1
      %v520 = vrot.slane %v269, 1
      %v521 = vsel %vm446, %v519, %v520
      %v522 = vrot.slane %v270, 1
      %v523 = vsel %vm446, %v520, %v522
      %v524 = vrot.slane %v271, 1
      %v525 = vsel %vm446, %v522, %v524
      %v526 = vrot.slane %v358, 1
      %v527 = vsel %vm446, %v524, %v526
      %v528 = vrot.slane %v272, 1
      %v529 = vrot.slane %v273, 1
      %v530 = vsel %vm446, %v528, %v529
      %v531 = vrot.slane %v274, 1
      %v532 = vsel %vm446, %v529, %v531
      %v533 = vrot.slane %v275, 1
      %v534 = vsel %vm446, %v531, %v533
      %v535 = vrot.slane %v359, 1
      %v536 = vsel %vm446, %v533, %v535
      %v537 = vrot.slane %v276, 1
      %v538 = vrot.slane %v277, 1
      %v539 = vsel %vm446, %v537, %v538
      %v540 = vrot.slane %v278, 1
      %v541 = vsel %vm446, %v538, %v540
      %v542 = vrot.slane %v279, 1
      %v543 = vsel %vm446, %v540, %v542
      %v544 = vrot.slane %v360, 1
      %v545 = vsel %vm446, %v542, %v544
      %v546 = vrot.slane %v280, 1
      %v547 = vrot.slane %v281, 1
      %v548 = vsel %vm446, %v546, %v547
      %v549 = vrot.slane %v282, 1
      %v550 = vsel %vm446, %v547, %v549
      %v551 = vrot.slane %v283, 1
      %v552 = vsel %vm446, %v549, %v551
      %v553 = vrot.slane %v361, 1
      %v554 = vsel %vm446, %v551, %v553
      %v555 = vrot.slane %v284, 1
      %v556 = vrot.slane %v285, 1
      %v557 = vsel %vm446, %v555, %v556
      %v558 = vrot.slane %v286, 1
      %v559 = vsel %vm446, %v556, %v558
      %v560 = vrot.slane %v287, 1
      %v561 = vsel %vm446, %v558, %v560
      %v562 = vrot.slane %v362, 1
      %v563 = vsel %vm446, %v560, %v562
      %v564 = vrot.slane %v288, 1
      %v565 = vrot.slane %v289, 1
      %v566 = vsel %vm446, %v564, %v565
      %v567 = vrot.slane %v290, 1
      %v568 = vsel %vm446, %v565, %v567
      %v569 = vrot.slane %v291, 1
      %v570 = vsel %vm446, %v567, %v569
      %v571 = vrot.slane %v363, 1
      %v572 = vsel %vm446, %v569, %v571
      %v573 = vrot.slane %v292, 1
      %v574 = vrot.slane %v293, 1
      %v575 = vsel %vm446, %v573, %v574
      %v576 = vrot.slane %v294, 1
      %v577 = vsel %vm446, %v574, %v576
      %v578 = vrot.slane %v295, 1
      %v579 = vsel %vm446, %v576, %v578
      %v580 = vrot.slane %v364, 1
      %v581 = vsel %vm446, %v578, %v580
      %v582 = vrot.slane %v296, 1
      %v583 = vrot.slane %v297, 1
      %v584 = vsel %vm446, %v582, %v583
      %v585 = vrot.slane %v298, 1
      %v586 = vsel %vm446, %v583, %v585
      %v587 = vrot.slane %v299, 1
      %v588 = vsel %vm446, %v585, %v587
      %v589 = vrot.slane %v365, 1
      %v590 = vsel %vm446, %v587, %v589
      %v655 = vpack.c.bf16 %v451, %v449
      %v656 = vpack.c.bf16 %v455, %v453
      %v657 = vpack.c.bf16 %v460, %v458
      %v658 = vpack.c.bf16 %v464, %v462
      %v659 = vpack.c.bf16 %v469, %v467
      %v660 = vpack.c.bf16 %v473, %v471
      %v661 = vpack.c.bf16 %v478, %v476
      %v662 = vpack.c.bf16 %v482, %v480
      %v663 = vpack.c.bf16 %v487, %v485
      %v664 = vpack.c.bf16 %v491, %v489
      %v665 = vpack.c.bf16 %v496, %v494
      %v666 = vpack.c.bf16 %v500, %v498
      %v667 = vpack.c.bf16 %v505, %v503
      %v668 = vpack.c.bf16 %v509, %v507
      %v669 = vpack.c.bf16 %v514, %v512
      %v670 = vpack.c.bf16 %v518, %v516
      %v671 = vpack.c.bf16 %v523, %v521
      %v672 = vpack.c.bf16 %v527, %v525
      %v673 = vpack.c.bf16 %v532, %v530
      %v674 = vpack.c.bf16 %v536, %v534
      %v675 = vpack.c.bf16 %v541, %v539
      %v676 = vpack.c.bf16 %v545, %v543
      %v677 = vpack.c.bf16 %v550, %v548
      %v678 = vpack.c.bf16 %v554, %v552
      %v679 = vpack.c.bf16 %v559, %v557
      %v680 = vpack.c.bf16 %v563, %v561
      %v681 = vpack.c.bf16 %v568, %v566
      %v682 = vpack.c.bf16 %v572, %v570
      %v683 = vpack.c.bf16 %v577, %v575
      %v684 = vpack.c.bf16 %v581, %v579
      %v685 = vpack.c.bf16 %v586, %v584
      %v686 = vpack.c.bf16 %v590, %v588
      %s687 = scalar_lea.vmem %s1, 8
      %v688 = vld [vmem:[%s687] sm:$0xf]
      %v689 = vld [vmem:[%s687 + $0x4] sm:$0x3]
      %v692 = vunpack.c.l.b16 %v688
      %v693 = vunpack.c.l.b16 %v689
      %v694 = vpack.c.b16 %v693, %v692
      %vm695 = vcmask 97280
      %v697 = vsel %vm695, %v655, 0
      %v700 = vsel %vm695, %v656, 0
      %v703 = vsel %vm695, %v657, 0
      %v706 = vsel %vm695, %v658, 0
      %v709 = vsel %vm695, %v659, 0
      %v712 = vsel %vm695, %v660, 0
      %v715 = vsel %vm695, %v661, 0
      %v718 = vsel %vm695, %v662, 0
      %v721 = vsel %vm695, %v663, 0
      %v724 = vsel %vm695, %v664, 0
      %v727 = vsel %vm695, %v665, 0
      %v730 = vsel %vm695, %v666, 0
      %v733 = vsel %vm695, %v667, 0
      %v736 = vsel %vm695, %v668, 0
      %v739 = vsel %vm695, %v669, 0
      %v742 = vsel %vm695, %v670, 0
      %v745 = vsel %vm695, %v671, 0
      %v748 = vsel %vm695, %v672, 0
      %v751 = vsel %vm695, %v673, 0
      %v754 = vsel %vm695, %v674, 0
      %v757 = vsel %vm695, %v675, 0
      %v760 = vsel %vm695, %v676, 0
      %v763 = vsel %vm695, %v677, 0
      %v766 = vsel %vm695, %v678, 0
      %v769 = vsel %vm695, %v679, 0
      %v772 = vsel %vm695, %v680, 0
      %v775 = vsel %vm695, %v681, 0
      %v778 = vsel %vm695, %v682, 0
      %v781 = vsel %vm695, %v683, 0
      %v784 = vsel %vm695, %v684, 0
      %v787 = vsel %vm695, %v685, 0
      %v790 = vsel %vm695, %v686, 0
      %vm792 = vcmask 1045504
      %v794 = vsel %vm792, %v694, 0
      %796 = vmatprep.subr.bf16.mxu0 0
      %797 = vmatpush1.bf16.msra.mxu0 %v794
      %798 = vmatprep.subr.bf16.mxu0 0
      %799 = vmatpush1.bf16.msra.mxu0 0
      %800 = vmatprep.subr.bf16.mxu0 0
      %801 = vmatpush1.bf16.msra.mxu0 0
      %802 = vmatprep.subr.bf16.mxu0 0
      %803 = vmatpush1.bf16.msra.mxu0 0
      %804 = vmatprep.subr.bf16.mxu0 0
      %805 = vmatpush1.bf16.msra.mxu0 0
      %806 = vmatprep.subr.bf16.mxu0 0
      %807 = vmatpush1.bf16.msra.mxu0 0
      %808 = vmatprep.subr.bf16.mxu0 0
      %809 = vmatpush1.bf16.msra.mxu0 0
      %810 = vmatprep.subr.bf16.mxu0 0
      %811 = vmatpush1.bf16.msra.mxu0 0
      %812 = vmatprep.subr.bf16.mxu0 0
      %813 = vmatpush1.bf16.msra.mxu0 0
      %814 = vmatprep.subr.bf16.mxu0 0
      %815 = vmatpush1.bf16.msra.mxu0 0
      %816 = vmatprep.subr.bf16.mxu0 0
      %817 = vmatpush1.bf16.msra.mxu0 0
      %818 = vmatprep.subr.bf16.mxu0 0
      %819 = vmatpush1.bf16.msra.mxu0 0
      %820 = vmatprep.subr.bf16.mxu0 0
      %821 = vmatpush1.bf16.msra.mxu0 0
      %822 = vmatprep.subr.bf16.mxu0 0
      %823 = vmatpush1.bf16.msra.mxu0 0
      %824 = vmatprep.subr.bf16.mxu0 0
      %825 = vmatpush1.bf16.msra.mxu0 0
      %826 = vmatprep.subr.bf16.mxu0 0
      %827 = vmatpush1.bf16.msra.mxu0 0
      %828 = vmatprep.mubr.bf16.mxu0 0
      %829 = vmatmul.mubr.bf16.gmra.mrb[0].mxu0 %v697
      %v830 = vpop.f32.mrb[0].mxu0
      %v831 = vadd.f32 0.0, %v830
      %v832 = vpop.f32.mrb[0].mxu0
      %v833 = vpop.f32.mrb[0].mxu0
      %v834 = vadd.f32 0.0, %v833
      %v835 = vpop.f32.mrb[0].mxu0
      %836 = vmatprep.mubr.bf16.mxu0 0
      %837 = vmatmul.mubr.bf16.gmra.mrb[0].mxu0 %v700
      %v838 = vpop.f32.mrb[0].mxu0
      %v839 = vadd.f32 0.0, %v838
      %v840 = vpop.f32.mrb[0].mxu0
      %v841 = vpop.f32.mrb[0].mxu0
      %v842 = vadd.f32 0.0, %v841
      %v843 = vpop.f32.mrb[0].mxu0
      %844 = vmatprep.mubr.bf16.mxu0 0
      %845 = vmatmul.mubr.bf16.gmra.mrb[0].mxu0 %v703
      %v846 = vpop.f32.mrb[0].mxu0
      %v847 = vadd.f32 0.0, %v846
      %v848 = vpop.f32.mrb[0].mxu0
      %v849 = vpop.f32.mrb[0].mxu0
      %v850 = vadd.f32 0.0, %v849
      %v851 = vpop.f32.mrb[0].mxu0
      %852 = vmatprep.mubr.bf16.mxu0 0
      %853 = vmatmul.mubr.bf16.gmra.mrb[0].mxu0 %v706
      %v854 = vpop.f32.mrb[0].mxu0
      %v855 = vadd.f32 0.0, %v854
      %v856 = vpop.f32.mrb[0].mxu0
      %v857 = vpop.f32.mrb[0].mxu0
      %v858 = vadd.f32 0.0, %v857
      %v859 = vpop.f32.mrb[0].mxu0
      %860 = vmatprep.mubr.bf16.mxu0 0
      %861 = vmatmul.mubr.bf16.gmra.mrb[0].mxu0 %v709
      %v862 = vpop.f32.mrb[0].mxu0
      %v863 = vadd.f32 0.0, %v862
      %v864 = vpop.f32.mrb[0].mxu0
      %v865 = vpop.f32.mrb[0].mxu0
      %v866 = vadd.f32 0.0, %v865
      %v867 = vpop.f32.mrb[0].mxu0
      %868 = vmatprep.mubr.bf16.mxu0 0
      %869 = vmatmul.mubr.bf16.gmra.mrb[0].mxu0 %v712
      %v870 = vpop.f32.mrb[0].mxu0
      %v871 = vadd.f32 0.0, %v870
      %v872 = vpop.f32.mrb[0].mxu0
      %v873 = vpop.f32.mrb[0].mxu0
      %v874 = vadd.f32 0.0, %v873
      %v875 = vpop.f32.mrb[0].mxu0
      %876 = vmatprep.mubr.bf16.mxu0 0
      %877 = vmatmul.mubr.bf16.gmra.mrb[0].mxu0 %v715
      %v878 = vpop.f32.mrb[0].mxu0
      %v879 = vadd.f32 0.0, %v878
      %v880 = vpop.f32.mrb[0].mxu0
      %v881 = vpop.f32.mrb[0].mxu0
      %v882 = vadd.f32 0.0, %v881
      %v883 = vpop.f32.mrb[0].mxu0
      %884 = vmatprep.mubr.bf16.mxu0 0
      %885 = vmatmul.mubr.bf16.gmra.mrb[0].mxu0 %v718
      %v886 = vpop.f32.mrb[0].mxu0
      %v887 = vadd.f32 0.0, %v886
      %v888 = vpop.f32.mrb[0].mxu0
      %v889 = vpop.f32.mrb[0].mxu0
      %v890 = vadd.f32 0.0, %v889
      %v891 = vpop.f32.mrb[0].mxu0
      %892 = vmatprep.mubr.bf16.mxu0 0
      %893 = vmatmul.mubr.bf16.gmra.mrb[0].mxu0 %v721
      %v894 = vpop.f32.mrb[0].mxu0
      %v895 = vadd.f32 0.0, %v894
      %v896 = vpop.f32.mrb[0].mxu0
      %v897 = vpop.f32.mrb[0].mxu0
      %v898 = vadd.f32 0.0, %v897
      %v899 = vpop.f32.mrb[0].mxu0
      %900 = vmatprep.mubr.bf16.mxu0 0
      %901 = vmatmul.mubr.bf16.gmra.mrb[0].mxu0 %v724
      %v902 = vpop.f32.mrb[0].mxu0
      %v903 = vadd.f32 0.0, %v902
      %v904 = vpop.f32.mrb[0].mxu0
      %v905 = vpop.f32.mrb[0].mxu0
      %v906 = vadd.f32 0.0, %v905
      %v907 = vpop.f32.mrb[0].mxu0
      %908 = vmatprep.mubr.bf16.mxu0 0
      %909 = vmatmul.mubr.bf16.gmra.mrb[0].mxu0 %v727
      %v910 = vpop.f32.mrb[0].mxu0
      %v911 = vadd.f32 0.0, %v910
      %v912 = vpop.f32.mrb[0].mxu0
      %v913 = vpop.f32.mrb[0].mxu0
      %v914 = vadd.f32 0.0, %v913
      %v915 = vpop.f32.mrb[0].mxu0
      %916 = vmatprep.mubr.bf16.mxu0 0
      %917 = vmatmul.mubr.bf16.gmra.mrb[0].mxu0 %v730
      %v918 = vpop.f32.mrb[0].mxu0
      %v919 = vadd.f32 0.0, %v918
      %v920 = vpop.f32.mrb[0].mxu0
      %v921 = vpop.f32.mrb[0].mxu0
      %v922 = vadd.f32 0.0, %v921
      %v923 = vpop.f32.mrb[0].mxu0
      %924 = vmatprep.mubr.bf16.mxu0 0
      %925 = vmatmul.mubr.bf16.gmra.mrb[0].mxu0 %v733
      %v926 = vpop.f32.mrb[0].mxu0
      %v927 = vadd.f32 0.0, %v926
      %v928 = vpop.f32.mrb[0].mxu0
      %v929 = vpop.f32.mrb[0].mxu0
      %v930 = vadd.f32 0.0, %v929
      %v931 = vpop.f32.mrb[0].mxu0
      %932 = vmatprep.mubr.bf16.mxu0 0
      %933 = vmatmul.mubr.bf16.gmra.mrb[0].mxu0 %v736
      %v934 = vpop.f32.mrb[0].mxu0
      %v935 = vadd.f32 0.0, %v934
      %v936 = vpop.f32.mrb[0].mxu0
      %v937 = vpop.f32.mrb[0].mxu0
      %v938 = vadd.f32 0.0, %v937
      %v939 = vpop.f32.mrb[0].mxu0
      %940 = vmatprep.mubr.bf16.mxu0 0
      %941 = vmatmul.mubr.bf16.gmra.mrb[0].mxu0 %v739
      %v942 = vpop.f32.mrb[0].mxu0
      %v943 = vadd.f32 0.0, %v942
      %v944 = vpop.f32.mrb[0].mxu0
      %v945 = vpop.f32.mrb[0].mxu0
      %v946 = vadd.f32 0.0, %v945
      %v947 = vpop.f32.mrb[0].mxu0
      %948 = vmatprep.mubr.bf16.mxu0 0
      %949 = vmatmul.mubr.bf16.gmra.mrb[0].mxu0 %v742
      %v950 = vpop.f32.mrb[0].mxu0
      %v951 = vadd.f32 0.0, %v950
      %v952 = vpop.f32.mrb[0].mxu0
      %v953 = vpop.f32.mrb[0].mxu0
      %v954 = vadd.f32 0.0, %v953
      %v955 = vpop.f32.mrb[0].mxu0
      %956 = vmatprep.mubr.bf16.mxu0 0
      %957 = vmatmul.mubr.bf16.gmra.mrb[0].mxu0 %v745
      %v958 = vpop.f32.mrb[0].mxu0
      %v959 = vadd.f32 0.0, %v958
      %v960 = vpop.f32.mrb[0].mxu0
      %v961 = vpop.f32.mrb[0].mxu0
      %v962 = vadd.f32 0.0, %v961
      %v963 = vpop.f32.mrb[0].mxu0
      %964 = vmatprep.mubr.bf16.mxu0 0
      %965 = vmatmul.mubr.bf16.gmra.mrb[0].mxu0 %v748
      %v966 = vpop.f32.mrb[0].mxu0
      %v967 = vadd.f32 0.0, %v966
      %v968 = vpop.f32.mrb[0].mxu0
      %v969 = vpop.f32.mrb[0].mxu0
      %v970 = vadd.f32 0.0, %v969
      %v971 = vpop.f32.mrb[0].mxu0
      %972 = vmatprep.mubr.bf16.mxu0 0
      %973 = vmatmul.mubr.bf16.gmra.mrb[0].mxu0 %v751
      %v974 = vpop.f32.mrb[0].mxu0
      %v975 = vadd.f32 0.0, %v974
      %v976 = vpop.f32.mrb[0].mxu0
      %v977 = vpop.f32.mrb[0].mxu0
      %v978 = vadd.f32 0.0, %v977
      %v979 = vpop.f32.mrb[0].mxu0
      %980 = vmatprep.mubr.bf16.mxu0 0
      %981 = vmatmul.mubr.bf16.gmra.mrb[0].mxu0 %v754
      %v982 = vpop.f32.mrb[0].mxu0
      %v983 = vadd.f32 0.0, %v982
      %v984 = vpop.f32.mrb[0].mxu0
      %v985 = vpop.f32.mrb[0].mxu0
      %v986 = vadd.f32 0.0, %v985
      %v987 = vpop.f32.mrb[0].mxu0
      %988 = vmatprep.mubr.bf16.mxu0 0
      %989 = vmatmul.mubr.bf16.gmra.mrb[0].mxu0 %v757
      %v990 = vpop.f32.mrb[0].mxu0
      %v991 = vadd.f32 0.0, %v990
      %v992 = vpop.f32.mrb[0].mxu0
      %v993 = vpop.f32.mrb[0].mxu0
      %v994 = vadd.f32 0.0, %v993
      %v995 = vpop.f32.mrb[0].mxu0
      %996 = vmatprep.mubr.bf16.mxu0 0
      %997 = vmatmul.mubr.bf16.gmra.mrb[0].mxu0 %v760
      %v998 = vpop.f32.mrb[0].mxu0
      %v999 = vadd.f32 0.0, %v998
      %v1000 = vpop.f32.mrb[0].mxu0
      %v1001 = vpop.f32.mrb[0].mxu0
      %v1002 = vadd.f32 0.0, %v1001
      %v1003 = vpop.f32.mrb[0].mxu0
      %1004 = vmatprep.mubr.bf16.mxu0 0
      %1005 = vmatmul.mubr.bf16.gmra.mrb[0].mxu0 %v763
      %v1006 = vpop.f32.mrb[0].mxu0
      %v1007 = vadd.f32 0.0, %v1006
      %v1008 = vpop.f32.mrb[0].mxu0
      %v1009 = vpop.f32.mrb[0].mxu0
      %v1010 = vadd.f32 0.0, %v1009
      %v1011 = vpop.f32.mrb[0].mxu0
      %1012 = vmatprep.mubr.bf16.mxu0 0
      %1013 = vmatmul.mubr.bf16.gmra.mrb[0].mxu0 %v766
      %v1014 = vpop.f32.mrb[0].mxu0
      %v1015 = vadd.f32 0.0, %v1014
      %v1016 = vpop.f32.mrb[0].mxu0
      %v1017 = vpop.f32.mrb[0].mxu0
      %v1018 = vadd.f32 0.0, %v1017
      %v1019 = vpop.f32.mrb[0].mxu0
      %1020 = vmatprep.mubr.bf16.mxu0 0
      %1021 = vmatmul.mubr.bf16.gmra.mrb[0].mxu0 %v769
      %v1022 = vpop.f32.mrb[0].mxu0
      %v1023 = vadd.f32 0.0, %v1022
      %v1024 = vpop.f32.mrb[0].mxu0
      %v1025 = vpop.f32.mrb[0].mxu0
      %v1026 = vadd.f32 0.0, %v1025
      %v1027 = vpop.f32.mrb[0].mxu0
      %1028 = vmatprep.mubr.bf16.mxu0 0
      %1029 = vmatmul.mubr.bf16.gmra.mrb[0].mxu0 %v772
      %v1030 = vpop.f32.mrb[0].mxu0
      %v1031 = vadd.f32 0.0, %v1030
      %v1032 = vpop.f32.mrb[0].mxu0
      %v1033 = vpop.f32.mrb[0].mxu0
      %v1034 = vadd.f32 0.0, %v1033
      %v1035 = vpop.f32.mrb[0].mxu0
      %1036 = vmatprep.mubr.bf16.mxu0 0
      %1037 = vmatmul.mubr.bf16.gmra.mrb[0].mxu0 %v775
      %v1038 = vpop.f32.mrb[0].mxu0
      %v1039 = vadd.f32 0.0, %v1038
      %v1040 = vpop.f32.mrb[0].mxu0
      %v1041 = vpop.f32.mrb[0].mxu0
      %v1042 = vadd.f32 0.0, %v1041
      %v1043 = vpop.f32.mrb[0].mxu0
      %1044 = vmatprep.mubr.bf16.mxu0 0
      %1045 = vmatmul.mubr.bf16.gmra.mrb[0].mxu0 %v778
      %v1046 = vpop.f32.mrb[0].mxu0
      %v1047 = vadd.f32 0.0, %v1046
      %v1048 = vpop.f32.mrb[0].mxu0
      %v1049 = vpop.f32.mrb[0].mxu0
      %v1050 = vadd.f32 0.0, %v1049
      %v1051 = vpop.f32.mrb[0].mxu0
      %1052 = vmatprep.mubr.bf16.mxu0 0
      %1053 = vmatmul.mubr.bf16.gmra.mrb[0].mxu0 %v781
      %v1054 = vpop.f32.mrb[0].mxu0
      %v1055 = vadd.f32 0.0, %v1054
      %v1056 = vpop.f32.mrb[0].mxu0
      %v1057 = vpop.f32.mrb[0].mxu0
      %v1058 = vadd.f32 0.0, %v1057
      %v1059 = vpop.f32.mrb[0].mxu0
      %1060 = vmatprep.mubr.bf16.mxu0 0
      %1061 = vmatmul.mubr.bf16.gmra.mrb[0].mxu0 %v784
      %v1062 = vpop.f32.mrb[0].mxu0
      %v1063 = vadd.f32 0.0, %v1062
      %v1064 = vpop.f32.mrb[0].mxu0
      %v1065 = vpop.f32.mrb[0].mxu0
      %v1066 = vadd.f32 0.0, %v1065
      %v1067 = vpop.f32.mrb[0].mxu0
      %1068 = vmatprep.mubr.bf16.mxu0 0
      %1069 = vmatmul.mubr.bf16.gmra.mrb[0].mxu0 %v787
      %v1070 = vpop.f32.mrb[0].mxu0
      %v1071 = vadd.f32 0.0, %v1070
      %v1072 = vpop.f32.mrb[0].mxu0
      %v1073 = vpop.f32.mrb[0].mxu0
      %v1074 = vadd.f32 0.0, %v1073
      %v1075 = vpop.f32.mrb[0].mxu0
      %1076 = vmatprep.mubr.bf16.mxu0 0
      %1077 = vmatmul.mubr.bf16.gmra.mrb[0].mxu0 %v790
      %v1078 = vpop.f32.mrb[0].mxu0
      %v1079 = vadd.f32 0.0, %v1078
      %v1080 = vpop.f32.mrb[0].mxu0
      %v1081 = vpop.f32.mrb[0].mxu0
      %v1082 = vadd.f32 0.0, %v1081
      %v1083 = vpop.f32.mrb[0].mxu0
      %1084 = vdwg.mxu0
      %v1087 = vunpack.c.l.b16 %v332
      %v1088 = vunpack.c.l.b16 %v333
      %v1089 = vpack.c.b16 %v1088, %v1087
      %v1091 = vsel %vm695, %v300, 0
      %v1094 = vsel %vm695, %v301, 0
      %v1097 = vsel %vm695, %v302, 0
      %v1100 = vsel %vm695, %v303, 0
      %v1103 = vsel %vm695, %v304, 0
      %v1106 = vsel %vm695, %v305, 0
      %v1109 = vsel %vm695, %v306, 0
      %v1112 = vsel %vm695, %v307, 0
      %v1115 = vsel %vm695, %v308, 0
      %v1118 = vsel %vm695, %v309, 0
      %v1121 = vsel %vm695, %v310, 0
      %v1124 = vsel %vm695, %v311, 0
      %v1127 = vsel %vm695, %v312, 0
      %v1130 = vsel %vm695, %v313, 0
      %v1133 = vsel %vm695, %v314, 0
      %v1136 = vsel %vm695, %v315, 0
      %v1139 = vsel %vm695, %v316, 0
      %v1142 = vsel %vm695, %v317, 0
      %v1145 = vsel %vm695, %v318, 0
      %v1148 = vsel %vm695, %v319, 0
      %v1151 = vsel %vm695, %v320, 0
      %v1154 = vsel %vm695, %v321, 0
      %v1157 = vsel %vm695, %v322, 0
      %v1160 = vsel %vm695, %v323, 0
      %v1163 = vsel %vm695, %v324, 0
      %v1166 = vsel %vm695, %v325, 0
      %v1169 = vsel %vm695, %v326, 0
      %v1172 = vsel %vm695, %v327, 0
      %v1175 = vsel %vm695, %v328, 0
      %v1178 = vsel %vm695, %v329, 0
      %v1181 = vsel %vm695, %v330, 0
      %v1184 = vsel %vm695, %v331, 0
      %v1187 = vsel %vm792, %v1089, 0
      %1189 = vmatprep.subr.bf16.mxu0 0
      %1190 = vmatpush1.bf16.msra.mxu0 %v1187
      %1191 = vmatprep.subr.bf16.mxu0 0
      %1192 = vmatpush1.bf16.msra.mxu0 0
      %1193 = vmatprep.subr.bf16.mxu0 0
      %1194 = vmatpush1.bf16.msra.mxu0 0
      %1195 = vmatprep.subr.bf16.mxu0 0
      %1196 = vmatpush1.bf16.msra.mxu0 0
      %1197 = vmatprep.subr.bf16.mxu0 0
      %1198 = vmatpush1.bf16.msra.mxu0 0
      %1199 = vmatprep.subr.bf16.mxu0 0
      %1200 = vmatpush1.bf16.msra.mxu0 0
      %1201 = vmatprep.subr.bf16.mxu0 0
      %1202 = vmatpush1.bf16.msra.mxu0 0
      %1203 = vmatprep.subr.bf16.mxu0 0
      %1204 = vmatpush1.bf16.msra.mxu0 0
      %1205 = vmatprep.subr.bf16.mxu0 0
      %1206 = vmatpush1.bf16.msra.mxu0 0
      %1207 = vmatprep.subr.bf16.mxu0 0
      %1208 = vmatpush1.bf16.msra.mxu0 0
      %1209 = vmatprep.subr.bf16.mxu0 0
      %1210 = vmatpush1.bf16.msra.mxu0 0
      %1211 = vmatprep.subr.bf16.mxu0 0
      %1212 = vmatpush1.bf16.msra.mxu0 0
      %1213 = vmatprep.subr.bf16.mxu0 0
      %1214 = vmatpush1.bf16.msra.mxu0 0
      %1215 = vmatprep.subr.bf16.mxu0 0
      %1216 = vmatpush1.bf16.msra.mxu0 0
      %1217 = vmatprep.subr.bf16.mxu0 0
      %1218 = vmatpush1.bf16.msra.mxu0 0
      %1219 = vmatprep.subr.bf16.mxu0 0
      %1220 = vmatpush1.bf16.msra.mxu0 0
      %1221 = vmatprep.mubr.bf16.mxu0 0
      %1222 = vmatmul.mubr.bf16.gmra.mrb[0].mxu0 %v1091
      %v1223 = vpop.f32.mrb[0].mxu0
      %v1224 = vadd.f32 %v831, %v1223
      %v1225 = vpop.f32.mrb[0].mxu0
      %v1226 = vpop.f32.mrb[0].mxu0
      %v1227 = vadd.f32 %v834, %v1226
      %v1228 = vpop.f32.mrb[0].mxu0
      %1229 = vmatprep.mubr.bf16.mxu0 0
      %1230 = vmatmul.mubr.bf16.gmra.mrb[0].mxu0 %v1094
      %v1231 = vpop.f32.mrb[0].mxu0
      %v1232 = vadd.f32 %v839, %v1231
      %v1233 = vpop.f32.mrb[0].mxu0
      %v1234 = vpop.f32.mrb[0].mxu0
      %v1235 = vadd.f32 %v842, %v1234
      %v1236 = vpop.f32.mrb[0].mxu0
      %1237 = vmatprep.mubr.bf16.mxu0 0
      %1238 = vmatmul.mubr.bf16.gmra.mrb[0].mxu0 %v1097
      %v1239 = vpop.f32.mrb[0].mxu0
      %v1240 = vadd.f32 %v847, %v1239
      %v1241 = vpop.f32.mrb[0].mxu0
      %v1242 = vpop.f32.mrb[0].mxu0
      %v1243 = vadd.f32 %v850, %v1242
      %v1244 = vpop.f32.mrb[0].mxu0
      %1245 = vmatprep.mubr.bf16.mxu0 0
      %1246 = vmatmul.mubr.bf16.gmra.mrb[0].mxu0 %v1100
      %v1247 = vpop.f32.mrb[0].mxu0
      %v1248 = vadd.f32 %v855, %v1247
      %v1249 = vpop.f32.mrb[0].mxu0
      %v1250 = vpop.f32.mrb[0].mxu0
      %v1251 = vadd.f32 %v858, %v1250
      %v1252 = vpop.f32.mrb[0].mxu0
      %1253 = vmatprep.mubr.bf16.mxu0 0
      %1254 = vmatmul.mubr.bf16.gmra.mrb[0].mxu0 %v1103
      %v1255 = vpop.f32.mrb[0].mxu0
      %v1256 = vadd.f32 %v863, %v1255
      %v1257 = vpop.f32.mrb[0].mxu0
      %v1258 = vpop.f32.mrb[0].mxu0
      %v1259 = vadd.f32 %v866, %v1258
      %v1260 = vpop.f32.mrb[0].mxu0
      %1261 = vmatprep.mubr.bf16.mxu0 0
      %1262 = vmatmul.mubr.bf16.gmra.mrb[0].mxu0 %v1106
      %v1263 = vpop.f32.mrb[0].mxu0
      %v1264 = vadd.f32 %v871, %v1263
      %v1265 = vpop.f32.mrb[0].mxu0
      %v1266 = vpop.f32.mrb[0].mxu0
      %v1267 = vadd.f32 %v874, %v1266
      %v1268 = vpop.f32.mrb[0].mxu0
      %1269 = vmatprep.mubr.bf16.mxu0 0
      %1270 = vmatmul.mubr.bf16.gmra.mrb[0].mxu0 %v1109
      %v1271 = vpop.f32.mrb[0].mxu0
      %v1272 = vadd.f32 %v879, %v1271
      %v1273 = vpop.f32.mrb[0].mxu0
      %v1274 = vpop.f32.mrb[0].mxu0
      %v1275 = vadd.f32 %v882, %v1274
      %v1276 = vpop.f32.mrb[0].mxu0
      %1277 = vmatprep.mubr.bf16.mxu0 0
      %1278 = vmatmul.mubr.bf16.gmra.mrb[0].mxu0 %v1112
      %v1279 = vpop.f32.mrb[0].mxu0
      %v1280 = vadd.f32 %v887, %v1279
      %v1281 = vpop.f32.mrb[0].mxu0
      %v1282 = vpop.f32.mrb[0].mxu0
      %v1283 = vadd.f32 %v890, %v1282
      %v1284 = vpop.f32.mrb[0].mxu0
      %1285 = vmatprep.mubr.bf16.mxu0 0
      %1286 = vmatmul.mubr.bf16.gmra.mrb[0].mxu0 %v1115
      %v1287 = vpop.f32.mrb[0].mxu0
      %v1288 = vadd.f32 %v895, %v1287
      %v1289 = vpop.f32.mrb[0].mxu0
      %v1290 = vpop.f32.mrb[0].mxu0
      %v1291 = vadd.f32 %v898, %v1290
      %v1292 = vpop.f32.mrb[0].mxu0
      %1293 = vmatprep.mubr.bf16.mxu0 0
      %1294 = vmatmul.mubr.bf16.gmra.mrb[0].mxu0 %v1118
      %v1295 = vpop.f32.mrb[0].mxu0
      %v1296 = vadd.f32 %v903, %v1295
      %v1297 = vpop.f32.mrb[0].mxu0
      %v1298 = vpop.f32.mrb[0].mxu0
      %v1299 = vadd.f32 %v906, %v1298
      %v1300 = vpop.f32.mrb[0].mxu0
      %1301 = vmatprep.mubr.bf16.mxu0 0
      %1302 = vmatmul.mubr.bf16.gmra.mrb[0].mxu0 %v1121
      %v1303 = vpop.f32.mrb[0].mxu0
      %v1304 = vadd.f32 %v911, %v1303
      %v1305 = vpop.f32.mrb[0].mxu0
      %v1306 = vpop.f32.mrb[0].mxu0
      %v1307 = vadd.f32 %v914, %v1306
      %v1308 = vpop.f32.mrb[0].mxu0
      %1309 = vmatprep.mubr.bf16.mxu0 0
      %1310 = vmatmul.mubr.bf16.gmra.mrb[0].mxu0 %v1124
      %v1311 = vpop.f32.mrb[0].mxu0
      %v1312 = vadd.f32 %v919, %v1311
      %v1313 = vpop.f32.mrb[0].mxu0
      %v1314 = vpop.f32.mrb[0].mxu0
      %v1315 = vadd.f32 %v922, %v1314
      %v1316 = vpop.f32.mrb[0].mxu0
      %1317 = vmatprep.mubr.bf16.mxu0 0
      %1318 = vmatmul.mubr.bf16.gmra.mrb[0].mxu0 %v1127
      %v1319 = vpop.f32.mrb[0].mxu0
      %v1320 = vadd.f32 %v927, %v1319
      %v1321 = vpop.f32.mrb[0].mxu0
      %v1322 = vpop.f32.mrb[0].mxu0
      %v1323 = vadd.f32 %v930, %v1322
      %v1324 = vpop.f32.mrb[0].mxu0
      %1325 = vmatprep.mubr.bf16.mxu0 0
      %1326 = vmatmul.mubr.bf16.gmra.mrb[0].mxu0 %v1130
      %v1327 = vpop.f32.mrb[0].mxu0
      %v1328 = vadd.f32 %v935, %v1327
      %v1329 = vpop.f32.mrb[0].mxu0
      %v1330 = vpop.f32.mrb[0].mxu0
      %v1331 = vadd.f32 %v938, %v1330
      %v1332 = vpop.f32.mrb[0].mxu0
      %1333 = vmatprep.mubr.bf16.mxu0 0
      %1334 = vmatmul.mubr.bf16.gmra.mrb[0].mxu0 %v1133
      %v1335 = vpop.f32.mrb[0].mxu0
      %v1336 = vadd.f32 %v943, %v1335
      %v1337 = vpop.f32.mrb[0].mxu0
      %v1338 = vpop.f32.mrb[0].mxu0
      %v1339 = vadd.f32 %v946, %v1338
      %v1340 = vpop.f32.mrb[0].mxu0
      %1341 = vmatprep.mubr.bf16.mxu0 0
      %1342 = vmatmul.mubr.bf16.gmra.mrb[0].mxu0 %v1136
      %v1343 = vpop.f32.mrb[0].mxu0
      %v1344 = vadd.f32 %v951, %v1343
      %v1345 = vpop.f32.mrb[0].mxu0
      %v1346 = vpop.f32.mrb[0].mxu0
      %v1347 = vadd.f32 %v954, %v1346
      %v1348 = vpop.f32.mrb[0].mxu0
      %1349 = vmatprep.mubr.bf16.mxu0 0
      %1350 = vmatmul.mubr.bf16.gmra.mrb[0].mxu0 %v1139
      %v1351 = vpop.f32.mrb[0].mxu0
      %v1352 = vadd.f32 %v959, %v1351
      %v1353 = vpop.f32.mrb[0].mxu0
      %v1354 = vpop.f32.mrb[0].mxu0
      %v1355 = vadd.f32 %v962, %v1354
      %v1356 = vpop.f32.mrb[0].mxu0
      %1357 = vmatprep.mubr.bf16.mxu0 0
      %1358 = vmatmul.mubr.bf16.gmra.mrb[0].mxu0 %v1142
      %v1359 = vpop.f32.mrb[0].mxu0
      %v1360 = vadd.f32 %v967, %v1359
      %v1361 = vpop.f32.mrb[0].mxu0
      %v1362 = vpop.f32.mrb[0].mxu0
      %v1363 = vadd.f32 %v970, %v1362
      %v1364 = vpop.f32.mrb[0].mxu0
      %1365 = vmatprep.mubr.bf16.mxu0 0
      %1366 = vmatmul.mubr.bf16.gmra.mrb[0].mxu0 %v1145
      %v1367 = vpop.f32.mrb[0].mxu0
      %v1368 = vadd.f32 %v975, %v1367
      %v1369 = vpop.f32.mrb[0].mxu0
      %v1370 = vpop.f32.mrb[0].mxu0
      %v1371 = vadd.f32 %v978, %v1370
      %v1372 = vpop.f32.mrb[0].mxu0
      %1373 = vmatprep.mubr.bf16.mxu0 0
      %1374 = vmatmul.mubr.bf16.gmra.mrb[0].mxu0 %v1148
      %v1375 = vpop.f32.mrb[0].mxu0
      %v1376 = vadd.f32 %v983, %v1375
      %v1377 = vpop.f32.mrb[0].mxu0
      %v1378 = vpop.f32.mrb[0].mxu0
      %v1379 = vadd.f32 %v986, %v1378
      %v1380 = vpop.f32.mrb[0].mxu0
      %1381 = vmatprep.mubr.bf16.mxu0 0
      %1382 = vmatmul.mubr.bf16.gmra.mrb[0].mxu0 %v1151
      %v1383 = vpop.f32.mrb[0].mxu0
      %v1384 = vadd.f32 %v991, %v1383
      %v1385 = vpop.f32.mrb[0].mxu0
      %v1386 = vpop.f32.mrb[0].mxu0
      %v1387 = vadd.f32 %v994, %v1386
      %v1388 = vpop.f32.mrb[0].mxu0
      %1389 = vmatprep.mubr.bf16.mxu0 0
      %1390 = vmatmul.mubr.bf16.gmra.mrb[0].mxu0 %v1154
      %v1391 = vpop.f32.mrb[0].mxu0
      %v1392 = vadd.f32 %v999, %v1391
      %v1393 = vpop.f32.mrb[0].mxu0
      %v1394 = vpop.f32.mrb[0].mxu0
      %v1395 = vadd.f32 %v1002, %v1394
      %v1396 = vpop.f32.mrb[0].mxu0
      %1397 = vmatprep.mubr.bf16.mxu0 0
      %1398 = vmatmul.mubr.bf16.gmra.mrb[0].mxu0 %v1157
      %v1399 = vpop.f32.mrb[0].mxu0
      %v1400 = vadd.f32 %v1007, %v1399
      %v1401 = vpop.f32.mrb[0].mxu0
      %v1402 = vpop.f32.mrb[0].mxu0
      %v1403 = vadd.f32 %v1010, %v1402
      %v1404 = vpop.f32.mrb[0].mxu0
      %1405 = vmatprep.mubr.bf16.mxu0 0
      %1406 = vmatmul.mubr.bf16.gmra.mrb[0].mxu0 %v1160
      %v1407 = vpop.f32.mrb[0].mxu0
      %v1408 = vadd.f32 %v1015, %v1407
      %v1409 = vpop.f32.mrb[0].mxu0
      %v1410 = vpop.f32.mrb[0].mxu0
      %v1411 = vadd.f32 %v1018, %v1410
      %v1412 = vpop.f32.mrb[0].mxu0
      %1413 = vmatprep.mubr.bf16.mxu0 0
      %1414 = vmatmul.mubr.bf16.gmra.mrb[0].mxu0 %v1163
      %v1415 = vpop.f32.mrb[0].mxu0
      %v1416 = vadd.f32 %v1023, %v1415
      %v1417 = vpop.f32.mrb[0].mxu0
      %v1418 = vpop.f32.mrb[0].mxu0
      %v1419 = vadd.f32 %v1026, %v1418
      %v1420 = vpop.f32.mrb[0].mxu0
      %1421 = vmatprep.mubr.bf16.mxu0 0
      %1422 = vmatmul.mubr.bf16.gmra.mrb[0].mxu0 %v1166
      %v1423 = vpop.f32.mrb[0].mxu0
      %v1424 = vadd.f32 %v1031, %v1423
      %v1425 = vpop.f32.mrb[0].mxu0
      %v1426 = vpop.f32.mrb[0].mxu0
      %v1427 = vadd.f32 %v1034, %v1426
      %v1428 = vpop.f32.mrb[0].mxu0
      %1429 = vmatprep.mubr.bf16.mxu0 0
      %1430 = vmatmul.mubr.bf16.gmra.mrb[0].mxu0 %v1169
      %v1431 = vpop.f32.mrb[0].mxu0
      %v1432 = vadd.f32 %v1039, %v1431
      %v1433 = vpop.f32.mrb[0].mxu0
      %v1434 = vpop.f32.mrb[0].mxu0
      %v1435 = vadd.f32 %v1042, %v1434
      %v1436 = vpop.f32.mrb[0].mxu0
      %1437 = vmatprep.mubr.bf16.mxu0 0
      %1438 = vmatmul.mubr.bf16.gmra.mrb[0].mxu0 %v1172
      %v1439 = vpop.f32.mrb[0].mxu0
      %v1440 = vadd.f32 %v1047, %v1439
      %v1441 = vpop.f32.mrb[0].mxu0
      %v1442 = vpop.f32.mrb[0].mxu0
      %v1443 = vadd.f32 %v1050, %v1442
      %v1444 = vpop.f32.mrb[0].mxu0
      %1445 = vmatprep.mubr.bf16.mxu0 0
      %1446 = vmatmul.mubr.bf16.gmra.mrb[0].mxu0 %v1175
      %v1447 = vpop.f32.mrb[0].mxu0
      %v1448 = vadd.f32 %v1055, %v1447
      %v1449 = vpop.f32.mrb[0].mxu0
      %v1450 = vpop.f32.mrb[0].mxu0
      %v1451 = vadd.f32 %v1058, %v1450
      %v1452 = vpop.f32.mrb[0].mxu0
      %1453 = vmatprep.mubr.bf16.mxu0 0
      %1454 = vmatmul.mubr.bf16.gmra.mrb[0].mxu0 %v1178
      %v1455 = vpop.f32.mrb[0].mxu0
      %v1456 = vadd.f32 %v1063, %v1455
      %v1457 = vpop.f32.mrb[0].mxu0
      %v1458 = vpop.f32.mrb[0].mxu0
      %v1459 = vadd.f32 %v1066, %v1458
      %v1460 = vpop.f32.mrb[0].mxu0
      %1461 = vmatprep.mubr.bf16.mxu0 0
      %1462 = vmatmul.mubr.bf16.gmra.mrb[0].mxu0 %v1181
      %v1463 = vpop.f32.mrb[0].mxu0
      %v1464 = vadd.f32 %v1071, %v1463
      %v1465 = vpop.f32.mrb[0].mxu0
      %v1466 = vpop.f32.mrb[0].mxu0
      %v1467 = vadd.f32 %v1074, %v1466
      %v1468 = vpop.f32.mrb[0].mxu0
      %1469 = vmatprep.mubr.bf16.mxu0 0
      %1470 = vmatmul.mubr.bf16.gmra.mrb[0].mxu0 %v1184
      %v1471 = vpop.f32.mrb[0].mxu0
      %v1472 = vadd.f32 %v1079, %v1471
      %v1473 = vpop.f32.mrb[0].mxu0
      %v1474 = vpop.f32.mrb[0].mxu0
      %v1475 = vadd.f32 %v1082, %v1474
      %v1476 = vpop.f32.mrb[0].mxu0
      %1477 = vdwg.mxu0
      %s1478 = scalar_lea.vmem %s165, 20
      %v1479 = vld [vmem:[%s1478] sm:$0xf]
      %v1480 = vld [vmem:[%s1478 + $0x4] sm:$0xf]
      %v1481 = vld [vmem:[%s1478 + $0x8] sm:$0xf]
      %v1482 = vld [vmem:[%s1478 + $0xc] sm:$0xf]
      %v1483 = vld [vmem:[%s1478 + $0x14] sm:$0xf]
      %v1484 = vld [vmem:[%s1478 + $0x18] sm:$0xf]
      %v1485 = vld [vmem:[%s1478 + $0x1c] sm:$0xf]
      %v1486 = vld [vmem:[%s1478 + $0x20] sm:$0xf]
      %v1487 = vld [vmem:[%s1478 + $0x28] sm:$0xf]
      %v1488 = vld [vmem:[%s1478 + $0x2c] sm:$0xf]
      %v1489 = vld [vmem:[%s1478 + $0x30] sm:$0xf]
      %v1490 = vld [vmem:[%s1478 + $0x34] sm:$0xf]
      %v1491 = vld [vmem:[%s1478 + $0x3c] sm:$0xf]
      %v1492 = vld [vmem:[%s1478 + $0x40] sm:$0xf]
      %v1493 = vld [vmem:[%s1478 + $0x44] sm:$0xf]
      %v1494 = vld [vmem:[%s1478 + $0x48] sm:$0xf]
      %v1495 = vld [vmem:[%s1478 + $0x50] sm:$0xf]
      %v1496 = vld [vmem:[%s1478 + $0x54] sm:$0xf]
      %v1497 = vld [vmem:[%s1478 + $0x58] sm:$0xf]
      %v1498 = vld [vmem:[%s1478 + $0x5c] sm:$0xf]
      %v1499 = vld [vmem:[%s1478 + $0x64] sm:$0xf]
      %v1500 = vld [vmem:[%s1478 + $0x68] sm:$0xf]
      %v1501 = vld [vmem:[%s1478 + $0x6c] sm:$0xf]
      %v1502 = vld [vmem:[%s1478 + $0x70] sm:$0xf]
      %v1503 = vld [vmem:[%s1478 + $0x78] sm:$0xf]
      %v1504 = vld [vmem:[%s1478 + $0x7c] sm:$0xf]
      %v1505 = vld [vmem:[%s1478 + $0x80] sm:$0xf]
      %v1506 = vld [vmem:[%s1478 + $0x84] sm:$0xf]
      %v1507 = vld [vmem:[%s1478 + $0x8c] sm:$0xf]
      %v1508 = vld [vmem:[%s1478 + $0x90] sm:$0xf]
      %v1509 = vld [vmem:[%s1478 + $0x94] sm:$0xf]
      %v1510 = vld [vmem:[%s1478 + $0x98] sm:$0xf]
      %v1511 = vld [vmem:[%s1478 + $0xa0] sm:$0xf]
      %v1512 = vld [vmem:[%s1478 + $0xa4] sm:$0xf]
      %v1513 = vld [vmem:[%s1478 + $0xa8] sm:$0xf]
      %v1514 = vld [vmem:[%s1478 + $0xac] sm:$0xf]
      %v1515 = vld [vmem:[%s1478 + $0xb4] sm:$0xf]
      %v1516 = vld [vmem:[%s1478 + $0xb8] sm:$0xf]
      %v1517 = vld [vmem:[%s1478 + $0xbc] sm:$0xf]
      %v1518 = vld [vmem:[%s1478 + $0xc0] sm:$0xf]
      %v1519 = vld [vmem:[%s1478 + $0xc8] sm:$0xf]
      %v1520 = vld [vmem:[%s1478 + $0xcc] sm:$0xf]
      %v1521 = vld [vmem:[%s1478 + $0xd0] sm:$0xf]
      %v1522 = vld [vmem:[%s1478 + $0xd4] sm:$0xf]
      %v1523 = vld [vmem:[%s1478 + $0xdc] sm:$0xf]
      %v1524 = vld [vmem:[%s1478 + $0xe0] sm:$0xf]
      %v1525 = vld [vmem:[%s1478 + $0xe4] sm:$0xf]
      %v1526 = vld [vmem:[%s1478 + $0xe8] sm:$0xf]
      %v1527 = vld [vmem:[%s1478 + $0xf0] sm:$0xf]
      %v1528 = vld [vmem:[%s1478 + $0xf4] sm:$0xf]
      %v1529 = vld [vmem:[%s1478 + $0xf8] sm:$0xf]
      %v1530 = vld [vmem:[%s1478 + $0xfc] sm:$0xf]
      %v1531 = vld [vmem:[%s1478 + $0x104] sm:$0xf]
      %v1532 = vld [vmem:[%s1478 + $0x108] sm:$0xf]
      %v1533 = vld [vmem:[%s1478 + $0x10c] sm:$0xf]
      %v1534 = vld [vmem:[%s1478 + $0x110] sm:$0xf]
      %v1535 = vld [vmem:[%s1478 + $0x118] sm:$0xf]
      %v1536 = vld [vmem:[%s1478 + $0x11c] sm:$0xf]
      %v1537 = vld [vmem:[%s1478 + $0x120] sm:$0xf]
      %v1538 = vld [vmem:[%s1478 + $0x124] sm:$0xf]
      %v1539 = vld [vmem:[%s1478 + $0x12c] sm:$0xf]
      %v1540 = vld [vmem:[%s1478 + $0x130] sm:$0xf]
      %v1541 = vld [vmem:[%s1478 + $0x134] sm:$0xf]
      %v1542 = vld [vmem:[%s1478 + $0x138] sm:$0xf]
      %v1543 = vunpack.c.l.bf16 %v1479
      %v1544 = vunpack.c.l.bf16 %v1480
      %v1545 = vunpack.c.l.bf16 %v1481
      %v1546 = vunpack.c.l.bf16 %v1482
      %v1547 = vunpack.c.l.bf16 %v1483
      %v1548 = vunpack.c.l.bf16 %v1484
      %v1549 = vunpack.c.l.bf16 %v1485
      %v1550 = vunpack.c.l.bf16 %v1486
      %v1551 = vunpack.c.l.bf16 %v1487
      %v1552 = vunpack.c.l.bf16 %v1488
      %v1553 = vunpack.c.l.bf16 %v1489
      %v1554 = vunpack.c.l.bf16 %v1490
      %v1555 = vunpack.c.l.bf16 %v1491
      %v1556 = vunpack.c.l.bf16 %v1492
      %v1557 = vunpack.c.l.bf16 %v1493
      %v1558 = vunpack.c.l.bf16 %v1494
      %v1559 = vunpack.c.l.bf16 %v1495
      %v1560 = vunpack.c.l.bf16 %v1496
      %v1561 = vunpack.c.l.bf16 %v1497
      %v1562 = vunpack.c.l.bf16 %v1498
      %v1563 = vunpack.c.l.bf16 %v1499
      %v1564 = vunpack.c.l.bf16 %v1500
      %v1565 = vunpack.c.l.bf16 %v1501
      %v1566 = vunpack.c.l.bf16 %v1502
      %v1567 = vunpack.c.l.bf16 %v1503
      %v1568 = vunpack.c.l.bf16 %v1504
      %v1569 = vunpack.c.l.bf16 %v1505
      %v1570 = vunpack.c.l.bf16 %v1506
      %v1571 = vunpack.c.l.bf16 %v1507
      %v1572 = vunpack.c.l.bf16 %v1508
      %v1573 = vunpack.c.l.bf16 %v1509
      %v1574 = vunpack.c.l.bf16 %v1510
      %v1575 = vunpack.c.l.bf16 %v1511
      %v1576 = vunpack.c.l.bf16 %v1512
      %v1577 = vunpack.c.l.bf16 %v1513
      %v1578 = vunpack.c.l.bf16 %v1514
      %v1579 = vunpack.c.l.bf16 %v1515
      %v1580 = vunpack.c.l.bf16 %v1516
      %v1581 = vunpack.c.l.bf16 %v1517
      %v1582 = vunpack.c.l.bf16 %v1518
      %v1583 = vunpack.c.l.bf16 %v1519
      %v1584 = vunpack.c.l.bf16 %v1520
      %v1585 = vunpack.c.l.bf16 %v1521
      %v1586 = vunpack.c.l.bf16 %v1522
      %v1587 = vunpack.c.l.bf16 %v1523
      %v1588 = vunpack.c.l.bf16 %v1524
      %v1589 = vunpack.c.l.bf16 %v1525
      %v1590 = vunpack.c.l.bf16 %v1526
      %v1591 = vunpack.c.l.bf16 %v1527
      %v1592 = vunpack.c.l.bf16 %v1528
      %v1593 = vunpack.c.l.bf16 %v1529
      %v1594 = vunpack.c.l.bf16 %v1530
      %v1595 = vunpack.c.l.bf16 %v1531
      %v1596 = vunpack.c.l.bf16 %v1532
      %v1597 = vunpack.c.l.bf16 %v1533
      %v1598 = vunpack.c.l.bf16 %v1534
      %v1599 = vunpack.c.l.bf16 %v1535
      %v1600 = vunpack.c.l.bf16 %v1536
      %v1601 = vunpack.c.l.bf16 %v1537
      %v1602 = vunpack.c.l.bf16 %v1538
      %v1603 = vunpack.c.l.bf16 %v1539
      %v1604 = vunpack.c.l.bf16 %v1540
      %v1605 = vunpack.c.l.bf16 %v1541
      %v1606 = vunpack.c.l.bf16 %v1542
      %v1607 = vpack.c.bf16 %v1544, %v1543
      %v1608 = vpack.c.bf16 %v1546, %v1545
      %v1609 = vpack.c.bf16 %v1548, %v1547
      %v1610 = vpack.c.bf16 %v1550, %v1549
      %v1611 = vpack.c.bf16 %v1552, %v1551
      %v1612 = vpack.c.bf16 %v1554, %v1553
      %v1613 = vpack.c.bf16 %v1556, %v1555
      %v1614 = vpack.c.bf16 %v1558, %v1557
      %v1615 = vpack.c.bf16 %v1560, %v1559
      %v1616 = vpack.c.bf16 %v1562, %v1561
      %v1617 = vpack.c.bf16 %v1564, %v1563
      %v1618 = vpack.c.bf16 %v1566, %v1565
      %v1619 = vpack.c.bf16 %v1568, %v1567
      %v1620 = vpack.c.bf16 %v1570, %v1569
      %v1621 = vpack.c.bf16 %v1572, %v1571
      %v1622 = vpack.c.bf16 %v1574, %v1573
      %v1623 = vpack.c.bf16 %v1576, %v1575
      %v1624 = vpack.c.bf16 %v1578, %v1577
      %v1625 = vpack.c.bf16 %v1580, %v1579
      %v1626 = vpack.c.bf16 %v1582, %v1581
      %v1627 = vpack.c.bf16 %v1584, %v1583
      %v1628 = vpack.c.bf16 %v1586, %v1585
      %v1629 = vpack.c.bf16 %v1588, %v1587
      %v1630 = vpack.c.bf16 %v1590, %v1589
      %v1631 = vpack.c.bf16 %v1592, %v1591
      %v1632 = vpack.c.bf16 %v1594, %v1593
      %v1633 = vpack.c.bf16 %v1596, %v1595
      %v1634 = vpack.c.bf16 %v1598, %v1597
      %v1635 = vpack.c.bf16 %v1600, %v1599
      %v1636 = vpack.c.bf16 %v1602, %v1601
      %v1637 = vpack.c.bf16 %v1604, %v1603
      %v1638 = vpack.c.bf16 %v1606, %v1605
      %s1639 = scalar_lea.vmem %s1, 16
      %v1640 = vld [vmem:[%s1639] sm:$0xf]
      %v1641 = vld [vmem:[%s1639 + $0x4] sm:$0x3]
      %v1644 = vunpack.c.l.b16 %v1640
      %v1645 = vunpack.c.l.b16 %v1641
      %v1646 = vpack.c.b16 %v1645, %v1644
      %v1648 = vsel %vm695, %v1607, 0
      %v1651 = vsel %vm695, %v1608, 0
      %v1654 = vsel %vm695, %v1609, 0
      %v1657 = vsel %vm695, %v1610, 0
      %v1660 = vsel %vm695, %v1611, 0
      %v1663 = vsel %vm695, %v1612, 0
      %v1666 = vsel %vm695, %v1613, 0
      %v1669 = vsel %vm695, %v1614, 0
      %v1672 = vsel %vm695, %v1615, 0
      %v1675 = vsel %vm695, %v1616, 0
      %v1678 = vsel %vm695, %v1617, 0
      %v1681 = vsel %vm695, %v1618, 0
      %v1684 = vsel %vm695, %v1619, 0
      %v1687 = vsel %vm695, %v1620, 0
      %v1690 = vsel %vm695, %v1621, 0
      %v1693 = vsel %vm695, %v1622, 0
      %v1696 = vsel %vm695, %v1623, 0
      %v1699 = vsel %vm695, %v1624, 0
      %v1702 = vsel %vm695, %v1625, 0
      %v1705 = vsel %vm695, %v1626, 0
      %v1708 = vsel %vm695, %v1627, 0
      %v1711 = vsel %vm695, %v1628, 0
      %v1714 = vsel %vm695, %v1629, 0
      %v1717 = vsel %vm695, %v1630, 0
      %v1720 = vsel %vm695, %v1631, 0
      %v1723 = vsel %vm695, %v1632, 0
      %v1726 = vsel %vm695, %v1633, 0
      %v1729 = vsel %vm695, %v1634, 0
      %v1732 = vsel %vm695, %v1635, 0
      %v1735 = vsel %vm695, %v1636, 0
      %v1738 = vsel %vm695, %v1637, 0
      %v1741 = vsel %vm695, %v1638, 0
      %v1744 = vsel %vm792, %v1646, 0
      %1746 = vmatprep.subr.bf16.mxu0 0
      %1747 = vmatpush1.bf16.msra.mxu0 %v1744
      %1748 = vmatprep.subr.bf16.mxu0 0
      %1749 = vmatpush1.bf16.msra.mxu0 0
      %1750 = vmatprep.subr.bf16.mxu0 0
      %1751 = vmatpush1.bf16.msra.mxu0 0
      %1752 = vmatprep.subr.bf16.mxu0 0
      %1753 = vmatpush1.bf16.msra.mxu0 0
      %1754 = vmatprep.subr.bf16.mxu0 0
      %1755 = vmatpush1.bf16.msra.mxu0 0
      %1756 = vmatprep.subr.bf16.mxu0 0
      %1757 = vmatpush1.bf16.msra.mxu0 0
      %1758 = vmatprep.subr.bf16.mxu0 0
      %1759 = vmatpush1.bf16.msra.mxu0 0
      %1760 = vmatprep.subr.bf16.mxu0 0
      %1761 = vmatpush1.bf16.msra.mxu0 0
      %1762 = vmatprep.subr.bf16.mxu0 0
      %1763 = vmatpush1.bf16.msra.mxu0 0
      %1764 = vmatprep.subr.bf16.mxu0 0
      %1765 = vmatpush1.bf16.msra.mxu0 0
      %1766 = vmatprep.subr.bf16.mxu0 0
      %1767 = vmatpush1.bf16.msra.mxu0 0
      %1768 = vmatprep.subr.bf16.mxu0 0
      %1769 = vmatpush1.bf16.msra.mxu0 0
      %1770 = vmatprep.subr.bf16.mxu0 0
      %1771 = vmatpush1.bf16.msra.mxu0 0
      %1772 = vmatprep.subr.bf16.mxu0 0
      %1773 = vmatpush1.bf16.msra.mxu0 0
      %1774 = vmatprep.subr.bf16.mxu0 0
      %1775 = vmatpush1.bf16.msra.mxu0 0
      %1776 = vmatprep.subr.bf16.mxu0 0
      %1777 = vmatpush1.bf16.msra.mxu0 0
      %1778 = vmatprep.mubr.bf16.mxu0 0
      %1779 = vmatmul.mubr.bf16.gmra.mrb[0].mxu0 %v1648
      %v1780 = vpop.f32.mrb[0].mxu0
      %v1781 = vadd.f32 0.0, %v1780
      %v1782 = vpop.f32.mrb[0].mxu0
      %v1783 = vpop.f32.mrb[0].mxu0
      %v1784 = vadd.f32 0.0, %v1783
      %v1785 = vpop.f32.mrb[0].mxu0
      %1786 = vmatprep.mubr.bf16.mxu0 0
      %1787 = vmatmul.mubr.bf16.gmra.mrb[0].mxu0 %v1651
      %v1788 = vpop.f32.mrb[0].mxu0
      %v1789 = vadd.f32 0.0, %v1788
      %v1790 = vpop.f32.mrb[0].mxu0
      %v1791 = vpop.f32.mrb[0].mxu0
      %v1792 = vadd.f32 0.0, %v1791
      %v1793 = vpop.f32.mrb[0].mxu0
      %1794 = vmatprep.mubr.bf16.mxu0 0
      %1795 = vmatmul.mubr.bf16.gmra.mrb[0].mxu0 %v1654
      %v1796 = vpop.f32.mrb[0].mxu0
      %v1797 = vadd.f32 0.0, %v1796
      %v1798 = vpop.f32.mrb[0].mxu0
      %v1799 = vpop.f32.mrb[0].mxu0
      %v1800 = vadd.f32 0.0, %v1799
      %v1801 = vpop.f32.mrb[0].mxu0
      %1802 = vmatprep.mubr.bf16.mxu0 0
      %1803 = vmatmul.mubr.bf16.gmra.mrb[0].mxu0 %v1657
      %v1804 = vpop.f32.mrb[0].mxu0
      %v1805 = vadd.f32 0.0, %v1804
      %v1806 = vpop.f32.mrb[0].mxu0
      %v1807 = vpop.f32.mrb[0].mxu0
      %v1808 = vadd.f32 0.0, %v1807
      %v1809 = vpop.f32.mrb[0].mxu0
      %1810 = vmatprep.mubr.bf16.mxu0 0
      %1811 = vmatmul.mubr.bf16.gmra.mrb[0].mxu0 %v1660
      %v1812 = vpop.f32.mrb[0].mxu0
      %v1813 = vadd.f32 0.0, %v1812
      %v1814 = vpop.f32.mrb[0].mxu0
      %v1815 = vpop.f32.mrb[0].mxu0
      %v1816 = vadd.f32 0.0, %v1815
      %v1817 = vpop.f32.mrb[0].mxu0
      %1818 = vmatprep.mubr.bf16.mxu0 0
      %1819 = vmatmul.mubr.bf16.gmra.mrb[0].mxu0 %v1663
      %v1820 = vpop.f32.mrb[0].mxu0
      %v1821 = vadd.f32 0.0, %v1820
      %v1822 = vpop.f32.mrb[0].mxu0
      %v1823 = vpop.f32.mrb[0].mxu0
      %v1824 = vadd.f32 0.0, %v1823
      %v1825 = vpop.f32.mrb[0].mxu0
      %1826 = vmatprep.mubr.bf16.mxu0 0
      %1827 = vmatmul.mubr.bf16.gmra.mrb[0].mxu0 %v1666
      %v1828 = vpop.f32.mrb[0].mxu0
      %v1829 = vadd.f32 0.0, %v1828
      %v1830 = vpop.f32.mrb[0].mxu0
      %v1831 = vpop.f32.mrb[0].mxu0
      %v1832 = vadd.f32 0.0, %v1831
      %v1833 = vpop.f32.mrb[0].mxu0
      %1834 = vmatprep.mubr.bf16.mxu0 0
      %1835 = vmatmul.mubr.bf16.gmra.mrb[0].mxu0 %v1669
      %v1836 = vpop.f32.mrb[0].mxu0
      %v1837 = vadd.f32 0.0, %v1836
      %v1838 = vpop.f32.mrb[0].mxu0
      %v1839 = vpop.f32.mrb[0].mxu0
      %v1840 = vadd.f32 0.0, %v1839
      %v1841 = vpop.f32.mrb[0].mxu0
      %1842 = vmatprep.mubr.bf16.mxu0 0
      %1843 = vmatmul.mubr.bf16.gmra.mrb[0].mxu0 %v1672
      %v1844 = vpop.f32.mrb[0].mxu0
      %v1845 = vadd.f32 0.0, %v1844
      %v1846 = vpop.f32.mrb[0].mxu0
      %v1847 = vpop.f32.mrb[0].mxu0
      %v1848 = vadd.f32 0.0, %v1847
      %v1849 = vpop.f32.mrb[0].mxu0
      %1850 = vmatprep.mubr.bf16.mxu0 0
      %1851 = vmatmul.mubr.bf16.gmra.mrb[0].mxu0 %v1675
      %v1852 = vpop.f32.mrb[0].mxu0
      %v1853 = vadd.f32 0.0, %v1852
      %v1854 = vpop.f32.mrb[0].mxu0
      %v1855 = vpop.f32.mrb[0].mxu0
      %v1856 = vadd.f32 0.0, %v1855
      %v1857 = vpop.f32.mrb[0].mxu0
      %1858 = vmatprep.mubr.bf16.mxu0 0
      %1859 = vmatmul.mubr.bf16.gmra.mrb[0].mxu0 %v1678
      %v1860 = vpop.f32.mrb[0].mxu0
      %v1861 = vadd.f32 0.0, %v1860
      %v1862 = vpop.f32.mrb[0].mxu0
      %v1863 = vpop.f32.mrb[0].mxu0
      %v1864 = vadd.f32 0.0, %v1863
      %v1865 = vpop.f32.mrb[0].mxu0
      %1866 = vmatprep.mubr.bf16.mxu0 0
      %1867 = vmatmul.mubr.bf16.gmra.mrb[0].mxu0 %v1681
      %v1868 = vpop.f32.mrb[0].mxu0
      %v1869 = vadd.f32 0.0, %v1868
      %v1870 = vpop.f32.mrb[0].mxu0
      %v1871 = vpop.f32.mrb[0].mxu0
      %v1872 = vadd.f32 0.0, %v1871
      %v1873 = vpop.f32.mrb[0].mxu0
      %1874 = vmatprep.mubr.bf16.mxu0 0
      %1875 = vmatmul.mubr.bf16.gmra.mrb[0].mxu0 %v1684
      %v1876 = vpop.f32.mrb[0].mxu0
      %v1877 = vadd.f32 0.0, %v1876
      %v1878 = vpop.f32.mrb[0].mxu0
      %v1879 = vpop.f32.mrb[0].mxu0
      %v1880 = vadd.f32 0.0, %v1879
      %v1881 = vpop.f32.mrb[0].mxu0
      %1882 = vmatprep.mubr.bf16.mxu0 0
      %1883 = vmatmul.mubr.bf16.gmra.mrb[0].mxu0 %v1687
      %v1884 = vpop.f32.mrb[0].mxu0
      %v1885 = vadd.f32 0.0, %v1884
      %v1886 = vpop.f32.mrb[0].mxu0
      %v1887 = vpop.f32.mrb[0].mxu0
      %v1888 = vadd.f32 0.0, %v1887
      %v1889 = vpop.f32.mrb[0].mxu0
      %1890 = vmatprep.mubr.bf16.mxu0 0
      %1891 = vmatmul.mubr.bf16.gmra.mrb[0].mxu0 %v1690
      %v1892 = vpop.f32.mrb[0].mxu0
      %v1893 = vadd.f32 0.0, %v1892
      %v1894 = vpop.f32.mrb[0].mxu0
      %v1895 = vpop.f32.mrb[0].mxu0
      %v1896 = vadd.f32 0.0, %v1895
      %v1897 = vpop.f32.mrb[0].mxu0
      %1898 = vmatprep.mubr.bf16.mxu0 0
      %1899 = vmatmul.mubr.bf16.gmra.mrb[0].mxu0 %v1693
      %v1900 = vpop.f32.mrb[0].mxu0
      %v1901 = vadd.f32 0.0, %v1900
      %v1902 = vpop.f32.mrb[0].mxu0
      %v1903 = vpop.f32.mrb[0].mxu0
      %v1904 = vadd.f32 0.0, %v1903
      %v1905 = vpop.f32.mrb[0].mxu0
      %1906 = vmatprep.mubr.bf16.mxu0 0
      %1907 = vmatmul.mubr.bf16.gmra.mrb[0].mxu0 %v1696
      %v1908 = vpop.f32.mrb[0].mxu0
      %v1909 = vadd.f32 0.0, %v1908
      %v1910 = vpop.f32.mrb[0].mxu0
      %v1911 = vpop.f32.mrb[0].mxu0
      %v1912 = vadd.f32 0.0, %v1911
      %v1913 = vpop.f32.mrb[0].mxu0
      %1914 = vmatprep.mubr.bf16.mxu0 0
      %1915 = vmatmul.mubr.bf16.gmra.mrb[0].mxu0 %v1699
      %v1916 = vpop.f32.mrb[0].mxu0
      %v1917 = vadd.f32 0.0, %v1916
      %v1918 = vpop.f32.mrb[0].mxu0
      %v1919 = vpop.f32.mrb[0].mxu0
      %v1920 = vadd.f32 0.0, %v1919
      %v1921 = vpop.f32.mrb[0].mxu0
      %1922 = vmatprep.mubr.bf16.mxu0 0
      %1923 = vmatmul.mubr.bf16.gmra.mrb[0].mxu0 %v1702
      %v1924 = vpop.f32.mrb[0].mxu0
      %v1925 = vadd.f32 0.0, %v1924
      %v1926 = vpop.f32.mrb[0].mxu0
      %v1927 = vpop.f32.mrb[0].mxu0
      %v1928 = vadd.f32 0.0, %v1927
      %v1929 = vpop.f32.mrb[0].mxu0
      %1930 = vmatprep.mubr.bf16.mxu0 0
      %1931 = vmatmul.mubr.bf16.gmra.mrb[0].mxu0 %v1705
      %v1932 = vpop.f32.mrb[0].mxu0
      %v1933 = vadd.f32 0.0, %v1932
      %v1934 = vpop.f32.mrb[0].mxu0
      %v1935 = vpop.f32.mrb[0].mxu0
      %v1936 = vadd.f32 0.0, %v1935
      %v1937 = vpop.f32.mrb[0].mxu0
      %1938 = vmatprep.mubr.bf16.mxu0 0
      %1939 = vmatmul.mubr.bf16.gmra.mrb[0].mxu0 %v1708
      %v1940 = vpop.f32.mrb[0].mxu0
      %v1941 = vadd.f32 0.0, %v1940
      %v1942 = vpop.f32.mrb[0].mxu0
      %v1943 = vpop.f32.mrb[0].mxu0
      %v1944 = vadd.f32 0.0, %v1943
      %v1945 = vpop.f32.mrb[0].mxu0
      %1946 = vmatprep.mubr.bf16.mxu0 0
      %1947 = vmatmul.mubr.bf16.gmra.mrb[0].mxu0 %v1711
      %v1948 = vpop.f32.mrb[0].mxu0
      %v1949 = vadd.f32 0.0, %v1948
      %v1950 = vpop.f32.mrb[0].mxu0
      %v1951 = vpop.f32.mrb[0].mxu0
      %v1952 = vadd.f32 0.0, %v1951
      %v1953 = vpop.f32.mrb[0].mxu0
      %1954 = vmatprep.mubr.bf16.mxu0 0
      %1955 = vmatmul.mubr.bf16.gmra.mrb[0].mxu0 %v1714
      %v1956 = vpop.f32.mrb[0].mxu0
      %v1957 = vadd.f32 0.0, %v1956
      %v1958 = vpop.f32.mrb[0].mxu0
      %v1959 = vpop.f32.mrb[0].mxu0
      %v1960 = vadd.f32 0.0, %v1959
      %v1961 = vpop.f32.mrb[0].mxu0
      %1962 = vmatprep.mubr.bf16.mxu0 0
      %1963 = vmatmul.mubr.bf16.gmra.mrb[0].mxu0 %v1717
      %v1964 = vpop.f32.mrb[0].mxu0
      %v1965 = vadd.f32 0.0, %v1964
      %v1966 = vpop.f32.mrb[0].mxu0
      %v1967 = vpop.f32.mrb[0].mxu0
      %v1968 = vadd.f32 0.0, %v1967
      %v1969 = vpop.f32.mrb[0].mxu0
      %1970 = vmatprep.mubr.bf16.mxu0 0
      %1971 = vmatmul.mubr.bf16.gmra.mrb[0].mxu0 %v1720
      %v1972 = vpop.f32.mrb[0].mxu0
      %v1973 = vadd.f32 0.0, %v1972
      %v1974 = vpop.f32.mrb[0].mxu0
      %v1975 = vpop.f32.mrb[0].mxu0
      %v1976 = vadd.f32 0.0, %v1975
      %v1977 = vpop.f32.mrb[0].mxu0
      %1978 = vmatprep.mubr.bf16.mxu0 0
      %1979 = vmatmul.mubr.bf16.gmra.mrb[0].mxu0 %v1723
      %v1980 = vpop.f32.mrb[0].mxu0
      %v1981 = vadd.f32 0.0, %v1980
      %v1982 = vpop.f32.mrb[0].mxu0
      %v1983 = vpop.f32.mrb[0].mxu0
      %v1984 = vadd.f32 0.0, %v1983
      %v1985 = vpop.f32.mrb[0].mxu0
      %1986 = vmatprep.mubr.bf16.mxu0 0
      %1987 = vmatmul.mubr.bf16.gmra.mrb[0].mxu0 %v1726
      %v1988 = vpop.f32.mrb[0].mxu0
      %v1989 = vadd.f32 0.0, %v1988
      %v1990 = vpop.f32.mrb[0].mxu0
      %v1991 = vpop.f32.mrb[0].mxu0
      %v1992 = vadd.f32 0.0, %v1991
      %v1993 = vpop.f32.mrb[0].mxu0
      %1994 = vmatprep.mubr.bf16.mxu0 0
      %1995 = vmatmul.mubr.bf16.gmra.mrb[0].mxu0 %v1729
      %v1996 = vpop.f32.mrb[0].mxu0
      %v1997 = vadd.f32 0.0, %v1996
      %v1998 = vpop.f32.mrb[0].mxu0
      %v1999 = vpop.f32.mrb[0].mxu0
      %v2000 = vadd.f32 0.0, %v1999
      %v2001 = vpop.f32.mrb[0].mxu0
      %2002 = vmatprep.mubr.bf16.mxu0 0
      %2003 = vmatmul.mubr.bf16.gmra.mrb[0].mxu0 %v1732
      %v2004 = vpop.f32.mrb[0].mxu0
      %v2005 = vadd.f32 0.0, %v2004
      %v2006 = vpop.f32.mrb[0].mxu0
      %v2007 = vpop.f32.mrb[0].mxu0
      %v2008 = vadd.f32 0.0, %v2007
      %v2009 = vpop.f32.mrb[0].mxu0
      %2010 = vmatprep.mubr.bf16.mxu0 0
      %2011 = vmatmul.mubr.bf16.gmra.mrb[0].mxu0 %v1735
      %v2012 = vpop.f32.mrb[0].mxu0
      %v2013 = vadd.f32 0.0, %v2012
      %v2014 = vpop.f32.mrb[0].mxu0
      %v2015 = vpop.f32.mrb[0].mxu0
      %v2016 = vadd.f32 0.0, %v2015
      %v2017 = vpop.f32.mrb[0].mxu0
      %2018 = vmatprep.mubr.bf16.mxu0 0
      %2019 = vmatmul.mubr.bf16.gmra.mrb[0].mxu0 %v1738
      %v2020 = vpop.f32.mrb[0].mxu0
      %v2021 = vadd.f32 0.0, %v2020
      %v2022 = vpop.f32.mrb[0].mxu0
      %v2023 = vpop.f32.mrb[0].mxu0
      %v2024 = vadd.f32 0.0, %v2023
      %v2025 = vpop.f32.mrb[0].mxu0
      %2026 = vmatprep.mubr.bf16.mxu0 0
      %2027 = vmatmul.mubr.bf16.gmra.mrb[0].mxu0 %v1741
      %v2028 = vpop.f32.mrb[0].mxu0
      %v2029 = vadd.f32 0.0, %v2028
      %v2030 = vpop.f32.mrb[0].mxu0
      %v2031 = vpop.f32.mrb[0].mxu0
      %v2032 = vadd.f32 0.0, %v2031
      %v2033 = vpop.f32.mrb[0].mxu0
      %2034 = vdwg.mxu0
      %v2035 = vadd.f32 %v1224, %v1781
      %v2036 = vadd.f32 %v1227, %v1784
      %v2037 = vadd.f32 %v1232, %v1789
      %v2038 = vadd.f32 %v1235, %v1792
      %v2039 = vadd.f32 %v1240, %v1797
      %v2040 = vadd.f32 %v1243, %v1800
      %v2041 = vadd.f32 %v1248, %v1805
      %v2042 = vadd.f32 %v1251, %v1808
      %v2043 = vadd.f32 %v1256, %v1813
      %v2044 = vadd.f32 %v1259, %v1816
      %v2045 = vadd.f32 %v1264, %v1821
      %v2046 = vadd.f32 %v1267, %v1824
      %v2047 = vadd.f32 %v1272, %v1829
      %v2048 = vadd.f32 %v1275, %v1832
      %v2049 = vadd.f32 %v1280, %v1837
      %v2050 = vadd.f32 %v1283, %v1840
      %v2051 = vadd.f32 %v1288, %v1845
      %v2052 = vadd.f32 %v1291, %v1848
      %v2053 = vadd.f32 %v1296, %v1853
      %v2054 = vadd.f32 %v1299, %v1856
      %v2055 = vadd.f32 %v1304, %v1861
      %v2056 = vadd.f32 %v1307, %v1864
      %v2057 = vadd.f32 %v1312, %v1869
      %v2058 = vadd.f32 %v1315, %v1872
      %v2059 = vadd.f32 %v1320, %v1877
      %v2060 = vadd.f32 %v1323, %v1880
      %v2061 = vadd.f32 %v1328, %v1885
      %v2062 = vadd.f32 %v1331, %v1888
      %v2063 = vadd.f32 %v1336, %v1893
      %v2064 = vadd.f32 %v1339, %v1896
      %v2065 = vadd.f32 %v1344, %v1901
      %v2066 = vadd.f32 %v1347, %v1904
      %v2067 = vadd.f32 %v1352, %v1909
      %v2068 = vadd.f32 %v1355, %v1912
      %v2069 = vadd.f32 %v1360, %v1917
      %v2070 = vadd.f32 %v1363, %v1920
      %v2071 = vadd.f32 %v1368, %v1925
      %v2072 = vadd.f32 %v1371, %v1928
      %v2073 = vadd.f32 %v1376, %v1933
      %v2074 = vadd.f32 %v1379, %v1936
      %v2075 = vadd.f32 %v1384, %v1941
      %v2076 = vadd.f32 %v1387, %v1944
      %v2077 = vadd.f32 %v1392, %v1949
      %v2078 = vadd.f32 %v1395, %v1952
      %v2079 = vadd.f32 %v1400, %v1957
      %v2080 = vadd.f32 %v1403, %v1960
      %v2081 = vadd.f32 %v1408, %v1965
      %v2082 = vadd.f32 %v1411, %v1968
      %v2083 = vadd.f32 %v1416, %v1973
      %v2084 = vadd.f32 %v1419, %v1976
      %v2085 = vadd.f32 %v1424, %v1981
      %v2086 = vadd.f32 %v1427, %v1984
      %v2087 = vadd.f32 %v1432, %v1989
      %v2088 = vadd.f32 %v1435, %v1992
      %v2089 = vadd.f32 %v1440, %v1997
      %v2090 = vadd.f32 %v1443, %v2000
      %v2091 = vadd.f32 %v1448, %v2005
      %v2092 = vadd.f32 %v1451, %v2008
      %v2093 = vadd.f32 %v1456, %v2013
      %v2094 = vadd.f32 %v1459, %v2016
      %v2095 = vadd.f32 %v1464, %v2021
      %v2096 = vadd.f32 %v1467, %v2024
      %v2097 = vadd.f32 %v1472, %v2029
      %v2098 = vadd.f32 %v1475, %v2032
      %v2099 = vld [vmem:[%s1478] sm:$0xf]
      %v2100 = vld [vmem:[%s1478 + $0x4] sm:$0xf]
      %v2101 = vld [vmem:[%s1478 + $0x8] sm:$0xf]
      %v2102 = vld [vmem:[%s1478 + $0xc] sm:$0xf]
      %v2103 = vld [vmem:[%s1478 + $0x10] sm:$0x1]
      %v2104 = vld [vmem:[%s1478 + $0x14] sm:$0xf]
      %v2105 = vld [vmem:[%s1478 + $0x18] sm:$0xf]
      %v2106 = vld [vmem:[%s1478 + $0x1c] sm:$0xf]
      %v2107 = vld [vmem:[%s1478 + $0x20] sm:$0xf]
      %v2108 = vld [vmem:[%s1478 + $0x24] sm:$0x1]
      %v2109 = vld [vmem:[%s1478 + $0x28] sm:$0xf]
      %v2110 = vld [vmem:[%s1478 + $0x2c] sm:$0xf]
      %v2111 = vld [vmem:[%s1478 + $0x30] sm:$0xf]
      %v2112 = vld [vmem:[%s1478 + $0x34] sm:$0xf]
      %v2113 = vld [vmem:[%s1478 + $0x38] sm:$0x1]
      %v2114 = vld [vmem:[%s1478 + $0x3c] sm:$0xf]
      %v2115 = vld [vmem:[%s1478 + $0x40] sm:$0xf]
      %v2116 = vld [vmem:[%s1478 + $0x44] sm:$0xf]
      %v2117 = vld [vmem:[%s1478 + $0x48] sm:$0xf]
      %v2118 = vld [vmem:[%s1478 + $0x4c] sm:$0x1]
      %v2119 = vld [vmem:[%s1478 + $0x50] sm:$0xf]
      %v2120 = vld [vmem:[%s1478 + $0x54] sm:$0xf]
      %v2121 = vld [vmem:[%s1478 + $0x58] sm:$0xf]
      %v2122 = vld [vmem:[%s1478 + $0x5c] sm:$0xf]
      %v2123 = vld [vmem:[%s1478 + $0x60] sm:$0x1]
      %v2124 = vld [vmem:[%s1478 + $0x64] sm:$0xf]
      %v2125 = vld [vmem:[%s1478 + $0x68] sm:$0xf]
      %v2126 = vld [vmem:[%s1478 + $0x6c] sm:$0xf]
      %v2127 = vld [vmem:[%s1478 + $0x70] sm:$0xf]
      %v2128 = vld [vmem:[%s1478 + $0x74] sm:$0x1]
      %v2129 = vld [vmem:[%s1478 + $0x78] sm:$0xf]
      %v2130 = vld [vmem:[%s1478 + $0x7c] sm:$0xf]
      %v2131 = vld [vmem:[%s1478 + $0x80] sm:$0xf]
      %v2132 = vld [vmem:[%s1478 + $0x84] sm:$0xf]
      %v2133 = vld [vmem:[%s1478 + $0x88] sm:$0x1]
      %v2134 = vld [vmem:[%s1478 + $0x8c] sm:$0xf]
      %v2135 = vld [vmem:[%s1478 + $0x90] sm:$0xf]
      %v2136 = vld [vmem:[%s1478 + $0x94] sm:$0xf]
      %v2137 = vld [vmem:[%s1478 + $0x98] sm:$0xf]
      %v2138 = vld [vmem:[%s1478 + $0x9c] sm:$0x1]
      %v2139 = vld [vmem:[%s1478 + $0xa0] sm:$0xf]
      %v2140 = vld [vmem:[%s1478 + $0xa4] sm:$0xf]
      %v2141 = vld [vmem:[%s1478 + $0xa8] sm:$0xf]
      %v2142 = vld [vmem:[%s1478 + $0xac] sm:$0xf]
      %v2143 = vld [vmem:[%s1478 + $0xb0] sm:$0x1]
      %v2144 = vld [vmem:[%s1478 + $0xb4] sm:$0xf]
      %v2145 = vld [vmem:[%s1478 + $0xb8] sm:$0xf]
      %v2146 = vld [vmem:[%s1478 + $0xbc] sm:$0xf]
      %v2147 = vld [vmem:[%s1478 + $0xc0] sm:$0xf]
      %v2148 = vld [vmem:[%s1478 + $0xc4] sm:$0x1]
      %v2149 = vld [vmem:[%s1478 + $0xc8] sm:$0xf]
      %v2150 = vld [vmem:[%s1478 + $0xcc] sm:$0xf]
      %v2151 = vld [vmem:[%s1478 + $0xd0] sm:$0xf]
      %v2152 = vld [vmem:[%s1478 + $0xd4] sm:$0xf]
      %v2153 = vld [vmem:[%s1478 + $0xd8] sm:$0x1]
      %v2154 = vld [vmem:[%s1478 + $0xdc] sm:$0xf]
      %v2155 = vld [vmem:[%s1478 + $0xe0] sm:$0xf]
      %v2156 = vld [vmem:[%s1478 + $0xe4] sm:$0xf]
      %v2157 = vld [vmem:[%s1478 + $0xe8] sm:$0xf]
      %v2158 = vld [vmem:[%s1478 + $0xec] sm:$0x1]
      %v2159 = vld [vmem:[%s1478 + $0xf0] sm:$0xf]
      %v2160 = vld [vmem:[%s1478 + $0xf4] sm:$0xf]
      %v2161 = vld [vmem:[%s1478 + $0xf8] sm:$0xf]
      %v2162 = vld [vmem:[%s1478 + $0xfc] sm:$0xf]
      %v2163 = vld [vmem:[%s1478 + $0x100] sm:$0x1]
      %v2164 = vld [vmem:[%s1478 + $0x104] sm:$0xf]
      %v2165 = vld [vmem:[%s1478 + $0x108] sm:$0xf]
      %v2166 = vld [vmem:[%s1478 + $0x10c] sm:$0xf]
      %v2167 = vld [vmem:[%s1478 + $0x110] sm:$0xf]
      %v2168 = vld [vmem:[%s1478 + $0x114] sm:$0x1]
      %v2169 = vld [vmem:[%s1478 + $0x118] sm:$0xf]
      %v2170 = vld [vmem:[%s1478 + $0x11c] sm:$0xf]
      %v2171 = vld [vmem:[%s1478 + $0x120] sm:$0xf]
      %v2172 = vld [vmem:[%s1478 + $0x124] sm:$0xf]
      %v2173 = vld [vmem:[%s1478 + $0x128] sm:$0x1]
      %v2174 = vld [vmem:[%s1478 + $0x12c] sm:$0xf]
      %v2175 = vld [vmem:[%s1478 + $0x130] sm:$0xf]
      %v2176 = vld [vmem:[%s1478 + $0x134] sm:$0xf]
      %v2177 = vld [vmem:[%s1478 + $0x138] sm:$0xf]
      %v2178 = vld [vmem:[%s1478 + $0x13c] sm:$0x1]
      %v2179 = vunpack.c.l.bf16 %v2099
      %v2180 = vunpack.c.l.bf16 %v2100
      %v2181 = vunpack.c.l.bf16 %v2101
      %v2182 = vunpack.c.l.bf16 %v2102
      %v2183 = vunpack.c.l.bf16 %v2103
      %v2184 = vunpack.c.l.bf16 %v2104
      %v2185 = vunpack.c.l.bf16 %v2105
      %v2186 = vunpack.c.l.bf16 %v2106
      %v2187 = vunpack.c.l.bf16 %v2107
      %v2188 = vunpack.c.l.bf16 %v2108
      %v2189 = vunpack.c.l.bf16 %v2109
      %v2190 = vunpack.c.l.bf16 %v2110
      %v2191 = vunpack.c.l.bf16 %v2111
      %v2192 = vunpack.c.l.bf16 %v2112
      %v2193 = vunpack.c.l.bf16 %v2113
      %v2194 = vunpack.c.l.bf16 %v2114
      %v2195 = vunpack.c.l.bf16 %v2115
      %v2196 = vunpack.c.l.bf16 %v2116
      %v2197 = vunpack.c.l.bf16 %v2117
      %v2198 = vunpack.c.l.bf16 %v2118
      %v2199 = vunpack.c.l.bf16 %v2119
      %v2200 = vunpack.c.l.bf16 %v2120
      %v2201 = vunpack.c.l.bf16 %v2121
      %v2202 = vunpack.c.l.bf16 %v2122
      %v2203 = vunpack.c.l.bf16 %v2123
      %v2204 = vunpack.c.l.bf16 %v2124
      %v2205 = vunpack.c.l.bf16 %v2125
      %v2206 = vunpack.c.l.bf16 %v2126
      %v2207 = vunpack.c.l.bf16 %v2127
      %v2208 = vunpack.c.l.bf16 %v2128
      %v2209 = vunpack.c.l.bf16 %v2129
      %v2210 = vunpack.c.l.bf16 %v2130
      %v2211 = vunpack.c.l.bf16 %v2131
      %v2212 = vunpack.c.l.bf16 %v2132
      %v2213 = vunpack.c.l.bf16 %v2133
      %v2214 = vunpack.c.l.bf16 %v2134
      %v2215 = vunpack.c.l.bf16 %v2135
      %v2216 = vunpack.c.l.bf16 %v2136
      %v2217 = vunpack.c.l.bf16 %v2137
      %v2218 = vunpack.c.l.bf16 %v2138
      %v2219 = vunpack.c.l.bf16 %v2139
      %v2220 = vunpack.c.l.bf16 %v2140
      %v2221 = vunpack.c.l.bf16 %v2141
      %v2222 = vunpack.c.l.bf16 %v2142
      %v2223 = vunpack.c.l.bf16 %v2143
      %v2224 = vunpack.c.l.bf16 %v2144
      %v2225 = vunpack.c.l.bf16 %v2145
      %v2226 = vunpack.c.l.bf16 %v2146
      %v2227 = vunpack.c.l.bf16 %v2147
      %v2228 = vunpack.c.l.bf16 %v2148
      %v2229 = vunpack.c.l.bf16 %v2149
      %v2230 = vunpack.c.l.bf16 %v2150
      %v2231 = vunpack.c.l.bf16 %v2151
      %v2232 = vunpack.c.l.bf16 %v2152
      %v2233 = vunpack.c.l.bf16 %v2153
      %v2234 = vunpack.c.l.bf16 %v2154
      %v2235 = vunpack.c.l.bf16 %v2155
      %v2236 = vunpack.c.l.bf16 %v2156
      %v2237 = vunpack.c.l.bf16 %v2157
      %v2238 = vunpack.c.l.bf16 %v2158
      %v2239 = vunpack.c.l.bf16 %v2159
      %v2240 = vunpack.c.l.bf16 %v2160
      %v2241 = vunpack.c.l.bf16 %v2161
      %v2242 = vunpack.c.l.bf16 %v2162
      %v2243 = vunpack.c.l.bf16 %v2163
      %v2244 = vunpack.c.l.bf16 %v2164
      %v2245 = vunpack.c.l.bf16 %v2165
      %v2246 = vunpack.c.l.bf16 %v2166
      %v2247 = vunpack.c.l.bf16 %v2167
      %v2248 = vunpack.c.l.bf16 %v2168
      %v2249 = vunpack.c.l.bf16 %v2169
      %v2250 = vunpack.c.l.bf16 %v2170
      %v2251 = vunpack.c.l.bf16 %v2171
      %v2252 = vunpack.c.l.bf16 %v2172
      %v2253 = vunpack.c.l.bf16 %v2173
      %v2254 = vunpack.c.l.bf16 %v2174
      %v2255 = vunpack.c.l.bf16 %v2175
      %v2256 = vunpack.c.l.bf16 %v2176
      %v2257 = vunpack.c.l.bf16 %v2177
      %v2258 = vunpack.c.l.bf16 %v2178
      %v2339 = vrot.slane %v2179, 1
      %v2340 = vrot.slane %v2180, 1
      %v2341 = vsel %vm446, %v2339, %v2340
      %v2342 = vrot.slane %v2181, 1
      %v2343 = vsel %vm446, %v2340, %v2342
      %v2344 = vrot.slane %v2182, 1
      %v2345 = vsel %vm446, %v2342, %v2344
      %v2346 = vrot.slane %v2183, 1
      %v2347 = vsel %vm446, %v2344, %v2346
      %v2348 = vrot.slane %v2184, 1
      %v2349 = vrot.slane %v2185, 1
      %v2350 = vsel %vm446, %v2348, %v2349
      %v2351 = vrot.slane %v2186, 1
      %v2352 = vsel %vm446, %v2349, %v2351
      %v2353 = vrot.slane %v2187, 1
      %v2354 = vsel %vm446, %v2351, %v2353
      %v2355 = vrot.slane %v2188, 1
      %v2356 = vsel %vm446, %v2353, %v2355
      %v2357 = vrot.slane %v2189, 1
      %v2358 = vrot.slane %v2190, 1
      %v2359 = vsel %vm446, %v2357, %v2358
      %v2360 = vrot.slane %v2191, 1
      %v2361 = vsel %vm446, %v2358, %v2360
      %v2362 = vrot.slane %v2192, 1
      %v2363 = vsel %vm446, %v2360, %v2362
      %v2364 = vrot.slane %v2193, 1
      %v2365 = vsel %vm446, %v2362, %v2364
      %v2366 = vrot.slane %v2194, 1
      %v2367 = vrot.slane %v2195, 1
      %v2368 = vsel %vm446, %v2366, %v2367
      %v2369 = vrot.slane %v2196, 1
      %v2370 = vsel %vm446, %v2367, %v2369
      %v2371 = vrot.slane %v2197, 1
      %v2372 = vsel %vm446, %v2369, %v2371
      %v2373 = vrot.slane %v2198, 1
      %v2374 = vsel %vm446, %v2371, %v2373
      %v2375 = vrot.slane %v2199, 1
      %v2376 = vrot.slane %v2200, 1
      %v2377 = vsel %vm446, %v2375, %v2376
      %v2378 = vrot.slane %v2201, 1
      %v2379 = vsel %vm446, %v2376, %v2378
      %v2380 = vrot.slane %v2202, 1
      %v2381 = vsel %vm446, %v2378, %v2380
      %v2382 = vrot.slane %v2203, 1
      %v2383 = vsel %vm446, %v2380, %v2382
      %v2384 = vrot.slane %v2204, 1
      %v2385 = vrot.slane %v2205, 1
      %v2386 = vsel %vm446, %v2384, %v2385
      %v2387 = vrot.slane %v2206, 1
      %v2388 = vsel %vm446, %v2385, %v2387
      %v2389 = vrot.slane %v2207, 1
      %v2390 = vsel %vm446, %v2387, %v2389
      %v2391 = vrot.slane %v2208, 1
      %v2392 = vsel %vm446, %v2389, %v2391
      %v2393 = vrot.slane %v2209, 1
      %v2394 = vrot.slane %v2210, 1
      %v2395 = vsel %vm446, %v2393, %v2394
      %v2396 = vrot.slane %v2211, 1
      %v2397 = vsel %vm446, %v2394, %v2396
      %v2398 = vrot.slane %v2212, 1
      %v2399 = vsel %vm446, %v2396, %v2398
      %v2400 = vrot.slane %v2213, 1
      %v2401 = vsel %vm446, %v2398, %v2400
      %v2402 = vrot.slane %v2214, 1
      %v2403 = vrot.slane %v2215, 1
      %v2404 = vsel %vm446, %v2402, %v2403
      %v2405 = vrot.slane %v2216, 1
      %v2406 = vsel %vm446, %v2403, %v2405
      %v2407 = vrot.slane %v2217, 1
      %v2408 = vsel %vm446, %v2405, %v2407
      %v2409 = vrot.slane %v2218, 1
      %v2410 = vsel %vm446, %v2407, %v2409
      %v2411 = vrot.slane %v2219, 1
      %v2412 = vrot.slane %v2220, 1
      %v2413 = vsel %vm446, %v2411, %v2412
      %v2414 = vrot.slane %v2221, 1
      %v2415 = vsel %vm446, %v2412, %v2414
      %v2416 = vrot.slane %v2222, 1
      %v2417 = vsel %vm446, %v2414, %v2416
      %v2418 = vrot.slane %v2223, 1
      %v2419 = vsel %vm446, %v2416, %v2418
      %v2420 = vrot.slane %v2224, 1
      %v2421 = vrot.slane %v2225, 1
      %v2422 = vsel %vm446, %v2420, %v2421
      %v2423 = vrot.slane %v2226, 1
      %v2424 = vsel %vm446, %v2421, %v2423
      %v2425 = vrot.slane %v2227, 1
      %v2426 = vsel %vm446, %v2423, %v2425
      %v2427 = vrot.slane %v2228, 1
      %v2428 = vsel %vm446, %v2425, %v2427
      %v2429 = vrot.slane %v2229, 1
      %v2430 = vrot.slane %v2230, 1
      %v2431 = vsel %vm446, %v2429, %v2430
      %v2432 = vrot.slane %v2231, 1
      %v2433 = vsel %vm446, %v2430, %v2432
      %v2434 = vrot.slane %v2232, 1
      %v2435 = vsel %vm446, %v2432, %v2434
      %v2436 = vrot.slane %v2233, 1
      %v2437 = vsel %vm446, %v2434, %v2436
      %v2438 = vrot.slane %v2234, 1
      %v2439 = vrot.slane %v2235, 1
      %v2440 = vsel %vm446, %v2438, %v2439
      %v2441 = vrot.slane %v2236, 1
      %v2442 = vsel %vm446, %v2439, %v2441
      %v2443 = vrot.slane %v2237, 1
      %v2444 = vsel %vm446, %v2441, %v2443
      %v2445 = vrot.slane %v2238, 1
      %v2446 = vsel %vm446, %v2443, %v2445
      %v2447 = vrot.slane %v2239, 1
      %v2448 = vrot.slane %v2240, 1
      %v2449 = vsel %vm446, %v2447, %v2448
      %v2450 = vrot.slane %v2241, 1
      %v2451 = vsel %vm446, %v2448, %v2450
      %v2452 = vrot.slane %v2242, 1
      %v2453 = vsel %vm446, %v2450, %v2452
      %v2454 = vrot.slane %v2243, 1
      %v2455 = vsel %vm446, %v2452, %v2454
      %v2456 = vrot.slane %v2244, 1
      %v2457 = vrot.slane %v2245, 1
      %v2458 = vsel %vm446, %v2456, %v2457
      %v2459 = vrot.slane %v2246, 1
      %v2460 = vsel %vm446, %v2457, %v2459
      %v2461 = vrot.slane %v2247, 1
      %v2462 = vsel %vm446, %v2459, %v2461
      %v2463 = vrot.slane %v2248, 1
      %v2464 = vsel %vm446, %v2461, %v2463
      %v2465 = vrot.slane %v2249, 1
      %v2466 = vrot.slane %v2250, 1
      %v2467 = vsel %vm446, %v2465, %v2466
      %v2468 = vrot.slane %v2251, 1
      %v2469 = vsel %vm446, %v2466, %v2468
      %v2470 = vrot.slane %v2252, 1
      %v2471 = vsel %vm446, %v2468, %v2470
      %v2472 = vrot.slane %v2253, 1
      %v2473 = vsel %vm446, %v2470, %v2472
      %v2474 = vrot.slane %v2254, 1
      %v2475 = vrot.slane %v2255, 1
      %v2476 = vsel %vm446, %v2474, %v2475
      %v2477 = vrot.slane %v2256, 1
      %v2478 = vsel %vm446, %v2475, %v2477
      %v2479 = vrot.slane %v2257, 1
      %v2480 = vsel %vm446, %v2477, %v2479
      %v2481 = vrot.slane %v2258, 1
      %v2482 = vsel %vm446, %v2479, %v2481
      %v2547 = vpack.c.bf16 %v2343, %v2341
      %v2548 = vpack.c.bf16 %v2347, %v2345
      %v2549 = vpack.c.bf16 %v2352, %v2350
      %v2550 = vpack.c.bf16 %v2356, %v2354
      %v2551 = vpack.c.bf16 %v2361, %v2359
      %v2552 = vpack.c.bf16 %v2365, %v2363
      %v2553 = vpack.c.bf16 %v2370, %v2368
      %v2554 = vpack.c.bf16 %v2374, %v2372
      %v2555 = vpack.c.bf16 %v2379, %v2377
      %v2556 = vpack.c.bf16 %v2383, %v2381
      %v2557 = vpack.c.bf16 %v2388, %v2386
      %v2558 = vpack.c.bf16 %v2392, %v2390
      %v2559 = vpack.c.bf16 %v2397, %v2395
      %v2560 = vpack.c.bf16 %v2401, %v2399
      %v2561 = vpack.c.bf16 %v2406, %v2404
      %v2562 = vpack.c.bf16 %v2410, %v2408
      %v2563 = vpack.c.bf16 %v2415, %v2413
      %v2564 = vpack.c.bf16 %v2419, %v2417
      %v2565 = vpack.c.bf16 %v2424, %v2422
      %v2566 = vpack.c.bf16 %v2428, %v2426
      %v2567 = vpack.c.bf16 %v2433, %v2431
      %v2568 = vpack.c.bf16 %v2437, %v2435
      %v2569 = vpack.c.bf16 %v2442, %v2440
      %v2570 = vpack.c.bf16 %v2446, %v2444
      %v2571 = vpack.c.bf16 %v2451, %v2449
      %v2572 = vpack.c.bf16 %v2455, %v2453
      %v2573 = vpack.c.bf16 %v2460, %v2458
      %v2574 = vpack.c.bf16 %v2464, %v2462
      %v2575 = vpack.c.bf16 %v2469, %v2467
      %v2576 = vpack.c.bf16 %v2473, %v2471
      %v2577 = vpack.c.bf16 %v2478, %v2476
      %v2578 = vpack.c.bf16 %v2482, %v2480
      %s2579 = scalar_lea.vmem %s1, 24
      %v2580 = vld [vmem:[%s2579] sm:$0xf]
      %v2581 = vld [vmem:[%s2579 + $0x4] sm:$0x3]
      %v2584 = vunpack.c.l.b16 %v2580
      %v2585 = vunpack.c.l.b16 %v2581
      %v2586 = vpack.c.b16 %v2585, %v2584
      %v2588 = vsel %vm695, %v2547, 0
      %v2591 = vsel %vm695, %v2548, 0
      %v2594 = vsel %vm695, %v2549, 0
      %v2597 = vsel %vm695, %v2550, 0
      %v2600 = vsel %vm695, %v2551, 0
      %v2603 = vsel %vm695, %v2552, 0
      %v2606 = vsel %vm695, %v2553, 0
      %v2609 = vsel %vm695, %v2554, 0
      %v2612 = vsel %vm695, %v2555, 0
      %v2615 = vsel %vm695, %v2556, 0
      %v2618 = vsel %vm695, %v2557, 0
      %v2621 = vsel %vm695, %v2558, 0
      %v2624 = vsel %vm695, %v2559, 0
      %v2627 = vsel %vm695, %v2560, 0
      %v2630 = vsel %vm695, %v2561, 0
      %v2633 = vsel %vm695, %v2562, 0
      %v2636 = vsel %vm695, %v2563, 0
      %v2639 = vsel %vm695, %v2564, 0
      %v2642 = vsel %vm695, %v2565, 0
      %v2645 = vsel %vm695, %v2566, 0
      %v2648 = vsel %vm695, %v2567, 0
      %v2651 = vsel %vm695, %v2568, 0
      %v2654 = vsel %vm695, %v2569, 0
      %v2657 = vsel %vm695, %v2570, 0
      %v2660 = vsel %vm695, %v2571, 0
      %v2663 = vsel %vm695, %v2572, 0
      %v2666 = vsel %vm695, %v2573, 0
      %v2669 = vsel %vm695, %v2574, 0
      %v2672 = vsel %vm695, %v2575, 0
      %v2675 = vsel %vm695, %v2576, 0
      %v2678 = vsel %vm695, %v2577, 0
      %v2681 = vsel %vm695, %v2578, 0
      %v2684 = vsel %vm792, %v2586, 0
      %2686 = vmatprep.subr.bf16.mxu0 0
      %2687 = vmatpush1.bf16.msra.mxu0 %v2684
      %2688 = vmatprep.subr.bf16.mxu0 0
      %2689 = vmatpush1.bf16.msra.mxu0 0
      %2690 = vmatprep.subr.bf16.mxu0 0
      %2691 = vmatpush1.bf16.msra.mxu0 0
      %2692 = vmatprep.subr.bf16.mxu0 0
      %2693 = vmatpush1.bf16.msra.mxu0 0
      %2694 = vmatprep.subr.bf16.mxu0 0
      %2695 = vmatpush1.bf16.msra.mxu0 0
      %2696 = vmatprep.subr.bf16.mxu0 0
      %2697 = vmatpush1.bf16.msra.mxu0 0
      %2698 = vmatprep.subr.bf16.mxu0 0
      %2699 = vmatpush1.bf16.msra.mxu0 0
      %2700 = vmatprep.subr.bf16.mxu0 0
      %2701 = vmatpush1.bf16.msra.mxu0 0
      %2702 = vmatprep.subr.bf16.mxu0 0
      %2703 = vmatpush1.bf16.msra.mxu0 0
      %2704 = vmatprep.subr.bf16.mxu0 0
      %2705 = vmatpush1.bf16.msra.mxu0 0
      %2706 = vmatprep.subr.bf16.mxu0 0
      %2707 = vmatpush1.bf16.msra.mxu0 0
      %2708 = vmatprep.subr.bf16.mxu0 0
      %2709 = vmatpush1.bf16.msra.mxu0 0
      %2710 = vmatprep.subr.bf16.mxu0 0
      %2711 = vmatpush1.bf16.msra.mxu0 0
      %2712 = vmatprep.subr.bf16.mxu0 0
      %2713 = vmatpush1.bf16.msra.mxu0 0
      %2714 = vmatprep.subr.bf16.mxu0 0
      %2715 = vmatpush1.bf16.msra.mxu0 0
      %2716 = vmatprep.subr.bf16.mxu0 0
      %2717 = vmatpush1.bf16.msra.mxu0 0
      %2718 = vmatprep.mubr.bf16.mxu0 0
      %2719 = vmatmul.mubr.bf16.gmra.mrb[0].mxu0 %v2588
      %v2720 = vpop.f32.mrb[0].mxu0
      %v2721 = vadd.f32 0.0, %v2720
      %v2722 = vpop.f32.mrb[0].mxu0
      %v2723 = vpop.f32.mrb[0].mxu0
      %v2724 = vadd.f32 0.0, %v2723
      %v2725 = vpop.f32.mrb[0].mxu0
      %2726 = vmatprep.mubr.bf16.mxu0 0
      %2727 = vmatmul.mubr.bf16.gmra.mrb[0].mxu0 %v2591
      %v2728 = vpop.f32.mrb[0].mxu0
      %v2729 = vadd.f32 0.0, %v2728
      %v2730 = vpop.f32.mrb[0].mxu0
      %v2731 = vpop.f32.mrb[0].mxu0
      %v2732 = vadd.f32 0.0, %v2731
      %v2733 = vpop.f32.mrb[0].mxu0
      %2734 = vmatprep.mubr.bf16.mxu0 0
      %2735 = vmatmul.mubr.bf16.gmra.mrb[0].mxu0 %v2594
      %v2736 = vpop.f32.mrb[0].mxu0
      %v2737 = vadd.f32 0.0, %v2736
      %v2738 = vpop.f32.mrb[0].mxu0
      %v2739 = vpop.f32.mrb[0].mxu0
      %v2740 = vadd.f32 0.0, %v2739
      %v2741 = vpop.f32.mrb[0].mxu0
      %2742 = vmatprep.mubr.bf16.mxu0 0
      %2743 = vmatmul.mubr.bf16.gmra.mrb[0].mxu0 %v2597
      %v2744 = vpop.f32.mrb[0].mxu0
      %v2745 = vadd.f32 0.0, %v2744
      %v2746 = vpop.f32.mrb[0].mxu0
      %v2747 = vpop.f32.mrb[0].mxu0
      %v2748 = vadd.f32 0.0, %v2747
      %v2749 = vpop.f32.mrb[0].mxu0
      %2750 = vmatprep.mubr.bf16.mxu0 0
      %2751 = vmatmul.mubr.bf16.gmra.mrb[0].mxu0 %v2600
      %v2752 = vpop.f32.mrb[0].mxu0
      %v2753 = vadd.f32 0.0, %v2752
      %v2754 = vpop.f32.mrb[0].mxu0
      %v2755 = vpop.f32.mrb[0].mxu0
      %v2756 = vadd.f32 0.0, %v2755
      %v2757 = vpop.f32.mrb[0].mxu0
      %2758 = vmatprep.mubr.bf16.mxu0 0
      %2759 = vmatmul.mubr.bf16.gmra.mrb[0].mxu0 %v2603
      %v2760 = vpop.f32.mrb[0].mxu0
      %v2761 = vadd.f32 0.0, %v2760
      %v2762 = vpop.f32.mrb[0].mxu0
      %v2763 = vpop.f32.mrb[0].mxu0
      %v2764 = vadd.f32 0.0, %v2763
      %v2765 = vpop.f32.mrb[0].mxu0
      %2766 = vmatprep.mubr.bf16.mxu0 0
      %2767 = vmatmul.mubr.bf16.gmra.mrb[0].mxu0 %v2606
      %v2768 = vpop.f32.mrb[0].mxu0
      %v2769 = vadd.f32 0.0, %v2768
      %v2770 = vpop.f32.mrb[0].mxu0
      %v2771 = vpop.f32.mrb[0].mxu0
      %v2772 = vadd.f32 0.0, %v2771
      %v2773 = vpop.f32.mrb[0].mxu0
      %2774 = vmatprep.mubr.bf16.mxu0 0
      %2775 = vmatmul.mubr.bf16.gmra.mrb[0].mxu0 %v2609
      %v2776 = vpop.f32.mrb[0].mxu0
      %v2777 = vadd.f32 0.0, %v2776
      %v2778 = vpop.f32.mrb[0].mxu0
      %v2779 = vpop.f32.mrb[0].mxu0
      %v2780 = vadd.f32 0.0, %v2779
      %v2781 = vpop.f32.mrb[0].mxu0
      %2782 = vmatprep.mubr.bf16.mxu0 0
      %2783 = vmatmul.mubr.bf16.gmra.mrb[0].mxu0 %v2612
      %v2784 = vpop.f32.mrb[0].mxu0
      %v2785 = vadd.f32 0.0, %v2784
      %v2786 = vpop.f32.mrb[0].mxu0
      %v2787 = vpop.f32.mrb[0].mxu0
      %v2788 = vadd.f32 0.0, %v2787
      %v2789 = vpop.f32.mrb[0].mxu0
      %2790 = vmatprep.mubr.bf16.mxu0 0
      %2791 = vmatmul.mubr.bf16.gmra.mrb[0].mxu0 %v2615
      %v2792 = vpop.f32.mrb[0].mxu0
      %v2793 = vadd.f32 0.0, %v2792
      %v2794 = vpop.f32.mrb[0].mxu0
      %v2795 = vpop.f32.mrb[0].mxu0
      %v2796 = vadd.f32 0.0, %v2795
      %v2797 = vpop.f32.mrb[0].mxu0
      %2798 = vmatprep.mubr.bf16.mxu0 0
      %2799 = vmatmul.mubr.bf16.gmra.mrb[0].mxu0 %v2618
      %v2800 = vpop.f32.mrb[0].mxu0
      %v2801 = vadd.f32 0.0, %v2800
      %v2802 = vpop.f32.mrb[0].mxu0
      %v2803 = vpop.f32.mrb[0].mxu0
      %v2804 = vadd.f32 0.0, %v2803
      %v2805 = vpop.f32.mrb[0].mxu0
      %2806 = vmatprep.mubr.bf16.mxu0 0
      %2807 = vmatmul.mubr.bf16.gmra.mrb[0].mxu0 %v2621
      %v2808 = vpop.f32.mrb[0].mxu0
      %v2809 = vadd.f32 0.0, %v2808
      %v2810 = vpop.f32.mrb[0].mxu0
      %v2811 = vpop.f32.mrb[0].mxu0
      %v2812 = vadd.f32 0.0, %v2811
      %v2813 = vpop.f32.mrb[0].mxu0
      %2814 = vmatprep.mubr.bf16.mxu0 0
      %2815 = vmatmul.mubr.bf16.gmra.mrb[0].mxu0 %v2624
      %v2816 = vpop.f32.mrb[0].mxu0
      %v2817 = vadd.f32 0.0, %v2816
      %v2818 = vpop.f32.mrb[0].mxu0
      %v2819 = vpop.f32.mrb[0].mxu0
      %v2820 = vadd.f32 0.0, %v2819
      %v2821 = vpop.f32.mrb[0].mxu0
      %2822 = vmatprep.mubr.bf16.mxu0 0
      %2823 = vmatmul.mubr.bf16.gmra.mrb[0].mxu0 %v2627
      %v2824 = vpop.f32.mrb[0].mxu0
      %v2825 = vadd.f32 0.0, %v2824
      %v2826 = vpop.f32.mrb[0].mxu0
      %v2827 = vpop.f32.mrb[0].mxu0
      %v2828 = vadd.f32 0.0, %v2827
      %v2829 = vpop.f32.mrb[0].mxu0
      %2830 = vmatprep.mubr.bf16.mxu0 0
      %2831 = vmatmul.mubr.bf16.gmra.mrb[0].mxu0 %v2630
      %v2832 = vpop.f32.mrb[0].mxu0
      %v2833 = vadd.f32 0.0, %v2832
      %v2834 = vpop.f32.mrb[0].mxu0
      %v2835 = vpop.f32.mrb[0].mxu0
      %v2836 = vadd.f32 0.0, %v2835
      %v2837 = vpop.f32.mrb[0].mxu0
      %2838 = vmatprep.mubr.bf16.mxu0 0
      %2839 = vmatmul.mubr.bf16.gmra.mrb[0].mxu0 %v2633
      %v2840 = vpop.f32.mrb[0].mxu0
      %v2841 = vadd.f32 0.0, %v2840
      %v2842 = vpop.f32.mrb[0].mxu0
      %v2843 = vpop.f32.mrb[0].mxu0
      %v2844 = vadd.f32 0.0, %v2843
      %v2845 = vpop.f32.mrb[0].mxu0
      %2846 = vmatprep.mubr.bf16.mxu0 0
      %2847 = vmatmul.mubr.bf16.gmra.mrb[0].mxu0 %v2636
      %v2848 = vpop.f32.mrb[0].mxu0
      %v2849 = vadd.f32 0.0, %v2848
      %v2850 = vpop.f32.mrb[0].mxu0
      %v2851 = vpop.f32.mrb[0].mxu0
      %v2852 = vadd.f32 0.0, %v2851
      %v2853 = vpop.f32.mrb[0].mxu0
      %2854 = vmatprep.mubr.bf16.mxu0 0
      %2855 = vmatmul.mubr.bf16.gmra.mrb[0].mxu0 %v2639
      %v2856 = vpop.f32.mrb[0].mxu0
      %v2857 = vadd.f32 0.0, %v2856
      %v2858 = vpop.f32.mrb[0].mxu0
      %v2859 = vpop.f32.mrb[0].mxu0
      %v2860 = vadd.f32 0.0, %v2859
      %v2861 = vpop.f32.mrb[0].mxu0
      %2862 = vmatprep.mubr.bf16.mxu0 0
      %2863 = vmatmul.mubr.bf16.gmra.mrb[0].mxu0 %v2642
      %v2864 = vpop.f32.mrb[0].mxu0
      %v2865 = vadd.f32 0.0, %v2864
      %v2866 = vpop.f32.mrb[0].mxu0
      %v2867 = vpop.f32.mrb[0].mxu0
      %v2868 = vadd.f32 0.0, %v2867
      %v2869 = vpop.f32.mrb[0].mxu0
      %2870 = vmatprep.mubr.bf16.mxu0 0
      %2871 = vmatmul.mubr.bf16.gmra.mrb[0].mxu0 %v2645
      %v2872 = vpop.f32.mrb[0].mxu0
      %v2873 = vadd.f32 0.0, %v2872
      %v2874 = vpop.f32.mrb[0].mxu0
      %v2875 = vpop.f32.mrb[0].mxu0
      %v2876 = vadd.f32 0.0, %v2875
      %v2877 = vpop.f32.mrb[0].mxu0
      %2878 = vmatprep.mubr.bf16.mxu0 0
      %2879 = vmatmul.mubr.bf16.gmra.mrb[0].mxu0 %v2648
      %v2880 = vpop.f32.mrb[0].mxu0
      %v2881 = vadd.f32 0.0, %v2880
      %v2882 = vpop.f32.mrb[0].mxu0
      %v2883 = vpop.f32.mrb[0].mxu0
      %v2884 = vadd.f32 0.0, %v2883
      %v2885 = vpop.f32.mrb[0].mxu0
      %2886 = vmatprep.mubr.bf16.mxu0 0
      %2887 = vmatmul.mubr.bf16.gmra.mrb[0].mxu0 %v2651
      %v2888 = vpop.f32.mrb[0].mxu0
      %v2889 = vadd.f32 0.0, %v2888
      %v2890 = vpop.f32.mrb[0].mxu0
      %v2891 = vpop.f32.mrb[0].mxu0
      %v2892 = vadd.f32 0.0, %v2891
      %v2893 = vpop.f32.mrb[0].mxu0
      %2894 = vmatprep.mubr.bf16.mxu0 0
      %2895 = vmatmul.mubr.bf16.gmra.mrb[0].mxu0 %v2654
      %v2896 = vpop.f32.mrb[0].mxu0
      %v2897 = vadd.f32 0.0, %v2896
      %v2898 = vpop.f32.mrb[0].mxu0
      %v2899 = vpop.f32.mrb[0].mxu0
      %v2900 = vadd.f32 0.0, %v2899
      %v2901 = vpop.f32.mrb[0].mxu0
      %2902 = vmatprep.mubr.bf16.mxu0 0
      %2903 = vmatmul.mubr.bf16.gmra.mrb[0].mxu0 %v2657
      %v2904 = vpop.f32.mrb[0].mxu0
      %v2905 = vadd.f32 0.0, %v2904
      %v2906 = vpop.f32.mrb[0].mxu0
      %v2907 = vpop.f32.mrb[0].mxu0
      %v2908 = vadd.f32 0.0, %v2907
      %v2909 = vpop.f32.mrb[0].mxu0
      %2910 = vmatprep.mubr.bf16.mxu0 0
      %2911 = vmatmul.mubr.bf16.gmra.mrb[0].mxu0 %v2660
      %v2912 = vpop.f32.mrb[0].mxu0
      %v2913 = vadd.f32 0.0, %v2912
      %v2914 = vpop.f32.mrb[0].mxu0
      %v2915 = vpop.f32.mrb[0].mxu0
      %v2916 = vadd.f32 0.0, %v2915
      %v2917 = vpop.f32.mrb[0].mxu0
      %2918 = vmatprep.mubr.bf16.mxu0 0
      %2919 = vmatmul.mubr.bf16.gmra.mrb[0].mxu0 %v2663
      %v2920 = vpop.f32.mrb[0].mxu0
      %v2921 = vadd.f32 0.0, %v2920
      %v2922 = vpop.f32.mrb[0].mxu0
      %v2923 = vpop.f32.mrb[0].mxu0
      %v2924 = vadd.f32 0.0, %v2923
      %v2925 = vpop.f32.mrb[0].mxu0
      %2926 = vmatprep.mubr.bf16.mxu0 0
      %2927 = vmatmul.mubr.bf16.gmra.mrb[0].mxu0 %v2666
      %v2928 = vpop.f32.mrb[0].mxu0
      %v2929 = vadd.f32 0.0, %v2928
      %v2930 = vpop.f32.mrb[0].mxu0
      %v2931 = vpop.f32.mrb[0].mxu0
      %v2932 = vadd.f32 0.0, %v2931
      %v2933 = vpop.f32.mrb[0].mxu0
      %2934 = vmatprep.mubr.bf16.mxu0 0
      %2935 = vmatmul.mubr.bf16.gmra.mrb[0].mxu0 %v2669
      %v2936 = vpop.f32.mrb[0].mxu0
      %v2937 = vadd.f32 0.0, %v2936
      %v2938 = vpop.f32.mrb[0].mxu0
      %v2939 = vpop.f32.mrb[0].mxu0
      %v2940 = vadd.f32 0.0, %v2939
      %v2941 = vpop.f32.mrb[0].mxu0
      %2942 = vmatprep.mubr.bf16.mxu0 0
      %2943 = vmatmul.mubr.bf16.gmra.mrb[0].mxu0 %v2672
      %v2944 = vpop.f32.mrb[0].mxu0
      %v2945 = vadd.f32 0.0, %v2944
      %v2946 = vpop.f32.mrb[0].mxu0
      %v2947 = vpop.f32.mrb[0].mxu0
      %v2948 = vadd.f32 0.0, %v2947
      %v2949 = vpop.f32.mrb[0].mxu0
      %2950 = vmatprep.mubr.bf16.mxu0 0
      %2951 = vmatmul.mubr.bf16.gmra.mrb[0].mxu0 %v2675
      %v2952 = vpop.f32.mrb[0].mxu0
      %v2953 = vadd.f32 0.0, %v2952
      %v2954 = vpop.f32.mrb[0].mxu0
      %v2955 = vpop.f32.mrb[0].mxu0
      %v2956 = vadd.f32 0.0, %v2955
      %v2957 = vpop.f32.mrb[0].mxu0
      %2958 = vmatprep.mubr.bf16.mxu0 0
      %2959 = vmatmul.mubr.bf16.gmra.mrb[0].mxu0 %v2678
      %v2960 = vpop.f32.mrb[0].mxu0
      %v2961 = vadd.f32 0.0, %v2960
      %v2962 = vpop.f32.mrb[0].mxu0
      %v2963 = vpop.f32.mrb[0].mxu0
      %v2964 = vadd.f32 0.0, %v2963
      %v2965 = vpop.f32.mrb[0].mxu0
      %2966 = vmatprep.mubr.bf16.mxu0 0
      %2967 = vmatmul.mubr.bf16.gmra.mrb[0].mxu0 %v2681
      %v2968 = vpop.f32.mrb[0].mxu0
      %v2969 = vadd.f32 0.0, %v2968
      %v2970 = vpop.f32.mrb[0].mxu0
      %v2971 = vpop.f32.mrb[0].mxu0
      %v2972 = vadd.f32 0.0, %v2971
      %v2973 = vpop.f32.mrb[0].mxu0
      %2974 = vdwg.mxu0
      %v2975 = vadd.f32 %v2035, %v2721
      %v2976 = vadd.f32 %v2036, %v2724
      %v2977 = vadd.f32 %v2037, %v2729
      %v2978 = vadd.f32 %v2038, %v2732
      %v2979 = vadd.f32 %v2039, %v2737
      %v2980 = vadd.f32 %v2040, %v2740
      %v2981 = vadd.f32 %v2041, %v2745
      %v2982 = vadd.f32 %v2042, %v2748
      %v2983 = vadd.f32 %v2043, %v2753
      %v2984 = vadd.f32 %v2044, %v2756
      %v2985 = vadd.f32 %v2045, %v2761
      %v2986 = vadd.f32 %v2046, %v2764
      %v2987 = vadd.f32 %v2047, %v2769
      %v2988 = vadd.f32 %v2048, %v2772
      %v2989 = vadd.f32 %v2049, %v2777
      %v2990 = vadd.f32 %v2050, %v2780
      %v2991 = vadd.f32 %v2051, %v2785
      %v2992 = vadd.f32 %v2052, %v2788
      %v2993 = vadd.f32 %v2053, %v2793
      %v2994 = vadd.f32 %v2054, %v2796
      %v2995 = vadd.f32 %v2055, %v2801
      %v2996 = vadd.f32 %v2056, %v2804
      %v2997 = vadd.f32 %v2057, %v2809
      %v2998 = vadd.f32 %v2058, %v2812
      %v2999 = vadd.f32 %v2059, %v2817
      %v3000 = vadd.f32 %v2060, %v2820
      %v3001 = vadd.f32 %v2061, %v2825
      %v3002 = vadd.f32 %v2062, %v2828
      %v3003 = vadd.f32 %v2063, %v2833
      %v3004 = vadd.f32 %v2064, %v2836
      %v3005 = vadd.f32 %v2065, %v2841
      %v3006 = vadd.f32 %v2066, %v2844
      %v3007 = vadd.f32 %v2067, %v2849
      %v3008 = vadd.f32 %v2068, %v2852
      %v3009 = vadd.f32 %v2069, %v2857
      %v3010 = vadd.f32 %v2070, %v2860
      %v3011 = vadd.f32 %v2071, %v2865
      %v3012 = vadd.f32 %v2072, %v2868
      %v3013 = vadd.f32 %v2073, %v2873
      %v3014 = vadd.f32 %v2074, %v2876
      %v3015 = vadd.f32 %v2075, %v2881
      %v3016 = vadd.f32 %v2076, %v2884
      %v3017 = vadd.f32 %v2077, %v2889
      %v3018 = vadd.f32 %v2078, %v2892
      %v3019 = vadd.f32 %v2079, %v2897
      %v3020 = vadd.f32 %v2080, %v2900
      %v3021 = vadd.f32 %v2081, %v2905
      %v3022 = vadd.f32 %v2082, %v2908
      %v3023 = vadd.f32 %v2083, %v2913
      %v3024 = vadd.f32 %v2084, %v2916
      %v3025 = vadd.f32 %v2085, %v2921
      %v3026 = vadd.f32 %v2086, %v2924
      %v3027 = vadd.f32 %v2087, %v2929
      %v3028 = vadd.f32 %v2088, %v2932
      %v3029 = vadd.f32 %v2089, %v2937
      %v3030 = vadd.f32 %v2090, %v2940
      %v3031 = vadd.f32 %v2091, %v2945
      %v3032 = vadd.f32 %v2092, %v2948
      %v3033 = vadd.f32 %v2093, %v2953
      %v3034 = vadd.f32 %v2094, %v2956
      %v3035 = vadd.f32 %v2095, %v2961
      %v3036 = vadd.f32 %v2096, %v2964
      %v3037 = vadd.f32 %v2097, %v2969
      %v3038 = vadd.f32 %v2098, %v2972
      %v3039 = vld [vmem:[%s2] sm:$0x1]
      %v3040 = vlaneseq
      %v3041 = vshrl.u32 %v3040, 7
      %v3042 = vsub.s32 0, %v3041
      %v3043 = vrot.slane %v3039, %v3042
      %v3044 = vadd.f32 %v2975, %v3043
      %v3045 = vadd.f32 %v2976, %v3043
      %v3046 = vadd.f32 %v2977, %v3043
      %v3047 = vadd.f32 %v2978, %v3043
      %v3048 = vadd.f32 %v2979, %v3043
      %v3049 = vadd.f32 %v2980, %v3043
      %v3050 = vadd.f32 %v2981, %v3043
      %v3051 = vadd.f32 %v2982, %v3043
      %v3052 = vadd.f32 %v2983, %v3043
      %v3053 = vadd.f32 %v2984, %v3043
      %v3054 = vadd.f32 %v2985, %v3043
      %v3055 = vadd.f32 %v2986, %v3043
      %v3056 = vadd.f32 %v2987, %v3043
      %v3057 = vadd.f32 %v2988, %v3043
      %v3058 = vadd.f32 %v2989, %v3043
      %v3059 = vadd.f32 %v2990, %v3043
      %v3060 = vadd.f32 %v2991, %v3043
      %v3061 = vadd.f32 %v2992, %v3043
      %v3062 = vadd.f32 %v2993, %v3043
      %v3063 = vadd.f32 %v2994, %v3043
      %v3064 = vadd.f32 %v2995, %v3043
      %v3065 = vadd.f32 %v2996, %v3043
      %v3066 = vadd.f32 %v2997, %v3043
      %v3067 = vadd.f32 %v2998, %v3043
      %v3068 = vadd.f32 %v2999, %v3043
      %v3069 = vadd.f32 %v3000, %v3043
      %v3070 = vadd.f32 %v3001, %v3043
      %v3071 = vadd.f32 %v3002, %v3043
      %v3072 = vadd.f32 %v3003, %v3043
      %v3073 = vadd.f32 %v3004, %v3043
      %v3074 = vadd.f32 %v3005, %v3043
      %v3075 = vadd.f32 %v3006, %v3043
      %v3076 = vadd.f32 %v3007, %v3043
      %v3077 = vadd.f32 %v3008, %v3043
      %v3078 = vadd.f32 %v3009, %v3043
      %v3079 = vadd.f32 %v3010, %v3043
      %v3080 = vadd.f32 %v3011, %v3043
      %v3081 = vadd.f32 %v3012, %v3043
      %v3082 = vadd.f32 %v3013, %v3043
      %v3083 = vadd.f32 %v3014, %v3043
      %v3084 = vadd.f32 %v3015, %v3043
      %v3085 = vadd.f32 %v3016, %v3043
      %v3086 = vadd.f32 %v3017, %v3043
      %v3087 = vadd.f32 %v3018, %v3043
      %v3088 = vadd.f32 %v3019, %v3043
      %v3089 = vadd.f32 %v3020, %v3043
      %v3090 = vadd.f32 %v3021, %v3043
      %v3091 = vadd.f32 %v3022, %v3043
      %v3092 = vadd.f32 %v3023, %v3043
      %v3093 = vadd.f32 %v3024, %v3043
      %v3094 = vadd.f32 %v3025, %v3043
      %v3095 = vadd.f32 %v3026, %v3043
      %v3096 = vadd.f32 %v3027, %v3043
      %v3097 = vadd.f32 %v3028, %v3043
      %v3098 = vadd.f32 %v3029, %v3043
      %v3099 = vadd.f32 %v3030, %v3043
      %v3100 = vadd.f32 %v3031, %v3043
      %v3101 = vadd.f32 %v3032, %v3043
      %v3102 = vadd.f32 %v3033, %v3043
      %v3103 = vadd.f32 %v3034, %v3043
      %v3104 = vadd.f32 %v3035, %v3043
      %v3105 = vadd.f32 %v3036, %v3043
      %v3106 = vadd.f32 %v3037, %v3043
      %v3107 = vadd.f32 %v3038, %v3043
      %vm3108 = vcmp.gt.f32.partialorder %v3044, 0.0
      %vm3109 = vcmp.gt.f32.partialorder %v3045, 0.0
      %vm3110 = vcmp.gt.f32.partialorder %v3046, 0.0
      %vm3111 = vcmp.gt.f32.partialorder %v3047, 0.0
      %vm3112 = vcmp.gt.f32.partialorder %v3048, 0.0
      %vm3113 = vcmp.gt.f32.partialorder %v3049, 0.0
      %vm3114 = vcmp.gt.f32.partialorder %v3050, 0.0
      %vm3115 = vcmp.gt.f32.partialorder %v3051, 0.0
      %vm3116 = vcmp.gt.f32.partialorder %v3052, 0.0
      %vm3117 = vcmp.gt.f32.partialorder %v3053, 0.0
      %vm3118 = vcmp.gt.f32.partialorder %v3054, 0.0
      %vm3119 = vcmp.gt.f32.partialorder %v3055, 0.0
      %vm3120 = vcmp.gt.f32.partialorder %v3056, 0.0
      %vm3121 = vcmp.gt.f32.partialorder %v3057, 0.0
      %vm3122 = vcmp.gt.f32.partialorder %v3058, 0.0
      %vm3123 = vcmp.gt.f32.partialorder %v3059, 0.0
      %vm3124 = vcmp.gt.f32.partialorder %v3060, 0.0
      %vm3125 = vcmp.gt.f32.partialorder %v3061, 0.0
      %vm3126 = vcmp.gt.f32.partialorder %v3062, 0.0
      %vm3127 = vcmp.gt.f32.partialorder %v3063, 0.0
      %vm3128 = vcmp.gt.f32.partialorder %v3064, 0.0
      %vm3129 = vcmp.gt.f32.partialorder %v3065, 0.0
      %vm3130 = vcmp.gt.f32.partialorder %v3066, 0.0
      %vm3131 = vcmp.gt.f32.partialorder %v3067, 0.0
      %vm3132 = vcmp.gt.f32.partialorder %v3068, 0.0
      %vm3133 = vcmp.gt.f32.partialorder %v3069, 0.0
      %vm3134 = vcmp.gt.f32.partialorder %v3070, 0.0
      %vm3135 = vcmp.gt.f32.partialorder %v3071, 0.0
      %vm3136 = vcmp.gt.f32.partialorder %v3072, 0.0
      %vm3137 = vcmp.gt.f32.partialorder %v3073, 0.0
      %vm3138 = vcmp.gt.f32.partialorder %v3074, 0.0
      %vm3139 = vcmp.gt.f32.partialorder %v3075, 0.0
      %vm3140 = vcmp.gt.f32.partialorder %v3076, 0.0
      %vm3141 = vcmp.gt.f32.partialorder %v3077, 0.0
      %vm3142 = vcmp.gt.f32.partialorder %v3078, 0.0
      %vm3143 = vcmp.gt.f32.partialorder %v3079, 0.0
      %vm3144 = vcmp.gt.f32.partialorder %v3080, 0.0
      %vm3145 = vcmp.gt.f32.partialorder %v3081, 0.0
      %vm3146 = vcmp.gt.f32.partialorder %v3082, 0.0
      %vm3147 = vcmp.gt.f32.partialorder %v3083, 0.0
      %vm3148 = vcmp.gt.f32.partialorder %v3084, 0.0
      %vm3149 = vcmp.gt.f32.partialorder %v3085, 0.0
      %vm3150 = vcmp.gt.f32.partialorder %v3086, 0.0
      %vm3151 = vcmp.gt.f32.partialorder %v3087, 0.0
      %vm3152 = vcmp.gt.f32.partialorder %v3088, 0.0
      %vm3153 = vcmp.gt.f32.partialorder %v3089, 0.0
      %vm3154 = vcmp.gt.f32.partialorder %v3090, 0.0
      %vm3155 = vcmp.gt.f32.partialorder %v3091, 0.0
      %vm3156 = vcmp.gt.f32.partialorder %v3092, 0.0
      %vm3157 = vcmp.gt.f32.partialorder %v3093, 0.0
      %vm3158 = vcmp.gt.f32.partialorder %v3094, 0.0
      %vm3159 = vcmp.gt.f32.partialorder %v3095, 0.0
      %vm3160 = vcmp.gt.f32.partialorder %v3096, 0.0
      %vm3161 = vcmp.gt.f32.partialorder %v3097, 0.0
      %vm3162 = vcmp.gt.f32.partialorder %v3098, 0.0
      %vm3163 = vcmp.gt.f32.partialorder %v3099, 0.0
      %vm3164 = vcmp.gt.f32.partialorder %v3100, 0.0
      %vm3165 = vcmp.gt.f32.partialorder %v3101, 0.0
      %vm3166 = vcmp.gt.f32.partialorder %v3102, 0.0
      %vm3167 = vcmp.gt.f32.partialorder %v3103, 0.0
      %vm3168 = vcmp.gt.f32.partialorder %v3104, 0.0
      %vm3169 = vcmp.gt.f32.partialorder %v3105, 0.0
      %vm3170 = vcmp.gt.f32.partialorder %v3106, 0.0
      %vm3171 = vcmp.gt.f32.partialorder %v3107, 0.0
      %v3172 = vmul.f32 %v3044, 0.2
      %v3173 = vmul.f32 %v3045, 0.2
      %v3174 = vmul.f32 %v3046, 0.2
      %v3175 = vmul.f32 %v3047, 0.2
      %v3176 = vmul.f32 %v3048, 0.2
      %v3177 = vmul.f32 %v3049, 0.2
      %v3178 = vmul.f32 %v3050, 0.2
      %v3179 = vmul.f32 %v3051, 0.2
      %v3180 = vmul.f32 %v3052, 0.2
      %v3181 = vmul.f32 %v3053, 0.2
      %v3182 = vmul.f32 %v3054, 0.2
      %v3183 = vmul.f32 %v3055, 0.2
      %v3184 = vmul.f32 %v3056, 0.2
      %v3185 = vmul.f32 %v3057, 0.2
      %v3186 = vmul.f32 %v3058, 0.2
      %v3187 = vmul.f32 %v3059, 0.2
      %v3188 = vmul.f32 %v3060, 0.2
      %v3189 = vmul.f32 %v3061, 0.2
      %v3190 = vmul.f32 %v3062, 0.2
      %v3191 = vmul.f32 %v3063, 0.2
      %v3192 = vmul.f32 %v3064, 0.2
      %v3193 = vmul.f32 %v3065, 0.2
      %v3194 = vmul.f32 %v3066, 0.2
      %v3195 = vmul.f32 %v3067, 0.2
      %v3196 = vmul.f32 %v3068, 0.2
      %v3197 = vmul.f32 %v3069, 0.2
      %v3198 = vmul.f32 %v3070, 0.2
      %v3199 = vmul.f32 %v3071, 0.2
      %v3200 = vmul.f32 %v3072, 0.2
      %v3201 = vmul.f32 %v3073, 0.2
      %v3202 = vmul.f32 %v3074, 0.2
      %v3203 = vmul.f32 %v3075, 0.2
      %v3204 = vmul.f32 %v3076, 0.2
      %v3205 = vmul.f32 %v3077, 0.2
      %v3206 = vmul.f32 %v3078, 0.2
      %v3207 = vmul.f32 %v3079, 0.2
      %v3208 = vmul.f32 %v3080, 0.2
      %v3209 = vmul.f32 %v3081, 0.2
      %v3210 = vmul.f32 %v3082, 0.2
      %v3211 = vmul.f32 %v3083, 0.2
      %v3212 = vmul.f32 %v3084, 0.2
      %v3213 = vmul.f32 %v3085, 0.2
      %v3214 = vmul.f32 %v3086, 0.2
      %v3215 = vmul.f32 %v3087, 0.2
      %v3216 = vmul.f32 %v3088, 0.2
      %v3217 = vmul.f32 %v3089, 0.2
      %v3218 = vmul.f32 %v3090, 0.2
      %v3219 = vmul.f32 %v3091, 0.2
      %v3220 = vmul.f32 %v3092, 0.2
      %v3221 = vmul.f32 %v3093, 0.2
      %v3222 = vmul.f32 %v3094, 0.2
      %v3223 = vmul.f32 %v3095, 0.2
      %v3224 = vmul.f32 %v3096, 0.2
      %v3225 = vmul.f32 %v3097, 0.2
      %v3226 = vmul.f32 %v3098, 0.2
      %v3227 = vmul.f32 %v3099, 0.2
      %v3228 = vmul.f32 %v3100, 0.2
      %v3229 = vmul.f32 %v3101, 0.2
      %v3230 = vmul.f32 %v3102, 0.2
      %v3231 = vmul.f32 %v3103, 0.2
      %v3232 = vmul.f32 %v3104, 0.2
      %v3233 = vmul.f32 %v3105, 0.2
      %v3234 = vmul.f32 %v3106, 0.2
      %v3235 = vmul.f32 %v3107, 0.2
      %v3236 = vsel %vm3108, %v3044, %v3172
      %v3237 = vsel %vm3109, %v3045, %v3173
      %v3238 = vsel %vm3110, %v3046, %v3174
      %v3239 = vsel %vm3111, %v3047, %v3175
      %v3240 = vsel %vm3112, %v3048, %v3176
      %v3241 = vsel %vm3113, %v3049, %v3177
      %v3242 = vsel %vm3114, %v3050, %v3178
      %v3243 = vsel %vm3115, %v3051, %v3179
      %v3244 = vsel %vm3116, %v3052, %v3180
      %v3245 = vsel %vm3117, %v3053, %v3181
      %v3246 = vsel %vm3118, %v3054, %v3182
      %v3247 = vsel %vm3119, %v3055, %v3183
      %v3248 = vsel %vm3120, %v3056, %v3184
      %v3249 = vsel %vm3121, %v3057, %v3185
      %v3250 = vsel %vm3122, %v3058, %v3186
      %v3251 = vsel %vm3123, %v3059, %v3187
      %v3252 = vsel %vm3124, %v3060, %v3188
      %v3253 = vsel %vm3125, %v3061, %v3189
      %v3254 = vsel %vm3126, %v3062, %v3190
      %v3255 = vsel %vm3127, %v3063, %v3191
      %v3256 = vsel %vm3128, %v3064, %v3192
      %v3257 = vsel %vm3129, %v3065, %v3193
      %v3258 = vsel %vm3130, %v3066, %v3194
      %v3259 = vsel %vm3131, %v3067, %v3195
      %v3260 = vsel %vm3132, %v3068, %v3196
      %v3261 = vsel %vm3133, %v3069, %v3197
      %v3262 = vsel %vm3134, %v3070, %v3198
      %v3263 = vsel %vm3135, %v3071, %v3199
      %v3264 = vsel %vm3136, %v3072, %v3200
      %v3265 = vsel %vm3137, %v3073, %v3201
      %v3266 = vsel %vm3138, %v3074, %v3202
      %v3267 = vsel %vm3139, %v3075, %v3203
      %v3268 = vsel %vm3140, %v3076, %v3204
      %v3269 = vsel %vm3141, %v3077, %v3205
      %v3270 = vsel %vm3142, %v3078, %v3206
      %v3271 = vsel %vm3143, %v3079, %v3207
      %v3272 = vsel %vm3144, %v3080, %v3208
      %v3273 = vsel %vm3145, %v3081, %v3209
      %v3274 = vsel %vm3146, %v3082, %v3210
      %v3275 = vsel %vm3147, %v3083, %v3211
      %v3276 = vsel %vm3148, %v3084, %v3212
      %v3277 = vsel %vm3149, %v3085, %v3213
      %v3278 = vsel %vm3150, %v3086, %v3214
      %v3279 = vsel %vm3151, %v3087, %v3215
      %v3280 = vsel %vm3152, %v3088, %v3216
      %v3281 = vsel %vm3153, %v3089, %v3217
      %v3282 = vsel %vm3154, %v3090, %v3218
      %v3283 = vsel %vm3155, %v3091, %v3219
      %v3284 = vsel %vm3156, %v3092, %v3220
      %v3285 = vsel %vm3157, %v3093, %v3221
      %v3286 = vsel %vm3158, %v3094, %v3222
      %v3287 = vsel %vm3159, %v3095, %v3223
      %v3288 = vsel %vm3160, %v3096, %v3224
      %v3289 = vsel %vm3161, %v3097, %v3225
      %v3290 = vsel %vm3162, %v3098, %v3226
      %v3291 = vsel %vm3163, %v3099, %v3227
      %v3292 = vsel %vm3164, %v3100, %v3228
      %v3293 = vsel %vm3165, %v3101, %v3229
      %v3294 = vsel %vm3166, %v3102, %v3230
      %v3295 = vsel %vm3167, %v3103, %v3231
      %v3296 = vsel %vm3168, %v3104, %v3232
      %v3297 = vsel %vm3169, %v3105, %v3233
      %v3298 = vsel %vm3170, %v3106, %v3234
      %v3299 = vsel %vm3171, %v3107, %v3235
      %v3300 = vld [vmem:[%s2 + $0x1] sm:$0x1]
      %v3301 = vlaneseq
      %v3302 = vshrl.u32 %v3301, 7
      %v3303 = vsub.s32 0, %v3302
      %v3304 = vrot.slane %v3300, %v3303
      %v3305 = vmul.f32 %v3236, %v3304
      %v3306 = vmul.f32 %v3237, %v3304
      %v3307 = vmul.f32 %v3238, %v3304
      %v3308 = vmul.f32 %v3239, %v3304
      %v3309 = vmul.f32 %v3240, %v3304
      %v3310 = vmul.f32 %v3241, %v3304
      %v3311 = vmul.f32 %v3242, %v3304
      %v3312 = vmul.f32 %v3243, %v3304
      %v3313 = vmul.f32 %v3244, %v3304
      %v3314 = vmul.f32 %v3245, %v3304
      %v3315 = vmul.f32 %v3246, %v3304
      %v3316 = vmul.f32 %v3247, %v3304
      %v3317 = vmul.f32 %v3248, %v3304
      %v3318 = vmul.f32 %v3249, %v3304
      %v3319 = vmul.f32 %v3250, %v3304
      %v3320 = vmul.f32 %v3251, %v3304
      %v3321 = vmul.f32 %v3252, %v3304
      %v3322 = vmul.f32 %v3253, %v3304
      %v3323 = vmul.f32 %v3254, %v3304
      %v3324 = vmul.f32 %v3255, %v3304
      %v3325 = vmul.f32 %v3256, %v3304
      %v3326 = vmul.f32 %v3257, %v3304
      %v3327 = vmul.f32 %v3258, %v3304
      %v3328 = vmul.f32 %v3259, %v3304
      %v3329 = vmul.f32 %v3260, %v3304
      %v3330 = vmul.f32 %v3261, %v3304
      %v3331 = vmul.f32 %v3262, %v3304
      %v3332 = vmul.f32 %v3263, %v3304
      %v3333 = vmul.f32 %v3264, %v3304
      %v3334 = vmul.f32 %v3265, %v3304
      %v3335 = vmul.f32 %v3266, %v3304
      %v3336 = vmul.f32 %v3267, %v3304
      %v3337 = vmul.f32 %v3268, %v3304
      %v3338 = vmul.f32 %v3269, %v3304
      %v3339 = vmul.f32 %v3270, %v3304
      %v3340 = vmul.f32 %v3271, %v3304
      %v3341 = vmul.f32 %v3272, %v3304
      %v3342 = vmul.f32 %v3273, %v3304
      %v3343 = vmul.f32 %v3274, %v3304
      %v3344 = vmul.f32 %v3275, %v3304
      %v3345 = vmul.f32 %v3276, %v3304
      %v3346 = vmul.f32 %v3277, %v3304
      %v3347 = vmul.f32 %v3278, %v3304
      %v3348 = vmul.f32 %v3279, %v3304
      %v3349 = vmul.f32 %v3280, %v3304
      %v3350 = vmul.f32 %v3281, %v3304
      %v3351 = vmul.f32 %v3282, %v3304
      %v3352 = vmul.f32 %v3283, %v3304
      %v3353 = vmul.f32 %v3284, %v3304
      %v3354 = vmul.f32 %v3285, %v3304
      %v3355 = vmul.f32 %v3286, %v3304
      %v3356 = vmul.f32 %v3287, %v3304
      %v3357 = vmul.f32 %v3288, %v3304
      %v3358 = vmul.f32 %v3289, %v3304
      %v3359 = vmul.f32 %v3290, %v3304
      %v3360 = vmul.f32 %v3291, %v3304
      %v3361 = vmul.f32 %v3292, %v3304
      %v3362 = vmul.f32 %v3293, %v3304
      %v3363 = vmul.f32 %v3294, %v3304
      %v3364 = vmul.f32 %v3295, %v3304
      %v3365 = vmul.f32 %v3296, %v3304
      %v3366 = vmul.f32 %v3297, %v3304
      %v3367 = vmul.f32 %v3298, %v3304
      %v3368 = vmul.f32 %v3299, %v3304
      %v3369 = vld [vmem:[%s2 + $0x2] sm:$0x1]
      %v3370 = vlaneseq
      %v3371 = vshrl.u32 %v3370, 7
      %v3372 = vsub.s32 0, %v3371
      %v3373 = vrot.slane %v3369, %v3372
      %v3374 = vadd.f32 %v3305, %v3373
      %v3375 = vadd.f32 %v3306, %v3373
      %v3376 = vadd.f32 %v3307, %v3373
      %v3377 = vadd.f32 %v3308, %v3373
      %v3378 = vadd.f32 %v3309, %v3373
      %v3379 = vadd.f32 %v3310, %v3373
      %v3380 = vadd.f32 %v3311, %v3373
      %v3381 = vadd.f32 %v3312, %v3373
      %v3382 = vadd.f32 %v3313, %v3373
      %v3383 = vadd.f32 %v3314, %v3373
      %v3384 = vadd.f32 %v3315, %v3373
      %v3385 = vadd.f32 %v3316, %v3373
      %v3386 = vadd.f32 %v3317, %v3373
      %v3387 = vadd.f32 %v3318, %v3373
      %v3388 = vadd.f32 %v3319, %v3373
      %v3389 = vadd.f32 %v3320, %v3373
      %v3390 = vadd.f32 %v3321, %v3373
      %v3391 = vadd.f32 %v3322, %v3373
      %v3392 = vadd.f32 %v3323, %v3373
      %v3393 = vadd.f32 %v3324, %v3373
      %v3394 = vadd.f32 %v3325, %v3373
      %v3395 = vadd.f32 %v3326, %v3373
      %v3396 = vadd.f32 %v3327, %v3373
      %v3397 = vadd.f32 %v3328, %v3373
      %v3398 = vadd.f32 %v3329, %v3373
      %v3399 = vadd.f32 %v3330, %v3373
      %v3400 = vadd.f32 %v3331, %v3373
      %v3401 = vadd.f32 %v3332, %v3373
      %v3402 = vadd.f32 %v3333, %v3373
      %v3403 = vadd.f32 %v3334, %v3373
      %v3404 = vadd.f32 %v3335, %v3373
      %v3405 = vadd.f32 %v3336, %v3373
      %v3406 = vadd.f32 %v3337, %v3373
      %v3407 = vadd.f32 %v3338, %v3373
      %v3408 = vadd.f32 %v3339, %v3373
      %v3409 = vadd.f32 %v3340, %v3373
      %v3410 = vadd.f32 %v3341, %v3373
      %v3411 = vadd.f32 %v3342, %v3373
      %v3412 = vadd.f32 %v3343, %v3373
      %v3413 = vadd.f32 %v3344, %v3373
      %v3414 = vadd.f32 %v3345, %v3373
      %v3415 = vadd.f32 %v3346, %v3373
      %v3416 = vadd.f32 %v3347, %v3373
      %v3417 = vadd.f32 %v3348, %v3373
      %v3418 = vadd.f32 %v3349, %v3373
      %v3419 = vadd.f32 %v3350, %v3373
      %v3420 = vadd.f32 %v3351, %v3373
      %v3421 = vadd.f32 %v3352, %v3373
      %v3422 = vadd.f32 %v3353, %v3373
      %v3423 = vadd.f32 %v3354, %v3373
      %v3424 = vadd.f32 %v3355, %v3373
      %v3425 = vadd.f32 %v3356, %v3373
      %v3426 = vadd.f32 %v3357, %v3373
      %v3427 = vadd.f32 %v3358, %v3373
      %v3428 = vadd.f32 %v3359, %v3373
      %v3429 = vadd.f32 %v3360, %v3373
      %v3430 = vadd.f32 %v3361, %v3373
      %v3431 = vadd.f32 %v3362, %v3373
      %v3432 = vadd.f32 %v3363, %v3373
      %v3433 = vadd.f32 %v3364, %v3373
      %v3434 = vadd.f32 %v3365, %v3373
      %v3435 = vadd.f32 %v3366, %v3373
      %v3436 = vadd.f32 %v3367, %v3373
      %v3437 = vadd.f32 %v3368, %v3373
      %v3438 = vpack.c.bf16 %v3375, %v3374
      %v3439 = vpack.c.bf16 %v3377, %v3376
      %v3440 = vpack.c.bf16 %v3379, %v3378
      %v3441 = vpack.c.bf16 %v3381, %v3380
      %v3442 = vpack.c.bf16 %v3383, %v3382
      %v3443 = vpack.c.bf16 %v3385, %v3384
      %v3444 = vpack.c.bf16 %v3387, %v3386
      %v3445 = vpack.c.bf16 %v3389, %v3388
      %v3446 = vpack.c.bf16 %v3391, %v3390
      %v3447 = vpack.c.bf16 %v3393, %v3392
      %v3448 = vpack.c.bf16 %v3395, %v3394
      %v3449 = vpack.c.bf16 %v3397, %v3396
      %v3450 = vpack.c.bf16 %v3399, %v3398
      %v3451 = vpack.c.bf16 %v3401, %v3400
      %v3452 = vpack.c.bf16 %v3403, %v3402
      %v3453 = vpack.c.bf16 %v3405, %v3404
      %v3454 = vpack.c.bf16 %v3407, %v3406
      %v3455 = vpack.c.bf16 %v3409, %v3408
      %v3456 = vpack.c.bf16 %v3411, %v3410
      %v3457 = vpack.c.bf16 %v3413, %v3412
      %v3458 = vpack.c.bf16 %v3415, %v3414
      %v3459 = vpack.c.bf16 %v3417, %v3416
      %v3460 = vpack.c.bf16 %v3419, %v3418
      %v3461 = vpack.c.bf16 %v3421, %v3420
      %v3462 = vpack.c.bf16 %v3423, %v3422
      %v3463 = vpack.c.bf16 %v3425, %v3424
      %v3464 = vpack.c.bf16 %v3427, %v3426
      %v3465 = vpack.c.bf16 %v3429, %v3428
      %v3466 = vpack.c.bf16 %v3431, %v3430
      %v3467 = vpack.c.bf16 %v3433, %v3432
      %v3468 = vpack.c.bf16 %v3435, %v3434
      %v3469 = vpack.c.bf16 %v3437, %v3436
      %v3502 = vunpack.c.l.b16 %v3438
      %v3503 = vunpack.c.h.b16 %v3438
      %v3504 = vunpack.c.l.b16 %v3439
      %v3505 = vunpack.c.h.b16 %v3439
      %v3506 = vunpack.c.l.b16 %v3440
      %v3507 = vunpack.c.h.b16 %v3440
      %v3508 = vunpack.c.l.b16 %v3441
      %v3509 = vunpack.c.h.b16 %v3441
      %v3510 = vunpack.c.l.b16 %v3442
      %v3511 = vunpack.c.h.b16 %v3442
      %v3512 = vunpack.c.l.b16 %v3443
      %v3513 = vunpack.c.h.b16 %v3443
      %v3514 = vunpack.c.l.b16 %v3444
      %v3515 = vunpack.c.h.b16 %v3444
      %v3516 = vunpack.c.l.b16 %v3445
      %v3517 = vunpack.c.h.b16 %v3445
      %v3518 = vunpack.c.l.b16 %v3446
      %v3519 = vunpack.c.h.b16 %v3446
      %v3520 = vunpack.c.l.b16 %v3447
      %v3521 = vunpack.c.h.b16 %v3447
      %v3522 = vunpack.c.l.b16 %v3448
      %v3523 = vunpack.c.h.b16 %v3448
      %v3524 = vunpack.c.l.b16 %v3449
      %v3525 = vunpack.c.h.b16 %v3449
      %v3526 = vunpack.c.l.b16 %v3450
      %v3527 = vunpack.c.h.b16 %v3450
      %v3528 = vunpack.c.l.b16 %v3451
      %v3529 = vunpack.c.h.b16 %v3451
      %v3530 = vunpack.c.l.b16 %v3452
      %v3531 = vunpack.c.h.b16 %v3452
      %v3532 = vunpack.c.l.b16 %v3453
      %v3533 = vunpack.c.h.b16 %v3453
      %v3534 = vunpack.c.l.b16 %v3454
      %v3535 = vunpack.c.h.b16 %v3454
      %v3536 = vunpack.c.l.b16 %v3455
      %v3537 = vunpack.c.h.b16 %v3455
      %v3538 = vunpack.c.l.b16 %v3456
      %v3539 = vunpack.c.h.b16 %v3456
      %v3540 = vunpack.c.l.b16 %v3457
      %v3541 = vunpack.c.h.b16 %v3457
      %v3542 = vunpack.c.l.b16 %v3458
      %v3543 = vunpack.c.h.b16 %v3458
      %v3544 = vunpack.c.l.b16 %v3459
      %v3545 = vunpack.c.h.b16 %v3459
      %v3546 = vunpack.c.l.b16 %v3460
      %v3547 = vunpack.c.h.b16 %v3460
      %v3548 = vunpack.c.l.b16 %v3461
      %v3549 = vunpack.c.h.b16 %v3461
      %v3550 = vunpack.c.l.b16 %v3462
      %v3551 = vunpack.c.h.b16 %v3462
      %v3552 = vunpack.c.l.b16 %v3463
      %v3553 = vunpack.c.h.b16 %v3463
      %v3554 = vunpack.c.l.b16 %v3464
      %v3555 = vunpack.c.h.b16 %v3464
      %v3556 = vunpack.c.l.b16 %v3465
      %v3557 = vunpack.c.h.b16 %v3465
      %v3558 = vunpack.c.l.b16 %v3466
      %v3559 = vunpack.c.h.b16 %v3466
      %v3560 = vunpack.c.l.b16 %v3467
      %v3561 = vunpack.c.h.b16 %v3467
      %v3562 = vunpack.c.l.b16 %v3468
      %v3563 = vunpack.c.h.b16 %v3468
      %v3564 = vunpack.c.l.b16 %v3469
      %v3565 = vunpack.c.h.b16 %v3469
      %v3566 = vpack.c.b16 %v3502, %v3502
      %v3567 = vpack.c.b16 %v3503, %v3503
      %v3568 = vpack.c.b16 %v3504, %v3504
      %v3569 = vpack.c.b16 %v3505, %v3505
      %v3570 = vpack.c.b16 %v3506, %v3506
      %v3571 = vpack.c.b16 %v3507, %v3507
      %v3572 = vpack.c.b16 %v3508, %v3508
      %v3573 = vpack.c.b16 %v3509, %v3509
      %v3574 = vpack.c.b16 %v3510, %v3510
      %v3575 = vpack.c.b16 %v3511, %v3511
      %v3576 = vpack.c.b16 %v3512, %v3512
      %v3577 = vpack.c.b16 %v3513, %v3513
      %v3578 = vpack.c.b16 %v3514, %v3514
      %v3579 = vpack.c.b16 %v3515, %v3515
      %v3580 = vpack.c.b16 %v3516, %v3516
      %v3581 = vpack.c.b16 %v3517, %v3517
      %v3582 = vpack.c.b16 %v3518, %v3518
      %v3583 = vpack.c.b16 %v3519, %v3519
      %v3584 = vpack.c.b16 %v3520, %v3520
      %v3585 = vpack.c.b16 %v3521, %v3521
      %v3586 = vpack.c.b16 %v3522, %v3522
      %v3587 = vpack.c.b16 %v3523, %v3523
      %v3588 = vpack.c.b16 %v3524, %v3524
      %v3589 = vpack.c.b16 %v3525, %v3525
      %v3590 = vpack.c.b16 %v3526, %v3526
      %v3591 = vpack.c.b16 %v3527, %v3527
      %v3592 = vpack.c.b16 %v3528, %v3528
      %v3593 = vpack.c.b16 %v3529, %v3529
      %v3594 = vpack.c.b16 %v3530, %v3530
      %v3595 = vpack.c.b16 %v3531, %v3531
      %v3596 = vpack.c.b16 %v3532, %v3532
      %v3597 = vpack.c.b16 %v3533, %v3533
      %v3598 = vpack.c.b16 %v3534, %v3534
      %v3599 = vpack.c.b16 %v3535, %v3535
      %v3600 = vpack.c.b16 %v3536, %v3536
      %v3601 = vpack.c.b16 %v3537, %v3537
      %v3602 = vpack.c.b16 %v3538, %v3538
      %v3603 = vpack.c.b16 %v3539, %v3539
      %v3604 = vpack.c.b16 %v3540, %v3540
      %v3605 = vpack.c.b16 %v3541, %v3541
      %v3606 = vpack.c.b16 %v3542, %v3542
      %v3607 = vpack.c.b16 %v3543, %v3543
      %v3608 = vpack.c.b16 %v3544, %v3544
      %v3609 = vpack.c.b16 %v3545, %v3545
      %v3610 = vpack.c.b16 %v3546, %v3546
      %v3611 = vpack.c.b16 %v3547, %v3547
      %v3612 = vpack.c.b16 %v3548, %v3548
      %v3613 = vpack.c.b16 %v3549, %v3549
      %v3614 = vpack.c.b16 %v3550, %v3550
      %v3615 = vpack.c.b16 %v3551, %v3551
      %v3616 = vpack.c.b16 %v3552, %v3552
      %v3617 = vpack.c.b16 %v3553, %v3553
      %v3618 = vpack.c.b16 %v3554, %v3554
      %v3619 = vpack.c.b16 %v3555, %v3555
      %v3620 = vpack.c.b16 %v3556, %v3556
      %v3621 = vpack.c.b16 %v3557, %v3557
      %v3622 = vpack.c.b16 %v3558, %v3558
      %v3623 = vpack.c.b16 %v3559, %v3559
      %v3624 = vpack.c.b16 %v3560, %v3560
      %v3625 = vpack.c.b16 %v3561, %v3561
      %v3626 = vpack.c.b16 %v3562, %v3562
      %v3627 = vpack.c.b16 %v3563, %v3563
      %v3628 = vpack.c.b16 %v3564, %v3564
      %v3629 = vpack.c.b16 %v3565, %v3565
      %vm3694 = vcmask 60416
      %3695 = vst.msk [vmem:[%s170] sm:$0xf] %vm3694, %v3566
      %3696 = vst.msk [vmem:[%s170 + $0x4] sm:$0xf] %vm3694, %v3567
      %3697 = vst.msk [vmem:[%s170 + $0x8] sm:$0xf] %vm3694, %v3568
      %3698 = vst.msk [vmem:[%s170 + $0xc] sm:$0xf] %vm3694, %v3569
      %3699 = vst.msk [vmem:[%s170 + $0x10] sm:$0xf] %vm3694, %v3570
      %3700 = vst.msk [vmem:[%s170 + $0x14] sm:$0xf] %vm3694, %v3571
      %3701 = vst.msk [vmem:[%s170 + $0x18] sm:$0xf] %vm3694, %v3572
      %3702 = vst.msk [vmem:[%s170 + $0x1c] sm:$0xf] %vm3694, %v3573
      %3703 = vst.msk [vmem:[%s170 + $0x20] sm:$0xf] %vm3694, %v3574
      %3704 = vst.msk [vmem:[%s170 + $0x24] sm:$0xf] %vm3694, %v3575
      %3705 = vst.msk [vmem:[%s170 + $0x28] sm:$0xf] %vm3694, %v3576
      %3706 = vst.msk [vmem:[%s170 + $0x2c] sm:$0xf] %vm3694, %v3577
      %3707 = vst.msk [vmem:[%s170 + $0x30] sm:$0xf] %vm3694, %v3578
      %3708 = vst.msk [vmem:[%s170 + $0x34] sm:$0xf] %vm3694, %v3579
      %3709 = vst.msk [vmem:[%s170 + $0x38] sm:$0xf] %vm3694, %v3580
      %3710 = vst.msk [vmem:[%s170 + $0x3c] sm:$0xf] %vm3694, %v3581
      %3711 = vst.msk [vmem:[%s170 + $0x40] sm:$0xf] %vm3694, %v3582
      %3712 = vst.msk [vmem:[%s170 + $0x44] sm:$0xf] %vm3694, %v3583
      %3713 = vst.msk [vmem:[%s170 + $0x48] sm:$0xf] %vm3694, %v3584
      %3714 = vst.msk [vmem:[%s170 + $0x4c] sm:$0xf] %vm3694, %v3585
      %3715 = vst.msk [vmem:[%s170 + $0x50] sm:$0xf] %vm3694, %v3586
      %3716 = vst.msk [vmem:[%s170 + $0x54] sm:$0xf] %vm3694, %v3587
      %3717 = vst.msk [vmem:[%s170 + $0x58] sm:$0xf] %vm3694, %v3588
      %3718 = vst.msk [vmem:[%s170 + $0x5c] sm:$0xf] %vm3694, %v3589
      %3719 = vst.msk [vmem:[%s170 + $0x60] sm:$0xf] %vm3694, %v3590
      %3720 = vst.msk [vmem:[%s170 + $0x64] sm:$0xf] %vm3694, %v3591
      %3721 = vst.msk [vmem:[%s170 + $0x68] sm:$0xf] %vm3694, %v3592
      %3722 = vst.msk [vmem:[%s170 + $0x6c] sm:$0xf] %vm3694, %v3593
      %3723 = vst.msk [vmem:[%s170 + $0x70] sm:$0xf] %vm3694, %v3594
      %3724 = vst.msk [vmem:[%s170 + $0x74] sm:$0xf] %vm3694, %v3595
      %3725 = vst.msk [vmem:[%s170 + $0x78] sm:$0xf] %vm3694, %v3596
      %3726 = vst.msk [vmem:[%s170 + $0x7c] sm:$0xf] %vm3694, %v3597
      %3727 = vst.msk [vmem:[%s170 + $0x80] sm:$0xf] %vm3694, %v3598
      %3728 = vst.msk [vmem:[%s170 + $0x84] sm:$0xf] %vm3694, %v3599
      %3729 = vst.msk [vmem:[%s170 + $0x88] sm:$0xf] %vm3694, %v3600
      %3730 = vst.msk [vmem:[%s170 + $0x8c] sm:$0xf] %vm3694, %v3601
      %3731 = vst.msk [vmem:[%s170 + $0x90] sm:$0xf] %vm3694, %v3602
      %3732 = vst.msk [vmem:[%s170 + $0x94] sm:$0xf] %vm3694, %v3603
      %3733 = vst.msk [vmem:[%s170 + $0x98] sm:$0xf] %vm3694, %v3604
      %3734 = vst.msk [vmem:[%s170 + $0x9c] sm:$0xf] %vm3694, %v3605
      %3735 = vst.msk [vmem:[%s170 + $0xa0] sm:$0xf] %vm3694, %v3606
      %3736 = vst.msk [vmem:[%s170 + $0xa4] sm:$0xf] %vm3694, %v3607
      %3737 = vst.msk [vmem:[%s170 + $0xa8] sm:$0xf] %vm3694, %v3608
      %3738 = vst.msk [vmem:[%s170 + $0xac] sm:$0xf] %vm3694, %v3609
      %3739 = vst.msk [vmem:[%s170 + $0xb0] sm:$0xf] %vm3694, %v3610
      %3740 = vst.msk [vmem:[%s170 + $0xb4] sm:$0xf] %vm3694, %v3611
      %3741 = vst.msk [vmem:[%s170 + $0xb8] sm:$0xf] %vm3694, %v3612
      %3742 = vst.msk [vmem:[%s170 + $0xbc] sm:$0xf] %vm3694, %v3613
      %3743 = vst.msk [vmem:[%s170 + $0xc0] sm:$0xf] %vm3694, %v3614
      %3744 = vst.msk [vmem:[%s170 + $0xc4] sm:$0xf] %vm3694, %v3615
      %3745 = vst.msk [vmem:[%s170 + $0xc8] sm:$0xf] %vm3694, %v3616
      %3746 = vst.msk [vmem:[%s170 + $0xcc] sm:$0xf] %vm3694, %v3617
      %3747 = vst.msk [vmem:[%s170 + $0xd0] sm:$0xf] %vm3694, %v3618
      %3748 = vst.msk [vmem:[%s170 + $0xd4] sm:$0xf] %vm3694, %v3619
      %3749 = vst.msk [vmem:[%s170 + $0xd8] sm:$0xf] %vm3694, %v3620
      %3750 = vst.msk [vmem:[%s170 + $0xdc] sm:$0xf] %vm3694, %v3621
      %3751 = vst.msk [vmem:[%s170 + $0xe0] sm:$0xf] %vm3694, %v3622
      %3752 = vst.msk [vmem:[%s170 + $0xe4] sm:$0xf] %vm3694, %v3623
      %3753 = vst.msk [vmem:[%s170 + $0xe8] sm:$0xf] %vm3694, %v3624
      %3754 = vst.msk [vmem:[%s170 + $0xec] sm:$0xf] %vm3694, %v3625
      %3755 = vst.msk [vmem:[%s170 + $0xf0] sm:$0xf] %vm3694, %v3626
      %3756 = vst.msk [vmem:[%s170 + $0xf4] sm:$0xf] %vm3694, %v3627
      %3757 = vst.msk [vmem:[%s170 + $0xf8] sm:$0xf] %vm3694, %v3628
      %3758 = vst.msk [vmem:[%s170 + $0xfc] sm:$0xf] %vm3694, %v3629
      %p3759 = scmp.lt.s32.totalorder %s14, 3
      %s3760 = scalar_select %p3759, %s14, 3
      %s3761 = smul.addr %s3760, 64
      %s3762 = smul.addr %s3761, 4
      %s3763 = scalar_lea.vmem %s3, %s3762
      // Predicated region
      $region33: #{discriminator_forward.5} parent=31 // pred_check
        %p3764 = pneg %p100
      $region34: #{discriminator_forward.5} parent=31 // pred_check_branch
        %3766 = sbr.rel (%p3764) target = $region36
      $region35: #{discriminator_forward.5} parent=31 // pred_region
        _
      $region36: #{discriminator_forward.5} parent=31 // pred_fallthru
        _
    $region32: #{discriminator_forward.5} parent=5 // pred_fallthru
      _
    %p3767 = scmp.le.s32.totalorder 2, %s9
    // Predicated region
    $region37: #{discriminator_forward.5} parent=5 // pred_check
      %p3768 = pneg %p3767
    $region38: #{discriminator_forward.5} parent=5 // pred_check_branch
      %3770 = sbr.rel (%p3768) target = $region40
    $region39: #{discriminator_forward.5} parent=5 // pred_region
      %s3771 = ssub.s32 %s9, 2
      // Predicated region
      $region41: #{discriminator_forward.5} parent=39 // pred_check
        %p3772 = pneg %p106
      $region42: #{discriminator_forward.5} parent=39 // pred_check_branch
        %3774 = sbr.rel (%p3772) target = $region44
      $region43: #{discriminator_forward.5} parent=39 // pred_region
        %p3775 = scmp.lt.s32.totalorder %s15, 3
        %s3776 = scalar_select %p3775, %s15, 3
        %s3777 = smul.addr %s3776, 64
        %s3778 = smul.addr %s3777, 4
        %s3779 = scalar_lea.vmem %s3, %s3778
      $region44: #{discriminator_forward.5} parent=39 // pred_fallthru
        _
    $region40: #{discriminator_forward.5} parent=5 // pred_fallthru
      _
  $region6: #{discriminator_forward.5} parent=0 // loop_footer
    %s13 = sadd.s32 1, %s9
  $region7: #{discriminator_forward.5} parent=0 // loop_footer_branch
    %8 = sbr.rel target = $region3
  $region8: #{discriminator_forward.5} parent=0 // loop_exit
    _

// kernel: discriminator_forward.6
$region0: #{discriminator_forward.6}
  #allocation0 [shape = 'u32[]', space=smem, size = 0x4, offset = 0x4, fixed_abs, tag = 'smem constant byte address 0x4 - core index']
  #allocation1 [shape = 'u32[144,128]{1,0:T(1,128)}', space=vmem, size = 0x12000, scoped, tag = 'internal scratch']
  %s0 = inlined_call_operand.vmem [shape: bf16[2,17,17,32], index: 0, kind: input, shape index: {}]
  %s1 = inlined_call_operand.vmem [shape: bf16[4,32,8], index: 1, kind: input, shape index: {}]
  %s2 = inlined_call_operand.vmem [shape: f32[3,8], index: 2, kind: input, shape index: {}]
  %s3 = inlined_call_operand.vmem [shape: bf16[2,16,16,8], index: 3, kind: output, shape index: {}]
  %s4 = sld [smem:[#allocation0]]
  $region45: #{discriminator_forward.6} parent=0
    _
  %s6 = ssub.s32 1, %s4
  %s7 = scalar_select 0, %s6, %s4
  loop: start=0, step=1, limit=4
  $region2: #{discriminator_forward.6} parent=0 // loop_pre_header
    _
  $region3: #{discriminator_forward.6} parent=0 // loop_header
    %s9 = sphi 0, %s13
    %p10 = scmp.ge.s32.totalorder %s9, 4
    %s19 = sphi 0, %s21
    %s22 = sphi 0, %s19
    %s23 = sphi 0, %s22
    %s39 = sphi 0, %s23
    %s43 = sphi 0, %s43
    %s45 = sphi 0, %s43
    %s46 = sphi 0, %s45
    %s60 = sphi 0, %s46
    %s64 = sphi 0, %s64
    %s66 = sphi 0, %s64
    %s67 = sphi 0, %s66
    %s81 = sphi 0, %s67
    %s87 = sphi 0, %s89
    %s90 = sphi 0, %s87
    %s91 = sphi 0, %s90
    %s107 = sphi 0, %s91
  $region4: #{discriminator_forward.6} parent=0 // loop_header_branch
    %12 = sbr.rel (%p10) target = $region8
  $region5: #{discriminator_forward.6} parent=0 // loop_body
    %s14 = ssub.s32 %s9, 1
    %s15 = ssub.s32 %s9, 2
    %s16 = sadd.s32 %s9, 1
    %s17 = ssub.s32 %s9, %s16
    %p18 = scmp.eq.s32.totalorder %s17, 0
    %s20 = sadd.s32 %s19, 1
    %s21 = scalar_select %p18, %s19, %s20
    %p24 = pneg %p18
    %p25 = scmp.eq.s32.totalorder %s9, 1
    %p26 = por %p24, %p25
    %p27 = scmp.ne.s32.totalorder %s19, %s22
    %p28 = scmp.eq.s32.totalorder %s9, 0
    %p29 = por %p27, %p28
    %p30 = scmp.ne.s32.totalorder %s19, %s22
    %p31 = scmp.eq.s32.totalorder %s14, 1
    %p32 = por %p30, %p31
    %p33 = scmp.ne.s32.totalorder %s22, %s23
    %p34 = scmp.eq.s32.totalorder %s14, 0
    %p35 = por %p33, %p34
    %p36 = scmp.ne.s32.totalorder %s22, %s23
    %p37 = scmp.eq.s32.totalorder %s15, 1
    %p38 = por %p36, %p37
    %p40 = scmp.ne.s32.totalorder %s23, %s39
    %p41 = scmp.eq.s32.totalorder %s15, 0
    %p42 = por %p40, %p41
    %s44 = sadd.s32 %s43, 1
    %p47 = scmp.eq.s32.totalorder %s9, 1
    %p48 = scmp.ne.s32.totalorder %s43, %s45
    %p49 = scmp.eq.s32.totalorder %s9, 0
    %p50 = por %p48, %p49
    %p51 = scmp.ne.s32.totalorder %s43, %s45
    %p52 = scmp.eq.s32.totalorder %s14, 1
    %p53 = por %p51, %p52
    %p54 = scmp.ne.s32.totalorder %s45, %s46
    %p55 = scmp.eq.s32.totalorder %s14, 0
    %p56 = por %p54, %p55
    %p57 = scmp.ne.s32.totalorder %s45, %s46
    %p58 = scmp.eq.s32.totalorder %s15, 1
    %p59 = por %p57, %p58
    %p61 = scmp.ne.s32.totalorder %s46, %s60
    %p62 = scmp.eq.s32.totalorder %s15, 0
    %p63 = por %p61, %p62
    %s65 = sadd.s32 %s64, 1
    %p68 = scmp.eq.s32.totalorder %s9, 1
    %p69 = scmp.ne.s32.totalorder %s64, %s66
    %p70 = scmp.eq.s32.totalorder %s9, 0
    %p71 = por %p69, %p70
    %p72 = scmp.ne.s32.totalorder %s64, %s66
    %p73 = scmp.eq.s32.totalorder %s14, 1
    %p74 = por %p72, %p73
    %p75 = scmp.ne.s32.totalorder %s66, %s67
    %p76 = scmp.eq.s32.totalorder %s14, 0
    %p77 = por %p75, %p76
    %p78 = scmp.ne.s32.totalorder %s66, %s67
    %p79 = scmp.eq.s32.totalorder %s15, 1
    %p80 = por %p78, %p79
    %p82 = scmp.ne.s32.totalorder %s67, %s81
    %p83 = scmp.eq.s32.totalorder %s15, 0
    %p84 = por %p82, %p83
    %s85 = ssub.s32 %s9, %s16
    %p86 = scmp.eq.s32.totalorder %s85, 0
    %s88 = sadd.s32 %s87, 1
    %s89 = scalar_select %p86, %s87, %s88
    %p92 = pneg %p86
    %p93 = scmp.eq.s32.totalorder %s9, 1
    %p94 = por %p92, %p93
    %p95 = scmp.ne.s32.totalorder %s87, %s90
    %p96 = scmp.eq.s32.totalorder %s9, 0
    %p97 = por %p95, %p96
    %p98 = scmp.ne.s32.totalorder %s87, %s90
    %p99 = scmp.eq.s32.totalorder %s14, 1
    %p100 = por %p98, %p99
    %p101 = scmp.ne.s32.totalorder %s90, %s91
    %p102 = scmp.eq.s32.totalorder %s14, 0
    %p103 = por %p101, %p102
    %p104 = scmp.ne.s32.totalorder %s90, %s91
    %p105 = scmp.eq.s32.totalorder %s15, 1
    %p106 = por %p104, %p105
    %p108 = scmp.ne.s32.totalorder %s91, %s107
    %p109 = scmp.eq.s32.totalorder %s15, 0
    %p110 = por %p108, %p109
    %p111 = scmp.le.s32.totalorder 1, %s9
    %p112 = scmp.lt.s32.totalorder %s9, 3
    %p113 = pnand %p111, %p112
    %p114 = pneg %p113
    // Predicated region
    $region9: #{discriminator_forward.6} parent=5 // pred_check
      _
    $region10: #{discriminator_forward.6} parent=5 // pred_check_branch
      %116 = sbr.rel (%p113) target = $region12
    $region11: #{discriminator_forward.6} parent=5 // pred_region
      %s117 = ssub.s32 %s9, 1
      // Predicated region
      $region13: #{discriminator_forward.6} parent=11 // pred_check
        %p118 = pneg %p56
      $region14: #{discriminator_forward.6} parent=11 // pred_check_branch
        %120 = sbr.rel (%p118) target = $region16
      $region15: #{discriminator_forward.6} parent=11 // pred_region
        _
      $region16: #{discriminator_forward.6} parent=11 // pred_fallthru
        _
      // Predicated region
      $region17: #{discriminator_forward.6} parent=11 // pred_check
        %p121 = pneg %p77
      $region18: #{discriminator_forward.6} parent=11 // pred_check_branch
        %123 = sbr.rel (%p121) target = $region20
      $region19: #{discriminator_forward.6} parent=11 // pred_region
        _
      $region20: #{discriminator_forward.6} parent=11 // pred_fallthru
        _
    $region12: #{discriminator_forward.6} parent=5 // pred_fallthru
      _
    %p124 = scmp.lt.s32.totalorder %s9, 2
    // Predicated region
    $region21: #{discriminator_forward.6} parent=5 // pred_check
      %p125 = pneg %p124
    $region22: #{discriminator_forward.6} parent=5 // pred_check_branch
      %127 = sbr.rel (%p125) target = $region24
    $region23: #{discriminator_forward.6} parent=5 // pred_region
      // Predicated region
      $region25: #{discriminator_forward.6} parent=23 // pred_check
        %p128 = pneg %p29
      $region26: #{discriminator_forward.6} parent=23 // pred_check_branch
        %130 = sbr.rel (%p128) target = $region28
      $region27: #{discriminator_forward.6} parent=23 // pred_region
        %p131 = scmp.lt.s32.totalorder %s9, 1
        %s132 = scalar_select %p131, %s9, 1
        %s133 = smul.addr %s132, 51
        %s134 = smul.addr %s133, 4
        %s135 = scalar_lea.vmem %s0, %s134
      $region28: #{discriminator_forward.6} parent=23 // pred_fallthru
        _
    $region24: #{discriminator_forward.6} parent=5 // pred_fallthru
      _
    %p136 = scmp.le.s32.totalorder 1, %s9
    %p137 = scmp.lt.s32.totalorder %s9, 3
    %p138 = pnand %p136, %p137
    %p139 = pneg %p138
    // Predicated region
    $region29: #{discriminator_forward.6} parent=5 // pred_check
      _
    $region30: #{discriminator_forward.6} parent=5 // pred_check_branch
      %141 = sbr.rel (%p138) target = $region32
    $region31: #{discriminator_forward.6} parent=5 // pred_region
      %s142 = ssub.s32 %s9, 1
      %p143 = scmp.lt.s32.totalorder %s14, 1
      %s144 = scalar_select %p143, %s14, 1
      %s145 = smul.addr %s144, 51
      %s146 = smul.addr %s145, 4
      %s147 = scalar_lea.vmem %s0, %s146
      %p148 = pneg %p35
      %p149 = pneg %p32
      %p150 = pneg %p56
      %p151 = pneg %p53
      %p152 = pneg %p77
      %p153 = pneg %p74
      %p154 = pneg %p103
      %p155 = pneg %p100
      %p156 = scmp.lt.s32.totalorder %s14, 1
      %s157 = scalar_select %p156, %s14, 1
      %s158 = smul.addr %s157, 32
      %s159 = smul.addr %s158, 4
      %s160 = scalar_lea.vmem %s3, %s159
      %p161 = scmp.lt.s32.totalorder %s14, 1
      %s162 = scalar_select %p161, %s14, 1
      %s163 = smul.addr %s162, 51
      %s164 = smul.addr %s163, 4
      %s165 = scalar_lea.vmem %s0, %s164
      %p166 = scmp.lt.s32.totalorder %s14, 1
      %s167 = scalar_select %p166, %s14, 1
      %s168 = smul.addr %s167, 32
      %s169 = smul.addr %s168, 4
      %s170 = scalar_lea.vmem %s3, %s169
      %v172 = vld [vmem:[%s165] sm:$0xf]
      %v173 = vld [vmem:[%s165 + $0x4] sm:$0xf]
      %v174 = vld [vmem:[%s165 + $0xc] sm:$0xf]
      %v175 = vld [vmem:[%s165 + $0x10] sm:$0xf]
      %v176 = vld [vmem:[%s165 + $0x18] sm:$0xf]
      %v177 = vld [vmem:[%s165 + $0x1c] sm:$0xf]
      %v178 = vld [vmem:[%s165 + $0x24] sm:$0xf]
      %v179 = vld [vmem:[%s165 + $0x28] sm:$0xf]
      %v180 = vld [vmem:[%s165 + $0x30] sm:$0xf]
      %v181 = vld [vmem:[%s165 + $0x34] sm:$0xf]
      %v182 = vld [vmem:[%s165 + $0x3c] sm:$0xf]
      %v183 = vld [vmem:[%s165 + $0x40] sm:$0xf]
      %v184 = vld [vmem:[%s165 + $0x48] sm:$0xf]
      %v185 = vld [vmem:[%s165 + $0x4c] sm:$0xf]
      %v186 = vld [vmem:[%s165 + $0x54] sm:$0xf]
      %v187 = vld [vmem:[%s165 + $0x58] sm:$0xf]
      %v188 = vld [vmem:[%s165 + $0x60] sm:$0xf]
      %v189 = vld [vmem:[%s165 + $0x64] sm:$0xf]
      %v190 = vld [vmem:[%s165 + $0x6c] sm:$0xf]
      %v191 = vld [vmem:[%s165 + $0x70] sm:$0xf]
      %v192 = vld [vmem:[%s165 + $0x78] sm:$0xf]
      %v193 = vld [vmem:[%s165 + $0x7c] sm:$0xf]
      %v194 = vld [vmem:[%s165 + $0x84] sm:$0xf]
      %v195 = vld [vmem:[%s165 + $0x88] sm:$0xf]
      %v196 = vld [vmem:[%s165 + $0x90] sm:$0xf]
      %v197 = vld [vmem:[%s165 + $0x94] sm:$0xf]
      %v198 = vld [vmem:[%s165 + $0x9c] sm:$0xf]
      %v199 = vld [vmem:[%s165 + $0xa0] sm:$0xf]
      %v200 = vld [vmem:[%s165 + $0xa8] sm:$0xf]
      %v201 = vld [vmem:[%s165 + $0xac] sm:$0xf]
      %v202 = vld [vmem:[%s165 + $0xb4] sm:$0xf]
      %v203 = vld [vmem:[%s165 + $0xb8] sm:$0xf]
      %v204 = vunpack.c.l.bf16 %v172
      %v205 = vunpack.c.l.bf16 %v173
      %v206 = vunpack.c.l.bf16 %v174
      %v207 = vunpack.c.l.bf16 %v175
      %v208 = vunpack.c.l.bf16 %v176
      %v209 = vunpack.c.l.bf16 %v177
      %v210 = vunpack.c.l.bf16 %v178
      %v211 = vunpack.c.l.bf16 %v179
      %v212 = vunpack.c.l.bf16 %v180
      %v213 = vunpack.c.l.bf16 %v181
      %v214 = vunpack.c.l.bf16 %v182
      %v215 = vunpack.c.l.bf16 %v183
      %v216 = vunpack.c.l.bf16 %v184
      %v217 = vunpack.c.l.bf16 %v185
      %v218 = vunpack.c.l.bf16 %v186
      %v219 = vunpack.c.l.bf16 %v187
      %v220 = vunpack.c.l.bf16 %v188
      %v221 = vunpack.c.l.bf16 %v189
      %v222 = vunpack.c.l.bf16 %v190
      %v223 = vunpack.c.l.bf16 %v191
      %v224 = vunpack.c.l.bf16 %v192
      %v225 = vunpack.c.l.bf16 %v193
      %v226 = vunpack.c.l.bf16 %v194
      %v227 = vunpack.c.l.bf16 %v195
      %v228 = vunpack.c.l.bf16 %v196
      %v229 = vunpack.c.l.bf16 %v197
      %v230 = vunpack.c.l.bf16 %v198
      %v231 = vunpack.c.l.bf16 %v199
      %v232 = vunpack.c.l.bf16 %v200
      %v233 = vunpack.c.l.bf16 %v201
      %v234 = vunpack.c.l.bf16 %v202
      %v235 = vunpack.c.l.bf16 %v203
      %v236 = vpack.c.bf16 %v205, %v204
      %v237 = vpack.c.bf16 %v207, %v206
      %v238 = vpack.c.bf16 %v209, %v208
      %v239 = vpack.c.bf16 %v211, %v210
      %v240 = vpack.c.bf16 %v213, %v212
      %v241 = vpack.c.bf16 %v215, %v214
      %v242 = vpack.c.bf16 %v217, %v216
      %v243 = vpack.c.bf16 %v219, %v218
      %v244 = vpack.c.bf16 %v221, %v220
      %v245 = vpack.c.bf16 %v223, %v222
      %v246 = vpack.c.bf16 %v225, %v224
      %v247 = vpack.c.bf16 %v227, %v226
      %v248 = vpack.c.bf16 %v229, %v228
      %v249 = vpack.c.bf16 %v231, %v230
      %v250 = vpack.c.bf16 %v233, %v232
      %v251 = vpack.c.bf16 %v235, %v234
      %v252 = vld [vmem:[%s1] sm:$0xf]
      %v253 = vld [vmem:[%s1 + $0x4] sm:$0xf]
      %v254 = vld [vmem:[%s1 + $0x8] sm:$0xf]
      %v255 = vld [vmem:[%s1 + $0xc] sm:$0xf]
      %v256 = vld [vmem:[%s165 + $0x8] sm:$0x1]
      %v257 = vld [vmem:[%s165 + $0x14] sm:$0x1]
      %v258 = vld [vmem:[%s165 + $0x20] sm:$0x1]
      %v259 = vld [vmem:[%s165 + $0x2c] sm:$0x1]
      %v260 = vld [vmem:[%s165 + $0x38] sm:$0x1]
      %v261 = vld [vmem:[%s165 + $0x44] sm:$0x1]
      %v262 = vld [vmem:[%s165 + $0x50] sm:$0x1]
      %v263 = vld [vmem:[%s165 + $0x5c] sm:$0x1]
      %v264 = vld [vmem:[%s165 + $0x68] sm:$0x1]
      %v265 = vld [vmem:[%s165 + $0x74] sm:$0x1]
      %v266 = vld [vmem:[%s165 + $0x80] sm:$0x1]
      %v267 = vld [vmem:[%s165 + $0x8c] sm:$0x1]
      %v268 = vld [vmem:[%s165 + $0x98] sm:$0x1]
      %v269 = vld [vmem:[%s165 + $0xa4] sm:$0x1]
      %v270 = vld [vmem:[%s165 + $0xb0] sm:$0x1]
      %v271 = vld [vmem:[%s165 + $0xbc] sm:$0x1]
      %v272 = vunpack.c.l.bf16 %v256
      %v273 = vunpack.c.l.bf16 %v257
      %v274 = vunpack.c.l.bf16 %v258
      %v275 = vunpack.c.l.bf16 %v259
      %v276 = vunpack.c.l.bf16 %v260
      %v277 = vunpack.c.l.bf16 %v261
      %v278 = vunpack.c.l.bf16 %v262
      %v279 = vunpack.c.l.bf16 %v263
      %v280 = vunpack.c.l.bf16 %v264
      %v281 = vunpack.c.l.bf16 %v265
      %v282 = vunpack.c.l.bf16 %v266
      %v283 = vunpack.c.l.bf16 %v267
      %v284 = vunpack.c.l.bf16 %v268
      %v285 = vunpack.c.l.bf16 %v269
      %v286 = vunpack.c.l.bf16 %v270
      %v287 = vunpack.c.l.bf16 %v271
      %vm336 = vcmask 1046528
      %v337 = vrot.slane %v204, 1
      %v338 = vrot.slane %v205, 1
      %v339 = vsel %vm336, %v337, %v338
      %v340 = vrot.slane %v272, 1
      %v341 = vsel %vm336, %v338, %v340
      %v342 = vrot.slane %v206, 1
      %v343 = vrot.slane %v207, 1
      %v344 = vsel %vm336, %v342, %v343
      %v345 = vrot.slane %v273, 1
      %v346 = vsel %vm336, %v343, %v345
      %v347 = vrot.slane %v208, 1
      %v348 = vrot.slane %v209, 1
      %v349 = vsel %vm336, %v347, %v348
      %v350 = vrot.slane %v274, 1
      %v351 = vsel %vm336, %v348, %v350
      %v352 = vrot.slane %v210, 1
      %v353 = vrot.slane %v211, 1
      %v354 = vsel %vm336, %v352, %v353
      %v355 = vrot.slane %v275, 1
      %v356 = vsel %vm336, %v353, %v355
      %v357 = vrot.slane %v212, 1
      %v358 = vrot.slane %v213, 1
      %v359 = vsel %vm336, %v357, %v358
      %v360 = vrot.slane %v276, 1
      %v361 = vsel %vm336, %v358, %v360
      %v362 = vrot.slane %v214, 1
      %v363 = vrot.slane %v215, 1
      %v364 = vsel %vm336, %v362, %v363
      %v365 = vrot.slane %v277, 1
      %v366 = vsel %vm336, %v363, %v365
      %v367 = vrot.slane %v216, 1
      %v368 = vrot.slane %v217, 1
      %v369 = vsel %vm336, %v367, %v368
      %v370 = vrot.slane %v278, 1
      %v371 = vsel %vm336, %v368, %v370
      %v372 = vrot.slane %v218, 1
      %v373 = vrot.slane %v219, 1
      %v374 = vsel %vm336, %v372, %v373
      %v375 = vrot.slane %v279, 1
      %v376 = vsel %vm336, %v373, %v375
      %v377 = vrot.slane %v220, 1
      %v378 = vrot.slane %v221, 1
      %v379 = vsel %vm336, %v377, %v378
      %v380 = vrot.slane %v280, 1
      %v381 = vsel %vm336, %v378, %v380
      %v382 = vrot.slane %v222, 1
      %v383 = vrot.slane %v223, 1
      %v384 = vsel %vm336, %v382, %v383
      %v385 = vrot.slane %v281, 1
      %v386 = vsel %vm336, %v383, %v385
      %v387 = vrot.slane %v224, 1
      %v388 = vrot.slane %v225, 1
      %v389 = vsel %vm336, %v387, %v388
      %v390 = vrot.slane %v282, 1
      %v391 = vsel %vm336, %v388, %v390
      %v392 = vrot.slane %v226, 1
      %v393 = vrot.slane %v227, 1
      %v394 = vsel %vm336, %v392, %v393
      %v395 = vrot.slane %v283, 1
      %v396 = vsel %vm336, %v393, %v395
      %v397 = vrot.slane %v228, 1
      %v398 = vrot.slane %v229, 1
      %v399 = vsel %vm336, %v397, %v398
      %v400 = vrot.slane %v284, 1
      %v401 = vsel %vm336, %v398, %v400
      %v402 = vrot.slane %v230, 1
      %v403 = vrot.slane %v231, 1
      %v404 = vsel %vm336, %v402, %v403
      %v405 = vrot.slane %v285, 1
      %v406 = vsel %vm336, %v403, %v405
      %v407 = vrot.slane %v232, 1
      %v408 = vrot.slane %v233, 1
      %v409 = vsel %vm336, %v407, %v408
      %v410 = vrot.slane %v286, 1
      %v411 = vsel %vm336, %v408, %v410
      %v412 = vrot.slane %v234, 1
      %v413 = vrot.slane %v235, 1
      %v414 = vsel %vm336, %v412, %v413
      %v415 = vrot.slane %v287, 1
      %v416 = vsel %vm336, %v413, %v415
      %v449 = vpack.c.bf16 %v341, %v339
      %v450 = vpack.c.bf16 %v346, %v344
      %v451 = vpack.c.bf16 %v351, %v349
      %v452 = vpack.c.bf16 %v356, %v354
      %v453 = vpack.c.bf16 %v361, %v359
      %v454 = vpack.c.bf16 %v366, %v364
      %v455 = vpack.c.bf16 %v371, %v369
      %v456 = vpack.c.bf16 %v376, %v374
      %v457 = vpack.c.bf16 %v381, %v379
      %v458 = vpack.c.bf16 %v386, %v384
      %v459 = vpack.c.bf16 %v391, %v389
      %v460 = vpack.c.bf16 %v396, %v394
      %v461 = vpack.c.bf16 %v401, %v399
      %v462 = vpack.c.bf16 %v406, %v404
      %v463 = vpack.c.bf16 %v411, %v409
      %v464 = vpack.c.bf16 %v416, %v414
      %s465 = scalar_lea.vmem %s1, 16
      %v466 = vld [vmem:[%s465] sm:$0xf]
      %v467 = vld [vmem:[%s465 + $0x4] sm:$0xf]
      %v468 = vld [vmem:[%s465 + $0x8] sm:$0xf]
      %v469 = vld [vmem:[%s465 + $0xc] sm:$0xf]
      %v474 = vunpack.c.l.b16 %v466
      %v475 = vunpack.c.l.b16 %v467
      %v476 = vunpack.c.l.b16 %v468
      %v477 = vunpack.c.l.b16 %v469
      %v478 = vpack.c.b16 %v475, %v474
      %v479 = vpack.c.b16 %v477, %v476
      %vm482 = vcmask 261120
      %v484 = vsel %vm482, %v449, 0
      %v487 = vsel %vm482, %v450, 0
      %v490 = vsel %vm482, %v451, 0
      %v493 = vsel %vm482, %v452, 0
      %v496 = vsel %vm482, %v453, 0
      %v499 = vsel %vm482, %v454, 0
      %v502 = vsel %vm482, %v455, 0
      %v505 = vsel %vm482, %v456, 0
      %v508 = vsel %vm482, %v457, 0
      %v511 = vsel %vm482, %v458, 0
      %v514 = vsel %vm482, %v459, 0
      %v517 = vsel %vm482, %v460, 0
      %v520 = vsel %vm482, %v461, 0
      %v523 = vsel %vm482, %v462, 0
      %v526 = vsel %vm482, %v463, 0
      %v529 = vsel %vm482, %v464, 0
      %531 = vmatprep.subr.bf16.mxu0 0
      %532 = vmatpush1.bf16.msra.mxu0 %v478
      %533 = vmatprep.subr.bf16.mxu0 0
      %534 = vmatpush1.bf16.msra.mxu0 %v479
      %535 = vmatprep.subr.bf16.mxu0 0
      %536 = vmatpush1.bf16.msra.mxu0 0
      %537 = vmatprep.subr.bf16.mxu0 0
      %538 = vmatpush1.bf16.msra.mxu0 0
      %539 = vmatprep.subr.bf16.mxu0 0
      %540 = vmatpush1.bf16.msra.mxu0 0
      %541 = vmatprep.subr.bf16.mxu0 0
      %542 = vmatpush1.bf16.msra.mxu0 0
      %543 = vmatprep.subr.bf16.mxu0 0
      %544 = vmatpush1.bf16.msra.mxu0 0
      %545 = vmatprep.subr.bf16.mxu0 0
      %546 = vmatpush1.bf16.msra.mxu0 0
      %547 = vmatprep.subr.bf16.mxu0 0
      %548 = vmatpush1.bf16.msra.mxu0 0
      %549 = vmatprep.subr.bf16.mxu0 0
      %550 = vmatpush1.bf16.msra.mxu0 0
      %551 = vmatprep.subr.bf16.mxu0 0
      %552 = vmatpush1.bf16.msra.mxu0 0
      %553 = vmatprep.subr.bf16.mxu0 0
      %554 = vmatpush1.bf16.msra.mxu0 0
      %555 = vmatprep.subr.bf16.mxu0 0
      %556 = vmatpush1.bf16.msra.mxu0 0
      %557 = vmatprep.subr.bf16.mxu0 0
      %558 = vmatpush1.bf16.msra.mxu0 0
      %559 = vmatprep.subr.bf16.mxu0 0
      %560 = vmatpush1.bf16.msra.mxu0 0
      %561 = vmatprep.subr.bf16.mxu0 0
      %562 = vmatpush1.bf16.msra.mxu0 0
      %563 = vmatprep.mubr.bf16.mxu0 0
      %564 = vmatmul.mubr.bf16.gmra.mrb[0].mxu0 %v484
      %v565 = vpop.f32.mrb[0].mxu0
      %v566 = vadd.f32 0.0, %v565
      %v567 = vpop.f32.mrb[0].mxu0
      %v568 = vpop.f32.mrb[0].mxu0
      %v569 = vadd.f32 0.0, %v568
      %v570 = vpop.f32.mrb[0].mxu0
      %571 = vmatprep.mubr.bf16.mxu0 0
      %572 = vmatmul.mubr.bf16.gmra.mrb[0].mxu0 %v487
      %v573 = vpop.f32.mrb[0].mxu0
      %v574 = vadd.f32 0.0, %v573
      %v575 = vpop.f32.mrb[0].mxu0
      %v576 = vpop.f32.mrb[0].mxu0
      %v577 = vadd.f32 0.0, %v576
      %v578 = vpop.f32.mrb[0].mxu0
      %579 = vmatprep.mubr.bf16.mxu0 0
      %580 = vmatmul.mubr.bf16.gmra.mrb[0].mxu0 %v490
      %v581 = vpop.f32.mrb[0].mxu0
      %v582 = vadd.f32 0.0, %v581
      %v583 = vpop.f32.mrb[0].mxu0
      %v584 = vpop.f32.mrb[0].mxu0
      %v585 = vadd.f32 0.0, %v584
      %v586 = vpop.f32.mrb[0].mxu0
      %587 = vmatprep.mubr.bf16.mxu0 0
      %588 = vmatmul.mubr.bf16.gmra.mrb[0].mxu0 %v493
      %v589 = vpop.f32.mrb[0].mxu0
      %v590 = vadd.f32 0.0, %v589
      %v591 = vpop.f32.mrb[0].mxu0
      %v592 = vpop.f32.mrb[0].mxu0
      %v593 = vadd.f32 0.0, %v592
      %v594 = vpop.f32.mrb[0].mxu0
      %595 = vmatprep.mubr.bf16.mxu0 0
      %596 = vmatmul.mubr.bf16.gmra.mrb[0].mxu0 %v496
      %v597 = vpop.f32.mrb[0].mxu0
      %v598 = vadd.f32 0.0, %v597
      %v599 = vpop.f32.mrb[0].mxu0
      %v600 = vpop.f32.mrb[0].mxu0
      %v601 = vadd.f32 0.0, %v600
      %v602 = vpop.f32.mrb[0].mxu0
      %603 = vmatprep.mubr.bf16.mxu0 0
      %604 = vmatmul.mubr.bf16.gmra.mrb[0].mxu0 %v499
      %v605 = vpop.f32.mrb[0].mxu0
      %v606 = vadd.f32 0.0, %v605
      %v607 = vpop.f32.mrb[0].mxu0
      %v608 = vpop.f32.mrb[0].mxu0
      %v609 = vadd.f32 0.0, %v608
      %v610 = vpop.f32.mrb[0].mxu0
      %611 = vmatprep.mubr.bf16.mxu0 0
      %612 = vmatmul.mubr.bf16.gmra.mrb[0].mxu0 %v502
      %v613 = vpop.f32.mrb[0].mxu0
      %v614 = vadd.f32 0.0, %v613
      %v615 = vpop.f32.mrb[0].mxu0
      %v616 = vpop.f32.mrb[0].mxu0
      %v617 = vadd.f32 0.0, %v616
      %v618 = vpop.f32.mrb[0].mxu0
      %619 = vmatprep.mubr.bf16.mxu0 0
      %620 = vmatmul.mubr.bf16.gmra.mrb[0].mxu0 %v505
      %v621 = vpop.f32.mrb[0].mxu0
      %v622 = vadd.f32 0.0, %v621
      %v623 = vpop.f32.mrb[0].mxu0
      %v624 = vpop.f32.mrb[0].mxu0
      %v625 = vadd.f32 0.0, %v624
      %v626 = vpop.f32.mrb[0].mxu0
      %627 = vmatprep.mubr.bf16.mxu0 0
      %628 = vmatmul.mubr.bf16.gmra.mrb[0].mxu0 %v508
      %v629 = vpop.f32.mrb[0].mxu0
      %v630 = vadd.f32 0.0, %v629
      %v631 = vpop.f32.mrb[0].mxu0
      %v632 = vpop.f32.mrb[0].mxu0
      %v633 = vadd.f32 0.0, %v632
      %v634 = vpop.f32.mrb[0].mxu0
      %635 = vmatprep.mubr.bf16.mxu0 0
      %636 = vmatmul.mubr.bf16.gmra.mrb[0].mxu0 %v511
      %v637 = vpop.f32.mrb[0].mxu0
      %v638 = vadd.f32 0.0, %v637
      %v639 = vpop.f32.mrb[0].mxu0
      %v640 = vpop.f32.mrb[0].mxu0
      %v641 = vadd.f32 0.0, %v640
      %v642 = vpop.f32.mrb[0].mxu0
      %643 = vmatprep.mubr.bf16.mxu0 0
      %644 = vmatmul.mubr.bf16.gmra.mrb[0].mxu0 %v514
      %v645 = vpop.f32.mrb[0].mxu0
      %v646 = vadd.f32 0.0, %v645
      %v647 = vpop.f32.mrb[0].mxu0
      %v648 = vpop.f32.mrb[0].mxu0
      %v649 = vadd.f32 0.0, %v648
      %v650 = vpop.f32.mrb[0].mxu0
      %651 = vmatprep.mubr.bf16.mxu0 0
      %652 = vmatmul.mubr.bf16.gmra.mrb[0].mxu0 %v517
      %v653 = vpop.f32.mrb[0].mxu0
      %v654 = vadd.f32 0.0, %v653
      %v655 = vpop.f32.mrb[0].mxu0
      %v656 = vpop.f32.mrb[0].mxu0
      %v657 = vadd.f32 0.0, %v656
      %v658 = vpop.f32.mrb[0].mxu0
      %659 = vmatprep.mubr.bf16.mxu0 0
      %660 = vmatmul.mubr.bf16.gmra.mrb[0].mxu0 %v520
      %v661 = vpop.f32.mrb[0].mxu0
      %v662 = vadd.f32 0.0, %v661
      %v663 = vpop.f32.mrb[0].mxu0
      %v664 = vpop.f32.mrb[0].mxu0
      %v665 = vadd.f32 0.0, %v664
      %v666 = vpop.f32.mrb[0].mxu0
      %667 = vmatprep.mubr.bf16.mxu0 0
      %668 = vmatmul.mubr.bf16.gmra.mrb[0].mxu0 %v523
      %v669 = vpop.f32.mrb[0].mxu0
      %v670 = vadd.f32 0.0, %v669
      %v671 = vpop.f32.mrb[0].mxu0
      %v672 = vpop.f32.mrb[0].mxu0
      %v673 = vadd.f32 0.0, %v672
      %v674 = vpop.f32.mrb[0].mxu0
      %675 = vmatprep.mubr.bf16.mxu0 0
      %676 = vmatmul.mubr.bf16.gmra.mrb[0].mxu0 %v526
      %v677 = vpop.f32.mrb[0].mxu0
      %v678 = vadd.f32 0.0, %v677
      %v679 = vpop.f32.mrb[0].mxu0
      %v680 = vpop.f32.mrb[0].mxu0
      %v681 = vadd.f32 0.0, %v680
      %v682 = vpop.f32.mrb[0].mxu0
      %683 = vmatprep.mubr.bf16.mxu0 0
      %684 = vmatmul.mubr.bf16.gmra.mrb[0].mxu0 %v529
      %v685 = vpop.f32.mrb[0].mxu0
      %v686 = vadd.f32 0.0, %v685
      %v687 = vpop.f32.mrb[0].mxu0
      %v688 = vpop.f32.mrb[0].mxu0
      %v689 = vadd.f32 0.0, %v688
      %v690 = vpop.f32.mrb[0].mxu0
      %691 = vdwg.mxu0
      %v696 = vunpack.c.l.b16 %v252
      %v697 = vunpack.c.l.b16 %v253
      %v698 = vunpack.c.l.b16 %v254
      %v699 = vunpack.c.l.b16 %v255
      %v700 = vpack.c.b16 %v697, %v696
      %v701 = vpack.c.b16 %v699, %v698
      %v705 = vsel %vm482, %v236, 0
      %v708 = vsel %vm482, %v237, 0
      %v711 = vsel %vm482, %v238, 0
      %v714 = vsel %vm482, %v239, 0
      %v717 = vsel %vm482, %v240, 0
      %v720 = vsel %vm482, %v241, 0
      %v723 = vsel %vm482, %v242, 0
      %v726 = vsel %vm482, %v243, 0
      %v729 = vsel %vm482, %v244, 0
      %v732 = vsel %vm482, %v245, 0
      %v735 = vsel %vm482, %v246, 0
      %v738 = vsel %vm482, %v247, 0
      %v741 = vsel %vm482, %v248, 0
      %v744 = vsel %vm482, %v249, 0
      %v747 = vsel %vm482, %v250, 0
      %v750 = vsel %vm482, %v251, 0
      %752 = vmatprep.subr.bf16.mxu0 0
      %753 = vmatpush1.bf16.msra.mxu0 %v700
      %754 = vmatprep.subr.bf16.mxu0 0
      %755 = vmatpush1.bf16.msra.mxu0 %v701
      %756 = vmatprep.subr.bf16.mxu0 0
      %757 = vmatpush1.bf16.msra.mxu0 0
      %758 = vmatprep.subr.bf16.mxu0 0
      %759 = vmatpush1.bf16.msra.mxu0 0
      %760 = vmatprep.subr.bf16.mxu0 0
      %761 = vmatpush1.bf16.msra.mxu0 0
      %762 = vmatprep.subr.bf16.mxu0 0
      %763 = vmatpush1.bf16.msra.mxu0 0
      %764 = vmatprep.subr.bf16.mxu0 0
      %765 = vmatpush1.bf16.msra.mxu0 0
      %766 = vmatprep.subr.bf16.mxu0 0
      %767 = vmatpush1.bf16.msra.mxu0 0
      %768 = vmatprep.subr.bf16.mxu0 0
      %769 = vmatpush1.bf16.msra.mxu0 0
      %770 = vmatprep.subr.bf16.mxu0 0
      %771 = vmatpush1.bf16.msra.mxu0 0
      %772 = vmatprep.subr.bf16.mxu0 0
      %773 = vmatpush1.bf16.msra.mxu0 0
      %774 = vmatprep.subr.bf16.mxu0 0
      %775 = vmatpush1.bf16.msra.mxu0 0
      %776 = vmatprep.subr.bf16.mxu0 0
      %777 = vmatpush1.bf16.msra.mxu0 0
      %778 = vmatprep.subr.bf16.mxu0 0
      %779 = vmatpush1.bf16.msra.mxu0 0
      %780 = vmatprep.subr.bf16.mxu0 0
      %781 = vmatpush1.bf16.msra.mxu0 0
      %782 = vmatprep.subr.bf16.mxu0 0
      %783 = vmatpush1.bf16.msra.mxu0 0
      %784 = vmatprep.mubr.bf16.mxu0 0
      %785 = vmatmul.mubr.bf16.gmra.mrb[0].mxu0 %v705
      %v786 = vpop.f32.mrb[0].mxu0
      %v787 = vadd.f32 %v566, %v786
      %v788 = vpop.f32.mrb[0].mxu0
      %v789 = vpop.f32.mrb[0].mxu0
      %v790 = vadd.f32 %v569, %v789
      %v791 = vpop.f32.mrb[0].mxu0
      %792 = vmatprep.mubr.bf16.mxu0 0
      %793 = vmatmul.mubr.bf16.gmra.mrb[0].mxu0 %v708
      %v794 = vpop.f32.mrb[0].mxu0
      %v795 = vadd.f32 %v574, %v794
      %v796 = vpop.f32.mrb[0].mxu0
      %v797 = vpop.f32.mrb[0].mxu0
      %v798 = vadd.f32 %v577, %v797
      %v799 = vpop.f32.mrb[0].mxu0
      %800 = vmatprep.mubr.bf16.mxu0 0
      %801 = vmatmul.mubr.bf16.gmra.mrb[0].mxu0 %v711
      %v802 = vpop.f32.mrb[0].mxu0
      %v803 = vadd.f32 %v582, %v802
      %v804 = vpop.f32.mrb[0].mxu0
      %v805 = vpop.f32.mrb[0].mxu0
      %v806 = vadd.f32 %v585, %v805
      %v807 = vpop.f32.mrb[0].mxu0
      %808 = vmatprep.mubr.bf16.mxu0 0
      %809 = vmatmul.mubr.bf16.gmra.mrb[0].mxu0 %v714
      %v810 = vpop.f32.mrb[0].mxu0
      %v811 = vadd.f32 %v590, %v810
      %v812 = vpop.f32.mrb[0].mxu0
      %v813 = vpop.f32.mrb[0].mxu0
      %v814 = vadd.f32 %v593, %v813
      %v815 = vpop.f32.mrb[0].mxu0
      %816 = vmatprep.mubr.bf16.mxu0 0
      %817 = vmatmul.mubr.bf16.gmra.mrb[0].mxu0 %v717
      %v818 = vpop.f32.mrb[0].mxu0
      %v819 = vadd.f32 %v598, %v818
      %v820 = vpop.f32.mrb[0].mxu0
      %v821 = vpop.f32.mrb[0].mxu0
      %v822 = vadd.f32 %v601, %v821
      %v823 = vpop.f32.mrb[0].mxu0
      %824 = vmatprep.mubr.bf16.mxu0 0
      %825 = vmatmul.mubr.bf16.gmra.mrb[0].mxu0 %v720
      %v826 = vpop.f32.mrb[0].mxu0
      %v827 = vadd.f32 %v606, %v826
      %v828 = vpop.f32.mrb[0].mxu0
      %v829 = vpop.f32.mrb[0].mxu0
      %v830 = vadd.f32 %v609, %v829
      %v831 = vpop.f32.mrb[0].mxu0
      %832 = vmatprep.mubr.bf16.mxu0 0
      %833 = vmatmul.mubr.bf16.gmra.mrb[0].mxu0 %v723
      %v834 = vpop.f32.mrb[0].mxu0
      %v835 = vadd.f32 %v614, %v834
      %v836 = vpop.f32.mrb[0].mxu0
      %v837 = vpop.f32.mrb[0].mxu0
      %v838 = vadd.f32 %v617, %v837
      %v839 = vpop.f32.mrb[0].mxu0
      %840 = vmatprep.mubr.bf16.mxu0 0
      %841 = vmatmul.mubr.bf16.gmra.mrb[0].mxu0 %v726
      %v842 = vpop.f32.mrb[0].mxu0
      %v843 = vadd.f32 %v622, %v842
      %v844 = vpop.f32.mrb[0].mxu0
      %v845 = vpop.f32.mrb[0].mxu0
      %v846 = vadd.f32 %v625, %v845
      %v847 = vpop.f32.mrb[0].mxu0
      %848 = vmatprep.mubr.bf16.mxu0 0
      %849 = vmatmul.mubr.bf16.gmra.mrb[0].mxu0 %v729
      %v850 = vpop.f32.mrb[0].mxu0
      %v851 = vadd.f32 %v630, %v850
      %v852 = vpop.f32.mrb[0].mxu0
      %v853 = vpop.f32.mrb[0].mxu0
      %v854 = vadd.f32 %v633, %v853
      %v855 = vpop.f32.mrb[0].mxu0
      %856 = vmatprep.mubr.bf16.mxu0 0
      %857 = vmatmul.mubr.bf16.gmra.mrb[0].mxu0 %v732
      %v858 = vpop.f32.mrb[0].mxu0
      %v859 = vadd.f32 %v638, %v858
      %v860 = vpop.f32.mrb[0].mxu0
      %v861 = vpop.f32.mrb[0].mxu0
      %v862 = vadd.f32 %v641, %v861
      %v863 = vpop.f32.mrb[0].mxu0
      %864 = vmatprep.mubr.bf16.mxu0 0
      %865 = vmatmul.mubr.bf16.gmra.mrb[0].mxu0 %v735
      %v866 = vpop.f32.mrb[0].mxu0
      %v867 = vadd.f32 %v646, %v866
      %v868 = vpop.f32.mrb[0].mxu0
      %v869 = vpop.f32.mrb[0].mxu0
      %v870 = vadd.f32 %v649, %v869
      %v871 = vpop.f32.mrb[0].mxu0
      %872 = vmatprep.mubr.bf16.mxu0 0
      %873 = vmatmul.mubr.bf16.gmra.mrb[0].mxu0 %v738
      %v874 = vpop.f32.mrb[0].mxu0
      %v875 = vadd.f32 %v654, %v874
      %v876 = vpop.f32.mrb[0].mxu0
      %v877 = vpop.f32.mrb[0].mxu0
      %v878 = vadd.f32 %v657, %v877
      %v879 = vpop.f32.mrb[0].mxu0
      %880 = vmatprep.mubr.bf16.mxu0 0
      %881 = vmatmul.mubr.bf16.gmra.mrb[0].mxu0 %v741
      %v882 = vpop.f32.mrb[0].mxu0
      %v883 = vadd.f32 %v662, %v882
      %v884 = vpop.f32.mrb[0].mxu0
      %v885 = vpop.f32.mrb[0].mxu0
      %v886 = vadd.f32 %v665, %v885
      %v887 = vpop.f32.mrb[0].mxu0
      %888 = vmatprep.mubr.bf16.mxu0 0
      %889 = vmatmul.mubr.bf16.gmra.mrb[0].mxu0 %v744
      %v890 = vpop.f32.mrb[0].mxu0
      %v891 = vadd.f32 %v670, %v890
      %v892 = vpop.f32.mrb[0].mxu0
      %v893 = vpop.f32.mrb[0].mxu0
      %v894 = vadd.f32 %v673, %v893
      %v895 = vpop.f32.mrb[0].mxu0
      %896 = vmatprep.mubr.bf16.mxu0 0
      %897 = vmatmul.mubr.bf16.gmra.mrb[0].mxu0 %v747
      %v898 = vpop.f32.mrb[0].mxu0
      %v899 = vadd.f32 %v678, %v898
      %v900 = vpop.f32.mrb[0].mxu0
      %v901 = vpop.f32.mrb[0].mxu0
      %v902 = vadd.f32 %v681, %v901
      %v903 = vpop.f32.mrb[0].mxu0
      %904 = vmatprep.mubr.bf16.mxu0 0
      %905 = vmatmul.mubr.bf16.gmra.mrb[0].mxu0 %v750
      %v906 = vpop.f32.mrb[0].mxu0
      %v907 = vadd.f32 %v686, %v906
      %v908 = vpop.f32.mrb[0].mxu0
      %v909 = vpop.f32.mrb[0].mxu0
      %v910 = vadd.f32 %v689, %v909
      %v911 = vpop.f32.mrb[0].mxu0
      %912 = vdwg.mxu0
      %s913 = scalar_lea.vmem %s165, 12
      %v914 = vld [vmem:[%s913] sm:$0xf]
      %v915 = vld [vmem:[%s913 + $0x4] sm:$0xf]
      %v916 = vld [vmem:[%s913 + $0xc] sm:$0xf]
      %v917 = vld [vmem:[%s913 + $0x10] sm:$0xf]
      %v918 = vld [vmem:[%s913 + $0x18] sm:$0xf]
      %v919 = vld [vmem:[%s913 + $0x1c] sm:$0xf]
      %v920 = vld [vmem:[%s913 + $0x24] sm:$0xf]
      %v921 = vld [vmem:[%s913 + $0x28] sm:$0xf]
      %v922 = vld [vmem:[%s913 + $0x30] sm:$0xf]
      %v923 = vld [vmem:[%s913 + $0x34] sm:$0xf]
      %v924 = vld [vmem:[%s913 + $0x3c] sm:$0xf]
      %v925 = vld [vmem:[%s913 + $0x40] sm:$0xf]
      %v926 = vld [vmem:[%s913 + $0x48] sm:$0xf]
      %v927 = vld [vmem:[%s913 + $0x4c] sm:$0xf]
      %v928 = vld [vmem:[%s913 + $0x54] sm:$0xf]
      %v929 = vld [vmem:[%s913 + $0x58] sm:$0xf]
      %v930 = vld [vmem:[%s913 + $0x60] sm:$0xf]
      %v931 = vld [vmem:[%s913 + $0x64] sm:$0xf]
      %v932 = vld [vmem:[%s913 + $0x6c] sm:$0xf]
      %v933 = vld [vmem:[%s913 + $0x70] sm:$0xf]
      %v934 = vld [vmem:[%s913 + $0x78] sm:$0xf]
      %v935 = vld [vmem:[%s913 + $0x7c] sm:$0xf]
      %v936 = vld [vmem:[%s913 + $0x84] sm:$0xf]
      %v937 = vld [vmem:[%s913 + $0x88] sm:$0xf]
      %v938 = vld [vmem:[%s913 + $0x90] sm:$0xf]
      %v939 = vld [vmem:[%s913 + $0x94] sm:$0xf]
      %v940 = vld [vmem:[%s913 + $0x9c] sm:$0xf]
      %v941 = vld [vmem:[%s913 + $0xa0] sm:$0xf]
      %v942 = vld [vmem:[%s913 + $0xa8] sm:$0xf]
      %v943 = vld [vmem:[%s913 + $0xac] sm:$0xf]
      %v944 = vld [vmem:[%s913 + $0xb4] sm:$0xf]
      %v945 = vld [vmem:[%s913 + $0xb8] sm:$0xf]
      %v946 = vunpack.c.l.bf16 %v914
      %v947 = vunpack.c.l.bf16 %v915
      %v948 = vunpack.c.l.bf16 %v916
      %v949 = vunpack.c.l.bf16 %v917
      %v950 = vunpack.c.l.bf16 %v918
      %v951 = vunpack.c.l.bf16 %v919
      %v952 = vunpack.c.l.bf16 %v920
      %v953 = vunpack.c.l.bf16 %v921
      %v954 = vunpack.c.l.bf16 %v922
      %v955 = vunpack.c.l.bf16 %v923
      %v956 = vunpack.c.l.bf16 %v924
      %v957 = vunpack.c.l.bf16 %v925
      %v958 = vunpack.c.l.bf16 %v926
      %v959 = vunpack.c.l.bf16 %v927
      %v960 = vunpack.c.l.bf16 %v928
      %v961 = vunpack.c.l.bf16 %v929
      %v962 = vunpack.c.l.bf16 %v930
      %v963 = vunpack.c.l.bf16 %v931
      %v964 = vunpack.c.l.bf16 %v932
      %v965 = vunpack.c.l.bf16 %v933
      %v966 = vunpack.c.l.bf16 %v934
      %v967 = vunpack.c.l.bf16 %v935
      %v968 = vunpack.c.l.bf16 %v936
      %v969 = vunpack.c.l.bf16 %v937
      %v970 = vunpack.c.l.bf16 %v938
      %v971 = vunpack.c.l.bf16 %v939
      %v972 = vunpack.c.l.bf16 %v940
      %v973 = vunpack.c.l.bf16 %v941
      %v974 = vunpack.c.l.bf16 %v942
      %v975 = vunpack.c.l.bf16 %v943
      %v976 = vunpack.c.l.bf16 %v944
      %v977 = vunpack.c.l.bf16 %v945
      %v978 = vpack.c.bf16 %v947, %v946
      %v979 = vpack.c.bf16 %v949, %v948
      %v980 = vpack.c.bf16 %v951, %v950
      %v981 = vpack.c.bf16 %v953, %v952
      %v982 = vpack.c.bf16 %v955, %v954
      %v983 = vpack.c.bf16 %v957, %v956
      %v984 = vpack.c.bf16 %v959, %v958
      %v985 = vpack.c.bf16 %v961, %v960
      %v986 = vpack.c.bf16 %v963, %v962
      %v987 = vpack.c.bf16 %v965, %v964
      %v988 = vpack.c.bf16 %v967, %v966
      %v989 = vpack.c.bf16 %v969, %v968
      %v990 = vpack.c.bf16 %v971, %v970
      %v991 = vpack.c.bf16 %v973, %v972
      %v992 = vpack.c.bf16 %v975, %v974
      %v993 = vpack.c.bf16 %v977, %v976
      %s994 = scalar_lea.vmem %s1, 32
      %v995 = vld [vmem:[%s994] sm:$0xf]
      %v996 = vld [vmem:[%s994 + $0x4] sm:$0xf]
      %v997 = vld [vmem:[%s994 + $0x8] sm:$0xf]
      %v998 = vld [vmem:[%s994 + $0xc] sm:$0xf]
      %v1003 = vunpack.c.l.b16 %v995
      %v1004 = vunpack.c.l.b16 %v996
      %v1005 = vunpack.c.l.b16 %v997
      %v1006 = vunpack.c.l.b16 %v998
      %v1007 = vpack.c.b16 %v1004, %v1003
      %v1008 = vpack.c.b16 %v1006, %v1005
      %v1012 = vsel %vm482, %v978, 0
      %v1015 = vsel %vm482, %v979, 0
      %v1018 = vsel %vm482, %v980, 0
      %v1021 = vsel %vm482, %v981, 0
      %v1024 = vsel %vm482, %v982, 0
      %v1027 = vsel %vm482, %v983, 0
      %v1030 = vsel %vm482, %v984, 0
      %v1033 = vsel %vm482, %v985, 0
      %v1036 = vsel %vm482, %v986, 0
      %v1039 = vsel %vm482, %v987, 0
      %v1042 = vsel %vm482, %v988, 0
      %v1045 = vsel %vm482, %v989, 0
      %v1048 = vsel %vm482, %v990, 0
      %v1051 = vsel %vm482, %v991, 0
      %v1054 = vsel %vm482, %v992, 0
      %v1057 = vsel %vm482, %v993, 0
      %1059 = vmatprep.subr.bf16.mxu0 0
      %1060 = vmatpush1.bf16.msra.mxu0 %v1007
      %1061 = vmatprep.subr.bf16.mxu0 0
      %1062 = vmatpush1.bf16.msra.mxu0 %v1008
      %1063 = vmatprep.subr.bf16.mxu0 0
      %1064 = vmatpush1.bf16.msra.mxu0 0
      %1065 = vmatprep.subr.bf16.mxu0 0
      %1066 = vmatpush1.bf16.msra.mxu0 0
      %1067 = vmatprep.subr.bf16.mxu0 0
      %1068 = vmatpush1.bf16.msra.mxu0 0
      %1069 = vmatprep.subr.bf16.mxu0 0
      %1070 = vmatpush1.bf16.msra.mxu0 0
      %1071 = vmatprep.subr.bf16.mxu0 0
      %1072 = vmatpush1.bf16.msra.mxu0 0
      %1073 = vmatprep.subr.bf16.mxu0 0
      %1074 = vmatpush1.bf16.msra.mxu0 0
      %1075 = vmatprep.subr.bf16.mxu0 0
      %1076 = vmatpush1.bf16.msra.mxu0 0
      %1077 = vmatprep.subr.bf16.mxu0 0
      %1078 = vmatpush1.bf16.msra.mxu0 0
      %1079 = vmatprep.subr.bf16.mxu0 0
      %1080 = vmatpush1.bf16.msra.mxu0 0
      %1081 = vmatprep.subr.bf16.mxu0 0
      %1082 = vmatpush1.bf16.msra.mxu0 0
      %1083 = vmatprep.subr.bf16.mxu0 0
      %1084 = vmatpush1.bf16.msra.mxu0 0
      %1085 = vmatprep.subr.bf16.mxu0 0
      %1086 = vmatpush1.bf16.msra.mxu0 0
      %1087 = vmatprep.subr.bf16.mxu0 0
      %1088 = vmatpush1.bf16.msra.mxu0 0
      %1089 = vmatprep.subr.bf16.mxu0 0
      %1090 = vmatpush1.bf16.msra.mxu0 0
      %1091 = vmatprep.mubr.bf16.mxu0 0
      %1092 = vmatmul.mubr.bf16.gmra.mrb[0].mxu0 %v1012
      %v1093 = vpop.f32.mrb[0].mxu0
      %v1094 = vadd.f32 0.0, %v1093
      %v1095 = vpop.f32.mrb[0].mxu0
      %v1096 = vpop.f32.mrb[0].mxu0
      %v1097 = vadd.f32 0.0, %v1096
      %v1098 = vpop.f32.mrb[0].mxu0
      %1099 = vmatprep.mubr.bf16.mxu0 0
      %1100 = vmatmul.mubr.bf16.gmra.mrb[0].mxu0 %v1015
      %v1101 = vpop.f32.mrb[0].mxu0
      %v1102 = vadd.f32 0.0, %v1101
      %v1103 = vpop.f32.mrb[0].mxu0
      %v1104 = vpop.f32.mrb[0].mxu0
      %v1105 = vadd.f32 0.0, %v1104
      %v1106 = vpop.f32.mrb[0].mxu0
      %1107 = vmatprep.mubr.bf16.mxu0 0
      %1108 = vmatmul.mubr.bf16.gmra.mrb[0].mxu0 %v1018
      %v1109 = vpop.f32.mrb[0].mxu0
      %v1110 = vadd.f32 0.0, %v1109
      %v1111 = vpop.f32.mrb[0].mxu0
      %v1112 = vpop.f32.mrb[0].mxu0
      %v1113 = vadd.f32 0.0, %v1112
      %v1114 = vpop.f32.mrb[0].mxu0
      %1115 = vmatprep.mubr.bf16.mxu0 0
      %1116 = vmatmul.mubr.bf16.gmra.mrb[0].mxu0 %v1021
      %v1117 = vpop.f32.mrb[0].mxu0
      %v1118 = vadd.f32 0.0, %v1117
      %v1119 = vpop.f32.mrb[0].mxu0
      %v1120 = vpop.f32.mrb[0].mxu0
      %v1121 = vadd.f32 0.0, %v1120
      %v1122 = vpop.f32.mrb[0].mxu0
      %1123 = vmatprep.mubr.bf16.mxu0 0
      %1124 = vmatmul.mubr.bf16.gmra.mrb[0].mxu0 %v1024
      %v1125 = vpop.f32.mrb[0].mxu0
      %v1126 = vadd.f32 0.0, %v1125
      %v1127 = vpop.f32.mrb[0].mxu0
      %v1128 = vpop.f32.mrb[0].mxu0
      %v1129 = vadd.f32 0.0, %v1128
      %v1130 = vpop.f32.mrb[0].mxu0
      %1131 = vmatprep.mubr.bf16.mxu0 0
      %1132 = vmatmul.mubr.bf16.gmra.mrb[0].mxu0 %v1027
      %v1133 = vpop.f32.mrb[0].mxu0
      %v1134 = vadd.f32 0.0, %v1133
      %v1135 = vpop.f32.mrb[0].mxu0
      %v1136 = vpop.f32.mrb[0].mxu0
      %v1137 = vadd.f32 0.0, %v1136
      %v1138 = vpop.f32.mrb[0].mxu0
      %1139 = vmatprep.mubr.bf16.mxu0 0
      %1140 = vmatmul.mubr.bf16.gmra.mrb[0].mxu0 %v1030
      %v1141 = vpop.f32.mrb[0].mxu0
      %v1142 = vadd.f32 0.0, %v1141
      %v1143 = vpop.f32.mrb[0].mxu0
      %v1144 = vpop.f32.mrb[0].mxu0
      %v1145 = vadd.f32 0.0, %v1144
      %v1146 = vpop.f32.mrb[0].mxu0
      %1147 = vmatprep.mubr.bf16.mxu0 0
      %1148 = vmatmul.mubr.bf16.gmra.mrb[0].mxu0 %v1033
      %v1149 = vpop.f32.mrb[0].mxu0
      %v1150 = vadd.f32 0.0, %v1149
      %v1151 = vpop.f32.mrb[0].mxu0
      %v1152 = vpop.f32.mrb[0].mxu0
      %v1153 = vadd.f32 0.0, %v1152
      %v1154 = vpop.f32.mrb[0].mxu0
      %1155 = vmatprep.mubr.bf16.mxu0 0
      %1156 = vmatmul.mubr.bf16.gmra.mrb[0].mxu0 %v1036
      %v1157 = vpop.f32.mrb[0].mxu0
      %v1158 = vadd.f32 0.0, %v1157
      %v1159 = vpop.f32.mrb[0].mxu0
      %v1160 = vpop.f32.mrb[0].mxu0
      %v1161 = vadd.f32 0.0, %v1160
      %v1162 = vpop.f32.mrb[0].mxu0
      %1163 = vmatprep.mubr.bf16.mxu0 0
      %1164 = vmatmul.mubr.bf16.gmra.mrb[0].mxu0 %v1039
      %v1165 = vpop.f32.mrb[0].mxu0
      %v1166 = vadd.f32 0.0, %v1165
      %v1167 = vpop.f32.mrb[0].mxu0
      %v1168 = vpop.f32.mrb[0].mxu0
      %v1169 = vadd.f32 0.0, %v1168
      %v1170 = vpop.f32.mrb[0].mxu0
      %1171 = vmatprep.mubr.bf16.mxu0 0
      %1172 = vmatmul.mubr.bf16.gmra.mrb[0].mxu0 %v1042
      %v1173 = vpop.f32.mrb[0].mxu0
      %v1174 = vadd.f32 0.0, %v1173
      %v1175 = vpop.f32.mrb[0].mxu0
      %v1176 = vpop.f32.mrb[0].mxu0
      %v1177 = vadd.f32 0.0, %v1176
      %v1178 = vpop.f32.mrb[0].mxu0
      %1179 = vmatprep.mubr.bf16.mxu0 0
      %1180 = vmatmul.mubr.bf16.gmra.mrb[0].mxu0 %v1045
      %v1181 = vpop.f32.mrb[0].mxu0
      %v1182 = vadd.f32 0.0, %v1181
      %v1183 = vpop.f32.mrb[0].mxu0
      %v1184 = vpop.f32.mrb[0].mxu0
      %v1185 = vadd.f32 0.0, %v1184
      %v1186 = vpop.f32.mrb[0].mxu0
      %1187 = vmatprep.mubr.bf16.mxu0 0
      %1188 = vmatmul.mubr.bf16.gmra.mrb[0].mxu0 %v1048
      %v1189 = vpop.f32.mrb[0].mxu0
      %v1190 = vadd.f32 0.0, %v1189
      %v1191 = vpop.f32.mrb[0].mxu0
      %v1192 = vpop.f32.mrb[0].mxu0
      %v1193 = vadd.f32 0.0, %v1192
      %v1194 = vpop.f32.mrb[0].mxu0
      %1195 = vmatprep.mubr.bf16.mxu0 0
      %1196 = vmatmul.mubr.bf16.gmra.mrb[0].mxu0 %v1051
      %v1197 = vpop.f32.mrb[0].mxu0
      %v1198 = vadd.f32 0.0, %v1197
      %v1199 = vpop.f32.mrb[0].mxu0
      %v1200 = vpop.f32.mrb[0].mxu0
      %v1201 = vadd.f32 0.0, %v1200
      %v1202 = vpop.f32.mrb[0].mxu0
      %1203 = vmatprep.mubr.bf16.mxu0 0
      %1204 = vmatmul.mubr.bf16.gmra.mrb[0].mxu0 %v1054
      %v1205 = vpop.f32.mrb[0].mxu0
      %v1206 = vadd.f32 0.0, %v1205
      %v1207 = vpop.f32.mrb[0].mxu0
      %v1208 = vpop.f32.mrb[0].mxu0
      %v1209 = vadd.f32 0.0, %v1208
      %v1210 = vpop.f32.mrb[0].mxu0
      %1211 = vmatprep.mubr.bf16.mxu0 0
      %1212 = vmatmul.mubr.bf16.gmra.mrb[0].mxu0 %v1057
      %v1213 = vpop.f32.mrb[0].mxu0
      %v1214 = vadd.f32 0.0, %v1213
      %v1215 = vpop.f32.mrb[0].mxu0
      %v1216 = vpop.f32.mrb[0].mxu0
      %v1217 = vadd.f32 0.0, %v1216
      %v1218 = vpop.f32.mrb[0].mxu0
      %1219 = vdwg.mxu0
      %v1220 = vadd.f32 %v787, %v1094
      %v1221 = vadd.f32 %v790, %v1097
      %v1222 = vadd.f32 %v795, %v1102
      %v1223 = vadd.f32 %v798, %v1105
      %v1224 = vadd.f32 %v803, %v1110
      %v1225 = vadd.f32 %v806, %v1113
      %v1226 = vadd.f32 %v811, %v1118
      %v1227 = vadd.f32 %v814, %v1121
      %v1228 = vadd.f32 %v819, %v1126
      %v1229 = vadd.f32 %v822, %v1129
      %v1230 = vadd.f32 %v827, %v1134
      %v1231 = vadd.f32 %v830, %v1137
      %v1232 = vadd.f32 %v835, %v1142
      %v1233 = vadd.f32 %v838, %v1145
      %v1234 = vadd.f32 %v843, %v1150
      %v1235 = vadd.f32 %v846, %v1153
      %v1236 = vadd.f32 %v851, %v1158
      %v1237 = vadd.f32 %v854, %v1161
      %v1238 = vadd.f32 %v859, %v1166
      %v1239 = vadd.f32 %v862, %v1169
      %v1240 = vadd.f32 %v867, %v1174
      %v1241 = vadd.f32 %v870, %v1177
      %v1242 = vadd.f32 %v875, %v1182
      %v1243 = vadd.f32 %v878, %v1185
      %v1244 = vadd.f32 %v883, %v1190
      %v1245 = vadd.f32 %v886, %v1193
      %v1246 = vadd.f32 %v891, %v1198
      %v1247 = vadd.f32 %v894, %v1201
      %v1248 = vadd.f32 %v899, %v1206
      %v1249 = vadd.f32 %v902, %v1209
      %v1250 = vadd.f32 %v907, %v1214
      %v1251 = vadd.f32 %v910, %v1217
      %v1252 = vld [vmem:[%s913] sm:$0xf]
      %v1253 = vld [vmem:[%s913 + $0x4] sm:$0xf]
      %v1254 = vld [vmem:[%s913 + $0x8] sm:$0x1]
      %v1255 = vld [vmem:[%s913 + $0xc] sm:$0xf]
      %v1256 = vld [vmem:[%s913 + $0x10] sm:$0xf]
      %v1257 = vld [vmem:[%s913 + $0x14] sm:$0x1]
      %v1258 = vld [vmem:[%s913 + $0x18] sm:$0xf]
      %v1259 = vld [vmem:[%s913 + $0x1c] sm:$0xf]
      %v1260 = vld [vmem:[%s913 + $0x20] sm:$0x1]
      %v1261 = vld [vmem:[%s913 + $0x24] sm:$0xf]
      %v1262 = vld [vmem:[%s913 + $0x28] sm:$0xf]
      %v1263 = vld [vmem:[%s913 + $0x2c] sm:$0x1]
      %v1264 = vld [vmem:[%s913 + $0x30] sm:$0xf]
      %v1265 = vld [vmem:[%s913 + $0x34] sm:$0xf]
      %v1266 = vld [vmem:[%s913 + $0x38] sm:$0x1]
      %v1267 = vld [vmem:[%s913 + $0x3c] sm:$0xf]
      %v1268 = vld [vmem:[%s913 + $0x40] sm:$0xf]
      %v1269 = vld [vmem:[%s913 + $0x44] sm:$0x1]
      %v1270 = vld [vmem:[%s913 + $0x48] sm:$0xf]
      %v1271 = vld [vmem:[%s913 + $0x4c] sm:$0xf]
      %v1272 = vld [vmem:[%s913 + $0x50] sm:$0x1]
      %v1273 = vld [vmem:[%s913 + $0x54] sm:$0xf]
      %v1274 = vld [vmem:[%s913 + $0x58] sm:$0xf]
      %v1275 = vld [vmem:[%s913 + $0x5c] sm:$0x1]
      %v1276 = vld [vmem:[%s913 + $0x60] sm:$0xf]
      %v1277 = vld [vmem:[%s913 + $0x64] sm:$0xf]
      %v1278 = vld [vmem:[%s913 + $0x68] sm:$0x1]
      %v1279 = vld [vmem:[%s913 + $0x6c] sm:$0xf]
      %v1280 = vld [vmem:[%s913 + $0x70] sm:$0xf]
      %v1281 = vld [vmem:[%s913 + $0x74] sm:$0x1]
      %v1282 = vld [vmem:[%s913 + $0x78] sm:$0xf]
      %v1283 = vld [vmem:[%s913 + $0x7c] sm:$0xf]
      %v1284 = vld [vmem:[%s913 + $0x80] sm:$0x1]
      %v1285 = vld [vmem:[%s913 + $0x84] sm:$0xf]
      %v1286 = vld [vmem:[%s913 + $0x88] sm:$0xf]
      %v1287 = vld [vmem:[%s913 + $0x8c] sm:$0x1]
      %v1288 = vld [vmem:[%s913 + $0x90] sm:$0xf]
      %v1289 = vld [vmem:[%s913 + $0x94] sm:$0xf]
      %v1290 = vld [vmem:[%s913 + $0x98] sm:$0x1]
      %v1291 = vld [vmem:[%s913 + $0x9c] sm:$0xf]
      %v1292 = vld [vmem:[%s913 + $0xa0] sm:$0xf]
      %v1293 = vld [vmem:[%s913 + $0xa4] sm:$0x1]
      %v1294 = vld [vmem:[%s913 + $0xa8] sm:$0xf]
      %v1295 = vld [vmem:[%s913 + $0xac] sm:$0xf]
      %v1296 = vld [vmem:[%s913 + $0xb0] sm:$0x1]
      %v1297 = vld [vmem:[%s913 + $0xb4] sm:$0xf]
      %v1298 = vld [vmem:[%s913 + $0xb8] sm:$0xf]
      %v1299 = vld [vmem:[%s913 + $0xbc] sm:$0x1]
      %v1300 = vunpack.c.l.bf16 %v1252
      %v1301 = vunpack.c.l.bf16 %v1253
      %v1302 = vunpack.c.l.bf16 %v1254
      %v1303 = vunpack.c.l.bf16 %v1255
      %v1304 = vunpack.c.l.bf16 %v1256
      %v1305 = vunpack.c.l.bf16 %v1257
      %v1306 = vunpack.c.l.bf16 %v1258
      %v1307 = vunpack.c.l.bf16 %v1259
      %v1308 = vunpack.c.l.bf16 %v1260
      %v1309 = vunpack.c.l.bf16 %v1261
      %v1310 = vunpack.c.l.bf16 %v1262
      %v1311 = vunpack.c.l.bf16 %v1263
      %v1312 = vunpack.c.l.bf16 %v1264
      %v1313 = vunpack.c.l.bf16 %v1265
      %v1314 = vunpack.c.l.bf16 %v1266
      %v1315 = vunpack.c.l.bf16 %v1267
      %v1316 = vunpack.c.l.bf16 %v1268
      %v1317 = vunpack.c.l.bf16 %v1269
      %v1318 = vunpack.c.l.bf16 %v1270
      %v1319 = vunpack.c.l.bf16 %v1271
      %v1320 = vunpack.c.l.bf16 %v1272
      %v1321 = vunpack.c.l.bf16 %v1273
      %v1322 = vunpack.c.l.bf16 %v1274
      %v1323 = vunpack.c.l.bf16 %v1275
      %v1324 = vunpack.c.l.bf16 %v1276
      %v1325 = vunpack.c.l.bf16 %v1277
      %v1326 = vunpack.c.l.bf16 %v1278
      %v1327 = vunpack.c.l.bf16 %v1279
      %v1328 = vunpack.c.l.bf16 %v1280
      %v1329 = vunpack.c.l.bf16 %v1281
      %v1330 = vunpack.c.l.bf16 %v1282
      %v1331 = vunpack.c.l.bf16 %v1283
      %v1332 = vunpack.c.l.bf16 %v1284
      %v1333 = vunpack.c.l.bf16 %v1285
      %v1334 = vunpack.c.l.bf16 %v1286
      %v1335 = vunpack.c.l.bf16 %v1287
      %v1336 = vunpack.c.l.bf16 %v1288
      %v1337 = vunpack.c.l.bf16 %v1289
      %v1338 = vunpack.c.l.bf16 %v1290
      %v1339 = vunpack.c.l.bf16 %v1291
      %v1340 = vunpack.c.l.bf16 %v1292
      %v1341 = vunpack.c.l.bf16 %v1293
      %v1342 = vunpack.c.l.bf16 %v1294
      %v1343 = vunpack.c.l.bf16 %v1295
      %v1344 = vunpack.c.l.bf16 %v1296
      %v1345 = vunpack.c.l.bf16 %v1297
      %v1346 = vunpack.c.l.bf16 %v1298
      %v1347 = vunpack.c.l.bf16 %v1299
      %v1396 = vrot.slane %v1300, 1
      %v1397 = vrot.slane %v1301, 1
      %v1398 = vsel %vm336, %v1396, %v1397
      %v1399 = vrot.slane %v1302, 1
      %v1400 = vsel %vm336, %v1397, %v1399
      %v1401 = vrot.slane %v1303, 1
      %v1402 = vrot.slane %v1304, 1
      %v1403 = vsel %vm336, %v1401, %v1402
      %v1404 = vrot.slane %v1305, 1
      %v1405 = vsel %vm336, %v1402, %v1404
      %v1406 = vrot.slane %v1306, 1
      %v1407 = vrot.slane %v1307, 1
      %v1408 = vsel %vm336, %v1406, %v1407
      %v1409 = vrot.slane %v1308, 1
      %v1410 = vsel %vm336, %v1407, %v1409
      %v1411 = vrot.slane %v1309, 1
      %v1412 = vrot.slane %v1310, 1
      %v1413 = vsel %vm336, %v1411, %v1412
      %v1414 = vrot.slane %v1311, 1
      %v1415 = vsel %vm336, %v1412, %v1414
      %v1416 = vrot.slane %v1312, 1
      %v1417 = vrot.slane %v1313, 1
      %v1418 = vsel %vm336, %v1416, %v1417
      %v1419 = vrot.slane %v1314, 1
      %v1420 = vsel %vm336, %v1417, %v1419
      %v1421 = vrot.slane %v1315, 1
      %v1422 = vrot.slane %v1316, 1
      %v1423 = vsel %vm336, %v1421, %v1422
      %v1424 = vrot.slane %v1317, 1
      %v1425 = vsel %vm336, %v1422, %v1424
      %v1426 = vrot.slane %v1318, 1
      %v1427 = vrot.slane %v1319, 1
      %v1428 = vsel %vm336, %v1426, %v1427
      %v1429 = vrot.slane %v1320, 1
      %v1430 = vsel %vm336, %v1427, %v1429
      %v1431 = vrot.slane %v1321, 1
      %v1432 = vrot.slane %v1322, 1
      %v1433 = vsel %vm336, %v1431, %v1432
      %v1434 = vrot.slane %v1323, 1
      %v1435 = vsel %vm336, %v1432, %v1434
      %v1436 = vrot.slane %v1324, 1
      %v1437 = vrot.slane %v1325, 1
      %v1438 = vsel %vm336, %v1436, %v1437
      %v1439 = vrot.slane %v1326, 1
      %v1440 = vsel %vm336, %v1437, %v1439
      %v1441 = vrot.slane %v1327, 1
      %v1442 = vrot.slane %v1328, 1
      %v1443 = vsel %vm336, %v1441, %v1442
      %v1444 = vrot.slane %v1329, 1
      %v1445 = vsel %vm336, %v1442, %v1444
      %v1446 = vrot.slane %v1330, 1
      %v1447 = vrot.slane %v1331, 1
      %v1448 = vsel %vm336, %v1446, %v1447
      %v1449 = vrot.slane %v1332, 1
      %v1450 = vsel %vm336, %v1447, %v1449
      %v1451 = vrot.slane %v1333, 1
      %v1452 = vrot.slane %v1334, 1
      %v1453 = vsel %vm336, %v1451, %v1452
      %v1454 = vrot.slane %v1335, 1
      %v1455 = vsel %vm336, %v1452, %v1454
      %v1456 = vrot.slane %v1336, 1
      %v1457 = vrot.slane %v1337, 1
      %v1458 = vsel %vm336, %v1456, %v1457
      %v1459 = vrot.slane %v1338, 1
      %v1460 = vsel %vm336, %v1457, %v1459
      %v1461 = vrot.slane %v1339, 1
      %v1462 = vrot.slane %v1340, 1
      %v1463 = vsel %vm336, %v1461, %v1462
      %v1464 = vrot.slane %v1341, 1
      %v1465 = vsel %vm336, %v1462, %v1464
      %v1466 = vrot.slane %v1342, 1
      %v1467 = vrot.slane %v1343, 1
      %v1468 = vsel %vm336, %v1466, %v1467
      %v1469 = vrot.slane %v1344, 1
      %v1470 = vsel %vm336, %v1467, %v1469
      %v1471 = vrot.slane %v1345, 1
      %v1472 = vrot.slane %v1346, 1
      %v1473 = vsel %vm336, %v1471, %v1472
      %v1474 = vrot.slane %v1347, 1
      %v1475 = vsel %vm336, %v1472, %v1474
      %v1508 = vpack.c.bf16 %v1400, %v1398
      %v1509 = vpack.c.bf16 %v1405, %v1403
      %v1510 = vpack.c.bf16 %v1410, %v1408
      %v1511 = vpack.c.bf16 %v1415, %v1413
      %v1512 = vpack.c.bf16 %v1420, %v1418
      %v1513 = vpack.c.bf16 %v1425, %v1423
      %v1514 = vpack.c.bf16 %v1430, %v1428
      %v1515 = vpack.c.bf16 %v1435, %v1433
      %v1516 = vpack.c.bf16 %v1440, %v1438
      %v1517 = vpack.c.bf16 %v1445, %v1443
      %v1518 = vpack.c.bf16 %v1450, %v1448
      %v1519 = vpack.c.bf16 %v1455, %v1453
      %v1520 = vpack.c.bf16 %v1460, %v1458
      %v1521 = vpack.c.bf16 %v1465, %v1463
      %v1522 = vpack.c.bf16 %v1470, %v1468
      %v1523 = vpack.c.bf16 %v1475, %v1473
      %s1524 = scalar_lea.vmem %s1, 48
      %v1525 = vld [vmem:[%s1524] sm:$0xf]
      %v1526 = vld [vmem:[%s1524 + $0x4] sm:$0xf]
      %v1527 = vld [vmem:[%s1524 + $0x8] sm:$0xf]
      %v1528 = vld [vmem:[%s1524 + $0xc] sm:$0xf]
      %v1533 = vunpack.c.l.b16 %v1525
      %v1534 = vunpack.c.l.b16 %v1526
      %v1535 = vunpack.c.l.b16 %v1527
      %v1536 = vunpack.c.l.b16 %v1528
      %v1537 = vpack.c.b16 %v1534, %v1533
      %v1538 = vpack.c.b16 %v1536, %v1535
      %v1542 = vsel %vm482, %v1508, 0
      %v1545 = vsel %vm482, %v1509, 0
      %v1548 = vsel %vm482, %v1510, 0
      %v1551 = vsel %vm482, %v1511, 0
      %v1554 = vsel %vm482, %v1512, 0
      %v1557 = vsel %vm482, %v1513, 0
      %v1560 = vsel %vm482, %v1514, 0
      %v1563 = vsel %vm482, %v1515, 0
      %v1566 = vsel %vm482, %v1516, 0
      %v1569 = vsel %vm482, %v1517, 0
      %v1572 = vsel %vm482, %v1518, 0
      %v1575 = vsel %vm482, %v1519, 0
      %v1578 = vsel %vm482, %v1520, 0
      %v1581 = vsel %vm482, %v1521, 0
      %v1584 = vsel %vm482, %v1522, 0
      %v1587 = vsel %vm482, %v1523, 0
      %1589 = vmatprep.subr.bf16.mxu0 0
      %1590 = vmatpush1.bf16.msra.mxu0 %v1537
      %1591 = vmatprep.subr.bf16.mxu0 0
      %1592 = vmatpush1.bf16.msra.mxu0 %v1538
      %1593 = vmatprep.subr.bf16.mxu0 0
      %1594 = vmatpush1.bf16.msra.mxu0 0
      %1595 = vmatprep.subr.bf16.mxu0 0
      %1596 = vmatpush1.bf16.msra.mxu0 0
      %1597 = vmatprep.subr.bf16.mxu0 0
      %1598 = vmatpush1.bf16.msra.mxu0 0
      %1599 = vmatprep.subr.bf16.mxu0 0
      %1600 = vmatpush1.bf16.msra.mxu0 0
      %1601 = vmatprep.subr.bf16.mxu0 0
      %1602 = vmatpush1.bf16.msra.mxu0 0
      %1603 = vmatprep.subr.bf16.mxu0 0
      %1604 = vmatpush1.bf16.msra.mxu0 0
      %1605 = vmatprep.subr.bf16.mxu0 0
      %1606 = vmatpush1.bf16.msra.mxu0 0
      %1607 = vmatprep.subr.bf16.mxu0 0
      %1608 = vmatpush1.bf16.msra.mxu0 0
      %1609 = vmatprep.subr.bf16.mxu0 0
      %1610 = vmatpush1.bf16.msra.mxu0 0
      %1611 = vmatprep.subr.bf16.mxu0 0
      %1612 = vmatpush1.bf16.msra.mxu0 0
      %1613 = vmatprep.subr.bf16.mxu0 0
      %1614 = vmatpush1.bf16.msra.mxu0 0
      %1615 = vmatprep.subr.bf16.mxu0 0
      %1616 = vmatpush1.bf16.msra.mxu0 0
      %1617 = vmatprep.subr.bf16.mxu0 0
      %1618 = vmatpush1.bf16.msra.mxu0 0
      %1619 = vmatprep.subr.bf16.mxu0 0
      %1620 = vmatpush1.bf16.msra.mxu0 0
      %1621 = vmatprep.mubr.bf16.mxu0 0
      %1622 = vmatmul.mubr.bf16.gmra.mrb[0].mxu0 %v1542
      %v1623 = vpop.f32.mrb[0].mxu0
      %v1624 = vadd.f32 0.0, %v1623
      %v1625 = vpop.f32.mrb[0].mxu0
      %v1626 = vpop.f32.mrb[0].mxu0
      %v1627 = vadd.f32 0.0, %v1626
      %v1628 = vpop.f32.mrb[0].mxu0
      %1629 = vmatprep.mubr.bf16.mxu0 0
      %1630 = vmatmul.mubr.bf16.gmra.mrb[0].mxu0 %v1545
      %v1631 = vpop.f32.mrb[0].mxu0
      %v1632 = vadd.f32 0.0, %v1631
      %v1633 = vpop.f32.mrb[0].mxu0
      %v1634 = vpop.f32.mrb[0].mxu0
      %v1635 = vadd.f32 0.0, %v1634
      %v1636 = vpop.f32.mrb[0].mxu0
      %1637 = vmatprep.mubr.bf16.mxu0 0
      %1638 = vmatmul.mubr.bf16.gmra.mrb[0].mxu0 %v1548
      %v1639 = vpop.f32.mrb[0].mxu0
      %v1640 = vadd.f32 0.0, %v1639
      %v1641 = vpop.f32.mrb[0].mxu0
      %v1642 = vpop.f32.mrb[0].mxu0
      %v1643 = vadd.f32 0.0, %v1642
      %v1644 = vpop.f32.mrb[0].mxu0
      %1645 = vmatprep.mubr.bf16.mxu0 0
      %1646 = vmatmul.mubr.bf16.gmra.mrb[0].mxu0 %v1551
      %v1647 = vpop.f32.mrb[0].mxu0
      %v1648 = vadd.f32 0.0, %v1647
      %v1649 = vpop.f32.mrb[0].mxu0
      %v1650 = vpop.f32.mrb[0].mxu0
      %v1651 = vadd.f32 0.0, %v1650
      %v1652 = vpop.f32.mrb[0].mxu0
      %1653 = vmatprep.mubr.bf16.mxu0 0
      %1654 = vmatmul.mubr.bf16.gmra.mrb[0].mxu0 %v1554
      %v1655 = vpop.f32.mrb[0].mxu0
      %v1656 = vadd.f32 0.0, %v1655
      %v1657 = vpop.f32.mrb[0].mxu0
      %v1658 = vpop.f32.mrb[0].mxu0
      %v1659 = vadd.f32 0.0, %v1658
      %v1660 = vpop.f32.mrb[0].mxu0
      %1661 = vmatprep.mubr.bf16.mxu0 0
      %1662 = vmatmul.mubr.bf16.gmra.mrb[0].mxu0 %v1557
      %v1663 = vpop.f32.mrb[0].mxu0
      %v1664 = vadd.f32 0.0, %v1663
      %v1665 = vpop.f32.mrb[0].mxu0
      %v1666 = vpop.f32.mrb[0].mxu0
      %v1667 = vadd.f32 0.0, %v1666
      %v1668 = vpop.f32.mrb[0].mxu0
      %1669 = vmatprep.mubr.bf16.mxu0 0
      %1670 = vmatmul.mubr.bf16.gmra.mrb[0].mxu0 %v1560
      %v1671 = vpop.f32.mrb[0].mxu0
      %v1672 = vadd.f32 0.0, %v1671
      %v1673 = vpop.f32.mrb[0].mxu0
      %v1674 = vpop.f32.mrb[0].mxu0
      %v1675 = vadd.f32 0.0, %v1674
      %v1676 = vpop.f32.mrb[0].mxu0
      %1677 = vmatprep.mubr.bf16.mxu0 0
      %1678 = vmatmul.mubr.bf16.gmra.mrb[0].mxu0 %v1563
      %v1679 = vpop.f32.mrb[0].mxu0
      %v1680 = vadd.f32 0.0, %v1679
      %v1681 = vpop.f32.mrb[0].mxu0
      %v1682 = vpop.f32.mrb[0].mxu0
      %v1683 = vadd.f32 0.0, %v1682
      %v1684 = vpop.f32.mrb[0].mxu0
      %1685 = vmatprep.mubr.bf16.mxu0 0
      %1686 = vmatmul.mubr.bf16.gmra.mrb[0].mxu0 %v1566
      %v1687 = vpop.f32.mrb[0].mxu0
      %v1688 = vadd.f32 0.0, %v1687
      %v1689 = vpop.f32.mrb[0].mxu0
      %v1690 = vpop.f32.mrb[0].mxu0
      %v1691 = vadd.f32 0.0, %v1690
      %v1692 = vpop.f32.mrb[0].mxu0
      %1693 = vmatprep.mubr.bf16.mxu0 0
      %1694 = vmatmul.mubr.bf16.gmra.mrb[0].mxu0 %v1569
      %v1695 = vpop.f32.mrb[0].mxu0
      %v1696 = vadd.f32 0.0, %v1695
      %v1697 = vpop.f32.mrb[0].mxu0
      %v1698 = vpop.f32.mrb[0].mxu0
      %v1699 = vadd.f32 0.0, %v1698
      %v1700 = vpop.f32.mrb[0].mxu0
      %1701 = vmatprep.mubr.bf16.mxu0 0
      %1702 = vmatmul.mubr.bf16.gmra.mrb[0].mxu0 %v1572
      %v1703 = vpop.f32.mrb[0].mxu0
      %v1704 = vadd.f32 0.0, %v1703
      %v1705 = vpop.f32.mrb[0].mxu0
      %v1706 = vpop.f32.mrb[0].mxu0
      %v1707 = vadd.f32 0.0, %v1706
      %v1708 = vpop.f32.mrb[0].mxu0
      %1709 = vmatprep.mubr.bf16.mxu0 0
      %1710 = vmatmul.mubr.bf16.gmra.mrb[0].mxu0 %v1575
      %v1711 = vpop.f32.mrb[0].mxu0
      %v1712 = vadd.f32 0.0, %v1711
      %v1713 = vpop.f32.mrb[0].mxu0
      %v1714 = vpop.f32.mrb[0].mxu0
      %v1715 = vadd.f32 0.0, %v1714
      %v1716 = vpop.f32.mrb[0].mxu0
      %1717 = vmatprep.mubr.bf16.mxu0 0
      %1718 = vmatmul.mubr.bf16.gmra.mrb[0].mxu0 %v1578
      %v1719 = vpop.f32.mrb[0].mxu0
      %v1720 = vadd.f32 0.0, %v1719
      %v1721 = vpop.f32.mrb[0].mxu0
      %v1722 = vpop.f32.mrb[0].mxu0
      %v1723 = vadd.f32 0.0, %v1722
      %v1724 = vpop.f32.mrb[0].mxu0
      %1725 = vmatprep.mubr.bf16.mxu0 0
      %1726 = vmatmul.mubr.bf16.gmra.mrb[0].mxu0 %v1581
      %v1727 = vpop.f32.mrb[0].mxu0
      %v1728 = vadd.f32 0.0, %v1727
      %v1729 = vpop.f32.mrb[0].mxu0
      %v1730 = vpop.f32.mrb[0].mxu0
      %v1731 = vadd.f32 0.0, %v1730
      %v1732 = vpop.f32.mrb[0].mxu0
      %1733 = vmatprep.mubr.bf16.mxu0 0
      %1734 = vmatmul.mubr.bf16.gmra.mrb[0].mxu0 %v1584
      %v1735 = vpop.f32.mrb[0].mxu0
      %v1736 = vadd.f32 0.0, %v1735
      %v1737 = vpop.f32.mrb[0].mxu0
      %v1738 = vpop.f32.mrb[0].mxu0
      %v1739 = vadd.f32 0.0, %v1738
      %v1740 = vpop.f32.mrb[0].mxu0
      %1741 = vmatprep.mubr.bf16.mxu0 0
      %1742 = vmatmul.mubr.bf16.gmra.mrb[0].mxu0 %v1587
      %v1743 = vpop.f32.mrb[0].mxu0
      %v1744 = vadd.f32 0.0, %v1743
      %v1745 = vpop.f32.mrb[0].mxu0
      %v1746 = vpop.f32.mrb[0].mxu0
      %v1747 = vadd.f32 0.0, %v1746
      %v1748 = vpop.f32.mrb[0].mxu0
      %1749 = vdwg.mxu0
      %v1750 = vadd.f32 %v1220, %v1624
      %v1751 = vadd.f32 %v1221, %v1627
      %v1752 = vadd.f32 %v1222, %v1632
      %v1753 = vadd.f32 %v1223, %v1635
      %v1754 = vadd.f32 %v1224, %v1640
      %v1755 = vadd.f32 %v1225, %v1643
      %v1756 = vadd.f32 %v1226, %v1648
      %v1757 = vadd.f32 %v1227, %v1651
      %v1758 = vadd.f32 %v1228, %v1656
      %v1759 = vadd.f32 %v1229, %v1659
      %v1760 = vadd.f32 %v1230, %v1664
      %v1761 = vadd.f32 %v1231, %v1667
      %v1762 = vadd.f32 %v1232, %v1672
      %v1763 = vadd.f32 %v1233, %v1675
      %v1764 = vadd.f32 %v1234, %v1680
      %v1765 = vadd.f32 %v1235, %v1683
      %v1766 = vadd.f32 %v1236, %v1688
      %v1767 = vadd.f32 %v1237, %v1691
      %v1768 = vadd.f32 %v1238, %v1696
      %v1769 = vadd.f32 %v1239, %v1699
      %v1770 = vadd.f32 %v1240, %v1704
      %v1771 = vadd.f32 %v1241, %v1707
      %v1772 = vadd.f32 %v1242, %v1712
      %v1773 = vadd.f32 %v1243, %v1715
      %v1774 = vadd.f32 %v1244, %v1720
      %v1775 = vadd.f32 %v1245, %v1723
      %v1776 = vadd.f32 %v1246, %v1728
      %v1777 = vadd.f32 %v1247, %v1731
      %v1778 = vadd.f32 %v1248, %v1736
      %v1779 = vadd.f32 %v1249, %v1739
      %v1780 = vadd.f32 %v1250, %v1744
      %v1781 = vadd.f32 %v1251, %v1747
      %v1782 = vld [vmem:[%s2] sm:$0x1]
      %v1783 = vlaneseq
      %v1784 = vshrl.u32 %v1783, 7
      %v1785 = vsub.s32 0, %v1784
      %v1786 = vrot.slane %v1782, %v1785
      %v1787 = vadd.f32 %v1750, %v1786
      %v1788 = vadd.f32 %v1751, %v1786
      %v1789 = vadd.f32 %v1752, %v1786
      %v1790 = vadd.f32 %v1753, %v1786
      %v1791 = vadd.f32 %v1754, %v1786
      %v1792 = vadd.f32 %v1755, %v1786
      %v1793 = vadd.f32 %v1756, %v1786
      %v1794 = vadd.f32 %v1757, %v1786
      %v1795 = vadd.f32 %v1758, %v1786
      %v1796 = vadd.f32 %v1759, %v1786
      %v1797 = vadd.f32 %v1760, %v1786
      %v1798 = vadd.f32 %v1761, %v1786
      %v1799 = vadd.f32 %v1762, %v1786
      %v1800 = vadd.f32 %v1763, %v1786
      %v1801 = vadd.f32 %v1764, %v1786
      %v1802 = vadd.f32 %v1765, %v1786
      %v1803 = vadd.f32 %v1766, %v1786
      %v1804 = vadd.f32 %v1767, %v1786
      %v1805 = vadd.f32 %v1768, %v1786
      %v1806 = vadd.f32 %v1769, %v1786
      %v1807 = vadd.f32 %v1770, %v1786
      %v1808 = vadd.f32 %v1771, %v1786
      %v1809 = vadd.f32 %v1772, %v1786
      %v1810 = vadd.f32 %v1773, %v1786
      %v1811 = vadd.f32 %v1774, %v1786
      %v1812 = vadd.f32 %v1775, %v1786
      %v1813 = vadd.f32 %v1776, %v1786
      %v1814 = vadd.f32 %v1777, %v1786
      %v1815 = vadd.f32 %v1778, %v1786
      %v1816 = vadd.f32 %v1779, %v1786
      %v1817 = vadd.f32 %v1780, %v1786
      %v1818 = vadd.f32 %v1781, %v1786
      %vm1819 = vcmp.gt.f32.partialorder %v1787, 0.0
      %vm1820 = vcmp.gt.f32.partialorder %v1788, 0.0
      %vm1821 = vcmp.gt.f32.partialorder %v1789, 0.0
      %vm1822 = vcmp.gt.f32.partialorder %v1790, 0.0
      %vm1823 = vcmp.gt.f32.partialorder %v1791, 0.0
      %vm1824 = vcmp.gt.f32.partialorder %v1792, 0.0
      %vm1825 = vcmp.gt.f32.partialorder %v1793, 0.0
      %vm1826 = vcmp.gt.f32.partialorder %v1794, 0.0
      %vm1827 = vcmp.gt.f32.partialorder %v1795, 0.0
      %vm1828 = vcmp.gt.f32.partialorder %v1796, 0.0
      %vm1829 = vcmp.gt.f32.partialorder %v1797, 0.0
      %vm1830 = vcmp.gt.f32.partialorder %v1798, 0.0
      %vm1831 = vcmp.gt.f32.partialorder %v1799, 0.0
      %vm1832 = vcmp.gt.f32.partialorder %v1800, 0.0
      %vm1833 = vcmp.gt.f32.partialorder %v1801, 0.0
      %vm1834 = vcmp.gt.f32.partialorder %v1802, 0.0
      %vm1835 = vcmp.gt.f32.partialorder %v1803, 0.0
      %vm1836 = vcmp.gt.f32.partialorder %v1804, 0.0
      %vm1837 = vcmp.gt.f32.partialorder %v1805, 0.0
      %vm1838 = vcmp.gt.f32.partialorder %v1806, 0.0
      %vm1839 = vcmp.gt.f32.partialorder %v1807, 0.0
      %vm1840 = vcmp.gt.f32.partialorder %v1808, 0.0
      %vm1841 = vcmp.gt.f32.partialorder %v1809, 0.0
      %vm1842 = vcmp.gt.f32.partialorder %v1810, 0.0
      %vm1843 = vcmp.gt.f32.partialorder %v1811, 0.0
      %vm1844 = vcmp.gt.f32.partialorder %v1812, 0.0
      %vm1845 = vcmp.gt.f32.partialorder %v1813, 0.0
      %vm1846 = vcmp.gt.f32.partialorder %v1814, 0.0
      %vm1847 = vcmp.gt.f32.partialorder %v1815, 0.0
      %vm1848 = vcmp.gt.f32.partialorder %v1816, 0.0
      %vm1849 = vcmp.gt.f32.partialorder %v1817, 0.0
      %vm1850 = vcmp.gt.f32.partialorder %v1818, 0.0
      %v1851 = vmul.f32 %v1787, 0.2
      %v1852 = vmul.f32 %v1788, 0.2
      %v1853 = vmul.f32 %v1789, 0.2
      %v1854 = vmul.f32 %v1790, 0.2
      %v1855 = vmul.f32 %v1791, 0.2
      %v1856 = vmul.f32 %v1792, 0.2
      %v1857 = vmul.f32 %v1793, 0.2
      %v1858 = vmul.f32 %v1794, 0.2
      %v1859 = vmul.f32 %v1795, 0.2
      %v1860 = vmul.f32 %v1796, 0.2
      %v1861 = vmul.f32 %v1797, 0.2
      %v1862 = vmul.f32 %v1798, 0.2
      %v1863 = vmul.f32 %v1799, 0.2
      %v1864 = vmul.f32 %v1800, 0.2
      %v1865 = vmul.f32 %v1801, 0.2
      %v1866 = vmul.f32 %v1802, 0.2
      %v1867 = vmul.f32 %v1803, 0.2
      %v1868 = vmul.f32 %v1804, 0.2
      %v1869 = vmul.f32 %v1805, 0.2
      %v1870 = vmul.f32 %v1806, 0.2
      %v1871 = vmul.f32 %v1807, 0.2
      %v1872 = vmul.f32 %v1808, 0.2
      %v1873 = vmul.f32 %v1809, 0.2
      %v1874 = vmul.f32 %v1810, 0.2
      %v1875 = vmul.f32 %v1811, 0.2
      %v1876 = vmul.f32 %v1812, 0.2
      %v1877 = vmul.f32 %v1813, 0.2
      %v1878 = vmul.f32 %v1814, 0.2
      %v1879 = vmul.f32 %v1815, 0.2
      %v1880 = vmul.f32 %v1816, 0.2
      %v1881 = vmul.f32 %v1817, 0.2
      %v1882 = vmul.f32 %v1818, 0.2
      %v1883 = vsel %vm1819, %v1787, %v1851
      %v1884 = vsel %vm1820, %v1788, %v1852
      %v1885 = vsel %vm1821, %v1789, %v1853
      %v1886 = vsel %vm1822, %v1790, %v1854
      %v1887 = vsel %vm1823, %v1791, %v1855
      %v1888 = vsel %vm1824, %v1792, %v1856
      %v1889 = vsel %vm1825, %v1793, %v1857
      %v1890 = vsel %vm1826, %v1794, %v1858
      %v1891 = vsel %vm1827, %v1795, %v1859
      %v1892 = vsel %vm1828, %v1796, %v1860
      %v1893 = vsel %vm1829, %v1797, %v1861
      %v1894 = vsel %vm1830, %v1798, %v1862
      %v1895 = vsel %vm1831, %v1799, %v1863
      %v1896 = vsel %vm1832, %v1800, %v1864
      %v1897 = vsel %vm1833, %v1801, %v1865
      %v1898 = vsel %vm1834, %v1802, %v1866
      %v1899 = vsel %vm1835, %v1803, %v1867
      %v1900 = vsel %vm1836, %v1804, %v1868
      %v1901 = vsel %vm1837, %v1805, %v1869
      %v1902 = vsel %vm1838, %v1806, %v1870
      %v1903 = vsel %vm1839, %v1807, %v1871
      %v1904 = vsel %vm1840, %v1808, %v1872
      %v1905 = vsel %vm1841, %v1809, %v1873
      %v1906 = vsel %vm1842, %v1810, %v1874
      %v1907 = vsel %vm1843, %v1811, %v1875
      %v1908 = vsel %vm1844, %v1812, %v1876
      %v1909 = vsel %vm1845, %v1813, %v1877
      %v1910 = vsel %vm1846, %v1814, %v1878
      %v1911 = vsel %vm1847, %v1815, %v1879
      %v1912 = vsel %vm1848, %v1816, %v1880
      %v1913 = vsel %vm1849, %v1817, %v1881
      %v1914 = vsel %vm1850, %v1818, %v1882
      %v1915 = vld [vmem:[%s2 + $0x1] sm:$0x1]
      %v1916 = vlaneseq
      %v1917 = vshrl.u32 %v1916, 7
      %v1918 = vsub.s32 0, %v1917
      %v1919 = vrot.slane %v1915, %v1918
      %v1920 = vmul.f32 %v1883, %v1919
      %v1921 = vmul.f32 %v1884, %v1919
      %v1922 = vmul.f32 %v1885, %v1919
      %v1923 = vmul.f32 %v1886, %v1919
      %v1924 = vmul.f32 %v1887, %v1919
      %v1925 = vmul.f32 %v1888, %v1919
      %v1926 = vmul.f32 %v1889, %v1919
      %v1927 = vmul.f32 %v1890, %v1919
      %v1928 = vmul.f32 %v1891, %v1919
      %v1929 = vmul.f32 %v1892, %v1919
      %v1930 = vmul.f32 %v1893, %v1919
      %v1931 = vmul.f32 %v1894, %v1919
      %v1932 = vmul.f32 %v1895, %v1919
      %v1933 = vmul.f32 %v1896, %v1919
      %v1934 = vmul.f32 %v1897, %v1919
      %v1935 = vmul.f32 %v1898, %v1919
      %v1936 = vmul.f32 %v1899, %v1919
      %v1937 = vmul.f32 %v1900, %v1919
      %v1938 = vmul.f32 %v1901, %v1919
      %v1939 = vmul.f32 %v1902, %v1919
      %v1940 = vmul.f32 %v1903, %v1919
      %v1941 = vmul.f32 %v1904, %v1919
      %v1942 = vmul.f32 %v1905, %v1919
      %v1943 = vmul.f32 %v1906, %v1919
      %v1944 = vmul.f32 %v1907, %v1919
      %v1945 = vmul.f32 %v1908, %v1919
      %v1946 = vmul.f32 %v1909, %v1919
      %v1947 = vmul.f32 %v1910, %v1919
      %v1948 = vmul.f32 %v1911, %v1919
      %v1949 = vmul.f32 %v1912, %v1919
      %v1950 = vmul.f32 %v1913, %v1919
      %v1951 = vmul.f32 %v1914, %v1919
      %v1952 = vld [vmem:[%s2 + $0x2] sm:$0x1]
      %v1953 = vlaneseq
      %v1954 = vshrl.u32 %v1953, 7
      %v1955 = vsub.s32 0, %v1954
      %v1956 = vrot.slane %v1952, %v1955
      %v1957 = vadd.f32 %v1920, %v1956
      %v1958 = vadd.f32 %v1921, %v1956
      %v1959 = vadd.f32 %v1922, %v1956
      %v1960 = vadd.f32 %v1923, %v1956
      %v1961 = vadd.f32 %v1924, %v1956
      %v1962 = vadd.f32 %v1925, %v1956
      %v1963 = vadd.f32 %v1926, %v1956
      %v1964 = vadd.f32 %v1927, %v1956
      %v1965 = vadd.f32 %v1928, %v1956
      %v1966 = vadd.f32 %v1929, %v1956
      %v1967 = vadd.f32 %v1930, %v1956
      %v1968 = vadd.f32 %v1931, %v1956
      %v1969 = vadd.f32 %v1932, %v1956
      %v1970 = vadd.f32 %v1933, %v1956
      %v1971 = vadd.f32 %v1934, %v1956
      %v1972 = vadd.f32 %v1935, %v1956
      %v1973 = vadd.f32 %v1936, %v1956
      %v1974 = vadd.f32 %v1937, %v1956
      %v1975 = vadd.f32 %v1938, %v1956
      %v1976 = vadd.f32 %v1939, %v1956
      %v1977 = vadd.f32 %v1940, %v1956
      %v1978 = vadd.f32 %v1941, %v1956
      %v1979 = vadd.f32 %v1942, %v1956
      %v1980 = vadd.f32 %v1943, %v1956
      %v1981 = vadd.f32 %v1944, %v1956
      %v1982 = vadd.f32 %v1945, %v1956
      %v1983 = vadd.f32 %v1946, %v1956
      %v1984 = vadd.f32 %v1947, %v1956
      %v1985 = vadd.f32 %v1948, %v1956
      %v1986 = vadd.f32 %v1949, %v1956
      %v1987 = vadd.f32 %v1950, %v1956
      %v1988 = vadd.f32 %v1951, %v1956
      %v1989 = vpack.c.bf16 %v1958, %v1957
      %v1990 = vpack.c.bf16 %v1960, %v1959
      %v1991 = vpack.c.bf16 %v1962, %v1961
      %v1992 = vpack.c.bf16 %v1964, %v1963
      %v1993 = vpack.c.bf16 %v1966, %v1965
      %v1994 = vpack.c.bf16 %v1968, %v1967
      %v1995 = vpack.c.bf16 %v1970, %v1969
      %v1996 = vpack.c.bf16 %v1972, %v1971
      %v1997 = vpack.c.bf16 %v1974, %v1973
      %v1998 = vpack.c.bf16 %v1976, %v1975
      %v1999 = vpack.c.bf16 %v1978, %v1977
      %v2000 = vpack.c.bf16 %v1980, %v1979
      %v2001 = vpack.c.bf16 %v1982, %v1981
      %v2002 = vpack.c.bf16 %v1984, %v1983
      %v2003 = vpack.c.bf16 %v1986, %v1985
      %v2004 = vpack.c.bf16 %v1988, %v1987
      %v2021 = vunpack.c.l.b16 %v1989
      %v2022 = vunpack.c.h.b16 %v1989
      %v2023 = vunpack.c.l.b16 %v1990
      %v2024 = vunpack.c.h.b16 %v1990
      %v2025 = vunpack.c.l.b16 %v1991
      %v2026 = vunpack.c.h.b16 %v1991
      %v2027 = vunpack.c.l.b16 %v1992
      %v2028 = vunpack.c.h.b16 %v1992
      %v2029 = vunpack.c.l.b16 %v1993
      %v2030 = vunpack.c.h.b16 %v1993
      %v2031 = vunpack.c.l.b16 %v1994
      %v2032 = vunpack.c.h.b16 %v1994
      %v2033 = vunpack.c.l.b16 %v1995
      %v2034 = vunpack.c.h.b16 %v1995
      %v2035 = vunpack.c.l.b16 %v1996
      %v2036 = vunpack.c.h.b16 %v1996
      %v2037 = vunpack.c.l.b16 %v1997
      %v2038 = vunpack.c.h.b16 %v1997
      %v2039 = vunpack.c.l.b16 %v1998
      %v2040 = vunpack.c.h.b16 %v1998
      %v2041 = vunpack.c.l.b16 %v1999
      %v2042 = vunpack.c.h.b16 %v1999
      %v2043 = vunpack.c.l.b16 %v2000
      %v2044 = vunpack.c.h.b16 %v2000
      %v2045 = vunpack.c.l.b16 %v2001
      %v2046 = vunpack.c.h.b16 %v2001
      %v2047 = vunpack.c.l.b16 %v2002
      %v2048 = vunpack.c.h.b16 %v2002
      %v2049 = vunpack.c.l.b16 %v2003
      %v2050 = vunpack.c.h.b16 %v2003
      %v2051 = vunpack.c.l.b16 %v2004
      %v2052 = vunpack.c.h.b16 %v2004
      %v2053 = vpack.c.b16 %v2021, %v2021
      %v2054 = vpack.c.b16 %v2022, %v2022
      %v2055 = vpack.c.b16 %v2023, %v2023
      %v2056 = vpack.c.b16 %v2024, %v2024
      %v2057 = vpack.c.b16 %v2025, %v2025
      %v2058 = vpack.c.b16 %v2026, %v2026
      %v2059 = vpack.c.b16 %v2027, %v2027
      %v2060 = vpack.c.b16 %v2028, %v2028
      %v2061 = vpack.c.b16 %v2029, %v2029
      %v2062 = vpack.c.b16 %v2030, %v2030
      %v2063 = vpack.c.b16 %v2031, %v2031
      %v2064 = vpack.c.b16 %v2032, %v2032
      %v2065 = vpack.c.b16 %v2033, %v2033
      %v2066 = vpack.c.b16 %v2034, %v2034
      %v2067 = vpack.c.b16 %v2035, %v2035
      %v2068 = vpack.c.b16 %v2036, %v2036
      %v2069 = vpack.c.b16 %v2037, %v2037
      %v2070 = vpack.c.b16 %v2038, %v2038
      %v2071 = vpack.c.b16 %v2039, %v2039
      %v2072 = vpack.c.b16 %v2040, %v2040
      %v2073 = vpack.c.b16 %v2041, %v2041
      %v2074 = vpack.c.b16 %v2042, %v2042
      %v2075 = vpack.c.b16 %v2043, %v2043
      %v2076 = vpack.c.b16 %v2044, %v2044
      %v2077 = vpack.c.b16 %v2045, %v2045
      %v2078 = vpack.c.b16 %v2046, %v2046
      %v2079 = vpack.c.b16 %v2047, %v2047
      %v2080 = vpack.c.b16 %v2048, %v2048
      %v2081 = vpack.c.b16 %v2049, %v2049
      %v2082 = vpack.c.b16 %v2050, %v2050
      %v2083 = vpack.c.b16 %v2051, %v2051
      %v2084 = vpack.c.b16 %v2052, %v2052
      %vm2117 = vcmask 60416
      %2118 = vst.msk [vmem:[%s170] sm:$0xf] %vm2117, %v2053
      %2119 = vst.msk [vmem:[%s170 + $0x4] sm:$0xf] %vm2117, %v2054
      %2120 = vst.msk [vmem:[%s170 + $0x8] sm:$0xf] %vm2117, %v2055
      %2121 = vst.msk [vmem:[%s170 + $0xc] sm:$0xf] %vm2117, %v2056
      %2122 = vst.msk [vmem:[%s170 + $0x10] sm:$0xf] %vm2117, %v2057
      %2123 = vst.msk [vmem:[%s170 + $0x14] sm:$0xf] %vm2117, %v2058
      %2124 = vst.msk [vmem:[%s170 + $0x18] sm:$0xf] %vm2117, %v2059
      %2125 = vst.msk [vmem:[%s170 + $0x1c] sm:$0xf] %vm2117, %v2060
      %2126 = vst.msk [vmem:[%s170 + $0x20] sm:$0xf] %vm2117, %v2061
      %2127 = vst.msk [vmem:[%s170 + $0x24] sm:$0xf] %vm2117, %v2062
      %2128 = vst.msk [vmem:[%s170 + $0x28] sm:$0xf] %vm2117, %v2063
      %2129 = vst.msk [vmem:[%s170 + $0x2c] sm:$0xf] %vm2117, %v2064
      %2130 = vst.msk [vmem:[%s170 + $0x30] sm:$0xf] %vm2117, %v2065
      %2131 = vst.msk [vmem:[%s170 + $0x34] sm:$0xf] %vm2117, %v2066
      %2132 = vst.msk [vmem:[%s170 + $0x38] sm:$0xf] %vm2117, %v2067
      %2133 = vst.msk [vmem:[%s170 + $0x3c] sm:$0xf] %vm2117, %v2068
      %2134 = vst.msk [vmem:[%s170 + $0x40] sm:$0xf] %vm2117, %v2069
      %2135 = vst.msk [vmem:[%s170 + $0x44] sm:$0xf] %vm2117, %v2070
      %2136 = vst.msk [vmem:[%s170 + $0x48] sm:$0xf] %vm2117, %v2071
      %2137 = vst.msk [vmem:[%s170 + $0x4c] sm:$0xf] %vm2117, %v2072
      %2138 = vst.msk [vmem:[%s170 + $0x50] sm:$0xf] %vm2117, %v2073
      %2139 = vst.msk [vmem:[%s170 + $0x54] sm:$0xf] %vm2117, %v2074
      %2140 = vst.msk [vmem:[%s170 + $0x58] sm:$0xf] %vm2117, %v2075
      %2141 = vst.msk [vmem:[%s170 + $0x5c] sm:$0xf] %vm2117, %v2076
      %2142 = vst.msk [vmem:[%s170 + $0x60] sm:$0xf] %vm2117, %v2077
      %2143 = vst.msk [vmem:[%s170 + $0x64] sm:$0xf] %vm2117, %v2078
      %2144 = vst.msk [vmem:[%s170 + $0x68] sm:$0xf] %vm2117, %v2079
      %2145 = vst.msk [vmem:[%s170 + $0x6c] sm:$0xf] %vm2117, %v2080
      %2146 = vst.msk [vmem:[%s170 + $0x70] sm:$0xf] %vm2117, %v2081
      %2147 = vst.msk [vmem:[%s170 + $0x74] sm:$0xf] %vm2117, %v2082
      %2148 = vst.msk [vmem:[%s170 + $0x78] sm:$0xf] %vm2117, %v2083
      %2149 = vst.msk [vmem:[%s170 + $0x7c] sm:$0xf] %vm2117, %v2084
      %p2150 = scmp.lt.s32.totalorder %s14, 1
      %s2151 = scalar_select %p2150, %s14, 1
      %s2152 = smul.addr %s2151, 32
      %s2153 = smul.addr %s2152, 4
      %s2154 = scalar_lea.vmem %s3, %s2153
      // Predicated region
      $region33: #{discriminator_forward.6} parent=31 // pred_check
        %p2155 = pneg %p100
      $region34: #{discriminator_forward.6} parent=31 // pred_check_branch
        %2157 = sbr.rel (%p2155) target = $region36
      $region35: #{discriminator_forward.6} parent=31 // pred_region
        _
      $region36: #{discriminator_forward.6} parent=31 // pred_fallthru
        _
    $region32: #{discriminator_forward.6} parent=5 // pred_fallthru
      _
    %p2158 = scmp.le.s32.totalorder 2, %s9
    // Predicated region
    $region37: #{discriminator_forward.6} parent=5 // pred_check
      %p2159 = pneg %p2158
    $region38: #{discriminator_forward.6} parent=5 // pred_check_branch
      %2161 = sbr.rel (%p2159) target = $region40
    $region39: #{discriminator_forward.6} parent=5 // pred_region
      %s2162 = ssub.s32 %s9, 2
      // Predicated region
      $region41: #{discriminator_forward.6} parent=39 // pred_check
        %p2163 = pneg %p106
      $region42: #{discriminator_forward.6} parent=39 // pred_check_branch
        %2165 = sbr.rel (%p2163) target = $region44
      $region43: #{discriminator_forward.6} parent=39 // pred_region
        %p2166 = scmp.lt.s32.totalorder %s15, 1
        %s2167 = scalar_select %p2166, %s15, 1
        %s2168 = smul.addr %s2167, 32
        %s2169 = smul.addr %s2168, 4
        %s2170 = scalar_lea.vmem %s3, %s2169
      $region44: #{discriminator_forward.6} parent=39 // pred_fallthru
        _
    $region40: #{discriminator_forward.6} parent=5 // pred_fallthru
      _
  $region6: #{discriminator_forward.6} parent=0 // loop_footer
    %s13 = sadd.s32 1, %s9
  $region7: #{discriminator_forward.6} parent=0 // loop_footer_branch
    %8 = sbr.rel target = $region3
  $region8: #{discriminator_forward.6} parent=0 // loop_exit
    _

// kernel: discriminator_forward.7
$region0: #{discriminator_forward.7}
  #allocation0 [shape = 'u32[]', space=smem, size = 0x4, offset = 0x4, fixed_abs, tag = 'smem constant byte address 0x4 - core index']
  #allocation1 [shape = 'u32[144,128]{1,0:T(1,128)}', space=vmem, size = 0x12000, scoped, tag = 'internal scratch']
  %s0 = inlined_call_operand.vmem [shape: bf16[2,9,9,32], index: 0, kind: input, shape index: {}]
  %s1 = inlined_call_operand.vmem [shape: bf16[4,32,16], index: 1, kind: input, shape index: {}]
  %s2 = inlined_call_operand.vmem [shape: f32[3,16], index: 2, kind: input, shape index: {}]
  %s3 = inlined_call_operand.vmem [shape: bf16[2,8,8,16], index: 3, kind: output, shape index: {}]
  %s4 = sld [smem:[#allocation0]]
  $region45: #{discriminator_forward.7} parent=0
    _
  %s6 = ssub.s32 1, %s4
  %s7 = scalar_select 0, %s6, %s4
  loop: start=0, step=1, limit=4
  $region2: #{discriminator_forward.7} parent=0 // loop_pre_header
    _
  $region3: #{discriminator_forward.7} parent=0 // loop_header
    %s9 = sphi 0, %s13
    %p10 = scmp.ge.s32.totalorder %s9, 4
    %s19 = sphi 0, %s21
    %s22 = sphi 0, %s19
    %s23 = sphi 0, %s22
    %s39 = sphi 0, %s23
    %s43 = sphi 0, %s43
    %s45 = sphi 0, %s43
    %s46 = sphi 0, %s45
    %s60 = sphi 0, %s46
    %s64 = sphi 0, %s64
    %s66 = sphi 0, %s64
    %s67 = sphi 0, %s66
    %s81 = sphi 0, %s67
    %s87 = sphi 0, %s89
    %s90 = sphi 0, %s87
    %s91 = sphi 0, %s90
    %s107 = sphi 0, %s91
  $region4: #{discriminator_forward.7} parent=0 // loop_header_branch
    %12 = sbr.rel (%p10) target = $region8
  $region5: #{discriminator_forward.7} parent=0 // loop_body
    %s14 = ssub.s32 %s9, 1
    %s15 = ssub.s32 %s9, 2
    %s16 = sadd.s32 %s9, 1
    %s17 = ssub.s32 %s9, %s16
    %p18 = scmp.eq.s32.totalorder %s17, 0
    %s20 = sadd.s32 %s19, 1
    %s21 = scalar_select %p18, %s19, %s20
    %p24 = pneg %p18
    %p25 = scmp.eq.s32.totalorder %s9, 1
    %p26 = por %p24, %p25
    %p27 = scmp.ne.s32.totalorder %s19, %s22
    %p28 = scmp.eq.s32.totalorder %s9, 0
    %p29 = por %p27, %p28
    %p30 = scmp.ne.s32.totalorder %s19, %s22
    %p31 = scmp.eq.s32.totalorder %s14, 1
    %p32 = por %p30, %p31
    %p33 = scmp.ne.s32.totalorder %s22, %s23
    %p34 = scmp.eq.s32.totalorder %s14, 0
    %p35 = por %p33, %p34
    %p36 = scmp.ne.s32.totalorder %s22, %s23
    %p37 = scmp.eq.s32.totalorder %s15, 1
    %p38 = por %p36, %p37
    %p40 = scmp.ne.s32.totalorder %s23, %s39
    %p41 = scmp.eq.s32.totalorder %s15, 0
    %p42 = por %p40, %p41
    %s44 = sadd.s32 %s43, 1
    %p47 = scmp.eq.s32.totalorder %s9, 1
    %p48 = scmp.ne.s32.totalorder %s43, %s45
    %p49 = scmp.eq.s32.totalorder %s9, 0
    %p50 = por %p48, %p49
    %p51 = scmp.ne.s32.totalorder %s43, %s45
    %p52 = scmp.eq.s32.totalorder %s14, 1
    %p53 = por %p51, %p52
    %p54 = scmp.ne.s32.totalorder %s45, %s46
    %p55 = scmp.eq.s32.totalorder %s14, 0
    %p56 = por %p54, %p55
    %p57 = scmp.ne.s32.totalorder %s45, %s46
    %p58 = scmp.eq.s32.totalorder %s15, 1
    %p59 = por %p57, %p58
    %p61 = scmp.ne.s32.totalorder %s46, %s60
    %p62 = scmp.eq.s32.totalorder %s15, 0
    %p63 = por %p61, %p62
    %s65 = sadd.s32 %s64, 1
    %p68 = scmp.eq.s32.totalorder %s9, 1
    %p69 = scmp.ne.s32.totalorder %s64, %s66
    %p70 = scmp.eq.s32.totalorder %s9, 0
    %p71 = por %p69, %p70
    %p72 = scmp.ne.s32.totalorder %s64, %s66
    %p73 = scmp.eq.s32.totalorder %s14, 1
    %p74 = por %p72, %p73
    %p75 = scmp.ne.s32.totalorder %s66, %s67
    %p76 = scmp.eq.s32.totalorder %s14, 0
    %p77 = por %p75, %p76
    %p78 = scmp.ne.s32.totalorder %s66, %s67
    %p79 = scmp.eq.s32.totalorder %s15, 1
    %p80 = por %p78, %p79
    %p82 = scmp.ne.s32.totalorder %s67, %s81
    %p83 = scmp.eq.s32.totalorder %s15, 0
    %p84 = por %p82, %p83
    %s85 = ssub.s32 %s9, %s16
    %p86 = scmp.eq.s32.totalorder %s85, 0
    %s88 = sadd.s32 %s87, 1
    %s89 = scalar_select %p86, %s87, %s88
    %p92 = pneg %p86
    %p93 = scmp.eq.s32.totalorder %s9, 1
    %p94 = por %p92, %p93
    %p95 = scmp.ne.s32.totalorder %s87, %s90
    %p96 = scmp.eq.s32.totalorder %s9, 0
    %p97 = por %p95, %p96
    %p98 = scmp.ne.s32.totalorder %s87, %s90
    %p99 = scmp.eq.s32.totalorder %s14, 1
    %p100 = por %p98, %p99
    %p101 = scmp.ne.s32.totalorder %s90, %s91
    %p102 = scmp.eq.s32.totalorder %s14, 0
    %p103 = por %p101, %p102
    %p104 = scmp.ne.s32.totalorder %s90, %s91
    %p105 = scmp.eq.s32.totalorder %s15, 1
    %p106 = por %p104, %p105
    %p108 = scmp.ne.s32.totalorder %s91, %s107
    %p109 = scmp.eq.s32.totalorder %s15, 0
    %p110 = por %p108, %p109
    %p111 = scmp.le.s32.totalorder 1, %s9
    %p112 = scmp.lt.s32.totalorder %s9, 3
    %p113 = pnand %p111, %p112
    %p114 = pneg %p113
    // Predicated region
    $region9: #{discriminator_forward.7} parent=5 // pred_check
      _
    $region10: #{discriminator_forward.7} parent=5 // pred_check_branch
      %116 = sbr.rel (%p113) target = $region12
    $region11: #{discriminator_forward.7} parent=5 // pred_region
      %s117 = ssub.s32 %s9, 1
      // Predicated region
      $region13: #{discriminator_forward.7} parent=11 // pred_check
        %p118 = pneg %p56
      $region14: #{discriminator_forward.7} parent=11 // pred_check_branch
        %120 = sbr.rel (%p118) target = $region16
      $region15: #{discriminator_forward.7} parent=11 // pred_region
        _
      $region16: #{discriminator_forward.7} parent=11 // pred_fallthru
        _
      // Predicated region
      $region17: #{discriminator_forward.7} parent=11 // pred_check
        %p121 = pneg %p77
      $region18: #{discriminator_forward.7} parent=11 // pred_check_branch
        %123 = sbr.rel (%p121) target = $region20
      $region19: #{discriminator_forward.7} parent=11 // pred_region
        _
      $region20: #{discriminator_forward.7} parent=11 // pred_fallthru
        _
    $region12: #{discriminator_forward.7} parent=5 // pred_fallthru
      _
    %p124 = scmp.lt.s32.totalorder %s9, 2
    // Predicated region
    $region21: #{discriminator_forward.7} parent=5 // pred_check
      %p125 = pneg %p124
    $region22: #{discriminator_forward.7} parent=5 // pred_check_branch
      %127 = sbr.rel (%p125) target = $region24
    $region23: #{discriminator_forward.7} parent=5 // pred_region
      // Predicated region
      $region25: #{discriminator_forward.7} parent=23 // pred_check
        %p128 = pneg %p29
      $region26: #{discriminator_forward.7} parent=23 // pred_check_branch
        %130 = sbr.rel (%p128) target = $region28
      $region27: #{discriminator_forward.7} parent=23 // pred_region
        %p131 = scmp.lt.s32.totalorder %s9, 1
        %s132 = scalar_select %p131, %s9, 1
        %s133 = smul.addr %s132, 18
        %s134 = smul.addr %s133, 4
        %s135 = scalar_lea.vmem %s0, %s134
      $region28: #{discriminator_forward.7} parent=23 // pred_fallthru
        _
    $region24: #{discriminator_forward.7} parent=5 // pred_fallthru
      _
    %p136 = scmp.le.s32.totalorder 1, %s9
    %p137 = scmp.lt.s32.totalorder %s9, 3
    %p138 = pnand %p136, %p137
    %p139 = pneg %p138
    // Predicated region
    $region29: #{discriminator_forward.7} parent=5 // pred_check
      _
    $region30: #{discriminator_forward.7} parent=5 // pred_check_branch
      %141 = sbr.rel (%p138) target = $region32
    $region31: #{discriminator_forward.7} parent=5 // pred_region
      %s142 = ssub.s32 %s9, 1
      %p143 = scmp.lt.s32.totalorder %s14, 1
      %s144 = scalar_select %p143, %s14, 1
      %s145 = smul.addr %s144, 18
      %s146 = smul.addr %s145, 4
      %s147 = scalar_lea.vmem %s0, %s146
      %p148 = pneg %p35
      %p149 = pneg %p32
      %p150 = pneg %p56
      %p151 = pneg %p53
      %p152 = pneg %p77
      %p153 = pneg %p74
      %p154 = pneg %p103
      %p155 = pneg %p100
      %p156 = scmp.lt.s32.totalorder %s14, 1
      %s157 = scalar_select %p156, %s14, 1
      %s158 = smul.addr %s157, 8
      %s159 = smul.addr %s158, 4
      %s160 = scalar_lea.vmem %s3, %s159
      %p161 = scmp.lt.s32.totalorder %s14, 1
      %s162 = scalar_select %p161, %s14, 1
      %s163 = smul.addr %s162, 18
      %s164 = smul.addr %s163, 4
      %s165 = scalar_lea.vmem %s0, %s164
      %p166 = scmp.lt.s32.totalorder %s14, 1
      %s167 = scalar_select %p166, %s14, 1
      %s168 = smul.addr %s167, 8
      %s169 = smul.addr %s168, 4
      %s170 = scalar_lea.vmem %s3, %s169
      %v172 = vld [vmem:[%s165] sm:$0xf]
      %v173 = vld [vmem:[%s165 + $0x8] sm:$0xf]
      %v174 = vld [vmem:[%s165 + $0x10] sm:$0xf]
      %v175 = vld [vmem:[%s165 + $0x18] sm:$0xf]
      %v176 = vld [vmem:[%s165 + $0x20] sm:$0xf]
      %v177 = vld [vmem:[%s165 + $0x28] sm:$0xf]
      %v178 = vld [vmem:[%s165 + $0x30] sm:$0xf]
      %v179 = vld [vmem:[%s165 + $0x38] sm:$0xf]
      %v180 = vunpack.c.l.bf16 %v172
      %v181 = vunpack.c.l.bf16 %v173
      %v182 = vunpack.c.l.bf16 %v174
      %v183 = vunpack.c.l.bf16 %v175
      %v184 = vunpack.c.l.bf16 %v176
      %v185 = vunpack.c.l.bf16 %v177
      %v186 = vunpack.c.l.bf16 %v178
      %v187 = vunpack.c.l.bf16 %v179
      %v188 = vpack.c.bf16 %v181, %v180
      %v189 = vpack.c.bf16 %v183, %v182
      %v190 = vpack.c.bf16 %v185, %v184
      %v191 = vpack.c.bf16 %v187, %v186
      %v192 = vld [vmem:[%s1] sm:$0xf]
      %v193 = vld [vmem:[%s1 + $0x4] sm:$0xf]
      %v194 = vld [vmem:[%s1 + $0x8] sm:$0xf]
      %v195 = vld [vmem:[%s1 + $0xc] sm:$0xf]
      %v196 = vld [vmem:[%s165 + $0x4] sm:$0x1]
      %v197 = vld [vmem:[%s165 + $0xc] sm:$0x1]
      %v198 = vld [vmem:[%s165 + $0x14] sm:$0x1]
      %v199 = vld [vmem:[%s165 + $0x1c] sm:$0x1]
      %v200 = vld [vmem:[%s165 + $0x24] sm:$0x1]
      %v201 = vld [vmem:[%s165 + $0x2c] sm:$0x1]
      %v202 = vld [vmem:[%s165 + $0x34] sm:$0x1]
      %v203 = vld [vmem:[%s165 + $0x3c] sm:$0x1]
      %v204 = vunpack.c.l.bf16 %v196
      %v205 = vunpack.c.l.bf16 %v197
      %v206 = vunpack.c.l.bf16 %v198
      %v207 = vunpack.c.l.bf16 %v199
      %v208 = vunpack.c.l.bf16 %v200
      %v209 = vunpack.c.l.bf16 %v201
      %v210 = vunpack.c.l.bf16 %v202
      %v211 = vunpack.c.l.bf16 %v203
      %vm228 = vcmask 1046528
      %v229 = vrot.slane %v180, 1
      %v230 = vrot.slane %v204, 1
      %v231 = vsel %vm228, %v229, %v230
      %v232 = vrot.slane %v181, 1
      %v233 = vrot.slane %v205, 1
      %v234 = vsel %vm228, %v232, %v233
      %v235 = vrot.slane %v182, 1
      %v236 = vrot.slane %v206, 1
      %v237 = vsel %vm228, %v235, %v236
      %v238 = vrot.slane %v183, 1
      %v239 = vrot.slane %v207, 1
      %v240 = vsel %vm228, %v238, %v239
      %v241 = vrot.slane %v184, 1
      %v242 = vrot.slane %v208, 1
      %v243 = vsel %vm228, %v241, %v242
      %v244 = vrot.slane %v185, 1
      %v245 = vrot.slane %v209, 1
      %v246 = vsel %vm228, %v244, %v245
      %v247 = vrot.slane %v186, 1
      %v248 = vrot.slane %v210, 1
      %v249 = vsel %vm228, %v247, %v248
      %v250 = vrot.slane %v187, 1
      %v251 = vrot.slane %v211, 1
      %v252 = vsel %vm228, %v250, %v251
      %v261 = vpack.c.bf16 %v234, %v231
      %v262 = vpack.c.bf16 %v240, %v237
      %v263 = vpack.c.bf16 %v246, %v243
      %v264 = vpack.c.bf16 %v252, %v249
      %s265 = scalar_lea.vmem %s1, 16
      %v266 = vld [vmem:[%s265] sm:$0xf]
      %v267 = vld [vmem:[%s265 + $0x4] sm:$0xf]
      %v268 = vld [vmem:[%s265 + $0x8] sm:$0xf]
      %v269 = vld [vmem:[%s265 + $0xc] sm:$0xf]
      %v274 = vunpack.c.l.b16 %v266
      %v275 = vunpack.c.l.b16 %v267
      %v276 = vunpack.c.l.b16 %v268
      %v277 = vunpack.c.l.b16 %v269
      %v278 = vpack.c.b16 %v275, %v274
      %v279 = vpack.c.b16 %v277, %v276
      %vm282 = vcmask 261120
      %v284 = vsel %vm282, %v261, 0
      %v287 = vsel %vm282, %v262, 0
      %v290 = vsel %vm282, %v263, 0
      %v293 = vsel %vm282, %v264, 0
      %295 = vmatprep.subr.bf16.mxu0 0
      %296 = vmatpush1.bf16.msra.mxu0 %v278
      %297 = vmatprep.subr.bf16.mxu0 0
      %298 = vmatpush1.bf16.msra.mxu0 %v279
      %299 = vmatprep.subr.bf16.mxu0 0
      %300 = vmatpush1.bf16.msra.mxu0 0
      %301 = vmatprep.subr.bf16.mxu0 0
      %302 = vmatpush1.bf16.msra.mxu0 0
      %303 = vmatprep.subr.bf16.mxu0 0
      %304 = vmatpush1.bf16.msra.mxu0 0
      %305 = vmatprep.subr.bf16.mxu0 0
      %306 = vmatpush1.bf16.msra.mxu0 0
      %307 = vmatprep.subr.bf16.mxu0 0
      %308 = vmatpush1.bf16.msra.mxu0 0
      %309 = vmatprep.subr.bf16.mxu0 0
      %310 = vmatpush1.bf16.msra.mxu0 0
      %311 = vmatprep.subr.bf16.mxu0 0
      %312 = vmatpush1.bf16.msra.mxu0 0
      %313 = vmatprep.subr.bf16.mxu0 0
      %314 = vmatpush1.bf16.msra.mxu0 0
      %315 = vmatprep.subr.bf16.mxu0 0
      %316 = vmatpush1.bf16.msra.mxu0 0
      %317 = vmatprep.subr.bf16.mxu0 0
      %318 = vmatpush1.bf16.msra.mxu0 0
      %319 = vmatprep.subr.bf16.mxu0 0
      %320 = vmatpush1.bf16.msra.mxu0 0
      %321 = vmatprep.subr.bf16.mxu0 0
      %322 = vmatpush1.bf16.msra.mxu0 0
      %323 = vmatprep.subr.bf16.mxu0 0
      %324 = vmatpush1.bf16.msra.mxu0 0
      %325 = vmatprep.subr.bf16.mxu0 0
      %326 = vmatpush1.bf16.msra.mxu0 0
      %327 = vmatprep.mubr.bf16.mxu0 0
      %328 = vmatmul.mubr.bf16.gmra.mrb[0].mxu0 %v284
      %v329 = vpop.f32.mrb[0].mxu0
      %v330 = vadd.f32 0.0, %v329
      %v331 = vpop.f32.mrb[0].mxu0
      %v332 = vpop.f32.mrb[0].mxu0
      %v333 = vadd.f32 0.0, %v332
      %v334 = vpop.f32.mrb[0].mxu0
      %335 = vmatprep.mubr.bf16.mxu0 0
      %336 = vmatmul.mubr.bf16.gmra.mrb[0].mxu0 %v287
      %v337 = vpop.f32.mrb[0].mxu0
      %v338 = vadd.f32 0.0, %v337
      %v339 = vpop.f32.mrb[0].mxu0
      %v340 = vpop.f32.mrb[0].mxu0
      %v341 = vadd.f32 0.0, %v340
      %v342 = vpop.f32.mrb[0].mxu0
      %343 = vmatprep.mubr.bf16.mxu0 0
      %344 = vmatmul.mubr.bf16.gmra.mrb[0].mxu0 %v290
      %v345 = vpop.f32.mrb[0].mxu0
      %v346 = vadd.f32 0.0, %v345
      %v347 = vpop.f32.mrb[0].mxu0
      %v348 = vpop.f32.mrb[0].mxu0
      %v349 = vadd.f32 0.0, %v348
      %v350 = vpop.f32.mrb[0].mxu0
      %351 = vmatprep.mubr.bf16.mxu0 0
      %352 = vmatmul.mubr.bf16.gmra.mrb[0].mxu0 %v293
      %v353 = vpop.f32.mrb[0].mxu0
      %v354 = vadd.f32 0.0, %v353
      %v355 = vpop.f32.mrb[0].mxu0
      %v356 = vpop.f32.mrb[0].mxu0
      %v357 = vadd.f32 0.0, %v356
      %v358 = vpop.f32.mrb[0].mxu0
      %359 = vdwg.mxu0
      %v364 = vunpack.c.l.b16 %v192
      %v365 = vunpack.c.l.b16 %v193
      %v366 = vunpack.c.l.b16 %v194
      %v367 = vunpack.c.l.b16 %v195
      %v368 = vpack.c.b16 %v365, %v364
      %v369 = vpack.c.b16 %v367, %v366
      %v373 = vsel %vm282, %v188, 0
      %v376 = vsel %vm282, %v189, 0
      %v379 = vsel %vm282, %v190, 0
      %v382 = vsel %vm282, %v191, 0
      %384 = vmatprep.subr.bf16.mxu0 0
      %385 = vmatpush1.bf16.msra.mxu0 %v368
      %386 = vmatprep.subr.bf16.mxu0 0
      %387 = vmatpush1.bf16.msra.mxu0 %v369
      %388 = vmatprep.subr.bf16.mxu0 0
      %389 = vmatpush1.bf16.msra.mxu0 0
      %390 = vmatprep.subr.bf16.mxu0 0
      %391 = vmatpush1.bf16.msra.mxu0 0
      %392 = vmatprep.subr.bf16.mxu0 0
      %393 = vmatpush1.bf16.msra.mxu0 0
      %394 = vmatprep.subr.bf16.mxu0 0
      %395 = vmatpush1.bf16.msra.mxu0 0
      %396 = vmatprep.subr.bf16.mxu0 0
      %397 = vmatpush1.bf16.msra.mxu0 0
      %398 = vmatprep.subr.bf16.mxu0 0
      %399 = vmatpush1.bf16.msra.mxu0 0
      %400 = vmatprep.subr.bf16.mxu0 0
      %401 = vmatpush1.bf16.msra.mxu0 0
      %402 = vmatprep.subr.bf16.mxu0 0
      %403 = vmatpush1.bf16.msra.mxu0 0
      %404 = vmatprep.subr.bf16.mxu0 0
      %405 = vmatpush1.bf16.msra.mxu0 0
      %406 = vmatprep.subr.bf16.mxu0 0
      %407 = vmatpush1.bf16.msra.mxu0 0
      %408 = vmatprep.subr.bf16.mxu0 0
      %409 = vmatpush1.bf16.msra.mxu0 0
      %410 = vmatprep.subr.bf16.mxu0 0
      %411 = vmatpush1.bf16.msra.mxu0 0
      %412 = vmatprep.subr.bf16.mxu0 0
      %413 = vmatpush1.bf16.msra.mxu0 0
      %414 = vmatprep.subr.bf16.mxu0 0
      %415 = vmatpush1.bf16.msra.mxu0 0
      %416 = vmatprep.mubr.bf16.mxu0 0
      %417 = vmatmul.mubr.bf16.gmra.mrb[0].mxu0 %v373
      %v418 = vpop.f32.mrb[0].mxu0
      %v419 = vadd.f32 %v330, %v418
      %v420 = vpop.f32.mrb[0].mxu0
      %v421 = vpop.f32.mrb[0].mxu0
      %v422 = vadd.f32 %v333, %v421
      %v423 = vpop.f32.mrb[0].mxu0
      %424 = vmatprep.mubr.bf16.mxu0 0
      %425 = vmatmul.mubr.bf16.gmra.mrb[0].mxu0 %v376
      %v426 = vpop.f32.mrb[0].mxu0
      %v427 = vadd.f32 %v338, %v426
      %v428 = vpop.f32.mrb[0].mxu0
      %v429 = vpop.f32.mrb[0].mxu0
      %v430 = vadd.f32 %v341, %v429
      %v431 = vpop.f32.mrb[0].mxu0
      %432 = vmatprep.mubr.bf16.mxu0 0
      %433 = vmatmul.mubr.bf16.gmra.mrb[0].mxu0 %v379
      %v434 = vpop.f32.mrb[0].mxu0
      %v435 = vadd.f32 %v346, %v434
      %v436 = vpop.f32.mrb[0].mxu0
      %v437 = vpop.f32.mrb[0].mxu0
      %v438 = vadd.f32 %v349, %v437
      %v439 = vpop.f32.mrb[0].mxu0
      %440 = vmatprep.mubr.bf16.mxu0 0
      %441 = vmatmul.mubr.bf16.gmra.mrb[0].mxu0 %v382
      %v442 = vpop.f32.mrb[0].mxu0
      %v443 = vadd.f32 %v354, %v442
      %v444 = vpop.f32.mrb[0].mxu0
      %v445 = vpop.f32.mrb[0].mxu0
      %v446 = vadd.f32 %v357, %v445
      %v447 = vpop.f32.mrb[0].mxu0
      %448 = vdwg.mxu0
      %s449 = scalar_lea.vmem %s165, 8
      %v450 = vld [vmem:[%s449] sm:$0xf]
      %v451 = vld [vmem:[%s449 + $0x8] sm:$0xf]
      %v452 = vld [vmem:[%s449 + $0x10] sm:$0xf]
      %v453 = vld [vmem:[%s449 + $0x18] sm:$0xf]
      %v454 = vld [vmem:[%s449 + $0x20] sm:$0xf]
      %v455 = vld [vmem:[%s449 + $0x28] sm:$0xf]
      %v456 = vld [vmem:[%s449 + $0x30] sm:$0xf]
      %v457 = vld [vmem:[%s449 + $0x38] sm:$0xf]
      %v458 = vunpack.c.l.bf16 %v450
      %v459 = vunpack.c.l.bf16 %v451
      %v460 = vunpack.c.l.bf16 %v452
      %v461 = vunpack.c.l.bf16 %v453
      %v462 = vunpack.c.l.bf16 %v454
      %v463 = vunpack.c.l.bf16 %v455
      %v464 = vunpack.c.l.bf16 %v456
      %v465 = vunpack.c.l.bf16 %v457
      %v466 = vpack.c.bf16 %v459, %v458
      %v467 = vpack.c.bf16 %v461, %v460
      %v468 = vpack.c.bf16 %v463, %v462
      %v469 = vpack.c.bf16 %v465, %v464
      %s470 = scalar_lea.vmem %s1, 32
      %v471 = vld [vmem:[%s470] sm:$0xf]
      %v472 = vld [vmem:[%s470 + $0x4] sm:$0xf]
      %v473 = vld [vmem:[%s470 + $0x8] sm:$0xf]
      %v474 = vld [vmem:[%s470 + $0xc] sm:$0xf]
      %v479 = vunpack.c.l.b16 %v471
      %v480 = vunpack.c.l.b16 %v472
      %v481 = vunpack.c.l.b16 %v473
      %v482 = vunpack.c.l.b16 %v474
      %v483 = vpack.c.b16 %v480, %v479
      %v484 = vpack.c.b16 %v482, %v481
      %v488 = vsel %vm282, %v466, 0
      %v491 = vsel %vm282, %v467, 0
      %v494 = vsel %vm282, %v468, 0
      %v497 = vsel %vm282, %v469, 0
      %499 = vmatprep.subr.bf16.mxu0 0
      %500 = vmatpush1.bf16.msra.mxu0 %v483
      %501 = vmatprep.subr.bf16.mxu0 0
      %502 = vmatpush1.bf16.msra.mxu0 %v484
      %503 = vmatprep.subr.bf16.mxu0 0
      %504 = vmatpush1.bf16.msra.mxu0 0
      %505 = vmatprep.subr.bf16.mxu0 0
      %506 = vmatpush1.bf16.msra.mxu0 0
      %507 = vmatprep.subr.bf16.mxu0 0
      %508 = vmatpush1.bf16.msra.mxu0 0
      %509 = vmatprep.subr.bf16.mxu0 0
      %510 = vmatpush1.bf16.msra.mxu0 0
      %511 = vmatprep.subr.bf16.mxu0 0
      %512 = vmatpush1.bf16.msra.mxu0 0
      %513 = vmatprep.subr.bf16.mxu0 0
      %514 = vmatpush1.bf16.msra.mxu0 0
      %515 = vmatprep.subr.bf16.mxu0 0
      %516 = vmatpush1.bf16.msra.mxu0 0
      %517 = vmatprep.subr.bf16.mxu0 0
      %518 = vmatpush1.bf16.msra.mxu0 0
      %519 = vmatprep.subr.bf16.mxu0 0
      %520 = vmatpush1.bf16.msra.mxu0 0
      %521 = vmatprep.subr.bf16.mxu0 0
      %522 = vmatpush1.bf16.msra.mxu0 0
      %523 = vmatprep.subr.bf16.mxu0 0
      %524 = vmatpush1.bf16.msra.mxu0 0
      %525 = vmatprep.subr.bf16.mxu0 0
      %526 = vmatpush1.bf16.msra.mxu0 0
      %527 = vmatprep.subr.bf16.mxu0 0
      %528 = vmatpush1.bf16.msra.mxu0 0
      %529 = vmatprep.subr.bf16.mxu0 0
      %530 = vmatpush1.bf16.msra.mxu0 0
      %531 = vmatprep.mubr.bf16.mxu0 0
      %532 = vmatmul.mubr.bf16.gmra.mrb[0].mxu0 %v488
      %v533 = vpop.f32.mrb[0].mxu0
      %v534 = vadd.f32 0.0, %v533
      %v535 = vpop.f32.mrb[0].mxu0
      %v536 = vpop.f32.mrb[0].mxu0
      %v537 = vadd.f32 0.0, %v536
      %v538 = vpop.f32.mrb[0].mxu0
      %539 = vmatprep.mubr.bf16.mxu0 0
      %540 = vmatmul.mubr.bf16.gmra.mrb[0].mxu0 %v491
      %v541 = vpop.f32.mrb[0].mxu0
      %v542 = vadd.f32 0.0, %v541
      %v543 = vpop.f32.mrb[0].mxu0
      %v544 = vpop.f32.mrb[0].mxu0
      %v545 = vadd.f32 0.0, %v544
      %v546 = vpop.f32.mrb[0].mxu0
      %547 = vmatprep.mubr.bf16.mxu0 0
      %548 = vmatmul.mubr.bf16.gmra.mrb[0].mxu0 %v494
      %v549 = vpop.f32.mrb[0].mxu0
      %v550 = vadd.f32 0.0, %v549
      %v551 = vpop.f32.mrb[0].mxu0
      %v552 = vpop.f32.mrb[0].mxu0
      %v553 = vadd.f32 0.0, %v552
      %v554 = vpop.f32.mrb[0].mxu0
      %555 = vmatprep.mubr.bf16.mxu0 0
      %556 = vmatmul.mubr.bf16.gmra.mrb[0].mxu0 %v497
      %v557 = vpop.f32.mrb[0].mxu0
      %v558 = vadd.f32 0.0, %v557
      %v559 = vpop.f32.mrb[0].mxu0
      %v560 = vpop.f32.mrb[0].mxu0
      %v561 = vadd.f32 0.0, %v560
      %v562 = vpop.f32.mrb[0].mxu0
      %563 = vdwg.mxu0
      %v564 = vadd.f32 %v419, %v534
      %v565 = vadd.f32 %v422, %v537
      %v566 = vadd.f32 %v427, %v542
      %v567 = vadd.f32 %v430, %v545
      %v568 = vadd.f32 %v435, %v550
      %v569 = vadd.f32 %v438, %v553
      %v570 = vadd.f32 %v443, %v558
      %v571 = vadd.f32 %v446, %v561
      %v572 = vld [vmem:[%s449] sm:$0xf]
      %v573 = vld [vmem:[%s449 + $0x4] sm:$0x1]
      %v574 = vld [vmem:[%s449 + $0x8] sm:$0xf]
      %v575 = vld [vmem:[%s449 + $0xc] sm:$0x1]
      %v576 = vld [vmem:[%s449 + $0x10] sm:$0xf]
      %v577 = vld [vmem:[%s449 + $0x14] sm:$0x1]
      %v578 = vld [vmem:[%s449 + $0x18] sm:$0xf]
      %v579 = vld [vmem:[%s449 + $0x1c] sm:$0x1]
      %v580 = vld [vmem:[%s449 + $0x20] sm:$0xf]
      %v581 = vld [vmem:[%s449 + $0x24] sm:$0x1]
      %v582 = vld [vmem:[%s449 + $0x28] sm:$0xf]
      %v583 = vld [vmem:[%s449 + $0x2c] sm:$0x1]
      %v584 = vld [vmem:[%s449 + $0x30] sm:$0xf]
      %v585 = vld [vmem:[%s449 + $0x34] sm:$0x1]
      %v586 = vld [vmem:[%s449 + $0x38] sm:$0xf]
      %v587 = vld [vmem:[%s449 + $0x3c] sm:$0x1]
      %v588 = vunpack.c.l.bf16 %v572
      %v589 = vunpack.c.l.bf16 %v573
      %v590 = vunpack.c.l.bf16 %v574
      %v591 = vunpack.c.l.bf16 %v575
      %v592 = vunpack.c.l.bf16 %v576
      %v593 = vunpack.c.l.bf16 %v577
      %v594 = vunpack.c.l.bf16 %v578
      %v595 = vunpack.c.l.bf16 %v579
      %v596 = vunpack.c.l.bf16 %v580
      %v597 = vunpack.c.l.bf16 %v581
      %v598 = vunpack.c.l.bf16 %v582
      %v599 = vunpack.c.l.bf16 %v583
      %v600 = vunpack.c.l.bf16 %v584
      %v601 = vunpack.c.l.bf16 %v585
      %v602 = vunpack.c.l.bf16 %v586
      %v603 = vunpack.c.l.bf16 %v587
      %v620 = vrot.slane %v588, 1
      %v621 = vrot.slane %v589, 1
      %v622 = vsel %vm228, %v620, %v621
      %v623 = vrot.slane %v590, 1
      %v624 = vrot.slane %v591, 1
      %v625 = vsel %vm228, %v623, %v624
      %v626 = vrot.slane %v592, 1
      %v627 = vrot.slane %v593, 1
      %v628 = vsel %vm228, %v626, %v627
      %v629 = vrot.slane %v594, 1
      %v630 = vrot.slane %v595, 1
      %v631 = vsel %vm228, %v629, %v630
      %v632 = vrot.slane %v596, 1
      %v633 = vrot.slane %v597, 1
      %v634 = vsel %vm228, %v632, %v633
      %v635 = vrot.slane %v598, 1
      %v636 = vrot.slane %v599, 1
      %v637 = vsel %vm228, %v635, %v636
      %v638 = vrot.slane %v600, 1
      %v639 = vrot.slane %v601, 1
      %v640 = vsel %vm228, %v638, %v639
      %v641 = vrot.slane %v602, 1
      %v642 = vrot.slane %v603, 1
      %v643 = vsel %vm228, %v641, %v642
      %v652 = vpack.c.bf16 %v625, %v622
      %v653 = vpack.c.bf16 %v631, %v628
      %v654 = vpack.c.bf16 %v637, %v634
      %v655 = vpack.c.bf16 %v643, %v640
      %s656 = scalar_lea.vmem %s1, 48
      %v657 = vld [vmem:[%s656] sm:$0xf]
      %v658 = vld [vmem:[%s656 + $0x4] sm:$0xf]
      %v659 = vld [vmem:[%s656 + $0x8] sm:$0xf]
      %v660 = vld [vmem:[%s656 + $0xc] sm:$0xf]
      %v665 = vunpack.c.l.b16 %v657
      %v666 = vunpack.c.l.b16 %v658
      %v667 = vunpack.c.l.b16 %v659
      %v668 = vunpack.c.l.b16 %v660
      %v669 = vpack.c.b16 %v666, %v665
      %v670 = vpack.c.b16 %v668, %v667
      %v674 = vsel %vm282, %v652, 0
      %v677 = vsel %vm282, %v653, 0
      %v680 = vsel %vm282, %v654, 0
      %v683 = vsel %vm282, %v655, 0
      %685 = vmatprep.subr.bf16.mxu0 0
      %686 = vmatpush1.bf16.msra.mxu0 %v669
      %687 = vmatprep.subr.bf16.mxu0 0
      %688 = vmatpush1.bf16.msra.mxu0 %v670
      %689 = vmatprep.subr.bf16.mxu0 0
      %690 = vmatpush1.bf16.msra.mxu0 0
      %691 = vmatprep.subr.bf16.mxu0 0
      %692 = vmatpush1.bf16.msra.mxu0 0
      %693 = vmatprep.subr.bf16.mxu0 0
      %694 = vmatpush1.bf16.msra.mxu0 0
      %695 = vmatprep.subr.bf16.mxu0 0
      %696 = vmatpush1.bf16.msra.mxu0 0
      %697 = vmatprep.subr.bf16.mxu0 0
      %698 = vmatpush1.bf16.msra.mxu0 0
      %699 = vmatprep.subr.bf16.mxu0 0
      %700 = vmatpush1.bf16.msra.mxu0 0
      %701 = vmatprep.subr.bf16.mxu0 0
      %702 = vmatpush1.bf16.msra.mxu0 0
      %703 = vmatprep.subr.bf16.mxu0 0
      %704 = vmatpush1.bf16.msra.mxu0 0
      %705 = vmatprep.subr.bf16.mxu0 0
      %706 = vmatpush1.bf16.msra.mxu0 0
      %707 = vmatprep.subr.bf16.mxu0 0
      %708 = vmatpush1.bf16.msra.mxu0 0
      %709 = vmatprep.subr.bf16.mxu0 0
      %710 = vmatpush1.bf16.msra.mxu0 0
      %711 = vmatprep.subr.bf16.mxu0 0
      %712 = vmatpush1.bf16.msra.mxu0 0
      %713 = vmatprep.subr.bf16.mxu0 0
      %714 = vmatpush1.bf16.msra.mxu0 0
      %715 = vmatprep.subr.bf16.mxu0 0
      %716 = vmatpush1.bf16.msra.mxu0 0
      %717 = vmatprep.mubr.bf16.mxu0 0
      %718 = vmatmul.mubr.bf16.gmra.mrb[0].mxu0 %v674
      %v719 = vpop.f32.mrb[0].mxu0
      %v720 = vadd.f32 0.0, %v719
      %v721 = vpop.f32.mrb[0].mxu0
      %v722 = vpop.f32.mrb[0].mxu0
      %v723 = vadd.f32 0.0, %v722
      %v724 = vpop.f32.mrb[0].mxu0
      %725 = vmatprep.mubr.bf16.mxu0 0
      %726 = vmatmul.mubr.bf16.gmra.mrb[0].mxu0 %v677
      %v727 = vpop.f32.mrb[0].mxu0
      %v728 = vadd.f32 0.0, %v727
      %v729 = vpop.f32.mrb[0].mxu0
      %v730 = vpop.f32.mrb[0].mxu0
      %v731 = vadd.f32 0.0, %v730
      %v732 = vpop.f32.mrb[0].mxu0
      %733 = vmatprep.mubr.bf16.mxu0 0
      %734 = vmatmul.mubr.bf16.gmra.mrb[0].mxu0 %v680
      %v735 = vpop.f32.mrb[0].mxu0
      %v736 = vadd.f32 0.0, %v735
      %v737 = vpop.f32.mrb[0].mxu0
      %v738 = vpop.f32.mrb[0].mxu0
      %v739 = vadd.f32 0.0, %v738
      %v740 = vpop.f32.mrb[0].mxu0
      %741 = vmatprep.mubr.bf16.mxu0 0
      %742 = vmatmul.mubr.bf16.gmra.mrb[0].mxu0 %v683
      %v743 = vpop.f32.mrb[0].mxu0
      %v744 = vadd.f32 0.0, %v743
      %v745 = vpop.f32.mrb[0].mxu0
      %v746 = vpop.f32.mrb[0].mxu0
      %v747 = vadd.f32 0.0, %v746
      %v748 = vpop.f32.mrb[0].mxu0
      %749 = vdwg.mxu0
      %v750 = vadd.f32 %v564, %v720
      %v751 = vadd.f32 %v565, %v723
      %v752 = vadd.f32 %v566, %v728
      %v753 = vadd.f32 %v567, %v731
      %v754 = vadd.f32 %v568, %v736
      %v755 = vadd.f32 %v569, %v739
      %v756 = vadd.f32 %v570, %v744
      %v757 = vadd.f32 %v571, %v747
      %v758 = vld [vmem:[%s2] sm:$0x1]
      %v759 = vlaneseq
      %v760 = vshrl.u32 %v759, 7
      %v761 = vsub.s32 0, %v760
      %v762 = vrot.slane %v758, %v761
      %v763 = vadd.f32 %v750, %v762
      %v764 = vadd.f32 %v751, %v762
      %v765 = vadd.f32 %v752, %v762
      %v766 = vadd.f32 %v753, %v762
      %v767 = vadd.f32 %v754, %v762
      %v768 = vadd.f32 %v755, %v762
      %v769 = vadd.f32 %v756, %v762
      %v770 = vadd.f32 %v757, %v762
      %vm771 = vcmp.gt.f32.partialorder %v763, 0.0
      %vm772 = vcmp.gt.f32.partialorder %v764, 0.0
      %vm773 = vcmp.gt.f32.partialorder %v765, 0.0
      %vm774 = vcmp.gt.f32.partialorder %v766, 0.0
      %vm775 = vcmp.gt.f32.partialorder %v767, 0.0
      %vm776 = vcmp.gt.f32.partialorder %v768, 0.0
      %vm777 = vcmp.gt.f32.partialorder %v769, 0.0
      %vm778 = vcmp.gt.f32.partialorder %v770, 0.0
      %v779 = vmul.f32 %v763, 0.2
      %v780 = vmul.f32 %v764, 0.2
      %v781 = vmul.f32 %v765, 0.2
      %v782 = vmul.f32 %v766, 0.2
      %v783 = vmul.f32 %v767, 0.2
      %v784 = vmul.f32 %v768, 0.2
      %v785 = vmul.f32 %v769, 0.2
      %v786 = vmul.f32 %v770, 0.2
      %v787 = vsel %vm771, %v763, %v779
      %v788 = vsel %vm772, %v764, %v780
      %v789 = vsel %vm773, %v765, %v781
      %v790 = vsel %vm774, %v766, %v782
      %v791 = vsel %vm775, %v767, %v783
      %v792 = vsel %vm776, %v768, %v784
      %v793 = vsel %vm777, %v769, %v785
      %v794 = vsel %vm778, %v770, %v786
      %v795 = vld [vmem:[%s2 + $0x1] sm:$0x1]
      %v796 = vlaneseq
      %v797 = vshrl.u32 %v796, 7
      %v798 = vsub.s32 0, %v797
      %v799 = vrot.slane %v795, %v798
      %v800 = vmul.f32 %v787, %v799
      %v801 = vmul.f32 %v788, %v799
      %v802 = vmul.f32 %v789, %v799
      %v803 = vmul.f32 %v790, %v799
      %v804 = vmul.f32 %v791, %v799
      %v805 = vmul.f32 %v792, %v799
      %v806 = vmul.f32 %v793, %v799
      %v807 = vmul.f32 %v794, %v799
      %v808 = vld [vmem:[%s2 + $0x2] sm:$0x1]
      %v809 = vlaneseq
      %v810 = vshrl.u32 %v809, 7
      %v811 = vsub.s32 0, %v810
      %v812 = vrot.slane %v808, %v811
      %v813 = vadd.f32 %v800, %v812
      %v814 = vadd.f32 %v801, %v812
      %v815 = vadd.f32 %v802, %v812
      %v816 = vadd.f32 %v803, %v812
      %v817 = vadd.f32 %v804, %v812
      %v818 = vadd.f32 %v805, %v812
      %v819 = vadd.f32 %v806, %v812
      %v820 = vadd.f32 %v807, %v812
      %v821 = vpack.c.bf16 %v813, %v813
      %v822 = vpack.c.bf16 %v814, %v814
      %v823 = vpack.c.bf16 %v815, %v815
      %v824 = vpack.c.bf16 %v816, %v816
      %v825 = vpack.c.bf16 %v817, %v817
      %v826 = vpack.c.bf16 %v818, %v818
      %v827 = vpack.c.bf16 %v819, %v819
      %v828 = vpack.c.bf16 %v820, %v820
      %vm829 = vcmask 125952
      %830 = vst.msk [vmem:[%s170] sm:$0xf] %vm829, %v821
      %831 = vst.msk [vmem:[%s170 + $0x4] sm:$0xf] %vm829, %v822
      %832 = vst.msk [vmem:[%s170 + $0x8] sm:$0xf] %vm829, %v823
      %833 = vst.msk [vmem:[%s170 + $0xc] sm:$0xf] %vm829, %v824
      %834 = vst.msk [vmem:[%s170 + $0x10] sm:$0xf] %vm829, %v825
      %835 = vst.msk [vmem:[%s170 + $0x14] sm:$0xf] %vm829, %v826
      %836 = vst.msk [vmem:[%s170 + $0x18] sm:$0xf] %vm829, %v827
      %837 = vst.msk [vmem:[%s170 + $0x1c] sm:$0xf] %vm829, %v828
      %p838 = scmp.lt.s32.totalorder %s14, 1
      %s839 = scalar_select %p838, %s14, 1
      %s840 = smul.addr %s839, 8
      %s841 = smul.addr %s840, 4
      %s842 = scalar_lea.vmem %s3, %s841
      // Predicated region
      $region33: #{discriminator_forward.7} parent=31 // pred_check
        %p843 = pneg %p100
      $region34: #{discriminator_forward.7} parent=31 // pred_check_branch
        %845 = sbr.rel (%p843) target = $region36
      $region35: #{discriminator_forward.7} parent=31 // pred_region
        _
      $region36: #{discriminator_forward.7} parent=31 // pred_fallthru
        _
    $region32: #{discriminator_forward.7} parent=5 // pred_fallthru
      _
    %p846 = scmp.le.s32.totalorder 2, %s9
    // Predicated region
    $region37: #{discriminator_forward.7} parent=5 // pred_check
      %p847 = pneg %p846
    $region38: #{discriminator_forward.7} parent=5 // pred_check_branch
      %849 = sbr.rel (%p847) target = $region40
    $region39: #{discriminator_forward.7} parent=5 // pred_region
      %s850 = ssub.s32 %s9, 2
      // Predicated region
      $region41: #{discriminator_forward.7} parent=39 // pred_check
        %p851 = pneg %p106
      $region42: #{discriminator_forward.7} parent=39 // pred_check_branch
        %853 = sbr.rel (%p851) target = $region44
      $region43: #{discriminator_forward.7} parent=39 // pred_region
        %p854 = scmp.lt.s32.totalorder %s15, 1
        %s855 = scalar_select %p854, %s15, 1
        %s856 = smul.addr %s855, 8
        %s857 = smul.addr %s856, 4
        %s858 = scalar_lea.vmem %s3, %s857
      $region44: #{discriminator_forward.7} parent=39 // pred_fallthru
        _
    $region40: #{discriminator_forward.7} parent=5 // pred_fallthru
      _
  $region6: #{discriminator_forward.7} parent=0 // loop_footer
    %s13 = sadd.s32 1, %s9
  $region7: #{discriminator_forward.7} parent=0 // loop_footer_branch
    %8 = sbr.rel target = $region3
  $region8: #{discriminator_forward.7} parent=0 // loop_exit
    _

// kernel: discriminator_forward.8
$region0: #{discriminator_forward.8}
  #allocation0 [shape = 'u32[]', space=smem, size = 0x4, offset = 0x4, fixed_abs, tag = 'smem constant byte address 0x4 - core index']
  #allocation1 [shape = 'u32[144,128]{1,0:T(1,128)}', space=vmem, size = 0x12000, scoped, tag = 'internal scratch']
  %s0 = inlined_call_operand.vmem [shape: bf16[32,256], index: 0, kind: input, shape index: {}]
  %s1 = inlined_call_operand.vmem [shape: bf16[256,32], index: 1, kind: input, shape index: {}]
  %s2 = inlined_call_operand.vmem [shape: f32[3,32], index: 2, kind: input, shape index: {}]
  %s3 = inlined_call_operand.vmem [shape: bf16[32,32], index: 3, kind: output, shape index: {}]
  %s4 = sld [smem:[#allocation0]]
  $region22: #{discriminator_forward.8} parent=0
    _
  %s6 = ssub.s32 1, %s4
  %s7 = scalar_select 0, %s6, %s4
  // Predicated region
  $region2: #{discriminator_forward.8} parent=0 // pred_check
    _
  $region3: #{discriminator_forward.8} parent=0 // pred_check_branch
    %9 = sbr.rel (0) target = $region5
  $region4: #{discriminator_forward.8} parent=0 // pred_region
    _
  $region5: #{discriminator_forward.8} parent=0 // pred_fallthru
    _
  // Predicated region
  $region6: #{discriminator_forward.8} parent=0 // pred_check
    _
  $region7: #{discriminator_forward.8} parent=0 // pred_check_branch
    %11 = sbr.rel (0) target = $region9
  $region8: #{discriminator_forward.8} parent=0 // pred_region
    _
  $region9: #{discriminator_forward.8} parent=0 // pred_fallthru
    _
  // Predicated region
  $region10: #{discriminator_forward.8} parent=0 // pred_check
    _
  $region11: #{discriminator_forward.8} parent=0 // pred_check_branch
    %13 = sbr.rel (0) target = $region13
  $region12: #{discriminator_forward.8} parent=0 // pred_region
    _
  $region13: #{discriminator_forward.8} parent=0 // pred_fallthru
    _
  %v15 = vld [vmem:[%s0] sm:$0xff]
  %v16 = vld [vmem:[%s0 + $0x8] sm:$0xff]
  %v17 = vld [vmem:[%s0 + $0x10] sm:$0xff]
  %v18 = vld [vmem:[%s0 + $0x18] sm:$0xff]
  %v19 = vld [vmem:[%s1] sm:$0xf]
  %v20 = vld [vmem:[%s1 + $0x4] sm:$0xf]
  %v21 = vld [vmem:[%s1 + $0x8] sm:$0xf]
  %v22 = vld [vmem:[%s1 + $0xc] sm:$0xf]
  %v23 = vld [vmem:[%s1 + $0x10] sm:$0xf]
  %v24 = vld [vmem:[%s1 + $0x14] sm:$0xf]
  %v25 = vld [vmem:[%s1 + $0x18] sm:$0xf]
  %v26 = vld [vmem:[%s1 + $0x1c] sm:$0xf]
  %v27 = vld [vmem:[%s1 + $0x20] sm:$0xf]
  %v28 = vld [vmem:[%s1 + $0x24] sm:$0xf]
  %v29 = vld [vmem:[%s1 + $0x28] sm:$0xf]
  %v30 = vld [vmem:[%s1 + $0x2c] sm:$0xf]
  %v31 = vld [vmem:[%s1 + $0x30] sm:$0xf]
  %v32 = vld [vmem:[%s1 + $0x34] sm:$0xf]
  %v33 = vld [vmem:[%s1 + $0x38] sm:$0xf]
  %v34 = vld [vmem:[%s1 + $0x3c] sm:$0xf]
  %v35 = vld [vmem:[%s1 + $0x40] sm:$0xf]
  %v36 = vld [vmem:[%s1 + $0x44] sm:$0xf]
  %v37 = vld [vmem:[%s1 + $0x48] sm:$0xf]
  %v38 = vld [vmem:[%s1 + $0x4c] sm:$0xf]
  %v39 = vld [vmem:[%s1 + $0x50] sm:$0xf]
  %v40 = vld [vmem:[%s1 + $0x54] sm:$0xf]
  %v41 = vld [vmem:[%s1 + $0x58] sm:$0xf]
  %v42 = vld [vmem:[%s1 + $0x5c] sm:$0xf]
  %v43 = vld [vmem:[%s1 + $0x60] sm:$0xf]
  %v44 = vld [vmem:[%s1 + $0x64] sm:$0xf]
  %v45 = vld [vmem:[%s1 + $0x68] sm:$0xf]
  %v46 = vld [vmem:[%s1 + $0x6c] sm:$0xf]
  %v47 = vld [vmem:[%s1 + $0x70] sm:$0xf]
  %v48 = vld [vmem:[%s1 + $0x74] sm:$0xf]
  %v49 = vld [vmem:[%s1 + $0x78] sm:$0xf]
  %v50 = vld [vmem:[%s1 + $0x7c] sm:$0xf]
  %v51 = vld [vmem:[%s2] sm:$0x1]
  %v52 = vlaneseq
  %v53 = vshrl.u32 %v52, 7
  %v54 = vsub.s32 0, %v53
  %v55 = vrot.slane %v51, %v54
  %v60 = vunpack.c.l.b16 %v15
  %v61 = vunpack.c.h.b16 %v15
  %v62 = vunpack.c.l.b16 %v16
  %v63 = vunpack.c.h.b16 %v16
  %v64 = vunpack.c.l.b16 %v17
  %v65 = vunpack.c.h.b16 %v17
  %v66 = vunpack.c.l.b16 %v18
  %v67 = vunpack.c.h.b16 %v18
  %v68 = vpack.c.b16 %v62, %v60
  %v69 = vpack.c.b16 %v63, %v61
  %v70 = vpack.c.b16 %v66, %v64
  %v71 = vpack.c.b16 %v67, %v65
  %v108 = vunpack.c.l.b16 %v19
  %v109 = vunpack.c.l.b16 %v20
  %v110 = vunpack.c.l.b16 %v21
  %v111 = vunpack.c.l.b16 %v22
  %v112 = vunpack.c.l.b16 %v23
  %v113 = vunpack.c.l.b16 %v24
  %v114 = vunpack.c.l.b16 %v25
  %v115 = vunpack.c.l.b16 %v26
  %v116 = vunpack.c.l.b16 %v27
  %v117 = vunpack.c.l.b16 %v28
  %v118 = vunpack.c.l.b16 %v29
  %v119 = vunpack.c.l.b16 %v30
  %v120 = vunpack.c.l.b16 %v31
  %v121 = vunpack.c.l.b16 %v32
  %v122 = vunpack.c.l.b16 %v33
  %v123 = vunpack.c.l.b16 %v34
  %v124 = vunpack.c.l.b16 %v35
  %v125 = vunpack.c.l.b16 %v36
  %v126 = vunpack.c.l.b16 %v37
  %v127 = vunpack.c.l.b16 %v38
  %v128 = vunpack.c.l.b16 %v39
  %v129 = vunpack.c.l.b16 %v40
  %v130 = vunpack.c.l.b16 %v41
  %v131 = vunpack.c.l.b16 %v42
  %v132 = vunpack.c.l.b16 %v43
  %v133 = vunpack.c.l.b16 %v44
  %v134 = vunpack.c.l.b16 %v45
  %v135 = vunpack.c.l.b16 %v46
  %v136 = vunpack.c.l.b16 %v47
  %v137 = vunpack.c.l.b16 %v48
  %v138 = vunpack.c.l.b16 %v49
  %v139 = vunpack.c.l.b16 %v50
  %v140 = vpack.c.b16 %v109, %v108
  %v141 = vpack.c.b16 %v111, %v110
  %v142 = vpack.c.b16 %v113, %v112
  %v143 = vpack.c.b16 %v115, %v114
  %v144 = vpack.c.b16 %v117, %v116
  %v145 = vpack.c.b16 %v119, %v118
  %v146 = vpack.c.b16 %v121, %v120
  %v147 = vpack.c.b16 %v123, %v122
  %v148 = vpack.c.b16 %v125, %v124
  %v149 = vpack.c.b16 %v127, %v126
  %v150 = vpack.c.b16 %v129, %v128
  %v151 = vpack.c.b16 %v131, %v130
  %v152 = vpack.c.b16 %v133, %v132
  %v153 = vpack.c.b16 %v135, %v134
  %v154 = vpack.c.b16 %v137, %v136
  %v155 = vpack.c.b16 %v139, %v138
  %172 = vmatprep.subr.bf16.mxu0 0
  %173 = vmatpush1.bf16.msra.mxu0 %v140
  %174 = vmatprep.subr.bf16.mxu0 0
  %175 = vmatpush1.bf16.msra.mxu0 %v141
  %176 = vmatprep.subr.bf16.mxu0 0
  %177 = vmatpush1.bf16.msra.mxu0 %v142
  %178 = vmatprep.subr.bf16.mxu0 0
  %179 = vmatpush1.bf16.msra.mxu0 %v143
  %180 = vmatprep.subr.bf16.mxu0 0
  %181 = vmatpush1.bf16.msra.mxu0 %v144
  %182 = vmatprep.subr.bf16.mxu0 0
  %183 = vmatpush1.bf16.msra.mxu0 %v145
  %184 = vmatprep.subr.bf16.mxu0 0
  %185 = vmatpush1.bf16.msra.mxu0 %v146
  %186 = vmatprep.subr.bf16.mxu0 0
  %187 = vmatpush1.bf16.msra.mxu0 %v147
  %188 = vmatprep.subr.bf16.mxu0 0
  %189 = vmatpush1.bf16.msra.mxu0 %v148
  %190 = vmatprep.subr.bf16.mxu0 0
  %191 = vmatpush1.bf16.msra.mxu0 %v149
  %192 = vmatprep.subr.bf16.mxu0 0
  %193 = vmatpush1.bf16.msra.mxu0 %v150
  %194 = vmatprep.subr.bf16.mxu0 0
  %195 = vmatpush1.bf16.msra.mxu0 %v151
  %196 = vmatprep.subr.bf16.mxu0 0
  %197 = vmatpush1.bf16.msra.mxu0 %v152
  %198 = vmatprep.subr.bf16.mxu0 0
  %199 = vmatpush1.bf16.msra.mxu0 %v153
  %200 = vmatprep.subr.bf16.mxu0 0
  %201 = vmatpush1.bf16.msra.mxu0 %v154
  %202 = vmatprep.subr.bf16.mxu0 0
  %203 = vmatpush1.bf16.msra.mxu0 %v155
  %204 = vmatprep.mubr.bf16.mxu0 %v69
  %205 = vmatmul.mubr.bf16.gmra.mrb[0].mxu0 %v68
  %v206 = vpop.f32.mrb[0].mxu0
  %v207 = vadd.f32 %v55, %v206
  %v208 = vpop.f32.mrb[0].mxu0
  %v209 = vpop.f32.mrb[0].mxu0
  %v210 = vadd.f32 %v55, %v209
  %v211 = vpop.f32.mrb[0].mxu0
  %212 = vmatprep.mubr.bf16.mxu0 %v71
  %213 = vmatmul.mubr.bf16.gmra.mrb[0].mxu0 %v70
  %v214 = vpop.f32.mrb[0].mxu0
  %v215 = vadd.f32 %v55, %v214
  %v216 = vpop.f32.mrb[0].mxu0
  %v217 = vpop.f32.mrb[0].mxu0
  %v218 = vadd.f32 %v55, %v217
  %v219 = vpop.f32.mrb[0].mxu0
  %220 = vdwg.mxu0
  %vm221 = vcmp.gt.f32.partialorder %v207, 0.0
  %vm222 = vcmp.gt.f32.partialorder %v210, 0.0
  %vm223 = vcmp.gt.f32.partialorder %v215, 0.0
  %vm224 = vcmp.gt.f32.partialorder %v218, 0.0
  %v225 = vmul.f32 %v207, 0.2
  %v226 = vmul.f32 %v210, 0.2
  %v227 = vmul.f32 %v215, 0.2
  %v228 = vmul.f32 %v218, 0.2
  %v229 = vsel %vm221, %v207, %v225
  %v230 = vsel %vm222, %v210, %v226
  %v231 = vsel %vm223, %v215, %v227
  %v232 = vsel %vm224, %v218, %v228
  %v233 = vld [vmem:[%s2 + $0x1] sm:$0x1]
  %v234 = vlaneseq
  %v235 = vshrl.u32 %v234, 7
  %v236 = vsub.s32 0, %v235
  %v237 = vrot.slane %v233, %v236
  %v238 = vmul.f32 %v229, %v237
  %v239 = vmul.f32 %v230, %v237
  %v240 = vmul.f32 %v231, %v237
  %v241 = vmul.f32 %v232, %v237
  %v242 = vld [vmem:[%s2 + $0x2] sm:$0x1]
  %v243 = vlaneseq
  %v244 = vshrl.u32 %v243, 7
  %v245 = vsub.s32 0, %v244
  %v246 = vrot.slane %v242, %v245
  %v247 = vadd.f32 %v238, %v246
  %v248 = vadd.f32 %v239, %v246
  %v249 = vadd.f32 %v240, %v246
  %v250 = vadd.f32 %v241, %v246
  %v251 = vpack.c.bf16 %v248, %v247
  %v252 = vpack.c.bf16 %v250, %v249
  %v255 = vunpack.c.l.b16 %v251
  %v256 = vunpack.c.h.b16 %v251
  %v257 = vunpack.c.l.b16 %v252
  %v258 = vunpack.c.h.b16 %v252
  %v259 = vpack.c.b16 %v255, %v255
  %v260 = vpack.c.b16 %v256, %v256
  %v261 = vpack.c.b16 %v257, %v257
  %v262 = vpack.c.b16 %v258, %v258
  %vm267 = vcmask 257024
  %268 = vst.msk [vmem:[%s3] sm:$0xf] %vm267, %v259
  %269 = vst.msk [vmem:[%s3 + $0x4] sm:$0xf] %vm267, %v260
  %270 = vst.msk [vmem:[%s3 + $0x8] sm:$0xf] %vm267, %v261
  %271 = vst.msk [vmem:[%s3 + $0xc] sm:$0xf] %vm267, %v262
  // Predicated region
  $region14: #{discriminator_forward.8} parent=0 // pred_check
    _
  $region15: #{discriminator_forward.8} parent=0 // pred_check_branch
    %273 = sbr.rel (0) target = $region17
  $region16: #{discriminator_forward.8} parent=0 // pred_region
    _
  $region17: #{discriminator_forward.8} parent=0 // pred_fallthru
    _
  // Predicated region
  $region18: #{discriminator_forward.8} parent=0 // pred_check
    _
  $region19: #{discriminator_forward.8} parent=0 // pred_check_branch
    %275 = sbr.rel (0) target = $region21
  $region20: #{discriminator_forward.8} parent=0 // pred_region
    _
  $region21: #{discriminator_forward.8} parent=0 // pred_fallthru
    _

// kernel: discriminator_forward.9
$region0: #{discriminator_forward.9}
  #allocation0 [shape = 'u32[]', space=smem, size = 0x4, offset = 0x4, fixed_abs, tag = 'smem constant byte address 0x4 - core index']
  #allocation1 [shape = 'u32[144,128]{1,0:T(1,128)}', space=vmem, size = 0x12000, scoped, tag = 'internal scratch']
  #allocation2 [shape = 'f32[1,1]{1,0:T(1,128)S(1)}', space=vmem, size = 0x200, scoped, tag = 'scoped memory for discriminator_forward.9']
  %s0 = inlined_call_operand.vmem [shape: bf16[2,512], index: 0, kind: input, shape index: {}]
  %s1 = inlined_call_operand.vmem [shape: f32[1,512], index: 1, kind: input, shape index: {}]
  %s2 = inlined_call_operand.<no memory space> [shape: f32[1,1], index: 2, kind: input, shape index: {}]
  %s3 = inlined_call_operand.vmem [shape: f32[2,1], index: 3, kind: output, shape index: {}]
  %s4 = sld [smem:[#allocation0]]
  $region22: #{discriminator_forward.9} parent=0
    _
  %s6 = ssub.s32 1, %s4
  %s7 = scalar_select 0, %s6, %s4
  %v8 = vstv %s2
  %9 = vst [vmem:[#allocation2] sm:$0x1] %v8
  // Predicated region
  $region2: #{discriminator_forward.9} parent=0 // pred_check
    _
  $region3: #{discriminator_forward.9} parent=0 // pred_check_branch
    %11 = sbr.rel (0) target = $region5
  $region4: #{discriminator_forward.9} parent=0 // pred_region
    _
  $region5: #{discriminator_forward.9} parent=0 // pred_fallthru
    _
  // Predicated region
  $region6: #{discriminator_forward.9} parent=0 // pred_check
    _
  $region7: #{discriminator_forward.9} parent=0 // pred_check_branch
    %13 = sbr.rel (0) target = $region9
  $region8: #{discriminator_forward.9} parent=0 // pred_region
    _
  $region9: #{discriminator_forward.9} parent=0 // pred_fallthru
    _
  // Predicated region
  $region10: #{discriminator_forward.9} parent=0 // pred_check
    _
  $region11: #{discriminator_forward.9} parent=0 // pred_check_branch
    %15 = sbr.rel (0) target = $region13
  $region12: #{discriminator_forward.9} parent=0 // pred_region
    _
  $region13: #{discriminator_forward.9} parent=0 // pred_fallthru
    _
  %v16 = vld [vmem:[%s0] sm:$0xf]
  %v17 = vunpack.c.l.bf16 %v16
  %v18 = vld [vmem:[%s1] sm:$0xf]
  %v20 = vlaneseq
  %v21 = vshrl.u32 %v20, 7
  %v22 = vsub.s32 0, %v21
  %v23 = vrot.slane %v18, %v22
  %v24 = vlaneseq
  %v25 = vshrl.u32 %v24, 7
  %v26 = vsub.s32 1, %v25
  %v27 = vrot.slane %v18, %v26
  %v28 = vlaneseq
  %v29 = vshrl.u32 %v28, 7
  %v30 = vsub.s32 2, %v29
  %v31 = vrot.slane %v18, %v30
  %v32 = vlaneseq
  %v33 = vshrl.u32 %v32, 7
  %v34 = vsub.s32 3, %v33
  %v35 = vrot.slane %v18, %v34
  %v36 = vcombine.low %v23, %v27
  %v37 = vcombine.low %v31, %v35
  %v39 = vunpack.c.l.s4 1983009808
  %v40 = vunpack.c.0.s8 %v39
  %v41 = vlaneseq
  %v42 = vshrl.u32 %v41, 7
  %v43 = vsub.s32 %v40, %v42
  %v44 = vrot.slane %v36, %v43
  %v46 = vunpack.c.l.s4 1983009808
  %v47 = vunpack.c.0.s8 %v46
  %v48 = vlaneseq
  %v49 = vshrl.u32 %v48, 7
  %v50 = vsub.s32 %v47, %v49
  %v51 = vrot.slane %v37, %v50
  %v52 = vcombine.low %v44, %v51
  %v54 = vmul.f32 %v17, %v52
  %v56 = vcombine.high %v54, %v54
  %v58 = vunpack.c.l.s4 1983009808
  %v59 = vunpack.c.0.s8 %v58
  %v60 = vlaneseq
  %v61 = vshrl.u32 %v60, 7
  %v62 = vsub.s32 %v59, %v61
  %v63 = vrot.slane %v54, %v62
  %v65 = vunpack.c.l.s4 1983009808
  %v66 = vunpack.c.0.s8 %v65
  %v67 = vlaneseq
  %v68 = vshrl.u32 %v67, 7
  %v69 = vsub.s32 %v66, %v68
  %v70 = vrot.slane %v56, %v69
  %v71 = vcombine.high %v63, %v63
  %v72 = vcombine.high %v70, %v70
  %vm77 = vcmask 1041408
  %v78 = vsel %vm77, %v63, 0.0
  %v79 = vsel %vm77, %v71, 0.0
  %v80 = vadd.f32 %v78, %v79
  %v81 = vsel %vm77, %v70, 0.0
  %v82 = vadd.f32 %v80, %v81
  %v83 = vsel %vm77, %v72, 0.0
  %v84 = vadd.f32 %v82, %v83
  %85 = vadd.xlane.f32.xlu0 %v84
  %v86 = vpop.xlane.xlu0 %85
  %v87 = vld [vmem:[#allocation2] sm:$0x1]
  %v89 = vlaneseq
  %v90 = vshrl.u32 %v89, 7
  %v91 = vsub.s32 0, %v90
  %v92 = vrot.slane %v87, %v91
  %v94 = vadd.f32 %v86, %v92
  %v95 = vxor.u32 %v94, 2147483648
  %v96 = vmul.f32 %v95, 1.442695
  %v97 = vpow.pop %v96
  %v98 = vadd.f32 %v97, 1.0
  %v99 = vrcp.pop %v98
  %v100 = vmul.f32 1.0, %v99
  %vm101 = vcmask 1024
  %102 = vst.msk [vmem:[%s3] sm:$0x3] %vm101, %v100
  // Predicated region
  $region14: #{discriminator_forward.9} parent=0 // pred_check
    _
  $region15: #{discriminator_forward.9} parent=0 // pred_check_branch
    %104 = sbr.rel (0) target = $region17
  $region16: #{discriminator_forward.9} parent=0 // pred_region
    _
  $region17: #{discriminator_forward.9} parent=0 // pred_fallthru
    _
  // Predicated region
  $region18: #{discriminator_forward.9} parent=0 // pred_check
    _
  $region19: #{discriminator_forward.9} parent=0 // pred_check_branch
    %106 = sbr.rel (0) target = $region21
  $region20: #{discriminator_forward.9} parent=0 // pred_region
    _
  $region21: #{discriminator_forward.9} parent=0 // pred_fallthru
    _

</llo_original>
